<compile_context>
chip_gen: v7x
topology: tpu7x:2x2x1
jax: 0.10.0
libtpu: 0.0.40
codegen_flags: <defaults>
</compile_context>

<pallas_src>
import math
import jax
import jax.numpy as jnp
from jax.experimental import pallas as pl
from jax.experimental.pallas import tpu as pltpu

# ---------------- configuration (small analog of SlotCSwinQSA) ----------------
EMBED_DIM   = 32                    # analog of Swin-L embed_dim = 192
FEAT_HW     = 4                     # analog of the 7x7 final Swin feature map
N_IN_TOKENS = FEAT_HW * FEAT_HW * 8 # analog of 7*7*8 = 392 tokens after .view(B,-1,D)
POOL_TOKENS = 16                    # analog of self.patch_size = 14*14 = 196
NUM_CLASSES = 10
NUM_HEADS   = 2                     # classifier default (num_heads not forwarded by SlotCSwinQSA)
HEAD_DIM    = EMBED_DIM // NUM_HEADS
N_UNSUP     = 6                     # analog of n_unsup_concepts = 50
N_CONCEPTS  = 5                     # analog of n_concepts = 13
N_SPATIAL   = 7                     # analog of n_spatial_concepts = 95
K_MAX       = max(N_UNSUP, N_CONCEPTS, N_SPATIAL)
NUM_ITERS   = 1                     # ConceptQuerySlotAttention num_iterations default
LN_EPS      = 1e-5
SA_EPS      = 1e-8

# lane layout of the packed (P, 128) output slab
LANE_U     = 0
LANE_S     = LANE_U + N_UNSUP           # 6
LANE_OUT   = LANE_S + N_SPATIAL         # 13
LANE_C     = LANE_OUT + NUM_CLASSES     # 23
LANES_USED = LANE_C + N_CONCEPTS        # 28
OUT_LANES  = 128


def _rep_spec(a):
    """BlockSpec for a parameter replicated across the batch grid."""
    nd = a.ndim
    return pl.BlockSpec(a.shape, lambda i, nd=nd: (0,) * nd)


# ------------------------------------------------------------------------------
# Single fused kernel: one grid step = one batch element, whole classifier head.
# ------------------------------------------------------------------------------
def _fused_kernel(
    feat_ref, pool_w_ref, pool_b_ref,
    kv_w_ref, kv_b_ref,
    sa_sq_ref, sa_gru_ref, sa_vd_ref, sa_v3d_ref,
    slots_ref,
    ca_qkv_ref, ca_pw_ref, ca_pb_ref,
    out_ref,
):
    D = EMBED_DIM
    P = POOL_TOKENS

    # x = input_pool_nn(x.transpose(-1,-2)).transpose(-1,-2)
    #   pooled[p, c] = sum_n W[p, n] * feat[n, c] + bias[p]
    x = (jnp.dot(pool_w_ref[...], feat_ref[...],
                 preferred_element_type=jnp.float32)
         + pool_b_ref[...])                                              # (P, D)

    def plain_ln(v):  # affine terms are folded into the downstream weights at init
        mu = jnp.mean(v, axis=-1, keepdims=True)
        c = v - mu
        var = jnp.mean(c * c, axis=-1, keepdims=True)
        return c * jax.lax.rsqrt(var + LN_EPS)

    # Shared input LayerNorm + ONE (P, D)@(D, 6D) matmul producing k/v for all 3 branches.
    # Per-branch LN affine and the 1/sqrt(D) attention scale are folded into kv_w / kv_b.
    xn = plain_ln(x)
    kv_all = (jnp.dot(xn, kv_w_ref[...], preferred_element_type=jnp.float32)
              + kv_b_ref[...])                                           # (P, 6D)

    slots_pack = slots_ref[...]                                          # (2, 3, K_MAX, D)

    def slot_attention(b, nslots):
        k = kv_all[:, (2 * b) * D:(2 * b + 1) * D]                       # (P, D), pre-scaled
        v = kv_all[:, (2 * b + 1) * D:(2 * b + 2) * D]                   # (P, D)
        sq  = sa_sq_ref[b]                                               # (3, D, D): wq', w1', w2
        gru = sa_gru_ref[b]                                              # (2, D, 3D): wih, whh
        vd  = sa_vd_ref[b]                                               # (3, 1, D): bq, b1', b2
        v3  = sa_v3d_ref[b]                                              # (2, 1, 3D): bih, bhh
        slots = slots_pack[0, b][:nslots]                                # (K, D)
        for _ in range(NUM_ITERS):                                       # static unroll (=1)
            slots_prev = slots
            q = jnp.dot(plain_ln(slots), sq[0],
                        preferred_element_type=jnp.float32) + vd[0]      # (K, D)
            logits = jnp.dot(k, q.T, preferred_element_type=jnp.float32)  # (P, K)
            logits = logits - jnp.max(logits, axis=-1, keepdims=True)
            e = jnp.exp(logits)
            attn = e * pl.reciprocal(jnp.sum(e, axis=-1, keepdims=True),
                                     approx=True)                        # softmax over slots
            attn = attn + SA_EPS
            attn = attn * pl.reciprocal(jnp.sum(attn, axis=0, keepdims=True),
                                        approx=True)                     # weighted-mean renorm
            updates = jnp.dot(attn.T, v, preferred_element_type=jnp.float32)  # (K, D)

            # GRUCell(updates, slots_prev): gate weights fused (r|z|n) on lanes -> 2 matmuls
            gi = jnp.dot(updates, gru[0], preferred_element_type=jnp.float32) + v3[0]
            gh = jnp.dot(slots_prev, gru[1], preferred_element_type=jnp.float32) + v3[1]
            rz = jax.nn.sigmoid(gi[:, :2 * D] + gh[:, :2 * D])
            r = rz[:, :D]
            z = rz[:, D:]
            n = jnp.tanh(gi[:, 2 * D:] + r * gh[:, 2 * D:])
            slots_new = (1.0 - z) * n + z * slots_prev

            # residual MLP (pre-LN affine folded into w1' / b1')
            h = jnp.maximum(
                jnp.dot(plain_ln(slots_new), sq[1],
                        preferred_element_type=jnp.float32) + vd[1], 0.0)
            slots = slots_new + jnp.dot(h, sq[2],
                                        preferred_element_type=jnp.float32) + vd[2]
        return slots

    def cross_attention(slots, qkv, pw, pb, q_all):
        # merged-head k/v projections: single (K, D)@(D, D) matmuls, heads sliced from lanes
        k_all = jnp.dot(slots, qkv[1], preferred_element_type=jnp.float32)   # (K, D)
        v_all = jnp.dot(slots, qkv[2], preferred_element_type=jnp.float32)   # (K, D)
        ctxs = []
        attn_sum = None
        for hh in range(NUM_HEADS):                                      # static unroll
            lo = hh * HEAD_DIM
            hi = lo + HEAD_DIM
            logits = jnp.dot(q_all[:, lo:hi], k_all[:, lo:hi].T,
                             preferred_element_type=jnp.float32)         # (P, K), scale folded
            logits = logits - jnp.max(logits, axis=-1, keepdims=True)
            e = jnp.exp(logits)
            a = e * pl.reciprocal(jnp.sum(e, axis=-1, keepdims=True), approx=True)
            attn_sum = a if attn_sum is None else attn_sum + a
            ctxs.append(jnp.dot(a, v_all[:, lo:hi],
                                preferred_element_type=jnp.float32))     # (P, hd)
        ctx = jnp.concatenate(ctxs, axis=-1)                             # (P, D)
        out = jnp.dot(ctx, pw, preferred_element_type=jnp.float32) + pb  # (P, nc)
        attn_mean = attn_sum * (1.0 / NUM_HEADS)                         # mean over heads
        out_mean = jnp.mean(out, axis=0, keepdims=True)                  # mean over tokens
        return out_mean, attn_mean

    qkv_c = ca_qkv_ref[0]                                                # (3, D, D)
    qkv_s = ca_qkv_ref[1]
    pw_c, pb_c = ca_pw_ref[0], ca_pb_ref[0]
    pw_s, pb_s = ca_pw_ref[1], ca_pb_ref[1]
    # cross-attention q depends only on x: compute once per CA module and reuse.
    q_c = jnp.dot(x, qkv_c[0], preferred_element_type=jnp.float32)       # (P, D), head_scale folded
    q_s = jnp.dot(x, qkv_s[0], preferred_element_type=jnp.float32)

    # ---- unsupervised concepts ----
    # NOTE: original code uses `self.concept_tranformer` here (not the unsup one) — reproduced.
    slots_u = slot_attention(0, N_UNSUP) + slots_pack[1, 0][:N_UNSUP]
    out_u, attn_u = cross_attention(slots_u, qkv_c, pw_c, pb_c, q_c)

    # ---- supervised (global) concepts; sigma=0 -> slots_init = mu exactly ----
    slots_c = slot_attention(1, N_CONCEPTS) + slots_pack[1, 1][:N_CONCEPTS]
    out_c, attn_c = cross_attention(slots_c, qkv_c, pw_c, pb_c, q_c)
    c_attn = jnp.mean(attn_c, axis=0, keepdims=True)                     # (1, N_CONCEPTS)

    # ---- spatial concepts (no slot_pos add in the original forward) ----
    slots_s = slot_attention(2, N_SPATIAL)
    out_s, attn_s = cross_attention(slots_s, qkv_s, pw_s, pb_s, q_s)

    logits = out_u + out_c + out_s                                       # (1, num_classes)

    # Lane-dense output slab: one unmasked (P, 128) store / one writeback DMA per step.
    out_ref[...] = jnp.concatenate(
        [attn_u,                                                         # lanes  0:6
         attn_s,                                                         # lanes  6:13
         jnp.broadcast_to(logits, (P, NUM_CLASSES)),                     # lanes 13:23
         jnp.broadcast_to(c_attn, (P, N_CONCEPTS)),                      # lanes 23:28
         jnp.zeros((P, OUT_LANES - LANES_USED), jnp.float32)],
        axis=-1)


# ------------------------------------------------------------------------------
# Full forward (SlotCSwinQSA after the backbone) — ONE pallas_call.
# ------------------------------------------------------------------------------
def slot_cswin_qsa_forward(feat, params):
    B, n_in, d = feat.shape
    P = POOL_TOKENS

    arg_names = ("pool_w", "pool_b", "kv_w", "kv_b",
                 "sa_sq", "sa_gru", "sa_vd", "sa_v3d",
                 "slots_pack", "ca_qkv", "ca_pw", "ca_pb")
    rep_args = [params[k] for k in arg_names]

    feat_spec = pl.BlockSpec((pl.Squeezed(), n_in, d), lambda i: (i, 0, 0))
    out_spec = pl.BlockSpec((pl.Squeezed(), P, OUT_LANES), lambda i: (i, 0, 0))

    slab = pl.pallas_call(
        _fused_kernel,
        out_shape=jax.ShapeDtypeStruct((B, P, OUT_LANES), jnp.float32),
        grid=(B,),
        in_specs=[feat_spec] + [_rep_spec(a) for a in rep_args],
        out_specs=out_spec,
        compiler_params=pltpu.CompilerParams(dimension_semantics=("parallel",)),
    )(feat, *rep_args)

    out          = slab[:, 0, LANE_OUT:LANE_OUT + NUM_CLASSES]           # (B, num_classes)
    unsup_attn   = slab[:, :, LANE_U:LANE_U + N_UNSUP]                   # (B, P, n_unsup)
    concept_attn = slab[:, 0, LANE_C:LANE_C + N_CONCEPTS]                # (B, n_concepts)
    spatial_attn = slab[:, :, LANE_S:LANE_S + N_SPATIAL]                 # (B, P, n_spatial)
    return out, unsup_attn, concept_attn, spatial_attn


# ------------------------------------------------------------------------------
# Parameter init (deterministic, synthetic) — already in the packed kernel layout,
# with LayerNorm affines and attention scales folded into the weights.
# ------------------------------------------------------------------------------
def init_params(key):
    D = EMBED_DIM
    inv_sqrt_d = D ** -0.5
    head_scale = HEAD_DIM ** -0.5
    keys = iter(jax.random.split(key, 128))

    def dense(shape, fan_in=None):
        fi = shape[-2] if fan_in is None else fan_in
        return jax.random.normal(next(keys), shape, jnp.float32) / math.sqrt(fi)

    def sa_raw():
        return dict(
            ln_in_g=jnp.ones((D,), jnp.float32), ln_in_b=jnp.zeros((D,), jnp.float32),
            wk=dense((D, D)), wv=dense((D, D)),
            ln_s_g=jnp.ones((D,), jnp.float32), ln_s_b=jnp.zeros((D,), jnp.float32),
            wq=dense((D, D)),
            wih=dense((D, 3 * D)), whh=dense((D, 3 * D)),
            bih=jnp.zeros((3 * D,), jnp.float32), bhh=jnp.zeros((3 * D,), jnp.float32),
            ln_m_g=jnp.ones((D,), jnp.float32), ln_m_b=jnp.zeros((D,), jnp.float32),
            w1=dense((D, D)), b1=jnp.zeros((D,), jnp.float32),
            w2=dense((D, D)), b2=jnp.zeros((D,), jnp.float32),
        )

    def fold(g, b, w):
        # (LN_plain(x)*g + b) @ W  ==  LN_plain(x) @ (diag(g)@W)  +  b@W
        return g[:, None] * w, b @ w

    branches = [sa_raw() for _ in range(3)]

    kv_w_cols, kv_b_cols = [], []
    sq_list, gru_list, vd_list, v3d_list = [], [], [], []
    for p in branches:
        wk_f, bk_f = fold(p["ln_in_g"], p["ln_in_b"], p["wk"])
        wv_f, bv_f = fold(p["ln_in_g"], p["ln_in_b"], p["wv"])
        kv_w_cols += [wk_f * inv_sqrt_d, wv_f]          # 1/sqrt(D) attention scale folded into k
        kv_b_cols += [bk_f * inv_sqrt_d, bv_f]
        wq_f, bq_f = fold(p["ln_s_g"], p["ln_s_b"], p["wq"])
        w1_f, b1_x = fold(p["ln_m_g"], p["ln_m_b"], p["w1"])
        b1_f = b1_x + p["b1"]
        sq_list.append(jnp.stack([wq_f, w1_f, p["w2"]], axis=0))
        gru_list.append(jnp.stack([p["wih"], p["whh"]], axis=0))
        vd_list.append(jnp.stack([bq_f[None, :], b1_f[None, :], p["b2"][None, :]], axis=0))
        v3d_list.append(jnp.stack([p["bih"][None, :], p["bhh"][None, :]], axis=0))

    kv_w = jnp.concatenate(kv_w_cols, axis=1)            # (D, 6D)
    kv_b = jnp.concatenate(kv_b_cols, axis=0)[None, :]   # (1, 6D)
    sa_sq = jnp.stack(sq_list, axis=0)                   # (3, 3, D, D)
    sa_gru = jnp.stack(gru_list, axis=0)                 # (3, 2, D, 3D)
    sa_vd = jnp.stack(vd_list, axis=0)                   # (3, 3, 1, D)
    sa_v3d = jnp.stack(v3d_list, axis=0)                 # (3, 2, 1, 3D)

    def pad_slots(a):
        return jnp.pad(a, ((0, K_MAX - a.shape[0]), (0, 0)))

    # unsup: ConceptQuerySlotAttention called without slots_init -> learned internal init
    init_u = dense((N_UNSUP, D), fan_in=D)
    init_c = dense((N_CONCEPTS, D), fan_in=D)
    init_s = dense((N_SPATIAL, D), fan_in=D)
    pos_u = jnp.zeros((N_UNSUP, D), jnp.float32)         # (1,1,K*D) zero params reshaped
    pos_c = jnp.zeros((N_CONCEPTS, D), jnp.float32)
    pos_s = jnp.zeros((N_SPATIAL, D), jnp.float32)
    slots_pack = jnp.stack([
        jnp.stack([pad_slots(init_u), pad_slots(init_c), pad_slots(init_s)], axis=0),
        jnp.stack([pad_slots(pos_u), pad_slots(pos_c), pad_slots(pos_s)], axis=0),
    ], axis=0)                                            # (2, 3, K_MAX, D)

    def ca_module():
        wq = dense((D, D)) * head_scale                   # head_scale folded into q weights
        return (jnp.stack([wq, dense((D, D)), dense((D, D))], axis=0),   # (3, D, D)
                dense((D, NUM_CLASSES)),                                  # (D, nc)
                jnp.zeros((1, NUM_CLASSES), jnp.float32))
    qkv_c, pw_c, pb_c = ca_module()
    qkv_s, pw_s, pb_s = ca_module()
    ca_qkv = jnp.stack([qkv_c, qkv_s], axis=0)            # (2, 3, D, D)
    ca_pw = jnp.stack([pw_c, pw_s], axis=0)               # (2, D, nc)
    ca_pb = jnp.stack([pb_c, pb_s], axis=0)               # (2, 1, nc)

    return {
        "pool_w": dense((POOL_TOKENS, N_IN_TOKENS), fan_in=N_IN_TOKENS),
        "pool_b": jnp.zeros((POOL_TOKENS, 1), jnp.float32),
        "kv_w": kv_w, "kv_b": kv_b,
        "sa_sq": sa_sq, "sa_gru": sa_gru, "sa_vd": sa_vd, "sa_v3d": sa_v3d,
        "slots_pack": slots_pack,
        "ca_qkv": ca_qkv, "ca_pw": ca_pw, "ca_pb": ca_pb,
    }


if __name__ == "__main__":
    key = jax.random.PRNGKey(0)
    k_param, k_feat = jax.random.split(key)

    B = 2
    # feat = flattened Swin backbone output: x.view(B, -1, embed_dim)
    feat = jax.random.normal(k_feat, (B, N_IN_TOKENS, EMBED_DIM), jnp.float32)
    params = init_params(k_param)

    fwd = jax.jit(slot_cswin_qsa_forward)
    out, unsup_attn, concept_attn, spatial_attn = fwd(feat, params)
    jax.block_until_ready((out, unsup_attn, concept_attn, spatial_attn))

    assert out.shape == (B, NUM_CLASSES)
    assert unsup_attn.shape == (B, POOL_TOKENS, N_UNSUP)
    assert concept_attn.shape == (B, N_CONCEPTS)
    assert spatial_attn.shape == (B, POOL_TOKENS, N_SPATIAL)
    assert all(bool(jnp.all(jnp.isfinite(a)))
               for a in (out, unsup_attn, concept_attn, spatial_attn))
    print("KERNEL_OK")
</pallas_src>

<mosaic_0001>
module attributes {stable_mosaic.version = 11 : i64} {
  func.func @_fused_kernel(%arg0: i32, %arg1: memref<1x128x32xf32, #tpu.memory_space<vmem>>, %arg2: memref<16x128xf32, #tpu.memory_space<vmem>>, %arg3: memref<16x1xf32, #tpu.memory_space<vmem>>, %arg4: memref<32x192xf32, #tpu.memory_space<vmem>>, %arg5: memref<1x192xf32, #tpu.memory_space<vmem>>, %arg6: memref<3x3x32x32xf32, #tpu.memory_space<vmem>>, %arg7: memref<3x2x32x96xf32, #tpu.memory_space<vmem>>, %arg8: memref<3x3x1x32xf32, #tpu.memory_space<vmem>>, %arg9: memref<3x2x1x96xf32, #tpu.memory_space<vmem>>, %arg10: memref<2x3x7x32xf32, #tpu.memory_space<vmem>>, %arg11: memref<2x3x32x32xf32, #tpu.memory_space<vmem>>, %arg12: memref<2x32x10xf32, #tpu.memory_space<vmem>>, %arg13: memref<2x1x10xf32, #tpu.memory_space<vmem>>, %arg14: memref<1x16x128xf32, #tpu.memory_space<vmem>>) attributes {dimension_semantics = [#tpu.dimension_semantics<parallel>], iteration_bounds = array<i64: 2>, scalar_prefetch = 0 : i64, scratch_operands = 0 : i64, tpu.core_type = #tpu.core_type<tc>, window_params = [{transform_indices = @transform_0, window_bounds = array<i64: 1, 128, 32>}, {pipeline_mode = #tpu.pipeline_mode<synchronous>, transform_indices = @transform_1, window_bounds = array<i64: 16, 128>}, {pipeline_mode = #tpu.pipeline_mode<synchronous>, transform_indices = @transform_2, window_bounds = array<i64: 16, 1>}, {pipeline_mode = #tpu.pipeline_mode<synchronous>, transform_indices = @transform_3, window_bounds = array<i64: 32, 192>}, {pipeline_mode = #tpu.pipeline_mode<synchronous>, transform_indices = @transform_4, window_bounds = array<i64: 1, 192>}, {pipeline_mode = #tpu.pipeline_mode<synchronous>, transform_indices = @transform_5, window_bounds = array<i64: 3, 3, 32, 32>}, {pipeline_mode = #tpu.pipeline_mode<synchronous>, transform_indices = @transform_6, window_bounds = array<i64: 3, 2, 32, 96>}, {pipeline_mode = #tpu.pipeline_mode<synchronous>, transform_indices = @transform_7, window_bounds = array<i64: 3, 3, 1, 32>}, {pipeline_mode = #tpu.pipeline_mode<synchronous>, transform_indices = @transform_8, window_bounds = array<i64: 3, 2, 1, 96>}, {pipeline_mode = #tpu.pipeline_mode<synchronous>, transform_indices = @transform_9, window_bounds = array<i64: 2, 3, 7, 32>}, {pipeline_mode = #tpu.pipeline_mode<synchronous>, transform_indices = @transform_10, window_bounds = array<i64: 2, 3, 32, 32>}, {pipeline_mode = #tpu.pipeline_mode<synchronous>, transform_indices = @transform_11, window_bounds = array<i64: 2, 32, 10>}, {pipeline_mode = #tpu.pipeline_mode<synchronous>, transform_indices = @transform_12, window_bounds = array<i64: 2, 1, 10>}, {transform_indices = @transform_13, window_bounds = array<i64: 1, 16, 128>}]} {
    %c0 = arith.constant 0 : index
    %c0_0 = arith.constant 0 : index
    %0 = vector.load %arg2[%c0, %c0_0] : memref<16x128xf32, #tpu.memory_space<vmem>>, vector<16x128xf32>
    %c0_1 = arith.constant 0 : index
    %c0_2 = arith.constant 0 : index
    %c0_3 = arith.constant 0 : index
    %1 = vector.load %arg1[%c0_1, %c0_2, %c0_3] : memref<1x128x32xf32, #tpu.memory_space<vmem>>, vector<1x128x32xf32>
    %2 = vector.shape_cast %1 : vector<1x128x32xf32> to vector<128x32xf32>
    %cst = arith.constant dense<0.000000e+00> : vector<16x32xf32>
    %3 = tpu.matmul %0, %2, %cst {dimension_numbers = #tpu.dot_dimension_numbers<[1], [0], [0], [1], [0, 0, 1, 1], [], []>} : vector<16x128xf32>, vector<128x32xf32>, vector<16x32xf32> -> vector<16x32xf32>
    %c0_4 = arith.constant 0 : index
    %c0_5 = arith.constant 0 : index
    %4 = vector.load %arg3[%c0_4, %c0_5] : memref<16x1xf32, #tpu.memory_space<vmem>>, vector<16x1xf32>
    %5 = vector.broadcast %4 : vector<16x1xf32> to vector<16x32xf32>
    %6 = arith.addf %3, %5 : vector<16x32xf32>
    %cst_6 = arith.constant dense<0.000000e+00> : vector<16xf32>
    %7 = vector.multi_reduction <add>, %6, %cst_6 [1] : vector<16x32xf32> to vector<16xf32>
    %8 = vector.shape_cast %7 : vector<16xf32> to vector<16x1xf32>
    %cst_7 = arith.constant 3.200000e+01 : f32
    %9 = vector.broadcast %cst_7 : f32 to vector<16x1xf32>
    %10 = arith.divf %8, %9 : vector<16x1xf32>
    %11 = vector.broadcast %10 : vector<16x1xf32> to vector<16x32xf32>
    %12 = arith.subf %6, %11 : vector<16x32xf32>
    %13 = arith.mulf %12, %12 : vector<16x32xf32>
    %cst_8 = arith.constant dense<0.000000e+00> : vector<16xf32>
    %14 = vector.multi_reduction <add>, %13, %cst_8 [1] : vector<16x32xf32> to vector<16xf32>
    %15 = vector.shape_cast %14 : vector<16xf32> to vector<16x1xf32>
    %cst_9 = arith.constant 3.200000e+01 : f32
    %16 = vector.broadcast %cst_9 : f32 to vector<16x1xf32>
    %17 = arith.divf %15, %16 : vector<16x1xf32>
    %cst_10 = arith.constant 9.99999974E-6 : f32
    %18 = vector.broadcast %cst_10 : f32 to vector<16x1xf32>
    %19 = arith.addf %17, %18 : vector<16x1xf32>
    %20 = math.rsqrt %19 : vector<16x1xf32>
    %21 = vector.broadcast %20 : vector<16x1xf32> to vector<16x32xf32>
    %22 = arith.mulf %12, %21 : vector<16x32xf32>
    %c0_11 = arith.constant 0 : index
    %c0_12 = arith.constant 0 : index
    %23 = vector.load %arg4[%c0_11, %c0_12] : memref<32x192xf32, #tpu.memory_space<vmem>>, vector<32x192xf32>
    %cst_13 = arith.constant dense<0.000000e+00> : vector<16x192xf32>
    %24 = tpu.matmul %22, %23, %cst_13 {dimension_numbers = #tpu.dot_dimension_numbers<[1], [0], [0], [1], [0, 0, 1, 1], [], []>} : vector<16x32xf32>, vector<32x192xf32>, vector<16x192xf32> -> vector<16x192xf32>
    %c0_14 = arith.constant 0 : index
    %c0_15 = arith.constant 0 : index
    %25 = vector.load %arg5[%c0_14, %c0_15] : memref<1x192xf32, #tpu.memory_space<vmem>>, vector<1x192xf32>
    %26 = vector.broadcast %25 : vector<1x192xf32> to vector<16x192xf32>
    %27 = arith.addf %24, %26 : vector<16x192xf32>
    %c0_16 = arith.constant 0 : index
    %c0_17 = arith.constant 0 : index
    %c0_18 = arith.constant 0 : index
    %c0_19 = arith.constant 0 : index
    %28 = vector.load %arg10[%c0_16, %c0_17, %c0_18, %c0_19] : memref<2x3x7x32xf32, #tpu.memory_space<vmem>>, vector<2x3x7x32xf32>
    %c0_20 = arith.constant 0 : index
    %c0_21 = arith.constant 0 : index
    %c0_22 = arith.constant 0 : index
    %c0_23 = arith.constant 0 : index
    %29 = vector.load %arg11[%c0_20, %c0_21, %c0_22, %c0_23] : memref<2x3x32x32xf32, #tpu.memory_space<vmem>>, vector<1x3x32x32xf32>
    %30 = vector.shape_cast %29 : vector<1x3x32x32xf32> to vector<3x32x32xf32>
    %c1 = arith.constant 1 : index
    %c0_24 = arith.constant 0 : index
    %c0_25 = arith.constant 0 : index
    %c0_26 = arith.constant 0 : index
    %31 = vector.load %arg11[%c1, %c0_24, %c0_25, %c0_26] : memref<2x3x32x32xf32, #tpu.memory_space<vmem>>, vector<1x3x32x32xf32>
    %32 = vector.shape_cast %31 : vector<1x3x32x32xf32> to vector<3x32x32xf32>
    %c0_27 = arith.constant 0 : index
    %c0_28 = arith.constant 0 : index
    %c0_29 = arith.constant 0 : index
    %33 = vector.load %arg12[%c0_27, %c0_28, %c0_29] : memref<2x32x10xf32, #tpu.memory_space<vmem>>, vector<1x32x10xf32>
    %34 = vector.shape_cast %33 : vector<1x32x10xf32> to vector<32x10xf32>
    %c0_30 = arith.constant 0 : index
    %c0_31 = arith.constant 0 : index
    %c0_32 = arith.constant 0 : index
    %35 = vector.load %arg13[%c0_30, %c0_31, %c0_32] : memref<2x1x10xf32, #tpu.memory_space<vmem>>, vector<1x1x10xf32>
    %36 = vector.shape_cast %35 : vector<1x1x10xf32> to vector<1x10xf32>
    %c1_33 = arith.constant 1 : index
    %c0_34 = arith.constant 0 : index
    %c0_35 = arith.constant 0 : index
    %37 = vector.load %arg12[%c1_33, %c0_34, %c0_35] : memref<2x32x10xf32, #tpu.memory_space<vmem>>, vector<1x32x10xf32>
    %38 = vector.shape_cast %37 : vector<1x32x10xf32> to vector<32x10xf32>
    %c1_36 = arith.constant 1 : index
    %c0_37 = arith.constant 0 : index
    %c0_38 = arith.constant 0 : index
    %39 = vector.load %arg13[%c1_36, %c0_37, %c0_38] : memref<2x1x10xf32, #tpu.memory_space<vmem>>, vector<1x1x10xf32>
    %40 = vector.shape_cast %39 : vector<1x1x10xf32> to vector<1x10xf32>
    %41 = vector.extract_strided_slice %30 {offsets = [0, 0, 0], sizes = [1, 32, 32], strides = [1, 1, 1]} : vector<3x32x32xf32> to vector<1x32x32xf32>
    %42 = vector.shape_cast %41 : vector<1x32x32xf32> to vector<32x32xf32>
    %cst_39 = arith.constant dense<0.000000e+00> : vector<16x32xf32>
    %43 = tpu.matmul %6, %42, %cst_39 {dimension_numbers = #tpu.dot_dimension_numbers<[1], [0], [0], [1], [0, 0, 1, 1], [], []>} : vector<16x32xf32>, vector<32x32xf32>, vector<16x32xf32> -> vector<16x32xf32>
    %44 = vector.extract_strided_slice %32 {offsets = [0, 0, 0], sizes = [1, 32, 32], strides = [1, 1, 1]} : vector<3x32x32xf32> to vector<1x32x32xf32>
    %45 = vector.shape_cast %44 : vector<1x32x32xf32> to vector<32x32xf32>
    %cst_40 = arith.constant dense<0.000000e+00> : vector<16x32xf32>
    %46 = tpu.matmul %6, %45, %cst_40 {dimension_numbers = #tpu.dot_dimension_numbers<[1], [0], [0], [1], [0, 0, 1, 1], [], []>} : vector<16x32xf32>, vector<32x32xf32>, vector<16x32xf32> -> vector<16x32xf32>
    %47 = vector.extract_strided_slice %27 {offsets = [0, 0], sizes = [16, 32], strides = [1, 1]} : vector<16x192xf32> to vector<16x32xf32>
    %48 = vector.extract_strided_slice %27 {offsets = [0, 32], sizes = [16, 32], strides = [1, 1]} : vector<16x192xf32> to vector<16x32xf32>
    %c0_41 = arith.constant 0 : index
    %c0_42 = arith.constant 0 : index
    %c0_43 = arith.constant 0 : index
    %c0_44 = arith.constant 0 : index
    %49 = vector.load %arg6[%c0_41, %c0_42, %c0_43, %c0_44] : memref<3x3x32x32xf32, #tpu.memory_space<vmem>>, vector<1x3x32x32xf32>
    %50 = vector.shape_cast %49 : vector<1x3x32x32xf32> to vector<3x32x32xf32>
    %c0_45 = arith.constant 0 : index
    %c0_46 = arith.constant 0 : index
    %c0_47 = arith.constant 0 : index
    %c0_48 = arith.constant 0 : index
    %51 = vector.load %arg7[%c0_45, %c0_46, %c0_47, %c0_48] : memref<3x2x32x96xf32, #tpu.memory_space<vmem>>, vector<1x2x32x96xf32>
    %52 = vector.shape_cast %51 : vector<1x2x32x96xf32> to vector<2x32x96xf32>
    %c0_49 = arith.constant 0 : index
    %c0_50 = arith.constant 0 : index
    %c0_51 = arith.constant 0 : index
    %c0_52 = arith.constant 0 : index
    %53 = vector.load %arg8[%c0_49, %c0_50, %c0_51, %c0_52] : memref<3x3x1x32xf32, #tpu.memory_space<vmem>>, vector<1x3x1x32xf32>
    %54 = vector.shape_cast %53 : vector<1x3x1x32xf32> to vector<3x1x32xf32>
    %c0_53 = arith.constant 0 : index
    %c0_54 = arith.constant 0 : index
    %c0_55 = arith.constant 0 : index
    %c0_56 = arith.constant 0 : index
    %55 = vector.load %arg9[%c0_53, %c0_54, %c0_55, %c0_56] : memref<3x2x1x96xf32, #tpu.memory_space<vmem>>, vector<1x2x1x96xf32>
    %56 = vector.shape_cast %55 : vector<1x2x1x96xf32> to vector<2x1x96xf32>
    %57 = vector.extract_strided_slice %28 {offsets = [0, 0, 0, 0], sizes = [1, 1, 7, 32], strides = [1, 1, 1, 1]} : vector<2x3x7x32xf32> to vector<1x1x7x32xf32>
    %58 = vector.shape_cast %57 : vector<1x1x7x32xf32> to vector<7x32xf32>
    %59 = vector.extract_strided_slice %58 {offsets = [0, 0], sizes = [6, 32], strides = [1, 1]} : vector<7x32xf32> to vector<6x32xf32>
    %cst_57 = arith.constant dense<0.000000e+00> : vector<6xf32>
    %60 = vector.multi_reduction <add>, %59, %cst_57 [1] : vector<6x32xf32> to vector<6xf32>
    %61 = vector.shape_cast %60 : vector<6xf32> to vector<6x1xf32>
    %cst_58 = arith.constant 3.200000e+01 : f32
    %62 = vector.broadcast %cst_58 : f32 to vector<6x1xf32>
    %63 = arith.divf %61, %62 : vector<6x1xf32>
    %64 = vector.broadcast %63 : vector<6x1xf32> to vector<6x32xf32>
    %65 = arith.subf %59, %64 : vector<6x32xf32>
    %66 = arith.mulf %65, %65 : vector<6x32xf32>
    %cst_59 = arith.constant dense<0.000000e+00> : vector<6xf32>
    %67 = vector.multi_reduction <add>, %66, %cst_59 [1] : vector<6x32xf32> to vector<6xf32>
    %68 = vector.shape_cast %67 : vector<6xf32> to vector<6x1xf32>
    %cst_60 = arith.constant 3.200000e+01 : f32
    %69 = vector.broadcast %cst_60 : f32 to vector<6x1xf32>
    %70 = arith.divf %68, %69 : vector<6x1xf32>
    %cst_61 = arith.constant 9.99999974E-6 : f32
    %71 = vector.broadcast %cst_61 : f32 to vector<6x1xf32>
    %72 = arith.addf %70, %71 : vector<6x1xf32>
    %73 = math.rsqrt %72 : vector<6x1xf32>
    %74 = vector.broadcast %73 : vector<6x1xf32> to vector<6x32xf32>
    %75 = arith.mulf %65, %74 : vector<6x32xf32>
    %76 = vector.extract_strided_slice %50 {offsets = [0, 0, 0], sizes = [1, 32, 32], strides = [1, 1, 1]} : vector<3x32x32xf32> to vector<1x32x32xf32>
    %77 = vector.shape_cast %76 : vector<1x32x32xf32> to vector<32x32xf32>
    %cst_62 = arith.constant dense<0.000000e+00> : vector<6x32xf32>
    %78 = tpu.matmul %75, %77, %cst_62 {dimension_numbers = #tpu.dot_dimension_numbers<[1], [0], [0], [1], [0, 0, 1, 1], [], []>} : vector<6x32xf32>, vector<32x32xf32>, vector<6x32xf32> -> vector<6x32xf32>
    %79 = vector.extract_strided_slice %54 {offsets = [0, 0, 0], sizes = [1, 1, 32], strides = [1, 1, 1]} : vector<3x1x32xf32> to vector<1x1x32xf32>
    %80 = vector.shape_cast %79 : vector<1x1x32xf32> to vector<1x32xf32>
    %81 = vector.broadcast %80 : vector<1x32xf32> to vector<6x32xf32>
    %82 = arith.addf %78, %81 : vector<6x32xf32>
    %83 = tpu.transpose %82, [1, 0] : vector<6x32xf32> -> vector<32x6xf32>
    %cst_63 = arith.constant dense<0.000000e+00> : vector<16x6xf32>
    %84 = tpu.matmul %47, %83, %cst_63 {dimension_numbers = #tpu.dot_dimension_numbers<[1], [0], [0], [1], [0, 0, 1, 1], [], []>} : vector<16x32xf32>, vector<32x6xf32>, vector<16x6xf32> -> vector<16x6xf32>
    %cst_64 = arith.constant dense<0xFF800000> : vector<16xf32>
    %85 = vector.multi_reduction <maximumf>, %84, %cst_64 [1] : vector<16x6xf32> to vector<16xf32>
    %86 = vector.shape_cast %85 : vector<16xf32> to vector<16x1xf32>
    %87 = vector.broadcast %86 : vector<16x1xf32> to vector<16x6xf32>
    %88 = arith.subf %84, %87 : vector<16x6xf32>
    %89 = math.exp %88 : vector<16x6xf32>
    %cst_65 = arith.constant dense<0.000000e+00> : vector<16xf32>
    %90 = vector.multi_reduction <add>, %89, %cst_65 [1] : vector<16x6xf32> to vector<16xf32>
    %91 = vector.shape_cast %90 : vector<16xf32> to vector<16x1xf32>
    %92 = tpu.reciprocal %91 {approx = true} : vector<16x1xf32> -> vector<16x1xf32>
    %93 = vector.broadcast %92 : vector<16x1xf32> to vector<16x6xf32>
    %94 = arith.mulf %89, %93 : vector<16x6xf32>
    %cst_66 = arith.constant 9.99999993E-9 : f32
    %95 = vector.broadcast %cst_66 : f32 to vector<16x6xf32>
    %96 = arith.addf %94, %95 : vector<16x6xf32>
    %cst_67 = arith.constant dense<0.000000e+00> : vector<6xf32>
    %97 = vector.multi_reduction <add>, %96, %cst_67 [0] : vector<16x6xf32> to vector<6xf32>
    %98 = vector.shape_cast %97 : vector<6xf32> to vector<1x6xf32>
    %99 = tpu.reciprocal %98 {approx = true} : vector<1x6xf32> -> vector<1x6xf32>
    %100 = vector.broadcast %99 : vector<1x6xf32> to vector<16x6xf32>
    %101 = arith.mulf %96, %100 : vector<16x6xf32>
    %102 = tpu.transpose %101, [1, 0] : vector<16x6xf32> -> vector<6x16xf32>
    %cst_68 = arith.constant dense<0.000000e+00> : vector<6x32xf32>
    %103 = tpu.matmul %102, %48, %cst_68 {dimension_numbers = #tpu.dot_dimension_numbers<[1], [0], [0], [1], [0, 0, 1, 1], [], []>} : vector<6x16xf32>, vector<16x32xf32>, vector<6x32xf32> -> vector<6x32xf32>
    %104 = vector.extract_strided_slice %52 {offsets = [0, 0, 0], sizes = [1, 32, 96], strides = [1, 1, 1]} : vector<2x32x96xf32> to vector<1x32x96xf32>
    %105 = vector.shape_cast %104 : vector<1x32x96xf32> to vector<32x96xf32>
    %cst_69 = arith.constant dense<0.000000e+00> : vector<6x96xf32>
    %106 = tpu.matmul %103, %105, %cst_69 {dimension_numbers = #tpu.dot_dimension_numbers<[1], [0], [0], [1], [0, 0, 1, 1], [], []>} : vector<6x32xf32>, vector<32x96xf32>, vector<6x96xf32> -> vector<6x96xf32>
    %107 = vector.extract_strided_slice %56 {offsets = [0, 0, 0], sizes = [1, 1, 96], strides = [1, 1, 1]} : vector<2x1x96xf32> to vector<1x1x96xf32>
    %108 = vector.shape_cast %107 : vector<1x1x96xf32> to vector<1x96xf32>
    %109 = vector.broadcast %108 : vector<1x96xf32> to vector<6x96xf32>
    %110 = arith.addf %106, %109 : vector<6x96xf32>
    %111 = vector.extract_strided_slice %52 {offsets = [1, 0, 0], sizes = [1, 32, 96], strides = [1, 1, 1]} : vector<2x32x96xf32> to vector<1x32x96xf32>
    %112 = vector.shape_cast %111 : vector<1x32x96xf32> to vector<32x96xf32>
    %cst_70 = arith.constant dense<0.000000e+00> : vector<6x96xf32>
    %113 = tpu.matmul %59, %112, %cst_70 {dimension_numbers = #tpu.dot_dimension_numbers<[1], [0], [0], [1], [0, 0, 1, 1], [], []>} : vector<6x32xf32>, vector<32x96xf32>, vector<6x96xf32> -> vector<6x96xf32>
    %114 = vector.extract_strided_slice %56 {offsets = [1, 0, 0], sizes = [1, 1, 96], strides = [1, 1, 1]} : vector<2x1x96xf32> to vector<1x1x96xf32>
    %115 = vector.shape_cast %114 : vector<1x1x96xf32> to vector<1x96xf32>
    %116 = vector.broadcast %115 : vector<1x96xf32> to vector<6x96xf32>
    %117 = arith.addf %113, %116 : vector<6x96xf32>
    %118 = vector.extract_strided_slice %110 {offsets = [0, 0], sizes = [6, 64], strides = [1, 1]} : vector<6x96xf32> to vector<6x64xf32>
    %119 = vector.extract_strided_slice %117 {offsets = [0, 0], sizes = [6, 64], strides = [1, 1]} : vector<6x96xf32> to vector<6x64xf32>
    %120 = arith.addf %118, %119 : vector<6x64xf32>
    %121 = arith.negf %120 : vector<6x64xf32>
    %122 = math.exp %121 : vector<6x64xf32>
    %cst_71 = arith.constant 1.000000e+00 : f32
    %123 = vector.broadcast %cst_71 : f32 to vector<6x64xf32>
    %124 = arith.addf %123, %122 : vector<6x64xf32>
    %125 = arith.divf %123, %124 : vector<6x64xf32>
    %126 = vector.extract_strided_slice %125 {offsets = [0, 0], sizes = [6, 32], strides = [1, 1]} : vector<6x64xf32> to vector<6x32xf32>
    %127 = vector.extract_strided_slice %125 {offsets = [0, 32], sizes = [6, 32], strides = [1, 1]} : vector<6x64xf32> to vector<6x32xf32>
    %128 = vector.extract_strided_slice %110 {offsets = [0, 64], sizes = [6, 32], strides = [1, 1]} : vector<6x96xf32> to vector<6x32xf32>
    %129 = vector.extract_strided_slice %117 {offsets = [0, 64], sizes = [6, 32], strides = [1, 1]} : vector<6x96xf32> to vector<6x32xf32>
    %130 = arith.mulf %126, %129 : vector<6x32xf32>
    %131 = arith.addf %128, %130 : vector<6x32xf32>
    %132 = math.tanh %131 : vector<6x32xf32>
    %cst_72 = arith.constant 1.000000e+00 : f32
    %133 = vector.broadcast %cst_72 : f32 to vector<6x32xf32>
    %134 = arith.subf %133, %127 : vector<6x32xf32>
    %135 = arith.mulf %134, %132 : vector<6x32xf32>
    %136 = arith.mulf %127, %59 : vector<6x32xf32>
    %137 = arith.addf %135, %136 : vector<6x32xf32>
    %cst_73 = arith.constant dense<0.000000e+00> : vector<6xf32>
    %138 = vector.multi_reduction <add>, %137, %cst_73 [1] : vector<6x32xf32> to vector<6xf32>
    %139 = vector.shape_cast %138 : vector<6xf32> to vector<6x1xf32>
    %cst_74 = arith.constant 3.200000e+01 : f32
    %140 = vector.broadcast %cst_74 : f32 to vector<6x1xf32>
    %141 = arith.divf %139, %140 : vector<6x1xf32>
    %142 = vector.broadcast %141 : vector<6x1xf32> to vector<6x32xf32>
    %143 = arith.subf %137, %142 : vector<6x32xf32>
    %144 = arith.mulf %143, %143 : vector<6x32xf32>
    %cst_75 = arith.constant dense<0.000000e+00> : vector<6xf32>
    %145 = vector.multi_reduction <add>, %144, %cst_75 [1] : vector<6x32xf32> to vector<6xf32>
    %146 = vector.shape_cast %145 : vector<6xf32> to vector<6x1xf32>
    %cst_76 = arith.constant 3.200000e+01 : f32
    %147 = vector.broadcast %cst_76 : f32 to vector<6x1xf32>
    %148 = arith.divf %146, %147 : vector<6x1xf32>
    %cst_77 = arith.constant 9.99999974E-6 : f32
    %149 = vector.broadcast %cst_77 : f32 to vector<6x1xf32>
    %150 = arith.addf %148, %149 : vector<6x1xf32>
    %151 = math.rsqrt %150 : vector<6x1xf32>
    %152 = vector.broadcast %151 : vector<6x1xf32> to vector<6x32xf32>
    %153 = arith.mulf %143, %152 : vector<6x32xf32>
    %154 = vector.extract_strided_slice %50 {offsets = [1, 0, 0], sizes = [1, 32, 32], strides = [1, 1, 1]} : vector<3x32x32xf32> to vector<1x32x32xf32>
    %155 = vector.shape_cast %154 : vector<1x32x32xf32> to vector<32x32xf32>
    %cst_78 = arith.constant dense<0.000000e+00> : vector<6x32xf32>
    %156 = tpu.matmul %153, %155, %cst_78 {dimension_numbers = #tpu.dot_dimension_numbers<[1], [0], [0], [1], [0, 0, 1, 1], [], []>} : vector<6x32xf32>, vector<32x32xf32>, vector<6x32xf32> -> vector<6x32xf32>
    %157 = vector.extract_strided_slice %54 {offsets = [1, 0, 0], sizes = [1, 1, 32], strides = [1, 1, 1]} : vector<3x1x32xf32> to vector<1x1x32xf32>
    %158 = vector.shape_cast %157 : vector<1x1x32xf32> to vector<1x32xf32>
    %159 = vector.broadcast %158 : vector<1x32xf32> to vector<6x32xf32>
    %160 = arith.addf %156, %159 : vector<6x32xf32>
    %cst_79 = arith.constant 0.000000e+00 : f32
    %161 = vector.broadcast %cst_79 : f32 to vector<6x32xf32>
    %162 = arith.maximumf %160, %161 : vector<6x32xf32>
    %163 = vector.extract_strided_slice %50 {offsets = [2, 0, 0], sizes = [1, 32, 32], strides = [1, 1, 1]} : vector<3x32x32xf32> to vector<1x32x32xf32>
    %164 = vector.shape_cast %163 : vector<1x32x32xf32> to vector<32x32xf32>
    %cst_80 = arith.constant dense<0.000000e+00> : vector<6x32xf32>
    %165 = tpu.matmul %162, %164, %cst_80 {dimension_numbers = #tpu.dot_dimension_numbers<[1], [0], [0], [1], [0, 0, 1, 1], [], []>} : vector<6x32xf32>, vector<32x32xf32>, vector<6x32xf32> -> vector<6x32xf32>
    %166 = arith.addf %137, %165 : vector<6x32xf32>
    %167 = vector.extract_strided_slice %54 {offsets = [2, 0, 0], sizes = [1, 1, 32], strides = [1, 1, 1]} : vector<3x1x32xf32> to vector<1x1x32xf32>
    %168 = vector.shape_cast %167 : vector<1x1x32xf32> to vector<1x32xf32>
    %169 = vector.broadcast %168 : vector<1x32xf32> to vector<6x32xf32>
    %170 = arith.addf %166, %169 : vector<6x32xf32>
    %171 = vector.extract_strided_slice %28 {offsets = [1, 0, 0, 0], sizes = [1, 1, 7, 32], strides = [1, 1, 1, 1]} : vector<2x3x7x32xf32> to vector<1x1x7x32xf32>
    %172 = vector.shape_cast %171 : vector<1x1x7x32xf32> to vector<7x32xf32>
    %173 = vector.extract_strided_slice %172 {offsets = [0, 0], sizes = [6, 32], strides = [1, 1]} : vector<7x32xf32> to vector<6x32xf32>
    %174 = arith.addf %170, %173 : vector<6x32xf32>
    %175 = vector.extract_strided_slice %30 {offsets = [1, 0, 0], sizes = [1, 32, 32], strides = [1, 1, 1]} : vector<3x32x32xf32> to vector<1x32x32xf32>
    %176 = vector.shape_cast %175 : vector<1x32x32xf32> to vector<32x32xf32>
    %cst_81 = arith.constant dense<0.000000e+00> : vector<6x32xf32>
    %177 = tpu.matmul %174, %176, %cst_81 {dimension_numbers = #tpu.dot_dimension_numbers<[1], [0], [0], [1], [0, 0, 1, 1], [], []>} : vector<6x32xf32>, vector<32x32xf32>, vector<6x32xf32> -> vector<6x32xf32>
    %178 = vector.extract_strided_slice %30 {offsets = [2, 0, 0], sizes = [1, 32, 32], strides = [1, 1, 1]} : vector<3x32x32xf32> to vector<1x32x32xf32>
    %179 = vector.shape_cast %178 : vector<1x32x32xf32> to vector<32x32xf32>
    %cst_82 = arith.constant dense<0.000000e+00> : vector<6x32xf32>
    %180 = tpu.matmul %174, %179, %cst_82 {dimension_numbers = #tpu.dot_dimension_numbers<[1], [0], [0], [1], [0, 0, 1, 1], [], []>} : vector<6x32xf32>, vector<32x32xf32>, vector<6x32xf32> -> vector<6x32xf32>
    %181 = vector.extract_strided_slice %43 {offsets = [0, 0], sizes = [16, 16], strides = [1, 1]} : vector<16x32xf32> to vector<16x16xf32>
    %182 = vector.extract_strided_slice %177 {offsets = [0, 0], sizes = [6, 16], strides = [1, 1]} : vector<6x32xf32> to vector<6x16xf32>
    %183 = tpu.transpose %182, [1, 0] : vector<6x16xf32> -> vector<16x6xf32>
    %cst_83 = arith.constant dense<0.000000e+00> : vector<16x6xf32>
    %184 = tpu.matmul %181, %183, %cst_83 {dimension_numbers = #tpu.dot_dimension_numbers<[1], [0], [0], [1], [0, 0, 1, 1], [], []>} : vector<16x16xf32>, vector<16x6xf32>, vector<16x6xf32> -> vector<16x6xf32>
    %cst_84 = arith.constant dense<0xFF800000> : vector<16xf32>
    %185 = vector.multi_reduction <maximumf>, %184, %cst_84 [1] : vector<16x6xf32> to vector<16xf32>
    %186 = vector.shape_cast %185 : vector<16xf32> to vector<16x1xf32>
    %187 = vector.broadcast %186 : vector<16x1xf32> to vector<16x6xf32>
    %188 = arith.subf %184, %187 : vector<16x6xf32>
    %189 = math.exp %188 : vector<16x6xf32>
    %cst_85 = arith.constant dense<0.000000e+00> : vector<16xf32>
    %190 = vector.multi_reduction <add>, %189, %cst_85 [1] : vector<16x6xf32> to vector<16xf32>
    %191 = vector.shape_cast %190 : vector<16xf32> to vector<16x1xf32>
    %192 = tpu.reciprocal %191 {approx = true} : vector<16x1xf32> -> vector<16x1xf32>
    %193 = vector.broadcast %192 : vector<16x1xf32> to vector<16x6xf32>
    %194 = arith.mulf %189, %193 : vector<16x6xf32>
    %195 = vector.extract_strided_slice %180 {offsets = [0, 0], sizes = [6, 16], strides = [1, 1]} : vector<6x32xf32> to vector<6x16xf32>
    %cst_86 = arith.constant dense<0.000000e+00> : vector<16x16xf32>
    %196 = tpu.matmul %194, %195, %cst_86 {dimension_numbers = #tpu.dot_dimension_numbers<[1], [0], [0], [1], [0, 0, 1, 1], [], []>} : vector<16x6xf32>, vector<6x16xf32>, vector<16x16xf32> -> vector<16x16xf32>
    %197 = vector.extract_strided_slice %43 {offsets = [0, 16], sizes = [16, 16], strides = [1, 1]} : vector<16x32xf32> to vector<16x16xf32>
    %198 = vector.extract_strided_slice %177 {offsets = [0, 16], sizes = [6, 16], strides = [1, 1]} : vector<6x32xf32> to vector<6x16xf32>
    %199 = tpu.transpose %198, [1, 0] : vector<6x16xf32> -> vector<16x6xf32>
    %cst_87 = arith.constant dense<0.000000e+00> : vector<16x6xf32>
    %200 = tpu.matmul %197, %199, %cst_87 {dimension_numbers = #tpu.dot_dimension_numbers<[1], [0], [0], [1], [0, 0, 1, 1], [], []>} : vector<16x16xf32>, vector<16x6xf32>, vector<16x6xf32> -> vector<16x6xf32>
    %cst_88 = arith.constant dense<0xFF800000> : vector<16xf32>
    %201 = vector.multi_reduction <maximumf>, %200, %cst_88 [1] : vector<16x6xf32> to vector<16xf32>
    %202 = vector.shape_cast %201 : vector<16xf32> to vector<16x1xf32>
    %203 = vector.broadcast %202 : vector<16x1xf32> to vector<16x6xf32>
    %204 = arith.subf %200, %203 : vector<16x6xf32>
    %205 = math.exp %204 : vector<16x6xf32>
    %cst_89 = arith.constant dense<0.000000e+00> : vector<16xf32>
    %206 = vector.multi_reduction <add>, %205, %cst_89 [1] : vector<16x6xf32> to vector<16xf32>
    %207 = vector.shape_cast %206 : vector<16xf32> to vector<16x1xf32>
    %208 = tpu.reciprocal %207 {approx = true} : vector<16x1xf32> -> vector<16x1xf32>
    %209 = vector.broadcast %208 : vector<16x1xf32> to vector<16x6xf32>
    %210 = arith.mulf %205, %209 : vector<16x6xf32>
    %211 = arith.addf %194, %210 : vector<16x6xf32>
    %212 = vector.extract_strided_slice %180 {offsets = [0, 16], sizes = [6, 16], strides = [1, 1]} : vector<6x32xf32> to vector<6x16xf32>
    %cst_90 = arith.constant dense<0.000000e+00> : vector<16x16xf32>
    %213 = tpu.matmul %210, %212, %cst_90 {dimension_numbers = #tpu.dot_dimension_numbers<[1], [0], [0], [1], [0, 0, 1, 1], [], []>} : vector<16x6xf32>, vector<6x16xf32>, vector<16x16xf32> -> vector<16x16xf32>
    %214 = tpu.concatenate %196, %213 in 1 : vector<16x16xf32>, vector<16x16xf32> -> vector<16x32xf32>
    %cst_91 = arith.constant dense<0.000000e+00> : vector<16x10xf32>
    %215 = tpu.matmul %214, %34, %cst_91 {dimension_numbers = #tpu.dot_dimension_numbers<[1], [0], [0], [1], [0, 0, 1, 1], [], []>} : vector<16x32xf32>, vector<32x10xf32>, vector<16x10xf32> -> vector<16x10xf32>
    %216 = vector.broadcast %36 : vector<1x10xf32> to vector<16x10xf32>
    %217 = arith.addf %215, %216 : vector<16x10xf32>
    %cst_92 = arith.constant 5.000000e-01 : f32
    %218 = vector.broadcast %cst_92 : f32 to vector<16x6xf32>
    %219 = arith.mulf %211, %218 : vector<16x6xf32>
    %cst_93 = arith.constant dense<0.000000e+00> : vector<10xf32>
    %220 = vector.multi_reduction <add>, %217, %cst_93 [0] : vector<16x10xf32> to vector<10xf32>
    %221 = vector.shape_cast %220 : vector<10xf32> to vector<1x10xf32>
    %cst_94 = arith.constant 1.600000e+01 : f32
    %222 = vector.broadcast %cst_94 : f32 to vector<1x10xf32>
    %223 = arith.divf %221, %222 : vector<1x10xf32>
    %224 = vector.extract_strided_slice %27 {offsets = [0, 64], sizes = [16, 32], strides = [1, 1]} : vector<16x192xf32> to vector<16x32xf32>
    %225 = vector.extract_strided_slice %27 {offsets = [0, 96], sizes = [16, 32], strides = [1, 1]} : vector<16x192xf32> to vector<16x32xf32>
    %c1_95 = arith.constant 1 : index
    %c0_96 = arith.constant 0 : index
    %c0_97 = arith.constant 0 : index
    %c0_98 = arith.constant 0 : index
    %226 = vector.load %arg6[%c1_95, %c0_96, %c0_97, %c0_98] : memref<3x3x32x32xf32, #tpu.memory_space<vmem>>, vector<1x3x32x32xf32>
    %227 = vector.shape_cast %226 : vector<1x3x32x32xf32> to vector<3x32x32xf32>
    %c1_99 = arith.constant 1 : index
    %c0_100 = arith.constant 0 : index
    %c0_101 = arith.constant 0 : index
    %c0_102 = arith.constant 0 : index
    %228 = vector.load %arg7[%c1_99, %c0_100, %c0_101, %c0_102] : memref<3x2x32x96xf32, #tpu.memory_space<vmem>>, vector<1x2x32x96xf32>
    %229 = vector.shape_cast %228 : vector<1x2x32x96xf32> to vector<2x32x96xf32>
    %c1_103 = arith.constant 1 : index
    %c0_104 = arith.constant 0 : index
    %c0_105 = arith.constant 0 : index
    %c0_106 = arith.constant 0 : index
    %230 = vector.load %arg8[%c1_103, %c0_104, %c0_105, %c0_106] : memref<3x3x1x32xf32, #tpu.memory_space<vmem>>, vector<1x3x1x32xf32>
    %231 = vector.shape_cast %230 : vector<1x3x1x32xf32> to vector<3x1x32xf32>
    %c1_107 = arith.constant 1 : index
    %c0_108 = arith.constant 0 : index
    %c0_109 = arith.constant 0 : index
    %c0_110 = arith.constant 0 : index
    %232 = vector.load %arg9[%c1_107, %c0_108, %c0_109, %c0_110] : memref<3x2x1x96xf32, #tpu.memory_space<vmem>>, vector<1x2x1x96xf32>
    %233 = vector.shape_cast %232 : vector<1x2x1x96xf32> to vector<2x1x96xf32>
    %234 = vector.extract_strided_slice %28 {offsets = [0, 1, 0, 0], sizes = [1, 1, 7, 32], strides = [1, 1, 1, 1]} : vector<2x3x7x32xf32> to vector<1x1x7x32xf32>
    %235 = vector.shape_cast %234 : vector<1x1x7x32xf32> to vector<7x32xf32>
    %236 = vector.extract_strided_slice %235 {offsets = [0, 0], sizes = [5, 32], strides = [1, 1]} : vector<7x32xf32> to vector<5x32xf32>
    %cst_111 = arith.constant dense<0.000000e+00> : vector<5xf32>
    %237 = vector.multi_reduction <add>, %236, %cst_111 [1] : vector<5x32xf32> to vector<5xf32>
    %238 = vector.shape_cast %237 : vector<5xf32> to vector<5x1xf32>
    %cst_112 = arith.constant 3.200000e+01 : f32
    %239 = vector.broadcast %cst_112 : f32 to vector<5x1xf32>
    %240 = arith.divf %238, %239 : vector<5x1xf32>
    %241 = vector.broadcast %240 : vector<5x1xf32> to vector<5x32xf32>
    %242 = arith.subf %236, %241 : vector<5x32xf32>
    %243 = arith.mulf %242, %242 : vector<5x32xf32>
    %cst_113 = arith.constant dense<0.000000e+00> : vector<5xf32>
    %244 = vector.multi_reduction <add>, %243, %cst_113 [1] : vector<5x32xf32> to vector<5xf32>
    %245 = vector.shape_cast %244 : vector<5xf32> to vector<5x1xf32>
    %cst_114 = arith.constant 3.200000e+01 : f32
    %246 = vector.broadcast %cst_114 : f32 to vector<5x1xf32>
    %247 = arith.divf %245, %246 : vector<5x1xf32>
    %cst_115 = arith.constant 9.99999974E-6 : f32
    %248 = vector.broadcast %cst_115 : f32 to vector<5x1xf32>
    %249 = arith.addf %247, %248 : vector<5x1xf32>
    %250 = math.rsqrt %249 : vector<5x1xf32>
    %251 = vector.broadcast %250 : vector<5x1xf32> to vector<5x32xf32>
    %252 = arith.mulf %242, %251 : vector<5x32xf32>
    %253 = vector.extract_strided_slice %227 {offsets = [0, 0, 0], sizes = [1, 32, 32], strides = [1, 1, 1]} : vector<3x32x32xf32> to vector<1x32x32xf32>
    %254 = vector.shape_cast %253 : vector<1x32x32xf32> to vector<32x32xf32>
    %cst_116 = arith.constant dense<0.000000e+00> : vector<5x32xf32>
    %255 = tpu.matmul %252, %254, %cst_116 {dimension_numbers = #tpu.dot_dimension_numbers<[1], [0], [0], [1], [0, 0, 1, 1], [], []>} : vector<5x32xf32>, vector<32x32xf32>, vector<5x32xf32> -> vector<5x32xf32>
    %256 = vector.extract_strided_slice %231 {offsets = [0, 0, 0], sizes = [1, 1, 32], strides = [1, 1, 1]} : vector<3x1x32xf32> to vector<1x1x32xf32>
    %257 = vector.shape_cast %256 : vector<1x1x32xf32> to vector<1x32xf32>
    %258 = vector.broadcast %257 : vector<1x32xf32> to vector<5x32xf32>
    %259 = arith.addf %255, %258 : vector<5x32xf32>
    %260 = tpu.transpose %259, [1, 0] : vector<5x32xf32> -> vector<32x5xf32>
    %cst_117 = arith.constant dense<0.000000e+00> : vector<16x5xf32>
    %261 = tpu.matmul %224, %260, %cst_117 {dimension_numbers = #tpu.dot_dimension_numbers<[1], [0], [0], [1], [0, 0, 1, 1], [], []>} : vector<16x32xf32>, vector<32x5xf32>, vector<16x5xf32> -> vector<16x5xf32>
    %cst_118 = arith.constant dense<0xFF800000> : vector<16xf32>
    %262 = vector.multi_reduction <maximumf>, %261, %cst_118 [1] : vector<16x5xf32> to vector<16xf32>
    %263 = vector.shape_cast %262 : vector<16xf32> to vector<16x1xf32>
    %264 = vector.broadcast %263 : vector<16x1xf32> to vector<16x5xf32>
    %265 = arith.subf %261, %264 : vector<16x5xf32>
    %266 = math.exp %265 : vector<16x5xf32>
    %cst_119 = arith.constant dense<0.000000e+00> : vector<16xf32>
    %267 = vector.multi_reduction <add>, %266, %cst_119 [1] : vector<16x5xf32> to vector<16xf32>
    %268 = vector.shape_cast %267 : vector<16xf32> to vector<16x1xf32>
    %269 = tpu.reciprocal %268 {approx = true} : vector<16x1xf32> -> vector<16x1xf32>
    %270 = vector.broadcast %269 : vector<16x1xf32> to vector<16x5xf32>
    %271 = arith.mulf %266, %270 : vector<16x5xf32>
    %cst_120 = arith.constant 9.99999993E-9 : f32
    %272 = vector.broadcast %cst_120 : f32 to vector<16x5xf32>
    %273 = arith.addf %271, %272 : vector<16x5xf32>
    %cst_121 = arith.constant dense<0.000000e+00> : vector<5xf32>
    %274 = vector.multi_reduction <add>, %273, %cst_121 [0] : vector<16x5xf32> to vector<5xf32>
    %275 = vector.shape_cast %274 : vector<5xf32> to vector<1x5xf32>
    %276 = tpu.reciprocal %275 {approx = true} : vector<1x5xf32> -> vector<1x5xf32>
    %277 = vector.broadcast %276 : vector<1x5xf32> to vector<16x5xf32>
    %278 = arith.mulf %273, %277 : vector<16x5xf32>
    %279 = tpu.transpose %278, [1, 0] : vector<16x5xf32> -> vector<5x16xf32>
    %cst_122 = arith.constant dense<0.000000e+00> : vector<5x32xf32>
    %280 = tpu.matmul %279, %225, %cst_122 {dimension_numbers = #tpu.dot_dimension_numbers<[1], [0], [0], [1], [0, 0, 1, 1], [], []>} : vector<5x16xf32>, vector<16x32xf32>, vector<5x32xf32> -> vector<5x32xf32>
    %281 = vector.extract_strided_slice %229 {offsets = [0, 0, 0], sizes = [1, 32, 96], strides = [1, 1, 1]} : vector<2x32x96xf32> to vector<1x32x96xf32>
    %282 = vector.shape_cast %281 : vector<1x32x96xf32> to vector<32x96xf32>
    %cst_123 = arith.constant dense<0.000000e+00> : vector<5x96xf32>
    %283 = tpu.matmul %280, %282, %cst_123 {dimension_numbers = #tpu.dot_dimension_numbers<[1], [0], [0], [1], [0, 0, 1, 1], [], []>} : vector<5x32xf32>, vector<32x96xf32>, vector<5x96xf32> -> vector<5x96xf32>
    %284 = vector.extract_strided_slice %233 {offsets = [0, 0, 0], sizes = [1, 1, 96], strides = [1, 1, 1]} : vector<2x1x96xf32> to vector<1x1x96xf32>
    %285 = vector.shape_cast %284 : vector<1x1x96xf32> to vector<1x96xf32>
    %286 = vector.broadcast %285 : vector<1x96xf32> to vector<5x96xf32>
    %287 = arith.addf %283, %286 : vector<5x96xf32>
    %288 = vector.extract_strided_slice %229 {offsets = [1, 0, 0], sizes = [1, 32, 96], strides = [1, 1, 1]} : vector<2x32x96xf32> to vector<1x32x96xf32>
    %289 = vector.shape_cast %288 : vector<1x32x96xf32> to vector<32x96xf32>
    %cst_124 = arith.constant dense<0.000000e+00> : vector<5x96xf32>
    %290 = tpu.matmul %236, %289, %cst_124 {dimension_numbers = #tpu.dot_dimension_numbers<[1], [0], [0], [1], [0, 0, 1, 1], [], []>} : vector<5x32xf32>, vector<32x96xf32>, vector<5x96xf32> -> vector<5x96xf32>
    %291 = vector.extract_strided_slice %233 {offsets = [1, 0, 0], sizes = [1, 1, 96], strides = [1, 1, 1]} : vector<2x1x96xf32> to vector<1x1x96xf32>
    %292 = vector.shape_cast %291 : vector<1x1x96xf32> to vector<1x96xf32>
    %293 = vector.broadcast %292 : vector<1x96xf32> to vector<5x96xf32>
    %294 = arith.addf %290, %293 : vector<5x96xf32>
    %295 = vector.extract_strided_slice %287 {offsets = [0, 0], sizes = [5, 64], strides = [1, 1]} : vector<5x96xf32> to vector<5x64xf32>
    %296 = vector.extract_strided_slice %294 {offsets = [0, 0], sizes = [5, 64], strides = [1, 1]} : vector<5x96xf32> to vector<5x64xf32>
    %297 = arith.addf %295, %296 : vector<5x64xf32>
    %298 = arith.negf %297 : vector<5x64xf32>
    %299 = math.exp %298 : vector<5x64xf32>
    %cst_125 = arith.constant 1.000000e+00 : f32
    %300 = vector.broadcast %cst_125 : f32 to vector<5x64xf32>
    %301 = arith.addf %300, %299 : vector<5x64xf32>
    %302 = arith.divf %300, %301 : vector<5x64xf32>
    %303 = vector.extract_strided_slice %302 {offsets = [0, 0], sizes = [5, 32], strides = [1, 1]} : vector<5x64xf32> to vector<5x32xf32>
    %304 = vector.extract_strided_slice %302 {offsets = [0, 32], sizes = [5, 32], strides = [1, 1]} : vector<5x64xf32> to vector<5x32xf32>
    %305 = vector.extract_strided_slice %287 {offsets = [0, 64], sizes = [5, 32], strides = [1, 1]} : vector<5x96xf32> to vector<5x32xf32>
    %306 = vector.extract_strided_slice %294 {offsets = [0, 64], sizes = [5, 32], strides = [1, 1]} : vector<5x96xf32> to vector<5x32xf32>
    %307 = arith.mulf %303, %306 : vector<5x32xf32>
    %308 = arith.addf %305, %307 : vector<5x32xf32>
    %309 = math.tanh %308 : vector<5x32xf32>
    %cst_126 = arith.constant 1.000000e+00 : f32
    %310 = vector.broadcast %cst_126 : f32 to vector<5x32xf32>
    %311 = arith.subf %310, %304 : vector<5x32xf32>
    %312 = arith.mulf %311, %309 : vector<5x32xf32>
    %313 = arith.mulf %304, %236 : vector<5x32xf32>
    %314 = arith.addf %312, %313 : vector<5x32xf32>
    %cst_127 = arith.constant dense<0.000000e+00> : vector<5xf32>
    %315 = vector.multi_reduction <add>, %314, %cst_127 [1] : vector<5x32xf32> to vector<5xf32>
    %316 = vector.shape_cast %315 : vector<5xf32> to vector<5x1xf32>
    %cst_128 = arith.constant 3.200000e+01 : f32
    %317 = vector.broadcast %cst_128 : f32 to vector<5x1xf32>
    %318 = arith.divf %316, %317 : vector<5x1xf32>
    %319 = vector.broadcast %318 : vector<5x1xf32> to vector<5x32xf32>
    %320 = arith.subf %314, %319 : vector<5x32xf32>
    %321 = arith.mulf %320, %320 : vector<5x32xf32>
    %cst_129 = arith.constant dense<0.000000e+00> : vector<5xf32>
    %322 = vector.multi_reduction <add>, %321, %cst_129 [1] : vector<5x32xf32> to vector<5xf32>
    %323 = vector.shape_cast %322 : vector<5xf32> to vector<5x1xf32>
    %cst_130 = arith.constant 3.200000e+01 : f32
    %324 = vector.broadcast %cst_130 : f32 to vector<5x1xf32>
    %325 = arith.divf %323, %324 : vector<5x1xf32>
    %cst_131 = arith.constant 9.99999974E-6 : f32
    %326 = vector.broadcast %cst_131 : f32 to vector<5x1xf32>
    %327 = arith.addf %325, %326 : vector<5x1xf32>
    %328 = math.rsqrt %327 : vector<5x1xf32>
    %329 = vector.broadcast %328 : vector<5x1xf32> to vector<5x32xf32>
    %330 = arith.mulf %320, %329 : vector<5x32xf32>
    %331 = vector.extract_strided_slice %227 {offsets = [1, 0, 0], sizes = [1, 32, 32], strides = [1, 1, 1]} : vector<3x32x32xf32> to vector<1x32x32xf32>
    %332 = vector.shape_cast %331 : vector<1x32x32xf32> to vector<32x32xf32>
    %cst_132 = arith.constant dense<0.000000e+00> : vector<5x32xf32>
    %333 = tpu.matmul %330, %332, %cst_132 {dimension_numbers = #tpu.dot_dimension_numbers<[1], [0], [0], [1], [0, 0, 1, 1], [], []>} : vector<5x32xf32>, vector<32x32xf32>, vector<5x32xf32> -> vector<5x32xf32>
    %334 = vector.extract_strided_slice %231 {offsets = [1, 0, 0], sizes = [1, 1, 32], strides = [1, 1, 1]} : vector<3x1x32xf32> to vector<1x1x32xf32>
    %335 = vector.shape_cast %334 : vector<1x1x32xf32> to vector<1x32xf32>
    %336 = vector.broadcast %335 : vector<1x32xf32> to vector<5x32xf32>
    %337 = arith.addf %333, %336 : vector<5x32xf32>
    %cst_133 = arith.constant 0.000000e+00 : f32
    %338 = vector.broadcast %cst_133 : f32 to vector<5x32xf32>
    %339 = arith.maximumf %337, %338 : vector<5x32xf32>
    %340 = vector.extract_strided_slice %227 {offsets = [2, 0, 0], sizes = [1, 32, 32], strides = [1, 1, 1]} : vector<3x32x32xf32> to vector<1x32x32xf32>
    %341 = vector.shape_cast %340 : vector<1x32x32xf32> to vector<32x32xf32>
    %cst_134 = arith.constant dense<0.000000e+00> : vector<5x32xf32>
    %342 = tpu.matmul %339, %341, %cst_134 {dimension_numbers = #tpu.dot_dimension_numbers<[1], [0], [0], [1], [0, 0, 1, 1], [], []>} : vector<5x32xf32>, vector<32x32xf32>, vector<5x32xf32> -> vector<5x32xf32>
    %343 = arith.addf %314, %342 : vector<5x32xf32>
    %344 = vector.extract_strided_slice %231 {offsets = [2, 0, 0], sizes = [1, 1, 32], strides = [1, 1, 1]} : vector<3x1x32xf32> to vector<1x1x32xf32>
    %345 = vector.shape_cast %344 : vector<1x1x32xf32> to vector<1x32xf32>
    %346 = vector.broadcast %345 : vector<1x32xf32> to vector<5x32xf32>
    %347 = arith.addf %343, %346 : vector<5x32xf32>
    %348 = vector.extract_strided_slice %28 {offsets = [1, 1, 0, 0], sizes = [1, 1, 7, 32], strides = [1, 1, 1, 1]} : vector<2x3x7x32xf32> to vector<1x1x7x32xf32>
    %349 = vector.shape_cast %348 : vector<1x1x7x32xf32> to vector<7x32xf32>
    %350 = vector.extract_strided_slice %349 {offsets = [0, 0], sizes = [5, 32], strides = [1, 1]} : vector<7x32xf32> to vector<5x32xf32>
    %351 = arith.addf %347, %350 : vector<5x32xf32>
    %352 = vector.extract_strided_slice %30 {offsets = [1, 0, 0], sizes = [1, 32, 32], strides = [1, 1, 1]} : vector<3x32x32xf32> to vector<1x32x32xf32>
    %353 = vector.shape_cast %352 : vector<1x32x32xf32> to vector<32x32xf32>
    %cst_135 = arith.constant dense<0.000000e+00> : vector<5x32xf32>
    %354 = tpu.matmul %351, %353, %cst_135 {dimension_numbers = #tpu.dot_dimension_numbers<[1], [0], [0], [1], [0, 0, 1, 1], [], []>} : vector<5x32xf32>, vector<32x32xf32>, vector<5x32xf32> -> vector<5x32xf32>
    %355 = vector.extract_strided_slice %30 {offsets = [2, 0, 0], sizes = [1, 32, 32], strides = [1, 1, 1]} : vector<3x32x32xf32> to vector<1x32x32xf32>
    %356 = vector.shape_cast %355 : vector<1x32x32xf32> to vector<32x32xf32>
    %cst_136 = arith.constant dense<0.000000e+00> : vector<5x32xf32>
    %357 = tpu.matmul %351, %356, %cst_136 {dimension_numbers = #tpu.dot_dimension_numbers<[1], [0], [0], [1], [0, 0, 1, 1], [], []>} : vector<5x32xf32>, vector<32x32xf32>, vector<5x32xf32> -> vector<5x32xf32>
    %358 = vector.extract_strided_slice %43 {offsets = [0, 0], sizes = [16, 16], strides = [1, 1]} : vector<16x32xf32> to vector<16x16xf32>
    %359 = vector.extract_strided_slice %354 {offsets = [0, 0], sizes = [5, 16], strides = [1, 1]} : vector<5x32xf32> to vector<5x16xf32>
    %360 = tpu.transpose %359, [1, 0] : vector<5x16xf32> -> vector<16x5xf32>
    %cst_137 = arith.constant dense<0.000000e+00> : vector<16x5xf32>
    %361 = tpu.matmul %358, %360, %cst_137 {dimension_numbers = #tpu.dot_dimension_numbers<[1], [0], [0], [1], [0, 0, 1, 1], [], []>} : vector<16x16xf32>, vector<16x5xf32>, vector<16x5xf32> -> vector<16x5xf32>
    %cst_138 = arith.constant dense<0xFF800000> : vector<16xf32>
    %362 = vector.multi_reduction <maximumf>, %361, %cst_138 [1] : vector<16x5xf32> to vector<16xf32>
    %363 = vector.shape_cast %362 : vector<16xf32> to vector<16x1xf32>
    %364 = vector.broadcast %363 : vector<16x1xf32> to vector<16x5xf32>
    %365 = arith.subf %361, %364 : vector<16x5xf32>
    %366 = math.exp %365 : vector<16x5xf32>
    %cst_139 = arith.constant dense<0.000000e+00> : vector<16xf32>
    %367 = vector.multi_reduction <add>, %366, %cst_139 [1] : vector<16x5xf32> to vector<16xf32>
    %368 = vector.shape_cast %367 : vector<16xf32> to vector<16x1xf32>
    %369 = tpu.reciprocal %368 {approx = true} : vector<16x1xf32> -> vector<16x1xf32>
    %370 = vector.broadcast %369 : vector<16x1xf32> to vector<16x5xf32>
    %371 = arith.mulf %366, %370 : vector<16x5xf32>
    %372 = vector.extract_strided_slice %357 {offsets = [0, 0], sizes = [5, 16], strides = [1, 1]} : vector<5x32xf32> to vector<5x16xf32>
    %cst_140 = arith.constant dense<0.000000e+00> : vector<16x16xf32>
    %373 = tpu.matmul %371, %372, %cst_140 {dimension_numbers = #tpu.dot_dimension_numbers<[1], [0], [0], [1], [0, 0, 1, 1], [], []>} : vector<16x5xf32>, vector<5x16xf32>, vector<16x16xf32> -> vector<16x16xf32>
    %374 = vector.extract_strided_slice %43 {offsets = [0, 16], sizes = [16, 16], strides = [1, 1]} : vector<16x32xf32> to vector<16x16xf32>
    %375 = vector.extract_strided_slice %354 {offsets = [0, 16], sizes = [5, 16], strides = [1, 1]} : vector<5x32xf32> to vector<5x16xf32>
    %376 = tpu.transpose %375, [1, 0] : vector<5x16xf32> -> vector<16x5xf32>
    %cst_141 = arith.constant dense<0.000000e+00> : vector<16x5xf32>
    %377 = tpu.matmul %374, %376, %cst_141 {dimension_numbers = #tpu.dot_dimension_numbers<[1], [0], [0], [1], [0, 0, 1, 1], [], []>} : vector<16x16xf32>, vector<16x5xf32>, vector<16x5xf32> -> vector<16x5xf32>
    %cst_142 = arith.constant dense<0xFF800000> : vector<16xf32>
    %378 = vector.multi_reduction <maximumf>, %377, %cst_142 [1] : vector<16x5xf32> to vector<16xf32>
    %379 = vector.shape_cast %378 : vector<16xf32> to vector<16x1xf32>
    %380 = vector.broadcast %379 : vector<16x1xf32> to vector<16x5xf32>
    %381 = arith.subf %377, %380 : vector<16x5xf32>
    %382 = math.exp %381 : vector<16x5xf32>
    %cst_143 = arith.constant dense<0.000000e+00> : vector<16xf32>
    %383 = vector.multi_reduction <add>, %382, %cst_143 [1] : vector<16x5xf32> to vector<16xf32>
    %384 = vector.shape_cast %383 : vector<16xf32> to vector<16x1xf32>
    %385 = tpu.reciprocal %384 {approx = true} : vector<16x1xf32> -> vector<16x1xf32>
    %386 = vector.broadcast %385 : vector<16x1xf32> to vector<16x5xf32>
    %387 = arith.mulf %382, %386 : vector<16x5xf32>
    %388 = arith.addf %371, %387 : vector<16x5xf32>
    %389 = vector.extract_strided_slice %357 {offsets = [0, 16], sizes = [5, 16], strides = [1, 1]} : vector<5x32xf32> to vector<5x16xf32>
    %cst_144 = arith.constant dense<0.000000e+00> : vector<16x16xf32>
    %390 = tpu.matmul %387, %389, %cst_144 {dimension_numbers = #tpu.dot_dimension_numbers<[1], [0], [0], [1], [0, 0, 1, 1], [], []>} : vector<16x5xf32>, vector<5x16xf32>, vector<16x16xf32> -> vector<16x16xf32>
    %391 = tpu.concatenate %373, %390 in 1 : vector<16x16xf32>, vector<16x16xf32> -> vector<16x32xf32>
    %cst_145 = arith.constant dense<0.000000e+00> : vector<16x10xf32>
    %392 = tpu.matmul %391, %34, %cst_145 {dimension_numbers = #tpu.dot_dimension_numbers<[1], [0], [0], [1], [0, 0, 1, 1], [], []>} : vector<16x32xf32>, vector<32x10xf32>, vector<16x10xf32> -> vector<16x10xf32>
    %393 = vector.broadcast %36 : vector<1x10xf32> to vector<16x10xf32>
    %394 = arith.addf %392, %393 : vector<16x10xf32>
    %cst_146 = arith.constant 5.000000e-01 : f32
    %395 = vector.broadcast %cst_146 : f32 to vector<16x5xf32>
    %396 = arith.mulf %388, %395 : vector<16x5xf32>
    %cst_147 = arith.constant dense<0.000000e+00> : vector<10xf32>
    %397 = vector.multi_reduction <add>, %394, %cst_147 [0] : vector<16x10xf32> to vector<10xf32>
    %398 = vector.shape_cast %397 : vector<10xf32> to vector<1x10xf32>
    %cst_148 = arith.constant 1.600000e+01 : f32
    %399 = vector.broadcast %cst_148 : f32 to vector<1x10xf32>
    %400 = arith.divf %398, %399 : vector<1x10xf32>
    %cst_149 = arith.constant dense<0.000000e+00> : vector<5xf32>
    %401 = vector.multi_reduction <add>, %396, %cst_149 [0] : vector<16x5xf32> to vector<5xf32>
    %402 = vector.shape_cast %401 : vector<5xf32> to vector<1x5xf32>
    %cst_150 = arith.constant 1.600000e+01 : f32
    %403 = vector.broadcast %cst_150 : f32 to vector<1x5xf32>
    %404 = arith.divf %402, %403 : vector<1x5xf32>
    %405 = vector.extract_strided_slice %27 {offsets = [0, 128], sizes = [16, 32], strides = [1, 1]} : vector<16x192xf32> to vector<16x32xf32>
    %406 = vector.extract_strided_slice %27 {offsets = [0, 160], sizes = [16, 32], strides = [1, 1]} : vector<16x192xf32> to vector<16x32xf32>
    %c2 = arith.constant 2 : index
    %c0_151 = arith.constant 0 : index
    %c0_152 = arith.constant 0 : index
    %c0_153 = arith.constant 0 : index
    %407 = vector.load %arg6[%c2, %c0_151, %c0_152, %c0_153] : memref<3x3x32x32xf32, #tpu.memory_space<vmem>>, vector<1x3x32x32xf32>
    %408 = vector.shape_cast %407 : vector<1x3x32x32xf32> to vector<3x32x32xf32>
    %c2_154 = arith.constant 2 : index
    %c0_155 = arith.constant 0 : index
    %c0_156 = arith.constant 0 : index
    %c0_157 = arith.constant 0 : index
    %409 = vector.load %arg7[%c2_154, %c0_155, %c0_156, %c0_157] : memref<3x2x32x96xf32, #tpu.memory_space<vmem>>, vector<1x2x32x96xf32>
    %410 = vector.shape_cast %409 : vector<1x2x32x96xf32> to vector<2x32x96xf32>
    %c2_158 = arith.constant 2 : index
    %c0_159 = arith.constant 0 : index
    %c0_160 = arith.constant 0 : index
    %c0_161 = arith.constant 0 : index
    %411 = vector.load %arg8[%c2_158, %c0_159, %c0_160, %c0_161] : memref<3x3x1x32xf32, #tpu.memory_space<vmem>>, vector<1x3x1x32xf32>
    %412 = vector.shape_cast %411 : vector<1x3x1x32xf32> to vector<3x1x32xf32>
    %c2_162 = arith.constant 2 : index
    %c0_163 = arith.constant 0 : index
    %c0_164 = arith.constant 0 : index
    %c0_165 = arith.constant 0 : index
    %413 = vector.load %arg9[%c2_162, %c0_163, %c0_164, %c0_165] : memref<3x2x1x96xf32, #tpu.memory_space<vmem>>, vector<1x2x1x96xf32>
    %414 = vector.shape_cast %413 : vector<1x2x1x96xf32> to vector<2x1x96xf32>
    %415 = vector.extract_strided_slice %28 {offsets = [0, 2, 0, 0], sizes = [1, 1, 7, 32], strides = [1, 1, 1, 1]} : vector<2x3x7x32xf32> to vector<1x1x7x32xf32>
    %416 = vector.shape_cast %415 : vector<1x1x7x32xf32> to vector<7x32xf32>
    %cst_166 = arith.constant dense<0.000000e+00> : vector<7xf32>
    %417 = vector.multi_reduction <add>, %416, %cst_166 [1] : vector<7x32xf32> to vector<7xf32>
    %418 = vector.shape_cast %417 : vector<7xf32> to vector<7x1xf32>
    %cst_167 = arith.constant 3.200000e+01 : f32
    %419 = vector.broadcast %cst_167 : f32 to vector<7x1xf32>
    %420 = arith.divf %418, %419 : vector<7x1xf32>
    %421 = vector.broadcast %420 : vector<7x1xf32> to vector<7x32xf32>
    %422 = arith.subf %416, %421 : vector<7x32xf32>
    %423 = arith.mulf %422, %422 : vector<7x32xf32>
    %cst_168 = arith.constant dense<0.000000e+00> : vector<7xf32>
    %424 = vector.multi_reduction <add>, %423, %cst_168 [1] : vector<7x32xf32> to vector<7xf32>
    %425 = vector.shape_cast %424 : vector<7xf32> to vector<7x1xf32>
    %cst_169 = arith.constant 3.200000e+01 : f32
    %426 = vector.broadcast %cst_169 : f32 to vector<7x1xf32>
    %427 = arith.divf %425, %426 : vector<7x1xf32>
    %cst_170 = arith.constant 9.99999974E-6 : f32
    %428 = vector.broadcast %cst_170 : f32 to vector<7x1xf32>
    %429 = arith.addf %427, %428 : vector<7x1xf32>
    %430 = math.rsqrt %429 : vector<7x1xf32>
    %431 = vector.broadcast %430 : vector<7x1xf32> to vector<7x32xf32>
    %432 = arith.mulf %422, %431 : vector<7x32xf32>
    %433 = vector.extract_strided_slice %408 {offsets = [0, 0, 0], sizes = [1, 32, 32], strides = [1, 1, 1]} : vector<3x32x32xf32> to vector<1x32x32xf32>
    %434 = vector.shape_cast %433 : vector<1x32x32xf32> to vector<32x32xf32>
    %cst_171 = arith.constant dense<0.000000e+00> : vector<7x32xf32>
    %435 = tpu.matmul %432, %434, %cst_171 {dimension_numbers = #tpu.dot_dimension_numbers<[1], [0], [0], [1], [0, 0, 1, 1], [], []>} : vector<7x32xf32>, vector<32x32xf32>, vector<7x32xf32> -> vector<7x32xf32>
    %436 = vector.extract_strided_slice %412 {offsets = [0, 0, 0], sizes = [1, 1, 32], strides = [1, 1, 1]} : vector<3x1x32xf32> to vector<1x1x32xf32>
    %437 = vector.shape_cast %436 : vector<1x1x32xf32> to vector<1x32xf32>
    %438 = vector.broadcast %437 : vector<1x32xf32> to vector<7x32xf32>
    %439 = arith.addf %435, %438 : vector<7x32xf32>
    %440 = tpu.transpose %439, [1, 0] : vector<7x32xf32> -> vector<32x7xf32>
    %cst_172 = arith.constant dense<0.000000e+00> : vector<16x7xf32>
    %441 = tpu.matmul %405, %440, %cst_172 {dimension_numbers = #tpu.dot_dimension_numbers<[1], [0], [0], [1], [0, 0, 1, 1], [], []>} : vector<16x32xf32>, vector<32x7xf32>, vector<16x7xf32> -> vector<16x7xf32>
    %cst_173 = arith.constant dense<0xFF800000> : vector<16xf32>
    %442 = vector.multi_reduction <maximumf>, %441, %cst_173 [1] : vector<16x7xf32> to vector<16xf32>
    %443 = vector.shape_cast %442 : vector<16xf32> to vector<16x1xf32>
    %444 = vector.broadcast %443 : vector<16x1xf32> to vector<16x7xf32>
    %445 = arith.subf %441, %444 : vector<16x7xf32>
    %446 = math.exp %445 : vector<16x7xf32>
    %cst_174 = arith.constant dense<0.000000e+00> : vector<16xf32>
    %447 = vector.multi_reduction <add>, %446, %cst_174 [1] : vector<16x7xf32> to vector<16xf32>
    %448 = vector.shape_cast %447 : vector<16xf32> to vector<16x1xf32>
    %449 = tpu.reciprocal %448 {approx = true} : vector<16x1xf32> -> vector<16x1xf32>
    %450 = vector.broadcast %449 : vector<16x1xf32> to vector<16x7xf32>
    %451 = arith.mulf %446, %450 : vector<16x7xf32>
    %cst_175 = arith.constant 9.99999993E-9 : f32
    %452 = vector.broadcast %cst_175 : f32 to vector<16x7xf32>
    %453 = arith.addf %451, %452 : vector<16x7xf32>
    %cst_176 = arith.constant dense<0.000000e+00> : vector<7xf32>
    %454 = vector.multi_reduction <add>, %453, %cst_176 [0] : vector<16x7xf32> to vector<7xf32>
    %455 = vector.shape_cast %454 : vector<7xf32> to vector<1x7xf32>
    %456 = tpu.reciprocal %455 {approx = true} : vector<1x7xf32> -> vector<1x7xf32>
    %457 = vector.broadcast %456 : vector<1x7xf32> to vector<16x7xf32>
    %458 = arith.mulf %453, %457 : vector<16x7xf32>
    %459 = tpu.transpose %458, [1, 0] : vector<16x7xf32> -> vector<7x16xf32>
    %cst_177 = arith.constant dense<0.000000e+00> : vector<7x32xf32>
    %460 = tpu.matmul %459, %406, %cst_177 {dimension_numbers = #tpu.dot_dimension_numbers<[1], [0], [0], [1], [0, 0, 1, 1], [], []>} : vector<7x16xf32>, vector<16x32xf32>, vector<7x32xf32> -> vector<7x32xf32>
    %461 = vector.extract_strided_slice %410 {offsets = [0, 0, 0], sizes = [1, 32, 96], strides = [1, 1, 1]} : vector<2x32x96xf32> to vector<1x32x96xf32>
    %462 = vector.shape_cast %461 : vector<1x32x96xf32> to vector<32x96xf32>
    %cst_178 = arith.constant dense<0.000000e+00> : vector<7x96xf32>
    %463 = tpu.matmul %460, %462, %cst_178 {dimension_numbers = #tpu.dot_dimension_numbers<[1], [0], [0], [1], [0, 0, 1, 1], [], []>} : vector<7x32xf32>, vector<32x96xf32>, vector<7x96xf32> -> vector<7x96xf32>
    %464 = vector.extract_strided_slice %414 {offsets = [0, 0, 0], sizes = [1, 1, 96], strides = [1, 1, 1]} : vector<2x1x96xf32> to vector<1x1x96xf32>
    %465 = vector.shape_cast %464 : vector<1x1x96xf32> to vector<1x96xf32>
    %466 = vector.broadcast %465 : vector<1x96xf32> to vector<7x96xf32>
    %467 = arith.addf %463, %466 : vector<7x96xf32>
    %468 = vector.extract_strided_slice %410 {offsets = [1, 0, 0], sizes = [1, 32, 96], strides = [1, 1, 1]} : vector<2x32x96xf32> to vector<1x32x96xf32>
    %469 = vector.shape_cast %468 : vector<1x32x96xf32> to vector<32x96xf32>
    %cst_179 = arith.constant dense<0.000000e+00> : vector<7x96xf32>
    %470 = tpu.matmul %416, %469, %cst_179 {dimension_numbers = #tpu.dot_dimension_numbers<[1], [0], [0], [1], [0, 0, 1, 1], [], []>} : vector<7x32xf32>, vector<32x96xf32>, vector<7x96xf32> -> vector<7x96xf32>
    %471 = vector.extract_strided_slice %414 {offsets = [1, 0, 0], sizes = [1, 1, 96], strides = [1, 1, 1]} : vector<2x1x96xf32> to vector<1x1x96xf32>
    %472 = vector.shape_cast %471 : vector<1x1x96xf32> to vector<1x96xf32>
    %473 = vector.broadcast %472 : vector<1x96xf32> to vector<7x96xf32>
    %474 = arith.addf %470, %473 : vector<7x96xf32>
    %475 = vector.extract_strided_slice %467 {offsets = [0, 0], sizes = [7, 64], strides = [1, 1]} : vector<7x96xf32> to vector<7x64xf32>
    %476 = vector.extract_strided_slice %474 {offsets = [0, 0], sizes = [7, 64], strides = [1, 1]} : vector<7x96xf32> to vector<7x64xf32>
    %477 = arith.addf %475, %476 : vector<7x64xf32>
    %478 = arith.negf %477 : vector<7x64xf32>
    %479 = math.exp %478 : vector<7x64xf32>
    %cst_180 = arith.constant 1.000000e+00 : f32
    %480 = vector.broadcast %cst_180 : f32 to vector<7x64xf32>
    %481 = arith.addf %480, %479 : vector<7x64xf32>
    %482 = arith.divf %480, %481 : vector<7x64xf32>
    %483 = vector.extract_strided_slice %482 {offsets = [0, 0], sizes = [7, 32], strides = [1, 1]} : vector<7x64xf32> to vector<7x32xf32>
    %484 = vector.extract_strided_slice %482 {offsets = [0, 32], sizes = [7, 32], strides = [1, 1]} : vector<7x64xf32> to vector<7x32xf32>
    %485 = vector.extract_strided_slice %467 {offsets = [0, 64], sizes = [7, 32], strides = [1, 1]} : vector<7x96xf32> to vector<7x32xf32>
    %486 = vector.extract_strided_slice %474 {offsets = [0, 64], sizes = [7, 32], strides = [1, 1]} : vector<7x96xf32> to vector<7x32xf32>
    %487 = arith.mulf %483, %486 : vector<7x32xf32>
    %488 = arith.addf %485, %487 : vector<7x32xf32>
    %489 = math.tanh %488 : vector<7x32xf32>
    %cst_181 = arith.constant 1.000000e+00 : f32
    %490 = vector.broadcast %cst_181 : f32 to vector<7x32xf32>
    %491 = arith.subf %490, %484 : vector<7x32xf32>
    %492 = arith.mulf %491, %489 : vector<7x32xf32>
    %493 = arith.mulf %484, %416 : vector<7x32xf32>
    %494 = arith.addf %492, %493 : vector<7x32xf32>
    %cst_182 = arith.constant dense<0.000000e+00> : vector<7xf32>
    %495 = vector.multi_reduction <add>, %494, %cst_182 [1] : vector<7x32xf32> to vector<7xf32>
    %496 = vector.shape_cast %495 : vector<7xf32> to vector<7x1xf32>
    %cst_183 = arith.constant 3.200000e+01 : f32
    %497 = vector.broadcast %cst_183 : f32 to vector<7x1xf32>
    %498 = arith.divf %496, %497 : vector<7x1xf32>
    %499 = vector.broadcast %498 : vector<7x1xf32> to vector<7x32xf32>
    %500 = arith.subf %494, %499 : vector<7x32xf32>
    %501 = arith.mulf %500, %500 : vector<7x32xf32>
    %cst_184 = arith.constant dense<0.000000e+00> : vector<7xf32>
    %502 = vector.multi_reduction <add>, %501, %cst_184 [1] : vector<7x32xf32> to vector<7xf32>
    %503 = vector.shape_cast %502 : vector<7xf32> to vector<7x1xf32>
    %cst_185 = arith.constant 3.200000e+01 : f32
    %504 = vector.broadcast %cst_185 : f32 to vector<7x1xf32>
    %505 = arith.divf %503, %504 : vector<7x1xf32>
    %cst_186 = arith.constant 9.99999974E-6 : f32
    %506 = vector.broadcast %cst_186 : f32 to vector<7x1xf32>
    %507 = arith.addf %505, %506 : vector<7x1xf32>
    %508 = math.rsqrt %507 : vector<7x1xf32>
    %509 = vector.broadcast %508 : vector<7x1xf32> to vector<7x32xf32>
    %510 = arith.mulf %500, %509 : vector<7x32xf32>
    %511 = vector.extract_strided_slice %408 {offsets = [1, 0, 0], sizes = [1, 32, 32], strides = [1, 1, 1]} : vector<3x32x32xf32> to vector<1x32x32xf32>
    %512 = vector.shape_cast %511 : vector<1x32x32xf32> to vector<32x32xf32>
    %cst_187 = arith.constant dense<0.000000e+00> : vector<7x32xf32>
    %513 = tpu.matmul %510, %512, %cst_187 {dimension_numbers = #tpu.dot_dimension_numbers<[1], [0], [0], [1], [0, 0, 1, 1], [], []>} : vector<7x32xf32>, vector<32x32xf32>, vector<7x32xf32> -> vector<7x32xf32>
    %514 = vector.extract_strided_slice %412 {offsets = [1, 0, 0], sizes = [1, 1, 32], strides = [1, 1, 1]} : vector<3x1x32xf32> to vector<1x1x32xf32>
    %515 = vector.shape_cast %514 : vector<1x1x32xf32> to vector<1x32xf32>
    %516 = vector.broadcast %515 : vector<1x32xf32> to vector<7x32xf32>
    %517 = arith.addf %513, %516 : vector<7x32xf32>
    %cst_188 = arith.constant 0.000000e+00 : f32
    %518 = vector.broadcast %cst_188 : f32 to vector<7x32xf32>
    %519 = arith.maximumf %517, %518 : vector<7x32xf32>
    %520 = vector.extract_strided_slice %408 {offsets = [2, 0, 0], sizes = [1, 32, 32], strides = [1, 1, 1]} : vector<3x32x32xf32> to vector<1x32x32xf32>
    %521 = vector.shape_cast %520 : vector<1x32x32xf32> to vector<32x32xf32>
    %cst_189 = arith.constant dense<0.000000e+00> : vector<7x32xf32>
    %522 = tpu.matmul %519, %521, %cst_189 {dimension_numbers = #tpu.dot_dimension_numbers<[1], [0], [0], [1], [0, 0, 1, 1], [], []>} : vector<7x32xf32>, vector<32x32xf32>, vector<7x32xf32> -> vector<7x32xf32>
    %523 = arith.addf %494, %522 : vector<7x32xf32>
    %524 = vector.extract_strided_slice %412 {offsets = [2, 0, 0], sizes = [1, 1, 32], strides = [1, 1, 1]} : vector<3x1x32xf32> to vector<1x1x32xf32>
    %525 = vector.shape_cast %524 : vector<1x1x32xf32> to vector<1x32xf32>
    %526 = vector.broadcast %525 : vector<1x32xf32> to vector<7x32xf32>
    %527 = arith.addf %523, %526 : vector<7x32xf32>
    %528 = vector.extract_strided_slice %32 {offsets = [1, 0, 0], sizes = [1, 32, 32], strides = [1, 1, 1]} : vector<3x32x32xf32> to vector<1x32x32xf32>
    %529 = vector.shape_cast %528 : vector<1x32x32xf32> to vector<32x32xf32>
    %cst_190 = arith.constant dense<0.000000e+00> : vector<7x32xf32>
    %530 = tpu.matmul %527, %529, %cst_190 {dimension_numbers = #tpu.dot_dimension_numbers<[1], [0], [0], [1], [0, 0, 1, 1], [], []>} : vector<7x32xf32>, vector<32x32xf32>, vector<7x32xf32> -> vector<7x32xf32>
    %531 = vector.extract_strided_slice %32 {offsets = [2, 0, 0], sizes = [1, 32, 32], strides = [1, 1, 1]} : vector<3x32x32xf32> to vector<1x32x32xf32>
    %532 = vector.shape_cast %531 : vector<1x32x32xf32> to vector<32x32xf32>
    %cst_191 = arith.constant dense<0.000000e+00> : vector<7x32xf32>
    %533 = tpu.matmul %527, %532, %cst_191 {dimension_numbers = #tpu.dot_dimension_numbers<[1], [0], [0], [1], [0, 0, 1, 1], [], []>} : vector<7x32xf32>, vector<32x32xf32>, vector<7x32xf32> -> vector<7x32xf32>
    %534 = vector.extract_strided_slice %46 {offsets = [0, 0], sizes = [16, 16], strides = [1, 1]} : vector<16x32xf32> to vector<16x16xf32>
    %535 = vector.extract_strided_slice %530 {offsets = [0, 0], sizes = [7, 16], strides = [1, 1]} : vector<7x32xf32> to vector<7x16xf32>
    %536 = tpu.transpose %535, [1, 0] : vector<7x16xf32> -> vector<16x7xf32>
    %cst_192 = arith.constant dense<0.000000e+00> : vector<16x7xf32>
    %537 = tpu.matmul %534, %536, %cst_192 {dimension_numbers = #tpu.dot_dimension_numbers<[1], [0], [0], [1], [0, 0, 1, 1], [], []>} : vector<16x16xf32>, vector<16x7xf32>, vector<16x7xf32> -> vector<16x7xf32>
    %cst_193 = arith.constant dense<0xFF800000> : vector<16xf32>
    %538 = vector.multi_reduction <maximumf>, %537, %cst_193 [1] : vector<16x7xf32> to vector<16xf32>
    %539 = vector.shape_cast %538 : vector<16xf32> to vector<16x1xf32>
    %540 = vector.broadcast %539 : vector<16x1xf32> to vector<16x7xf32>
    %541 = arith.subf %537, %540 : vector<16x7xf32>
    %542 = math.exp %541 : vector<16x7xf32>
    %cst_194 = arith.constant dense<0.000000e+00> : vector<16xf32>
    %543 = vector.multi_reduction <add>, %542, %cst_194 [1] : vector<16x7xf32> to vector<16xf32>
    %544 = vector.shape_cast %543 : vector<16xf32> to vector<16x1xf32>
    %545 = tpu.reciprocal %544 {approx = true} : vector<16x1xf32> -> vector<16x1xf32>
    %546 = vector.broadcast %545 : vector<16x1xf32> to vector<16x7xf32>
    %547 = arith.mulf %542, %546 : vector<16x7xf32>
    %548 = vector.extract_strided_slice %533 {offsets = [0, 0], sizes = [7, 16], strides = [1, 1]} : vector<7x32xf32> to vector<7x16xf32>
    %cst_195 = arith.constant dense<0.000000e+00> : vector<16x16xf32>
    %549 = tpu.matmul %547, %548, %cst_195 {dimension_numbers = #tpu.dot_dimension_numbers<[1], [0], [0], [1], [0, 0, 1, 1], [], []>} : vector<16x7xf32>, vector<7x16xf32>, vector<16x16xf32> -> vector<16x16xf32>
    %550 = vector.extract_strided_slice %46 {offsets = [0, 16], sizes = [16, 16], strides = [1, 1]} : vector<16x32xf32> to vector<16x16xf32>
    %551 = vector.extract_strided_slice %530 {offsets = [0, 16], sizes = [7, 16], strides = [1, 1]} : vector<7x32xf32> to vector<7x16xf32>
    %552 = tpu.transpose %551, [1, 0] : vector<7x16xf32> -> vector<16x7xf32>
    %cst_196 = arith.constant dense<0.000000e+00> : vector<16x7xf32>
    %553 = tpu.matmul %550, %552, %cst_196 {dimension_numbers = #tpu.dot_dimension_numbers<[1], [0], [0], [1], [0, 0, 1, 1], [], []>} : vector<16x16xf32>, vector<16x7xf32>, vector<16x7xf32> -> vector<16x7xf32>
    %cst_197 = arith.constant dense<0xFF800000> : vector<16xf32>
    %554 = vector.multi_reduction <maximumf>, %553, %cst_197 [1] : vector<16x7xf32> to vector<16xf32>
    %555 = vector.shape_cast %554 : vector<16xf32> to vector<16x1xf32>
    %556 = vector.broadcast %555 : vector<16x1xf32> to vector<16x7xf32>
    %557 = arith.subf %553, %556 : vector<16x7xf32>
    %558 = math.exp %557 : vector<16x7xf32>
    %cst_198 = arith.constant dense<0.000000e+00> : vector<16xf32>
    %559 = vector.multi_reduction <add>, %558, %cst_198 [1] : vector<16x7xf32> to vector<16xf32>
    %560 = vector.shape_cast %559 : vector<16xf32> to vector<16x1xf32>
    %561 = tpu.reciprocal %560 {approx = true} : vector<16x1xf32> -> vector<16x1xf32>
    %562 = vector.broadcast %561 : vector<16x1xf32> to vector<16x7xf32>
    %563 = arith.mulf %558, %562 : vector<16x7xf32>
    %564 = arith.addf %547, %563 : vector<16x7xf32>
    %565 = vector.extract_strided_slice %533 {offsets = [0, 16], sizes = [7, 16], strides = [1, 1]} : vector<7x32xf32> to vector<7x16xf32>
    %cst_199 = arith.constant dense<0.000000e+00> : vector<16x16xf32>
    %566 = tpu.matmul %563, %565, %cst_199 {dimension_numbers = #tpu.dot_dimension_numbers<[1], [0], [0], [1], [0, 0, 1, 1], [], []>} : vector<16x7xf32>, vector<7x16xf32>, vector<16x16xf32> -> vector<16x16xf32>
    %567 = tpu.concatenate %549, %566 in 1 : vector<16x16xf32>, vector<16x16xf32> -> vector<16x32xf32>
    %cst_200 = arith.constant dense<0.000000e+00> : vector<16x10xf32>
    %568 = tpu.matmul %567, %38, %cst_200 {dimension_numbers = #tpu.dot_dimension_numbers<[1], [0], [0], [1], [0, 0, 1, 1], [], []>} : vector<16x32xf32>, vector<32x10xf32>, vector<16x10xf32> -> vector<16x10xf32>
    %569 = vector.broadcast %40 : vector<1x10xf32> to vector<16x10xf32>
    %570 = arith.addf %568, %569 : vector<16x10xf32>
    %cst_201 = arith.constant 5.000000e-01 : f32
    %571 = vector.broadcast %cst_201 : f32 to vector<16x7xf32>
    %572 = arith.mulf %564, %571 : vector<16x7xf32>
    %cst_202 = arith.constant dense<0.000000e+00> : vector<10xf32>
    %573 = vector.multi_reduction <add>, %570, %cst_202 [0] : vector<16x10xf32> to vector<10xf32>
    %574 = vector.shape_cast %573 : vector<10xf32> to vector<1x10xf32>
    %cst_203 = arith.constant 1.600000e+01 : f32
    %575 = vector.broadcast %cst_203 : f32 to vector<1x10xf32>
    %576 = arith.divf %574, %575 : vector<1x10xf32>
    %577 = arith.addf %223, %400 : vector<1x10xf32>
    %578 = arith.addf %577, %576 : vector<1x10xf32>
    %579 = vector.shape_cast %578 : vector<1x10xf32> to vector<1x10xf32>
    %580 = vector.broadcast %579 : vector<1x10xf32> to vector<16x10xf32>
    %581 = vector.shape_cast %404 : vector<1x5xf32> to vector<1x5xf32>
    %582 = vector.broadcast %581 : vector<1x5xf32> to vector<16x5xf32>
    %cst_204 = arith.constant 0.000000e+00 : f32
    %583 = vector.broadcast %cst_204 : f32 to vector<16x100xf32>
    %584 = tpu.concatenate %219, %572, %580, %582, %583 in 1 : vector<16x6xf32>, vector<16x7xf32>, vector<16x10xf32>, vector<16x5xf32>, vector<16x100xf32> -> vector<16x128xf32>
    %c0_205 = arith.constant 0 : index
    %c0_206 = arith.constant 0 : index
    %c0_207 = arith.constant 0 : index
    %585 = vector.load %arg14[%c0_205, %c0_206, %c0_207] : memref<1x16x128xf32, #tpu.memory_space<vmem>>, vector<1x16x128xf32>
    %586 = vector.shape_cast %585 : vector<1x16x128xf32> to vector<16x128xf32>
    %587 = vector.shape_cast %584 : vector<16x128xf32> to vector<1x16x128xf32>
    tpu.vector_store %arg14[%c0_205, %c0_206, %c0_207], %587 {strides = array<i32>} : memref<1x16x128xf32, #tpu.memory_space<vmem>>, vector<1x16x128xf32>,
    return
  }
  func.func @transform_0(%arg0: i32) -> (i32, i32, i32) {
    %c0_i32 = arith.constant 0 : i32
    %c0_i32_0 = arith.constant 0 : i32
    %c0_i32_1 = arith.constant 0 : i32
    return %arg0, %c0_i32, %c0_i32_0 : i32, i32, i32
  }
  func.func @transform_1(%arg0: i32) -> (i32, i32) {
    %c0_i32 = arith.constant 0 : i32
    %c0_i32_0 = arith.constant 0 : i32
    %c0_i32_1 = arith.constant 0 : i32
    return %c0_i32, %c0_i32_0 : i32, i32
  }
  func.func @transform_2(%arg0: i32) -> (i32, i32) {
    %c0_i32 = arith.constant 0 : i32
    %c0_i32_0 = arith.constant 0 : i32
    %c0_i32_1 = arith.constant 0 : i32
    return %c0_i32, %c0_i32_0 : i32, i32
  }
  func.func @transform_3(%arg0: i32) -> (i32, i32) {
    %c0_i32 = arith.constant 0 : i32
    %c0_i32_0 = arith.constant 0 : i32
    %c0_i32_1 = arith.constant 0 : i32
    return %c0_i32, %c0_i32_0 : i32, i32
  }
  func.func @transform_4(%arg0: i32) -> (i32, i32) {
    %c0_i32 = arith.constant 0 : i32
    %c0_i32_0 = arith.constant 0 : i32
    %c0_i32_1 = arith.constant 0 : i32
    return %c0_i32, %c0_i32_0 : i32, i32
  }
  func.func @transform_5(%arg0: i32) -> (i32, i32, i32, i32) {
    %c0_i32 = arith.constant 0 : i32
    %c0_i32_0 = arith.constant 0 : i32
    %c0_i32_1 = arith.constant 0 : i32
    %c0_i32_2 = arith.constant 0 : i32
    %c0_i32_3 = arith.constant 0 : i32
    return %c0_i32, %c0_i32_0, %c0_i32_1, %c0_i32_2 : i32, i32, i32, i32
  }
  func.func @transform_6(%arg0: i32) -> (i32, i32, i32, i32) {
    %c0_i32 = arith.constant 0 : i32
    %c0_i32_0 = arith.constant 0 : i32
    %c0_i32_1 = arith.constant 0 : i32
    %c0_i32_2 = arith.constant 0 : i32
    %c0_i32_3 = arith.constant 0 : i32
    return %c0_i32, %c0_i32_0, %c0_i32_1, %c0_i32_2 : i32, i32, i32, i32
  }
  func.func @transform_7(%arg0: i32) -> (i32, i32, i32, i32) {
    %c0_i32 = arith.constant 0 : i32
    %c0_i32_0 = arith.constant 0 : i32
    %c0_i32_1 = arith.constant 0 : i32
    %c0_i32_2 = arith.constant 0 : i32
    %c0_i32_3 = arith.constant 0 : i32
    return %c0_i32, %c0_i32_0, %c0_i32_1, %c0_i32_2 : i32, i32, i32, i32
  }
  func.func @transform_8(%arg0: i32) -> (i32, i32, i32, i32) {
    %c0_i32 = arith.constant 0 : i32
    %c0_i32_0 = arith.constant 0 : i32
    %c0_i32_1 = arith.constant 0 : i32
    %c0_i32_2 = arith.constant 0 : i32
    %c0_i32_3 = arith.constant 0 : i32
    return %c0_i32, %c0_i32_0, %c0_i32_1, %c0_i32_2 : i32, i32, i32, i32
  }
  func.func @transform_9(%arg0: i32) -> (i32, i32, i32, i32) {
    %c0_i32 = arith.constant 0 : i32
    %c0_i32_0 = arith.constant 0 : i32
    %c0_i32_1 = arith.constant 0 : i32
    %c0_i32_2 = arith.constant 0 : i32
    %c0_i32_3 = arith.constant 0 : i32
    return %c0_i32, %c0_i32_0, %c0_i32_1, %c0_i32_2 : i32, i32, i32, i32
  }
  func.func @transform_10(%arg0: i32) -> (i32, i32, i32, i32) {
    %c0_i32 = arith.constant 0 : i32
    %c0_i32_0 = arith.constant 0 : i32
    %c0_i32_1 = arith.constant 0 : i32
    %c0_i32_2 = arith.constant 0 : i32
    %c0_i32_3 = arith.constant 0 : i32
    return %c0_i32, %c0_i32_0, %c0_i32_1, %c0_i32_2 : i32, i32, i32, i32
  }
  func.func @transform_11(%arg0: i32) -> (i32, i32, i32) {
    %c0_i32 = arith.constant 0 : i32
    %c0_i32_0 = arith.constant 0 : i32
    %c0_i32_1 = arith.constant 0 : i32
    %c0_i32_2 = arith.constant 0 : i32
    return %c0_i32, %c0_i32_0, %c0_i32_1 : i32, i32, i32
  }
  func.func @transform_12(%arg0: i32) -> (i32, i32, i32) {
    %c0_i32 = arith.constant 0 : i32
    %c0_i32_0 = arith.constant 0 : i32
    %c0_i32_1 = arith.constant 0 : i32
    %c0_i32_2 = arith.constant 0 : i32
    return %c0_i32, %c0_i32_0, %c0_i32_1 : i32, i32, i32
  }
  func.func @transform_13(%arg0: i32) -> (i32, i32, i32) {
    %c0_i32 = arith.constant 0 : i32
    %c0_i32_0 = arith.constant 0 : i32
    %c0_i32_1 = arith.constant 0 : i32
    return %arg0, %c0_i32, %c0_i32_0 : i32, i32, i32
  }
}

</mosaic_0001>

<llo_original>
// kernel: slot_cswin_qsa_forward.1
$region0: #{slot_cswin_qsa_forward.1}
  #allocation0 [shape = 'u32[]', space=smem, size = 0x4, offset = 0x4, fixed_abs, tag = 'smem constant byte address 0x4 - core index']
  #allocation1 [shape = 'u32[144,128]{1,0:T(1,128)}', space=vmem, size = 0x12000, scoped, tag = 'internal scratch']
  %s0 = inlined_call_operand.vmem [shape: f32[2,128,32], index: 0, kind: input, shape index: {}]
  %s1 = inlined_call_operand.hbm [shape: f32[16,128], index: 1, kind: input, shape index: {}]
  %s2 = inlined_call_operand.vmem [shape: f32[16,1], index: 2, kind: input, shape index: {}]
  %s3 = inlined_call_operand.vmem [shape: f32[32,192], index: 3, kind: input, shape index: {}]
  %s4 = inlined_call_operand.hbm [shape: f32[1,192], index: 4, kind: input, shape index: {}]
  %s5 = inlined_call_operand.vmem [shape: f32[3,3,32,32], index: 5, kind: input, shape index: {}]
  %s6 = inlined_call_operand.vmem [shape: f32[3,2,32,96], index: 6, kind: input, shape index: {}]
  %s7 = inlined_call_operand.hbm [shape: f32[3,3,1,32], index: 7, kind: input, shape index: {}]
  %s8 = inlined_call_operand.hbm [shape: f32[3,2,1,96], index: 8, kind: input, shape index: {}]
  %s9 = inlined_call_operand.vmem [shape: f32[2,3,7,32], index: 9, kind: input, shape index: {}]
  %s10 = inlined_call_operand.hbm [shape: f32[2,3,32,32], index: 10, kind: input, shape index: {}]
  %s11 = inlined_call_operand.vmem [shape: f32[2,32,10], index: 11, kind: input, shape index: {}]
  %s12 = inlined_call_operand.hbm [shape: f32[2,1,10], index: 12, kind: input, shape index: {}]
  %s13 = inlined_call_operand.vmem [shape: f32[2,16,128], index: 13, kind: output, shape index: {}]
  %s14 = sld [smem:[#allocation0]]
  $region109: #{slot_cswin_qsa_forward.1} parent=0
    _
  %s16 = ssub.s32 1, %s14
  %s17 = scalar_select 0, %s16, %s14
  $region1: #{slot_cswin_qsa_forward.1} parent=0
    #allocation2 [shape = 'u8[8192]{0}', space=vmem, size = 0x2000, scoped, tag = 'input window, operand 1, single buffered']
    #allocation3 [shape = 's32[2]{0}', space=sflag, size = 0x8, scoped, tag = 'scoped memory for slot_cswin_qsa_forward.1']
    #allocation4 [shape = 'u8[1024]{0}', space=vmem, size = 0x400, scoped, tag = 'input window, operand 4, single buffered']
    #allocation5 [shape = 's32[1]{0}', space=sflag, size = 0x4, scoped, tag = 'scoped memory for slot_cswin_qsa_forward.1']
    #allocation6 [shape = 'u8[4608]{0}', space=vmem, size = 0x1400, scoped, tag = 'input window, operand 7, single buffered']
    #allocation7 [shape = 'u8[3072]{0}', space=vmem, size = 0xc00, scoped, tag = 'input window, operand 8, single buffered']
    #allocation8 [shape = 's32[1]{0}', space=sflag, size = 0x4, scoped, tag = 'scoped memory for slot_cswin_qsa_forward.1']
    #allocation9 [shape = 'u8[98304]{0}', space=vmem, size = 0x18000, scoped, tag = 'input window, operand 10, single buffered']
    #allocation10 [shape = 'u8[1024]{0}', space=vmem, size = 0x400, scoped, tag = 'input window, operand 12, single buffered']
    #allocation11 [shape = 's32[1]{0}', space=sflag, size = 0x4, scoped, tag = 'scoped memory for slot_cswin_qsa_forward.1']
    %18 = vsyncpa [#allocation3], 0
    %19 = vsyncpa [#allocation5], 0
    %20 = vsyncpa [#allocation8], 0
    %21 = vsyncpa [#allocation11], 0
    loop: start=0, step=1, limit=4
    $region2: #{slot_cswin_qsa_forward.1} parent=1 // loop_pre_header
      _
    $region3: #{slot_cswin_qsa_forward.1} parent=1 // loop_header
      %s23 = sphi 0, %s27
      %p24 = scmp.ge.s32.totalorder %s23, 4
      %s33 = sphi 0, %s35
      %s36 = sphi 0, %s33
      %s37 = sphi 0, %s36
      %s53 = sphi 0, %s37
      %s57 = sphi 0, %s57
      %s59 = sphi 0, %s57
      %s60 = sphi 0, %s59
      %s74 = sphi 0, %s60
      %s78 = sphi 0, %s78
      %s80 = sphi 0, %s78
      %s81 = sphi 0, %s80
      %s95 = sphi 0, %s81
      %s99 = sphi 0, %s99
      %s101 = sphi 0, %s99
      %s102 = sphi 0, %s101
      %s116 = sphi 0, %s102
      %s120 = sphi 0, %s120
      %s122 = sphi 0, %s120
      %s123 = sphi 0, %s122
      %s137 = sphi 0, %s123
      %s141 = sphi 0, %s141
      %s143 = sphi 0, %s141
      %s144 = sphi 0, %s143
      %s158 = sphi 0, %s144
      %s162 = sphi 0, %s162
      %s164 = sphi 0, %s162
      %s165 = sphi 0, %s164
      %s179 = sphi 0, %s165
      %s183 = sphi 0, %s183
      %s185 = sphi 0, %s183
      %s186 = sphi 0, %s185
      %s200 = sphi 0, %s186
      %s204 = sphi 0, %s204
      %s206 = sphi 0, %s204
      %s207 = sphi 0, %s206
      %s221 = sphi 0, %s207
      %s225 = sphi 0, %s225
      %s227 = sphi 0, %s225
      %s228 = sphi 0, %s227
      %s242 = sphi 0, %s228
      %s246 = sphi 0, %s246
      %s248 = sphi 0, %s246
      %s249 = sphi 0, %s248
      %s263 = sphi 0, %s249
      %s267 = sphi 0, %s267
      %s269 = sphi 0, %s267
      %s270 = sphi 0, %s269
      %s284 = sphi 0, %s270
      %s288 = sphi 0, %s288
      %s290 = sphi 0, %s288
      %s291 = sphi 0, %s290
      %s305 = sphi 0, %s291
      %s311 = sphi 0, %s313
      %s314 = sphi 0, %s311
      %s315 = sphi 0, %s314
      %s331 = sphi 0, %s315
    $region4: #{slot_cswin_qsa_forward.1} parent=1 // loop_header_branch
      %26 = sbr.rel (%p24) target = $region8
    $region5: #{slot_cswin_qsa_forward.1} parent=1 // loop_body
      %s28 = ssub.s32 %s23, 1
      %s29 = ssub.s32 %s23, 2
      %s30 = sadd.s32 %s23, 1
      %s31 = ssub.s32 %s23, %s30
      %p32 = scmp.eq.s32.totalorder %s31, 0
      %s34 = sadd.s32 %s33, 1
      %s35 = scalar_select %p32, %s33, %s34
      %p38 = pneg %p32
      %p39 = scmp.eq.s32.totalorder %s23, 1
      %p40 = por %p38, %p39
      %p41 = scmp.ne.s32.totalorder %s33, %s36
      %p42 = scmp.eq.s32.totalorder %s23, 0
      %p43 = por %p41, %p42
      %p44 = scmp.ne.s32.totalorder %s33, %s36
      %p45 = scmp.eq.s32.totalorder %s28, 1
      %p46 = por %p44, %p45
      %p47 = scmp.ne.s32.totalorder %s36, %s37
      %p48 = scmp.eq.s32.totalorder %s28, 0
      %p49 = por %p47, %p48
      %p50 = scmp.ne.s32.totalorder %s36, %s37
      %p51 = scmp.eq.s32.totalorder %s29, 1
      %p52 = por %p50, %p51
      %p54 = scmp.ne.s32.totalorder %s37, %s53
      %p55 = scmp.eq.s32.totalorder %s29, 0
      %p56 = por %p54, %p55
      %s58 = sadd.s32 %s57, 1
      %p61 = scmp.eq.s32.totalorder %s23, 1
      %p62 = scmp.ne.s32.totalorder %s57, %s59
      %p63 = scmp.eq.s32.totalorder %s23, 0
      %p64 = por %p62, %p63
      %p65 = scmp.ne.s32.totalorder %s57, %s59
      %p66 = scmp.eq.s32.totalorder %s28, 1
      %p67 = por %p65, %p66
      %p68 = scmp.ne.s32.totalorder %s59, %s60
      %p69 = scmp.eq.s32.totalorder %s28, 0
      %p70 = por %p68, %p69
      %p71 = scmp.ne.s32.totalorder %s59, %s60
      %p72 = scmp.eq.s32.totalorder %s29, 1
      %p73 = por %p71, %p72
      %p75 = scmp.ne.s32.totalorder %s60, %s74
      %p76 = scmp.eq.s32.totalorder %s29, 0
      %p77 = por %p75, %p76
      %s79 = sadd.s32 %s78, 1
      %p82 = scmp.eq.s32.totalorder %s23, 1
      %p83 = scmp.ne.s32.totalorder %s78, %s80
      %p84 = scmp.eq.s32.totalorder %s23, 0
      %p85 = por %p83, %p84
      %p86 = scmp.ne.s32.totalorder %s78, %s80
      %p87 = scmp.eq.s32.totalorder %s28, 1
      %p88 = por %p86, %p87
      %p89 = scmp.ne.s32.totalorder %s80, %s81
      %p90 = scmp.eq.s32.totalorder %s28, 0
      %p91 = por %p89, %p90
      %p92 = scmp.ne.s32.totalorder %s80, %s81
      %p93 = scmp.eq.s32.totalorder %s29, 1
      %p94 = por %p92, %p93
      %p96 = scmp.ne.s32.totalorder %s81, %s95
      %p97 = scmp.eq.s32.totalorder %s29, 0
      %p98 = por %p96, %p97
      %s100 = sadd.s32 %s99, 1
      %p103 = scmp.eq.s32.totalorder %s23, 1
      %p104 = scmp.ne.s32.totalorder %s99, %s101
      %p105 = scmp.eq.s32.totalorder %s23, 0
      %p106 = por %p104, %p105
      %p107 = scmp.ne.s32.totalorder %s99, %s101
      %p108 = scmp.eq.s32.totalorder %s28, 1
      %p109 = por %p107, %p108
      %p110 = scmp.ne.s32.totalorder %s101, %s102
      %p111 = scmp.eq.s32.totalorder %s28, 0
      %p112 = por %p110, %p111
      %p113 = scmp.ne.s32.totalorder %s101, %s102
      %p114 = scmp.eq.s32.totalorder %s29, 1
      %p115 = por %p113, %p114
      %p117 = scmp.ne.s32.totalorder %s102, %s116
      %p118 = scmp.eq.s32.totalorder %s29, 0
      %p119 = por %p117, %p118
      %s121 = sadd.s32 %s120, 1
      %p124 = scmp.eq.s32.totalorder %s23, 1
      %p125 = scmp.ne.s32.totalorder %s120, %s122
      %p126 = scmp.eq.s32.totalorder %s23, 0
      %p127 = por %p125, %p126
      %p128 = scmp.ne.s32.totalorder %s120, %s122
      %p129 = scmp.eq.s32.totalorder %s28, 1
      %p130 = por %p128, %p129
      %p131 = scmp.ne.s32.totalorder %s122, %s123
      %p132 = scmp.eq.s32.totalorder %s28, 0
      %p133 = por %p131, %p132
      %p134 = scmp.ne.s32.totalorder %s122, %s123
      %p135 = scmp.eq.s32.totalorder %s29, 1
      %p136 = por %p134, %p135
      %p138 = scmp.ne.s32.totalorder %s123, %s137
      %p139 = scmp.eq.s32.totalorder %s29, 0
      %p140 = por %p138, %p139
      %s142 = sadd.s32 %s141, 1
      %p145 = scmp.eq.s32.totalorder %s23, 1
      %p146 = scmp.ne.s32.totalorder %s141, %s143
      %p147 = scmp.eq.s32.totalorder %s23, 0
      %p148 = por %p146, %p147
      %p149 = scmp.ne.s32.totalorder %s141, %s143
      %p150 = scmp.eq.s32.totalorder %s28, 1
      %p151 = por %p149, %p150
      %p152 = scmp.ne.s32.totalorder %s143, %s144
      %p153 = scmp.eq.s32.totalorder %s28, 0
      %p154 = por %p152, %p153
      %p155 = scmp.ne.s32.totalorder %s143, %s144
      %p156 = scmp.eq.s32.totalorder %s29, 1
      %p157 = por %p155, %p156
      %p159 = scmp.ne.s32.totalorder %s144, %s158
      %p160 = scmp.eq.s32.totalorder %s29, 0
      %p161 = por %p159, %p160
      %s163 = sadd.s32 %s162, 1
      %p166 = scmp.eq.s32.totalorder %s23, 1
      %p167 = scmp.ne.s32.totalorder %s162, %s164
      %p168 = scmp.eq.s32.totalorder %s23, 0
      %p169 = por %p167, %p168
      %p170 = scmp.ne.s32.totalorder %s162, %s164
      %p171 = scmp.eq.s32.totalorder %s28, 1
      %p172 = por %p170, %p171
      %p173 = scmp.ne.s32.totalorder %s164, %s165
      %p174 = scmp.eq.s32.totalorder %s28, 0
      %p175 = por %p173, %p174
      %p176 = scmp.ne.s32.totalorder %s164, %s165
      %p177 = scmp.eq.s32.totalorder %s29, 1
      %p178 = por %p176, %p177
      %p180 = scmp.ne.s32.totalorder %s165, %s179
      %p181 = scmp.eq.s32.totalorder %s29, 0
      %p182 = por %p180, %p181
      %s184 = sadd.s32 %s183, 1
      %p187 = scmp.eq.s32.totalorder %s23, 1
      %p188 = scmp.ne.s32.totalorder %s183, %s185
      %p189 = scmp.eq.s32.totalorder %s23, 0
      %p190 = por %p188, %p189
      %p191 = scmp.ne.s32.totalorder %s183, %s185
      %p192 = scmp.eq.s32.totalorder %s28, 1
      %p193 = por %p191, %p192
      %p194 = scmp.ne.s32.totalorder %s185, %s186
      %p195 = scmp.eq.s32.totalorder %s28, 0
      %p196 = por %p194, %p195
      %p197 = scmp.ne.s32.totalorder %s185, %s186
      %p198 = scmp.eq.s32.totalorder %s29, 1
      %p199 = por %p197, %p198
      %p201 = scmp.ne.s32.totalorder %s186, %s200
      %p202 = scmp.eq.s32.totalorder %s29, 0
      %p203 = por %p201, %p202
      %s205 = sadd.s32 %s204, 1
      %p208 = scmp.eq.s32.totalorder %s23, 1
      %p209 = scmp.ne.s32.totalorder %s204, %s206
      %p210 = scmp.eq.s32.totalorder %s23, 0
      %p211 = por %p209, %p210
      %p212 = scmp.ne.s32.totalorder %s204, %s206
      %p213 = scmp.eq.s32.totalorder %s28, 1
      %p214 = por %p212, %p213
      %p215 = scmp.ne.s32.totalorder %s206, %s207
      %p216 = scmp.eq.s32.totalorder %s28, 0
      %p217 = por %p215, %p216
      %p218 = scmp.ne.s32.totalorder %s206, %s207
      %p219 = scmp.eq.s32.totalorder %s29, 1
      %p220 = por %p218, %p219
      %p222 = scmp.ne.s32.totalorder %s207, %s221
      %p223 = scmp.eq.s32.totalorder %s29, 0
      %p224 = por %p222, %p223
      %s226 = sadd.s32 %s225, 1
      %p229 = scmp.eq.s32.totalorder %s23, 1
      %p230 = scmp.ne.s32.totalorder %s225, %s227
      %p231 = scmp.eq.s32.totalorder %s23, 0
      %p232 = por %p230, %p231
      %p233 = scmp.ne.s32.totalorder %s225, %s227
      %p234 = scmp.eq.s32.totalorder %s28, 1
      %p235 = por %p233, %p234
      %p236 = scmp.ne.s32.totalorder %s227, %s228
      %p237 = scmp.eq.s32.totalorder %s28, 0
      %p238 = por %p236, %p237
      %p239 = scmp.ne.s32.totalorder %s227, %s228
      %p240 = scmp.eq.s32.totalorder %s29, 1
      %p241 = por %p239, %p240
      %p243 = scmp.ne.s32.totalorder %s228, %s242
      %p244 = scmp.eq.s32.totalorder %s29, 0
      %p245 = por %p243, %p244
      %s247 = sadd.s32 %s246, 1
      %p250 = scmp.eq.s32.totalorder %s23, 1
      %p251 = scmp.ne.s32.totalorder %s246, %s248
      %p252 = scmp.eq.s32.totalorder %s23, 0
      %p253 = por %p251, %p252
      %p254 = scmp.ne.s32.totalorder %s246, %s248
      %p255 = scmp.eq.s32.totalorder %s28, 1
      %p256 = por %p254, %p255
      %p257 = scmp.ne.s32.totalorder %s248, %s249
      %p258 = scmp.eq.s32.totalorder %s28, 0
      %p259 = por %p257, %p258
      %p260 = scmp.ne.s32.totalorder %s248, %s249
      %p261 = scmp.eq.s32.totalorder %s29, 1
      %p262 = por %p260, %p261
      %p264 = scmp.ne.s32.totalorder %s249, %s263
      %p265 = scmp.eq.s32.totalorder %s29, 0
      %p266 = por %p264, %p265
      %s268 = sadd.s32 %s267, 1
      %p271 = scmp.eq.s32.totalorder %s23, 1
      %p272 = scmp.ne.s32.totalorder %s267, %s269
      %p273 = scmp.eq.s32.totalorder %s23, 0
      %p274 = por %p272, %p273
      %p275 = scmp.ne.s32.totalorder %s267, %s269
      %p276 = scmp.eq.s32.totalorder %s28, 1
      %p277 = por %p275, %p276
      %p278 = scmp.ne.s32.totalorder %s269, %s270
      %p279 = scmp.eq.s32.totalorder %s28, 0
      %p280 = por %p278, %p279
      %p281 = scmp.ne.s32.totalorder %s269, %s270
      %p282 = scmp.eq.s32.totalorder %s29, 1
      %p283 = por %p281, %p282
      %p285 = scmp.ne.s32.totalorder %s270, %s284
      %p286 = scmp.eq.s32.totalorder %s29, 0
      %p287 = por %p285, %p286
      %s289 = sadd.s32 %s288, 1
      %p292 = scmp.eq.s32.totalorder %s23, 1
      %p293 = scmp.ne.s32.totalorder %s288, %s290
      %p294 = scmp.eq.s32.totalorder %s23, 0
      %p295 = por %p293, %p294
      %p296 = scmp.ne.s32.totalorder %s288, %s290
      %p297 = scmp.eq.s32.totalorder %s28, 1
      %p298 = por %p296, %p297
      %p299 = scmp.ne.s32.totalorder %s290, %s291
      %p300 = scmp.eq.s32.totalorder %s28, 0
      %p301 = por %p299, %p300
      %p302 = scmp.ne.s32.totalorder %s290, %s291
      %p303 = scmp.eq.s32.totalorder %s29, 1
      %p304 = por %p302, %p303
      %p306 = scmp.ne.s32.totalorder %s291, %s305
      %p307 = scmp.eq.s32.totalorder %s29, 0
      %p308 = por %p306, %p307
      %s309 = ssub.s32 %s23, %s30
      %p310 = scmp.eq.s32.totalorder %s309, 0
      %s312 = sadd.s32 %s311, 1
      %s313 = scalar_select %p310, %s311, %s312
      %p316 = pneg %p310
      %p317 = scmp.eq.s32.totalorder %s23, 1
      %p318 = por %p316, %p317
      %p319 = scmp.ne.s32.totalorder %s311, %s314
      %p320 = scmp.eq.s32.totalorder %s23, 0
      %p321 = por %p319, %p320
      %p322 = scmp.ne.s32.totalorder %s311, %s314
      %p323 = scmp.eq.s32.totalorder %s28, 1
      %p324 = por %p322, %p323
      %p325 = scmp.ne.s32.totalorder %s314, %s315
      %p326 = scmp.eq.s32.totalorder %s28, 0
      %p327 = por %p325, %p326
      %p328 = scmp.ne.s32.totalorder %s314, %s315
      %p329 = scmp.eq.s32.totalorder %s29, 1
      %p330 = por %p328, %p329
      %p332 = scmp.ne.s32.totalorder %s315, %s331
      %p333 = scmp.eq.s32.totalorder %s29, 0
      %p334 = por %p332, %p333
      %p335 = scmp.le.s32.totalorder 1, %s23
      %p336 = scmp.lt.s32.totalorder %s23, 3
      %p337 = pnand %p335, %p336
      %p338 = pneg %p337
      // Predicated region
      $region9: #{slot_cswin_qsa_forward.1} parent=5 // pred_check
        _
      $region10: #{slot_cswin_qsa_forward.1} parent=5 // pred_check_branch
        %340 = sbr.rel (%p337) target = $region12
      $region11: #{slot_cswin_qsa_forward.1} parent=5 // pred_region
        %s341 = ssub.s32 %s23, 1
        // Predicated region
        $region13: #{slot_cswin_qsa_forward.1} parent=11 // pred_check
          %p342 = pneg %p70
        $region14: #{slot_cswin_qsa_forward.1} parent=11 // pred_check_branch
          %344 = sbr.rel (%p342) target = $region16
        $region15: #{slot_cswin_qsa_forward.1} parent=11 // pred_region
          %s346 = ssub.s32 256, 256
          %347 = vsyncadd [#allocation3], %s346
          %s348 = sshll.u32 [#allocation2], 4
          %s349 = int_to_ptr.vmem [resolvable:$true] %s348
          %354 = dma.hbm_to_vmem [thread:$0]  %s1, 256, %s349, [#allocation3], 128, 128, 8
        $region16: #{slot_cswin_qsa_forward.1} parent=11 // pred_fallthru
          _
        // Predicated region
        $region17: #{slot_cswin_qsa_forward.1} parent=11 // pred_check
          %p355 = pneg %p91
        $region18: #{slot_cswin_qsa_forward.1} parent=11 // pred_check_branch
          %357 = sbr.rel (%p355) target = $region20
        $region19: #{slot_cswin_qsa_forward.1} parent=11 // pred_region
          _
        $region20: #{slot_cswin_qsa_forward.1} parent=11 // pred_fallthru
          _
        // Predicated region
        $region21: #{slot_cswin_qsa_forward.1} parent=11 // pred_check
          %p358 = pneg %p112
        $region22: #{slot_cswin_qsa_forward.1} parent=11 // pred_check_branch
          %360 = sbr.rel (%p358) target = $region24
        $region23: #{slot_cswin_qsa_forward.1} parent=11 // pred_region
          _
        $region24: #{slot_cswin_qsa_forward.1} parent=11 // pred_fallthru
          _
        // Predicated region
        $region25: #{slot_cswin_qsa_forward.1} parent=11 // pred_check
          %p361 = pneg %p133
        $region26: #{slot_cswin_qsa_forward.1} parent=11 // pred_check_branch
          %363 = sbr.rel (%p361) target = $region28
        $region27: #{slot_cswin_qsa_forward.1} parent=11 // pred_region
          %s365 = ssub.s32 32, 32
          %366 = vsyncadd [#allocation5], %s365
          %s368 = sshll.u32 [#allocation4], 4
          %s369 = int_to_ptr.vmem [resolvable:$true] %s368
          %371 = dma.hbm_to_vmem [thread:$0]  %s4, 32, %s369, [#allocation5]
        $region28: #{slot_cswin_qsa_forward.1} parent=11 // pred_fallthru
          _
        // Predicated region
        $region29: #{slot_cswin_qsa_forward.1} parent=11 // pred_check
          %p372 = pneg %p154
        $region30: #{slot_cswin_qsa_forward.1} parent=11 // pred_check_branch
          %374 = sbr.rel (%p372) target = $region32
        $region31: #{slot_cswin_qsa_forward.1} parent=11 // pred_region
          _
        $region32: #{slot_cswin_qsa_forward.1} parent=11 // pred_fallthru
          _
        // Predicated region
        $region33: #{slot_cswin_qsa_forward.1} parent=11 // pred_check
          %p375 = pneg %p175
        $region34: #{slot_cswin_qsa_forward.1} parent=11 // pred_check_branch
          %377 = sbr.rel (%p375) target = $region36
        $region35: #{slot_cswin_qsa_forward.1} parent=11 // pred_region
          _
        $region36: #{slot_cswin_qsa_forward.1} parent=11 // pred_fallthru
          _
        // Predicated region
        $region37: #{slot_cswin_qsa_forward.1} parent=11 // pred_check
          %p378 = pneg %p196
        $region38: #{slot_cswin_qsa_forward.1} parent=11 // pred_check_branch
          %380 = sbr.rel (%p378) target = $region40
        $region39: #{slot_cswin_qsa_forward.1} parent=11 // pred_region
          %s382 = ssub.s32 144, 144
          %383 = vsyncadd [#allocation5], %s382
          %s384 = sshll.u32 [#allocation6], 4
          %s385 = int_to_ptr.vmem [resolvable:$true] %s384
          %390 = dma.hbm_to_vmem [thread:$0]  %s7, 144, %s385, [#allocation5], 16, 16, 1
        $region40: #{slot_cswin_qsa_forward.1} parent=11 // pred_fallthru
          _
        // Predicated region
        $region41: #{slot_cswin_qsa_forward.1} parent=11 // pred_check
          %p391 = pneg %p217
        $region42: #{slot_cswin_qsa_forward.1} parent=11 // pred_check_branch
          %393 = sbr.rel (%p391) target = $region44
        $region43: #{slot_cswin_qsa_forward.1} parent=11 // pred_region
          %s395 = ssub.s32 96, 96
          %396 = vsyncadd [#allocation8], %s395
          %s397 = sshll.u32 [#allocation7], 4
          %s398 = int_to_ptr.vmem [resolvable:$true] %s397
          %403 = dma.hbm_to_vmem [thread:$0]  %s8, 96, %s398, [#allocation8], 16, 16, 1
        $region44: #{slot_cswin_qsa_forward.1} parent=11 // pred_fallthru
          _
        // Predicated region
        $region45: #{slot_cswin_qsa_forward.1} parent=11 // pred_check
          %p404 = pneg %p238
        $region46: #{slot_cswin_qsa_forward.1} parent=11 // pred_check_branch
          %406 = sbr.rel (%p404) target = $region48
        $region47: #{slot_cswin_qsa_forward.1} parent=11 // pred_region
          _
        $region48: #{slot_cswin_qsa_forward.1} parent=11 // pred_fallthru
          _
        // Predicated region
        $region49: #{slot_cswin_qsa_forward.1} parent=11 // pred_check
          %p407 = pneg %p259
        $region50: #{slot_cswin_qsa_forward.1} parent=11 // pred_check_branch
          %409 = sbr.rel (%p407) target = $region52
        $region51: #{slot_cswin_qsa_forward.1} parent=11 // pred_region
          %s411 = ssub.s32 3072, 3072
          %412 = vsyncadd [#allocation8], %s411
          %s413 = sshll.u32 [#allocation9], 4
          %s414 = int_to_ptr.vmem [resolvable:$true] %s413
          %419 = dma.hbm_to_vmem [thread:$0]  %s10, 3072, %s414, [#allocation8], 128, 128, 8
        $region52: #{slot_cswin_qsa_forward.1} parent=11 // pred_fallthru
          _
        // Predicated region
        $region53: #{slot_cswin_qsa_forward.1} parent=11 // pred_check
          %p420 = pneg %p280
        $region54: #{slot_cswin_qsa_forward.1} parent=11 // pred_check_branch
          %422 = sbr.rel (%p420) target = $region56
        $region55: #{slot_cswin_qsa_forward.1} parent=11 // pred_region
          _
        $region56: #{slot_cswin_qsa_forward.1} parent=11 // pred_fallthru
          _
        // Predicated region
        $region57: #{slot_cswin_qsa_forward.1} parent=11 // pred_check
          %p423 = pneg %p301
        $region58: #{slot_cswin_qsa_forward.1} parent=11 // pred_check_branch
          %425 = sbr.rel (%p423) target = $region60
        $region59: #{slot_cswin_qsa_forward.1} parent=11 // pred_region
          %s427 = ssub.s32 32, 32
          %428 = vsyncadd [#allocation11], %s427
          %s429 = sshll.u32 [#allocation10], 4
          %s430 = int_to_ptr.vmem [resolvable:$true] %s429
          %435 = dma.hbm_to_vmem [thread:$0]  %s12, 32, %s430, [#allocation11], 16, 16, 1
        $region60: #{slot_cswin_qsa_forward.1} parent=11 // pred_fallthru
          _
      $region12: #{slot_cswin_qsa_forward.1} parent=5 // pred_fallthru
        _
      %p436 = scmp.lt.s32.totalorder %s23, 2
      // Predicated region
      $region61: #{slot_cswin_qsa_forward.1} parent=5 // pred_check
        %p437 = pneg %p436
      $region62: #{slot_cswin_qsa_forward.1} parent=5 // pred_check_branch
        %439 = sbr.rel (%p437) target = $region64
      $region63: #{slot_cswin_qsa_forward.1} parent=5 // pred_region
        // Predicated region
        $region65: #{slot_cswin_qsa_forward.1} parent=63 // pred_check
          %p440 = pneg %p43
        $region66: #{slot_cswin_qsa_forward.1} parent=63 // pred_check_branch
          %442 = sbr.rel (%p440) target = $region68
        $region67: #{slot_cswin_qsa_forward.1} parent=63 // pred_region
          %p443 = scmp.lt.s32.totalorder %s23, 1
          %s444 = scalar_select %p443, %s23, 1
          %s445 = smul.addr %s444, 16
          %s446 = smul.addr %s445, 8
          %s447 = scalar_lea.vmem %s0, %s446
        $region68: #{slot_cswin_qsa_forward.1} parent=63 // pred_fallthru
          _
      $region64: #{slot_cswin_qsa_forward.1} parent=5 // pred_fallthru
        _
      %p448 = scmp.le.s32.totalorder 1, %s23
      %p449 = scmp.lt.s32.totalorder %s23, 3
      %p450 = pnand %p448, %p449
      %p451 = pneg %p450
      // Predicated region
      $region69: #{slot_cswin_qsa_forward.1} parent=5 // pred_check
        _
      $region70: #{slot_cswin_qsa_forward.1} parent=5 // pred_check_branch
        %453 = sbr.rel (%p450) target = $region72
      $region71: #{slot_cswin_qsa_forward.1} parent=5 // pred_region
        %s454 = ssub.s32 %s23, 1
        // Predicated region
        $region73: #{slot_cswin_qsa_forward.1} parent=71 // pred_check
          %p455 = pneg %p70
        $region74: #{slot_cswin_qsa_forward.1} parent=71 // pred_check_branch
          %457 = sbr.rel (%p455) target = $region76
        $region75: #{slot_cswin_qsa_forward.1} parent=71 // pred_region
          %458 = dma.done [#allocation3], 256
        $region76: #{slot_cswin_qsa_forward.1} parent=71 // pred_fallthru
          _
        // Predicated region
        $region77: #{slot_cswin_qsa_forward.1} parent=71 // pred_check
          %p459 = pneg %p133
        $region78: #{slot_cswin_qsa_forward.1} parent=71 // pred_check_branch
          %461 = sbr.rel (%p459) target = $region80
        $region79: #{slot_cswin_qsa_forward.1} parent=71 // pred_region
          %462 = dma.done [#allocation5], 32
        $region80: #{slot_cswin_qsa_forward.1} parent=71 // pred_fallthru
          _
        // Predicated region
        $region81: #{slot_cswin_qsa_forward.1} parent=71 // pred_check
          %p463 = pneg %p196
        $region82: #{slot_cswin_qsa_forward.1} parent=71 // pred_check_branch
          %465 = sbr.rel (%p463) target = $region84
        $region83: #{slot_cswin_qsa_forward.1} parent=71 // pred_region
          %466 = dma.done [#allocation5], 144
        $region84: #{slot_cswin_qsa_forward.1} parent=71 // pred_fallthru
          _
        // Predicated region
        $region85: #{slot_cswin_qsa_forward.1} parent=71 // pred_check
          %p467 = pneg %p217
        $region86: #{slot_cswin_qsa_forward.1} parent=71 // pred_check_branch
          %469 = sbr.rel (%p467) target = $region88
        $region87: #{slot_cswin_qsa_forward.1} parent=71 // pred_region
          %470 = dma.done [#allocation8], 96
        $region88: #{slot_cswin_qsa_forward.1} parent=71 // pred_fallthru
          _
        // Predicated region
        $region89: #{slot_cswin_qsa_forward.1} parent=71 // pred_check
          %p471 = pneg %p259
        $region90: #{slot_cswin_qsa_forward.1} parent=71 // pred_check_branch
          %473 = sbr.rel (%p471) target = $region92
        $region91: #{slot_cswin_qsa_forward.1} parent=71 // pred_region
          %474 = dma.done [#allocation8], 3072
        $region92: #{slot_cswin_qsa_forward.1} parent=71 // pred_fallthru
          _
        // Predicated region
        $region93: #{slot_cswin_qsa_forward.1} parent=71 // pred_check
          %p475 = pneg %p301
        $region94: #{slot_cswin_qsa_forward.1} parent=71 // pred_check_branch
          %477 = sbr.rel (%p475) target = $region96
        $region95: #{slot_cswin_qsa_forward.1} parent=71 // pred_region
          %478 = dma.done [#allocation11], 32
        $region96: #{slot_cswin_qsa_forward.1} parent=71 // pred_fallthru
          _
        %p479 = scmp.lt.s32.totalorder %s28, 1
        %s480 = scalar_select %p479, %s28, 1
        %s481 = smul.addr %s480, 16
        %s482 = smul.addr %s481, 8
        %s483 = scalar_lea.vmem %s0, %s482
        %p484 = pneg %p49
        %p485 = pneg %p46
        %p486 = pneg %p70
        %p487 = pneg %p67
        %p488 = pneg %p91
        %p489 = pneg %p88
        %p490 = pneg %p112
        %p491 = pneg %p109
        %p492 = pneg %p133
        %p493 = pneg %p130
        %p494 = pneg %p154
        %p495 = pneg %p151
        %p496 = pneg %p175
        %p497 = pneg %p172
        %p498 = pneg %p196
        %p499 = pneg %p193
        %p500 = pneg %p217
        %p501 = pneg %p214
        %p502 = pneg %p238
        %p503 = pneg %p235
        %p504 = pneg %p259
        %p505 = pneg %p256
        %p506 = pneg %p280
        %p507 = pneg %p277
        %p508 = pneg %p301
        %p509 = pneg %p298
        %p510 = pneg %p327
        %p511 = pneg %p324
        %p512 = scmp.lt.s32.totalorder %s28, 1
        %s513 = scalar_select %p512, %s28, 1
        %s514 = smul.addr %s513, 2
        %s515 = smul.addr %s514, 8
        %s516 = scalar_lea.vmem %s13, %s515
        %p517 = scmp.lt.s32.totalorder %s28, 1
        %s518 = scalar_select %p517, %s28, 1
        %s519 = smul.addr %s518, 16
        %s520 = smul.addr %s519, 8
        %s521 = scalar_lea.vmem %s0, %s520
        %p522 = scmp.lt.s32.totalorder %s28, 1
        %s523 = scalar_select %p522, %s28, 1
        %s524 = smul.addr %s523, 2
        %s525 = smul.addr %s524, 8
        %s526 = scalar_lea.vmem %s13, %s525
        %v527 = vld [vmem:[#allocation2] sm:$0xff]
        %v528 = vld [vmem:[#allocation2 + $0x8] sm:$0xff]
        %v529 = vld [vmem:[%s521] sm:$0xff]
        %v530 = vld [vmem:[%s521 + $0x8] sm:$0xff]
        %v531 = vld [vmem:[%s521 + $0x10] sm:$0xff]
        %v532 = vld [vmem:[%s521 + $0x18] sm:$0xff]
        %v533 = vld [vmem:[%s521 + $0x20] sm:$0xff]
        %v534 = vld [vmem:[%s521 + $0x28] sm:$0xff]
        %v535 = vld [vmem:[%s521 + $0x30] sm:$0xff]
        %v536 = vld [vmem:[%s521 + $0x38] sm:$0xff]
        %v537 = vld [vmem:[%s521 + $0x40] sm:$0xff]
        %v538 = vld [vmem:[%s521 + $0x48] sm:$0xff]
        %v539 = vld [vmem:[%s521 + $0x50] sm:$0xff]
        %v540 = vld [vmem:[%s521 + $0x58] sm:$0xff]
        %v541 = vld [vmem:[%s521 + $0x60] sm:$0xff]
        %v542 = vld [vmem:[%s521 + $0x68] sm:$0xff]
        %v543 = vld [vmem:[%s521 + $0x70] sm:$0xff]
        %v544 = vld [vmem:[%s521 + $0x78] sm:$0xff]
        %v545 = vld [vmem:[%s2] sm:$0xff]
        %v546 = vld [vmem:[%s2 + $0x8] sm:$0xff]
        %548 = vset.pattern.permute.xlu0 0
        %549 = vperm.xlu0 %548, %v545
        %v550 = vpop.permute.xlu0 %549
        %553 = vset.pattern.permute.xlu0 0
        %554 = vperm.xlu0 %553, %v546
        %v555 = vpop.permute.xlu0 %554
        %557 = vmatprep.subr.mxu0 0.0
        %558 = vmatpush1.msra.mxu0 %v529
        %559 = vmatprep.subr.mxu0 0.0
        %560 = vmatpush1.msra.mxu0 %v530
        %561 = vmatprep.subr.mxu0 0.0
        %562 = vmatpush1.msra.mxu0 %v531
        %563 = vmatprep.subr.mxu0 0.0
        %564 = vmatpush1.msra.mxu0 %v532
        %565 = vmatprep.subr.mxu0 0.0
        %566 = vmatpush1.msra.mxu0 %v533
        %567 = vmatprep.subr.mxu0 0.0
        %568 = vmatpush1.msra.mxu0 %v534
        %569 = vmatprep.subr.mxu0 0.0
        %570 = vmatpush1.msra.mxu0 %v535
        %571 = vmatprep.subr.mxu0 0.0
        %572 = vmatpush1.msra.mxu0 %v536
        %573 = vmatprep.subr.mxu0 0.0
        %574 = vmatpush1.msra.mxu0 %v537
        %575 = vmatprep.subr.mxu0 0.0
        %576 = vmatpush1.msra.mxu0 %v538
        %577 = vmatprep.subr.mxu0 0.0
        %578 = vmatpush1.msra.mxu0 %v539
        %579 = vmatprep.subr.mxu0 0.0
        %580 = vmatpush1.msra.mxu0 %v540
        %581 = vmatprep.subr.mxu0 0.0
        %582 = vmatpush1.msra.mxu0 %v541
        %583 = vmatprep.subr.mxu0 0.0
        %584 = vmatpush1.msra.mxu0 %v542
        %585 = vmatprep.subr.mxu0 0.0
        %586 = vmatpush1.msra.mxu0 %v543
        %587 = vmatprep.subr.mxu0 0.0
        %588 = vmatpush1.msra.mxu0 %v544
        %589 = vmatprep.subr.mxu0 0.0
        %590 = vmatpush1.msra.mxu0 0.0
        %591 = vmatprep.subr.mxu0 0.0
        %592 = vmatpush1.msra.mxu0 0.0
        %593 = vmatprep.subr.mxu0 0.0
        %594 = vmatpush1.msra.mxu0 0.0
        %595 = vmatprep.subr.mxu0 0.0
        %596 = vmatpush1.msra.mxu0 0.0
        %597 = vmatprep.subr.mxu0 0.0
        %598 = vmatpush1.msra.mxu0 0.0
        %599 = vmatprep.subr.mxu0 0.0
        %600 = vmatpush1.msra.mxu0 0.0
        %601 = vmatprep.subr.mxu0 0.0
        %602 = vmatpush1.msra.mxu0 0.0
        %603 = vmatprep.subr.mxu0 0.0
        %604 = vmatpush1.msra.mxu0 0.0
        %605 = vmatprep.subr.mxu0 0.0
        %606 = vmatpush1.msra.mxu0 0.0
        %607 = vmatprep.subr.mxu0 0.0
        %608 = vmatpush1.msra.mxu0 0.0
        %609 = vmatprep.subr.mxu0 0.0
        %610 = vmatpush1.msra.mxu0 0.0
        %611 = vmatprep.subr.mxu0 0.0
        %612 = vmatpush1.msra.mxu0 0.0
        %613 = vmatprep.subr.mxu0 0.0
        %614 = vmatpush1.msra.mxu0 0.0
        %615 = vmatprep.subr.mxu0 0.0
        %616 = vmatpush1.msra.mxu0 0.0
        %617 = vmatprep.subr.mxu0 0.0
        %618 = vmatpush1.msra.mxu0 0.0
        %619 = vmatprep.subr.mxu0 0.0
        %620 = vmatpush1.msra.mxu0 0.0
        %621 = vmatprep.mubr.f32.mxu0 0.0
        %622 = vmatmul.mubr.f32.gmra.mrb[0].mxu0 %v527
        %v623 = vpop.f32.mrb[0].mxu0
        %v624 = vadd.f32 %v550, %v623
        %v625 = vpop.f32.mrb[0].mxu0
        %626 = vmatprep.mubr.f32.mxu0 0.0
        %627 = vmatmul.mubr.f32.gmra.mrb[0].mxu0 %v528
        %v628 = vpop.f32.mrb[0].mxu0
        %v629 = vadd.f32 %v555, %v628
        %v630 = vpop.f32.mrb[0].mxu0
        %631 = vdwg.mxu0
        %vm632 = vcmask 261120
        %v633 = vsel %vm632, %v624, 0.0
        %634 = vadd.xlane.f32.xlu0 %v633
        %v635 = vpop.xlane.xlu0 %634
        %v636 = vsel %vm632, %v629, 0.0
        %637 = vadd.xlane.f32.xlu0 %v636
        %v638 = vpop.xlane.xlu0 %637
        %v639 = vrcp.pop 32.0
        %v640 = vmul.f32 %v635, %v639
        %v641 = vmul.f32 %v638, %v639
        %v642 = vsub.f32 %v624, %v640
        %v643 = vsub.f32 %v629, %v641
        %v644 = vmul.f32 %v642, %v642
        %v645 = vmul.f32 %v643, %v643
        %v646 = vsel %vm632, %v644, 0.0
        %647 = vadd.xlane.f32.xlu0 %v646
        %v648 = vpop.xlane.xlu0 %647
        %v649 = vsel %vm632, %v645, 0.0
        %650 = vadd.xlane.f32.xlu0 %v649
        %v651 = vpop.xlane.xlu0 %650
        %v652 = vmul.f32 %v648, %v639
        %v653 = vmul.f32 %v651, %v639
        %v654 = vadd.f32 %v652, 1e-05
        %v655 = vadd.f32 %v653, 1e-05
        %v656 = vrsqrt.pop %v654
        %v657 = vrsqrt.pop %v655
        %v658 = vmul.f32 %v642, %v656
        %v659 = vmul.f32 %v643, %v657
        %v660 = vld [vmem:[%s3] sm:$0xff]
        %v661 = vld [vmem:[%s3 + $0x8] sm:$0xff]
        %v662 = vld [vmem:[%s3 + $0x10] sm:$0xff]
        %v663 = vld [vmem:[%s3 + $0x18] sm:$0xff]
        %v664 = vld [vmem:[%s3 + $0x20] sm:$0xff]
        %v665 = vld [vmem:[%s3 + $0x28] sm:$0xff]
        %v666 = vld [vmem:[%s3 + $0x30] sm:$0xff]
        %v667 = vld [vmem:[%s3 + $0x38] sm:$0xff]
        %v668 = vld [vmem:[#allocation4] sm:$0x3]
        %v670 = vlaneseq
        %v671 = vshrl.u32 %v670, 7
        %v672 = vsub.s32 0, %v671
        %v673 = vrot.slane %v668, %v672
        %v674 = vlaneseq
        %v675 = vshrl.u32 %v674, 7
        %v676 = vsub.s32 1, %v675
        %v677 = vrot.slane %v668, %v676
        %v681 = vsel %vm632, %v658, 0
        %v684 = vsel %vm632, %v659, 0
        %686 = vmatprep.subr.mxu0 %v661
        %687 = vmatpush1.msra.mxu0 %v660
        %688 = vmatprep.subr.mxu0 %v663
        %689 = vmatpush1.msra.mxu0 %v662
        %690 = vmatprep.subr.mxu0 %v665
        %691 = vmatpush1.msra.mxu0 %v664
        %692 = vmatprep.subr.mxu0 %v667
        %693 = vmatpush1.msra.mxu0 %v666
        %694 = vmatprep.subr.mxu0 0.0
        %695 = vmatpush1.msra.mxu0 0.0
        %696 = vmatprep.subr.mxu0 0.0
        %697 = vmatpush1.msra.mxu0 0.0
        %698 = vmatprep.subr.mxu0 0.0
        %699 = vmatpush1.msra.mxu0 0.0
        %700 = vmatprep.subr.mxu0 0.0
        %701 = vmatpush1.msra.mxu0 0.0
        %702 = vmatprep.subr.mxu0 0.0
        %703 = vmatpush1.msra.mxu0 0.0
        %704 = vmatprep.subr.mxu0 0.0
        %705 = vmatpush1.msra.mxu0 0.0
        %706 = vmatprep.subr.mxu0 0.0
        %707 = vmatpush1.msra.mxu0 0.0
        %708 = vmatprep.subr.mxu0 0.0
        %709 = vmatpush1.msra.mxu0 0.0
        %710 = vmatprep.subr.mxu0 0.0
        %711 = vmatpush1.msra.mxu0 0.0
        %712 = vmatprep.subr.mxu0 0.0
        %713 = vmatpush1.msra.mxu0 0.0
        %714 = vmatprep.subr.mxu0 0.0
        %715 = vmatpush1.msra.mxu0 0.0
        %716 = vmatprep.subr.mxu0 0.0
        %717 = vmatpush1.msra.mxu0 0.0
        %718 = vmatprep.subr.mxu0 0.0
        %719 = vmatpush1.msra.mxu0 0.0
        %720 = vmatprep.subr.mxu0 0.0
        %721 = vmatpush1.msra.mxu0 0.0
        %722 = vmatprep.subr.mxu0 0.0
        %723 = vmatpush1.msra.mxu0 0.0
        %724 = vmatprep.subr.mxu0 0.0
        %725 = vmatpush1.msra.mxu0 0.0
        %726 = vmatprep.subr.mxu0 0.0
        %727 = vmatpush1.msra.mxu0 0.0
        %728 = vmatprep.subr.mxu0 0.0
        %729 = vmatpush1.msra.mxu0 0.0
        %730 = vmatprep.subr.mxu0 0.0
        %731 = vmatpush1.msra.mxu0 0.0
        %732 = vmatprep.subr.mxu0 0.0
        %733 = vmatpush1.msra.mxu0 0.0
        %734 = vmatprep.subr.mxu0 0.0
        %735 = vmatpush1.msra.mxu0 0.0
        %736 = vmatprep.subr.mxu0 0.0
        %737 = vmatpush1.msra.mxu0 0.0
        %738 = vmatprep.subr.mxu0 0.0
        %739 = vmatpush1.msra.mxu0 0.0
        %740 = vmatprep.subr.mxu0 0.0
        %741 = vmatpush1.msra.mxu0 0.0
        %742 = vmatprep.subr.mxu0 0.0
        %743 = vmatpush1.msra.mxu0 0.0
        %744 = vmatprep.subr.mxu0 0.0
        %745 = vmatpush1.msra.mxu0 0.0
        %746 = vmatprep.subr.mxu0 0.0
        %747 = vmatpush1.msra.mxu0 0.0
        %748 = vmatprep.subr.mxu0 0.0
        %749 = vmatpush1.msra.mxu0 0.0
        %750 = vmatprep.mubr.f32.mxu0 0.0
        %751 = vmatmul.mubr.f32.gmra.mrb[0].mxu0 %v681
        %v752 = vpop.f32.mrb[0].mxu0
        %v753 = vadd.f32 %v673, %v752
        %v754 = vpop.f32.mrb[0].mxu0
        %v755 = vadd.f32 %v677, %v754
        %756 = vmatprep.mubr.f32.mxu0 0.0
        %757 = vmatmul.mubr.f32.gmra.mrb[0].mxu0 %v684
        %v758 = vpop.f32.mrb[0].mxu0
        %v759 = vadd.f32 %v673, %v758
        %v760 = vpop.f32.mrb[0].mxu0
        %v761 = vadd.f32 %v677, %v760
        %762 = vdwg.mxu0
        %v763 = vld [vmem:[%s9] sm:$0x7f]
        %v764 = vld [vmem:[%s9 + $0x8] sm:$0x7f]
        %v765 = vld [vmem:[%s9 + $0x10] sm:$0x7f]
        %v766 = vld [vmem:[%s9 + $0x18] sm:$0x7f]
        %v767 = vld [vmem:[%s9 + $0x20] sm:$0x7f]
        %v768 = vld [vmem:[#allocation9] sm:$0xff]
        %v769 = vld [vmem:[#allocation9 + $0x8] sm:$0xff]
        %v770 = vld [vmem:[#allocation9 + $0x10] sm:$0xff]
        %v771 = vld [vmem:[#allocation9 + $0x18] sm:$0xff]
        %v772 = vld [vmem:[#allocation9 + $0x20] sm:$0xff]
        %v773 = vld [vmem:[#allocation9 + $0x28] sm:$0xff]
        %v774 = vld [vmem:[#allocation9 + $0x30] sm:$0xff]
        %v775 = vld [vmem:[#allocation9 + $0x38] sm:$0xff]
        %v776 = vld [vmem:[#allocation9 + $0x40] sm:$0xff]
        %v777 = vld [vmem:[#allocation9 + $0x48] sm:$0xff]
        %v778 = vld [vmem:[#allocation9 + $0x50] sm:$0xff]
        %v779 = vld [vmem:[#allocation9 + $0x58] sm:$0xff]
        %s780 = scalar_lea.vmem [#allocation9], 96
        %v781 = vld [vmem:[%s780] sm:$0xff]
        %v782 = vld [vmem:[%s780 + $0x8] sm:$0xff]
        %v783 = vld [vmem:[%s780 + $0x10] sm:$0xff]
        %v784 = vld [vmem:[%s780 + $0x18] sm:$0xff]
        %v785 = vld [vmem:[%s780 + $0x20] sm:$0xff]
        %v786 = vld [vmem:[%s780 + $0x28] sm:$0xff]
        %v787 = vld [vmem:[%s780 + $0x30] sm:$0xff]
        %v788 = vld [vmem:[%s780 + $0x38] sm:$0xff]
        %v789 = vld [vmem:[%s780 + $0x40] sm:$0xff]
        %v790 = vld [vmem:[%s780 + $0x48] sm:$0xff]
        %v791 = vld [vmem:[%s780 + $0x50] sm:$0xff]
        %v792 = vld [vmem:[%s780 + $0x58] sm:$0xff]
        %v793 = vld [vmem:[%s11] sm:$0xff]
        %v794 = vld [vmem:[%s11 + $0x8] sm:$0xff]
        %v795 = vld [vmem:[%s11 + $0x10] sm:$0xff]
        %v796 = vld [vmem:[%s11 + $0x18] sm:$0xff]
        %v797 = vld [vmem:[#allocation10] sm:$0x1]
        %s798 = scalar_lea.vmem %s11, 32
        %v799 = vld [vmem:[%s798] sm:$0xff]
        %v800 = vld [vmem:[%s798 + $0x8] sm:$0xff]
        %v801 = vld [vmem:[%s798 + $0x10] sm:$0xff]
        %v802 = vld [vmem:[%s798 + $0x18] sm:$0xff]
        %s803 = scalar_lea.vmem [#allocation10], 1
        %v804 = vld [vmem:[%s803] sm:$0x1]
        %v806 = vsel %vm632, %v624, 0
        %v809 = vsel %vm632, %v629, 0
        %811 = vmatprep.subr.mxu0 0.0
        %812 = vmatpush1.msra.mxu0 %v768
        %813 = vmatprep.subr.mxu0 0.0
        %814 = vmatpush1.msra.mxu0 %v769
        %815 = vmatprep.subr.mxu0 0.0
        %816 = vmatpush1.msra.mxu0 %v770
        %817 = vmatprep.subr.mxu0 0.0
        %818 = vmatpush1.msra.mxu0 %v771
        %819 = vmatprep.subr.mxu0 0.0
        %820 = vmatpush1.msra.mxu0 0.0
        %821 = vmatprep.subr.mxu0 0.0
        %822 = vmatpush1.msra.mxu0 0.0
        %823 = vmatprep.subr.mxu0 0.0
        %824 = vmatpush1.msra.mxu0 0.0
        %825 = vmatprep.subr.mxu0 0.0
        %826 = vmatpush1.msra.mxu0 0.0
        %827 = vmatprep.subr.mxu0 0.0
        %828 = vmatpush1.msra.mxu0 0.0
        %829 = vmatprep.subr.mxu0 0.0
        %830 = vmatpush1.msra.mxu0 0.0
        %831 = vmatprep.subr.mxu0 0.0
        %832 = vmatpush1.msra.mxu0 0.0
        %833 = vmatprep.subr.mxu0 0.0
        %834 = vmatpush1.msra.mxu0 0.0
        %835 = vmatprep.subr.mxu0 0.0
        %836 = vmatpush1.msra.mxu0 0.0
        %837 = vmatprep.subr.mxu0 0.0
        %838 = vmatpush1.msra.mxu0 0.0
        %839 = vmatprep.subr.mxu0 0.0
        %840 = vmatpush1.msra.mxu0 0.0
        %841 = vmatprep.subr.mxu0 0.0
        %842 = vmatpush1.msra.mxu0 0.0
        %843 = vmatprep.subr.mxu0 0.0
        %844 = vmatpush1.msra.mxu0 0.0
        %845 = vmatprep.subr.mxu0 0.0
        %846 = vmatpush1.msra.mxu0 0.0
        %847 = vmatprep.subr.mxu0 0.0
        %848 = vmatpush1.msra.mxu0 0.0
        %849 = vmatprep.subr.mxu0 0.0
        %850 = vmatpush1.msra.mxu0 0.0
        %851 = vmatprep.subr.mxu0 0.0
        %852 = vmatpush1.msra.mxu0 0.0
        %853 = vmatprep.subr.mxu0 0.0
        %854 = vmatpush1.msra.mxu0 0.0
        %855 = vmatprep.subr.mxu0 0.0
        %856 = vmatpush1.msra.mxu0 0.0
        %857 = vmatprep.subr.mxu0 0.0
        %858 = vmatpush1.msra.mxu0 0.0
        %859 = vmatprep.subr.mxu0 0.0
        %860 = vmatpush1.msra.mxu0 0.0
        %861 = vmatprep.subr.mxu0 0.0
        %862 = vmatpush1.msra.mxu0 0.0
        %863 = vmatprep.subr.mxu0 0.0
        %864 = vmatpush1.msra.mxu0 0.0
        %865 = vmatprep.subr.mxu0 0.0
        %866 = vmatpush1.msra.mxu0 0.0
        %867 = vmatprep.subr.mxu0 0.0
        %868 = vmatpush1.msra.mxu0 0.0
        %869 = vmatprep.subr.mxu0 0.0
        %870 = vmatpush1.msra.mxu0 0.0
        %871 = vmatprep.subr.mxu0 0.0
        %872 = vmatpush1.msra.mxu0 0.0
        %873 = vmatprep.subr.mxu0 0.0
        %874 = vmatpush1.msra.mxu0 0.0
        %875 = vmatprep.mubr.f32.mxu0 0.0
        %876 = vmatmul.mubr.f32.gmra.mrb[0].mxu0 %v806
        %v877 = vpop.f32.mrb[0].mxu0
        %v878 = vadd.f32 0.0, %v877
        %v879 = vpop.f32.mrb[0].mxu0
        %880 = vmatprep.mubr.f32.mxu0 0.0
        %881 = vmatmul.mubr.f32.gmra.mrb[0].mxu0 %v809
        %v882 = vpop.f32.mrb[0].mxu0
        %v883 = vadd.f32 0.0, %v882
        %v884 = vpop.f32.mrb[0].mxu0
        %885 = vdwg.mxu0
        %886 = vmatprep.subr.mxu0 0.0
        %887 = vmatpush1.msra.mxu0 %v781
        %888 = vmatprep.subr.mxu0 0.0
        %889 = vmatpush1.msra.mxu0 %v782
        %890 = vmatprep.subr.mxu0 0.0
        %891 = vmatpush1.msra.mxu0 %v783
        %892 = vmatprep.subr.mxu0 0.0
        %893 = vmatpush1.msra.mxu0 %v784
        %894 = vmatprep.subr.mxu0 0.0
        %895 = vmatpush1.msra.mxu0 0.0
        %896 = vmatprep.subr.mxu0 0.0
        %897 = vmatpush1.msra.mxu0 0.0
        %898 = vmatprep.subr.mxu0 0.0
        %899 = vmatpush1.msra.mxu0 0.0
        %900 = vmatprep.subr.mxu0 0.0
        %901 = vmatpush1.msra.mxu0 0.0
        %902 = vmatprep.subr.mxu0 0.0
        %903 = vmatpush1.msra.mxu0 0.0
        %904 = vmatprep.subr.mxu0 0.0
        %905 = vmatpush1.msra.mxu0 0.0
        %906 = vmatprep.subr.mxu0 0.0
        %907 = vmatpush1.msra.mxu0 0.0
        %908 = vmatprep.subr.mxu0 0.0
        %909 = vmatpush1.msra.mxu0 0.0
        %910 = vmatprep.subr.mxu0 0.0
        %911 = vmatpush1.msra.mxu0 0.0
        %912 = vmatprep.subr.mxu0 0.0
        %913 = vmatpush1.msra.mxu0 0.0
        %914 = vmatprep.subr.mxu0 0.0
        %915 = vmatpush1.msra.mxu0 0.0
        %916 = vmatprep.subr.mxu0 0.0
        %917 = vmatpush1.msra.mxu0 0.0
        %918 = vmatprep.subr.mxu0 0.0
        %919 = vmatpush1.msra.mxu0 0.0
        %920 = vmatprep.subr.mxu0 0.0
        %921 = vmatpush1.msra.mxu0 0.0
        %922 = vmatprep.subr.mxu0 0.0
        %923 = vmatpush1.msra.mxu0 0.0
        %924 = vmatprep.subr.mxu0 0.0
        %925 = vmatpush1.msra.mxu0 0.0
        %926 = vmatprep.subr.mxu0 0.0
        %927 = vmatpush1.msra.mxu0 0.0
        %928 = vmatprep.subr.mxu0 0.0
        %929 = vmatpush1.msra.mxu0 0.0
        %930 = vmatprep.subr.mxu0 0.0
        %931 = vmatpush1.msra.mxu0 0.0
        %932 = vmatprep.subr.mxu0 0.0
        %933 = vmatpush1.msra.mxu0 0.0
        %934 = vmatprep.subr.mxu0 0.0
        %935 = vmatpush1.msra.mxu0 0.0
        %936 = vmatprep.subr.mxu0 0.0
        %937 = vmatpush1.msra.mxu0 0.0
        %938 = vmatprep.subr.mxu0 0.0
        %939 = vmatpush1.msra.mxu0 0.0
        %940 = vmatprep.subr.mxu0 0.0
        %941 = vmatpush1.msra.mxu0 0.0
        %942 = vmatprep.subr.mxu0 0.0
        %943 = vmatpush1.msra.mxu0 0.0
        %944 = vmatprep.subr.mxu0 0.0
        %945 = vmatpush1.msra.mxu0 0.0
        %946 = vmatprep.subr.mxu0 0.0
        %947 = vmatpush1.msra.mxu0 0.0
        %948 = vmatprep.subr.mxu0 0.0
        %949 = vmatpush1.msra.mxu0 0.0
        %950 = vmatprep.mubr.f32.mxu0 0.0
        %951 = vmatmul.mubr.f32.gmra.mrb[0].mxu0 %v806
        %v952 = vpop.f32.mrb[0].mxu0
        %v953 = vadd.f32 0.0, %v952
        %v954 = vpop.f32.mrb[0].mxu0
        %955 = vmatprep.mubr.f32.mxu0 0.0
        %956 = vmatmul.mubr.f32.gmra.mrb[0].mxu0 %v809
        %v957 = vpop.f32.mrb[0].mxu0
        %v958 = vadd.f32 0.0, %v957
        %v959 = vpop.f32.mrb[0].mxu0
        %960 = vdwg.mxu0
        %v961 = vld [vmem:[%s5] sm:$0xff]
        %v962 = vld [vmem:[%s5 + $0x8] sm:$0xff]
        %v963 = vld [vmem:[%s5 + $0x10] sm:$0xff]
        %v964 = vld [vmem:[%s5 + $0x18] sm:$0xff]
        %v965 = vld [vmem:[%s5 + $0x20] sm:$0xff]
        %v966 = vld [vmem:[%s5 + $0x28] sm:$0xff]
        %v967 = vld [vmem:[%s5 + $0x30] sm:$0xff]
        %v968 = vld [vmem:[%s5 + $0x38] sm:$0xff]
        %v969 = vld [vmem:[%s5 + $0x40] sm:$0xff]
        %v970 = vld [vmem:[%s5 + $0x48] sm:$0xff]
        %v971 = vld [vmem:[%s5 + $0x50] sm:$0xff]
        %v972 = vld [vmem:[%s5 + $0x58] sm:$0xff]
        %v973 = vld [vmem:[%s6] sm:$0xff]
        %v974 = vld [vmem:[%s6 + $0x8] sm:$0xff]
        %v975 = vld [vmem:[%s6 + $0x10] sm:$0xff]
        %v976 = vld [vmem:[%s6 + $0x18] sm:$0xff]
        %v977 = vld [vmem:[%s6 + $0x20] sm:$0xff]
        %v978 = vld [vmem:[%s6 + $0x28] sm:$0xff]
        %v979 = vld [vmem:[%s6 + $0x30] sm:$0xff]
        %v980 = vld [vmem:[%s6 + $0x38] sm:$0xff]
        %v981 = vld [vmem:[#allocation6] sm:$0x1]
        %v982 = vld [vmem:[#allocation6 + $0x1] sm:$0x1]
        %v983 = vld [vmem:[#allocation6 + $0x2] sm:$0x1]
        %v984 = vld [vmem:[#allocation7] sm:$0x1]
        %v985 = vld [vmem:[#allocation7 + $0x1] sm:$0x1]
        %vm986 = vcmask 259072
        %v987 = vsel %vm986, %v763, 0.0
        %988 = vadd.xlane.f32.xlu0 %v987
        %v989 = vpop.xlane.xlu0 %988
        %v990 = vmul.f32 %v989, %v639
        %v991 = vsub.f32 %v763, %v990
        %v992 = vmul.f32 %v991, %v991
        %v993 = vsel %vm986, %v992, 0.0
        %994 = vadd.xlane.f32.xlu0 %v993
        %v995 = vpop.xlane.xlu0 %994
        %v996 = vmul.f32 %v995, %v639
        %v997 = vadd.f32 %v996, 1e-05
        %v998 = vrsqrt.pop %v997
        %v999 = vmul.f32 %v991, %v998
        %v1001 = vlaneseq
        %v1002 = vshrl.u32 %v1001, 7
        %v1003 = vsub.s32 0, %v1002
        %v1004 = vrot.slane %v981, %v1003
        %v1007 = vsel %vm632, %v999, 0
        %1009 = vmatprep.subr.mxu0 0.0
        %1010 = vmatpush1.msra.mxu0 %v961
        %1011 = vmatprep.subr.mxu0 0.0
        %1012 = vmatpush1.msra.mxu0 %v962
        %1013 = vmatprep.subr.mxu0 0.0
        %1014 = vmatpush1.msra.mxu0 %v963
        %1015 = vmatprep.subr.mxu0 0.0
        %1016 = vmatpush1.msra.mxu0 %v964
        %1017 = vmatprep.subr.mxu0 0.0
        %1018 = vmatpush1.msra.mxu0 0.0
        %1019 = vmatprep.subr.mxu0 0.0
        %1020 = vmatpush1.msra.mxu0 0.0
        %1021 = vmatprep.subr.mxu0 0.0
        %1022 = vmatpush1.msra.mxu0 0.0
        %1023 = vmatprep.subr.mxu0 0.0
        %1024 = vmatpush1.msra.mxu0 0.0
        %1025 = vmatprep.subr.mxu0 0.0
        %1026 = vmatpush1.msra.mxu0 0.0
        %1027 = vmatprep.subr.mxu0 0.0
        %1028 = vmatpush1.msra.mxu0 0.0
        %1029 = vmatprep.subr.mxu0 0.0
        %1030 = vmatpush1.msra.mxu0 0.0
        %1031 = vmatprep.subr.mxu0 0.0
        %1032 = vmatpush1.msra.mxu0 0.0
        %1033 = vmatprep.subr.mxu0 0.0
        %1034 = vmatpush1.msra.mxu0 0.0
        %1035 = vmatprep.subr.mxu0 0.0
        %1036 = vmatpush1.msra.mxu0 0.0
        %1037 = vmatprep.subr.mxu0 0.0
        %1038 = vmatpush1.msra.mxu0 0.0
        %1039 = vmatprep.subr.mxu0 0.0
        %1040 = vmatpush1.msra.mxu0 0.0
        %1041 = vmatprep.subr.mxu0 0.0
        %1042 = vmatpush1.msra.mxu0 0.0
        %1043 = vmatprep.subr.mxu0 0.0
        %1044 = vmatpush1.msra.mxu0 0.0
        %1045 = vmatprep.subr.mxu0 0.0
        %1046 = vmatpush1.msra.mxu0 0.0
        %1047 = vmatprep.subr.mxu0 0.0
        %1048 = vmatpush1.msra.mxu0 0.0
        %1049 = vmatprep.subr.mxu0 0.0
        %1050 = vmatpush1.msra.mxu0 0.0
        %1051 = vmatprep.subr.mxu0 0.0
        %1052 = vmatpush1.msra.mxu0 0.0
        %1053 = vmatprep.subr.mxu0 0.0
        %1054 = vmatpush1.msra.mxu0 0.0
        %1055 = vmatprep.subr.mxu0 0.0
        %1056 = vmatpush1.msra.mxu0 0.0
        %1057 = vmatprep.subr.mxu0 0.0
        %1058 = vmatpush1.msra.mxu0 0.0
        %1059 = vmatprep.subr.mxu0 0.0
        %1060 = vmatpush1.msra.mxu0 0.0
        %1061 = vmatprep.subr.mxu0 0.0
        %1062 = vmatpush1.msra.mxu0 0.0
        %1063 = vmatprep.subr.mxu0 0.0
        %1064 = vmatpush1.msra.mxu0 0.0
        %1065 = vmatprep.subr.mxu0 0.0
        %1066 = vmatpush1.msra.mxu0 0.0
        %1067 = vmatprep.subr.mxu0 0.0
        %1068 = vmatpush1.msra.mxu0 0.0
        %1069 = vmatprep.subr.mxu0 0.0
        %1070 = vmatpush1.msra.mxu0 0.0
        %1071 = vmatprep.subr.mxu0 0.0
        %1072 = vmatpush1.msra.mxu0 0.0
        %1073 = vmatprep.mubr.f32.mxu0 0.0
        %1074 = vmatmul.mubr.f32.gmra.mrb[0].mxu0 %v1007
        %v1075 = vpop.f32.mrb[0].mxu0
        %v1076 = vadd.f32 %v1004, %v1075
        %v1077 = vpop.f32.mrb[0].mxu0
        %1078 = vdwg.mxu0
        %v1080 = vsel %vm632, %v753, 0
        %v1083 = vsel %vm632, %v759, 0
        %v1086 = vsel %vm632, %v1076, 0
        %1088 = vmatprep.subr.mxu0 0.0
        %1089 = vmatpush1.xpose.msra.mxu0 %v1086
        %1090 = vmatprep.subr.mxu0 0.0
        %1091 = vmatpush1.xpose.msra.mxu0 0.0
        %1092 = vmatprep.subr.mxu0 0.0
        %1093 = vmatpush1.xpose.msra.mxu0 0.0
        %1094 = vmatprep.subr.mxu0 0.0
        %1095 = vmatpush1.xpose.msra.mxu0 0.0
        %1096 = vmatprep.subr.mxu0 0.0
        %1097 = vmatpush1.xpose.msra.mxu0 0.0
        %1098 = vmatprep.subr.mxu0 0.0
        %1099 = vmatpush1.xpose.msra.mxu0 0.0
        %1100 = vmatprep.subr.mxu0 0.0
        %1101 = vmatpush1.xpose.msra.mxu0 0.0
        %1102 = vmatprep.subr.mxu0 0.0
        %1103 = vmatpush1.xpose.msra.mxu0 0.0
        %1104 = vmatprep.subr.mxu0 0.0
        %1105 = vmatpush1.xpose.msra.mxu0 0.0
        %1106 = vmatprep.subr.mxu0 0.0
        %1107 = vmatpush1.xpose.msra.mxu0 0.0
        %1108 = vmatprep.subr.mxu0 0.0
        %1109 = vmatpush1.xpose.msra.mxu0 0.0
        %1110 = vmatprep.subr.mxu0 0.0
        %1111 = vmatpush1.xpose.msra.mxu0 0.0
        %1112 = vmatprep.subr.mxu0 0.0
        %1113 = vmatpush1.xpose.msra.mxu0 0.0
        %1114 = vmatprep.subr.mxu0 0.0
        %1115 = vmatpush1.xpose.msra.mxu0 0.0
        %1116 = vmatprep.subr.mxu0 0.0
        %1117 = vmatpush1.xpose.msra.mxu0 0.0
        %1118 = vmatprep.subr.mxu0 0.0
        %1119 = vmatpush1.xpose.msra.mxu0 0.0
        %1120 = vmatprep.subr.mxu0 0.0
        %1121 = vmatpush1.xpose.msra.mxu0 0.0
        %1122 = vmatprep.subr.mxu0 0.0
        %1123 = vmatpush1.xpose.msra.mxu0 0.0
        %1124 = vmatprep.subr.mxu0 0.0
        %1125 = vmatpush1.xpose.msra.mxu0 0.0
        %1126 = vmatprep.subr.mxu0 0.0
        %1127 = vmatpush1.xpose.msra.mxu0 0.0
        %1128 = vmatprep.subr.mxu0 0.0
        %1129 = vmatpush1.xpose.msra.mxu0 0.0
        %1130 = vmatprep.subr.mxu0 0.0
        %1131 = vmatpush1.xpose.msra.mxu0 0.0
        %1132 = vmatprep.subr.mxu0 0.0
        %1133 = vmatpush1.xpose.msra.mxu0 0.0
        %1134 = vmatprep.subr.mxu0 0.0
        %1135 = vmatpush1.xpose.msra.mxu0 0.0
        %1136 = vmatprep.subr.mxu0 0.0
        %1137 = vmatpush1.xpose.msra.mxu0 0.0
        %1138 = vmatprep.subr.mxu0 0.0
        %1139 = vmatpush1.xpose.msra.mxu0 0.0
        %1140 = vmatprep.subr.mxu0 0.0
        %1141 = vmatpush1.xpose.msra.mxu0 0.0
        %1142 = vmatprep.subr.mxu0 0.0
        %1143 = vmatpush1.xpose.msra.mxu0 0.0
        %1144 = vmatprep.subr.mxu0 0.0
        %1145 = vmatpush1.xpose.msra.mxu0 0.0
        %1146 = vmatprep.subr.mxu0 0.0
        %1147 = vmatpush1.xpose.msra.mxu0 0.0
        %1148 = vmatprep.subr.mxu0 0.0
        %1149 = vmatpush1.xpose.msra.mxu0 0.0
        %1150 = vmatprep.subr.mxu0 0.0
        %1151 = vmatpush1.xpose.msra.mxu0 0.0
        %1152 = vmatprep.mubr.f32.mxu0 0.0
        %1153 = vmatmul.mubr.f32.gmra.mrb[0].mxu0 %v1080
        %v1154 = vpop.f32.mrb[0].mxu0
        %v1155 = vadd.f32 0.0, %v1154
        %v1156 = vpop.f32.mrb[0].mxu0
        %1157 = vmatprep.mubr.f32.mxu0 0.0
        %1158 = vmatmul.mubr.f32.gmra.mrb[0].mxu0 %v1083
        %v1159 = vpop.f32.mrb[0].mxu0
        %v1160 = vadd.f32 0.0, %v1159
        %v1161 = vpop.f32.mrb[0].mxu0
        %1162 = vdwg.mxu0
        %vm1163 = vcmask 48128
        %v1164 = vsel %vm1163, %v1155, -inf
        %1165 = vmax.xlane.f32.xlu0 %v1164
        %v1166 = vpop.xlane.xlu0 %1165
        %v1167 = vsel %vm1163, %v1160, -inf
        %1168 = vmax.xlane.f32.xlu0 %v1167
        %v1169 = vpop.xlane.xlu0 %1168
        %v1170 = vsub.f32 %v1155, %v1166
        %v1171 = vsub.f32 %v1160, %v1169
        %v1172 = vmul.f32 %v1170, 1.442695
        %v1173 = vpow.pop %v1172
        %v1174 = vmul.f32 %v1171, 1.442695
        %v1175 = vpow.pop %v1174
        %v1176 = vsel %vm1163, %v1173, 0.0
        %1177 = vadd.xlane.f32.xlu0 %v1176
        %v1178 = vpop.xlane.xlu0 %1177
        %v1179 = vsel %vm1163, %v1175, 0.0
        %1180 = vadd.xlane.f32.xlu0 %v1179
        %v1181 = vpop.xlane.xlu0 %1180
        %v1182 = vrcp.pop %v1178
        %v1183 = vrcp.pop %v1181
        %v1184 = vmul.f32 %v1173, %v1182
        %v1185 = vmul.f32 %v1175, %v1183
        %v1186 = vadd.f32 %v1184, 1e-08
        %v1187 = vadd.f32 %v1185, 1e-08
        %v1188 = vsel %vm1163, %v1186, 0.0
        %v1189 = vsel %vm1163, %v1187, 0.0
        %v1190 = vadd.f32 %v1188, %v1189
        %v1191 = vrot.slane %v1190, 4
        %v1192 = vadd.f32 %v1190, %v1191
        %v1193 = vrot.slane %v1192, 2
        %v1194 = vadd.f32 %v1192, %v1193
        %v1195 = vrot.slane %v1194, 1
        %v1196 = vadd.f32 %v1194, %v1195
        %v1197 = vrcp.pop %v1196
        %v1198 = vmul.f32 %v1186, %v1197
        %v1199 = vmul.f32 %v1187, %v1197
        %1200 = vxpose.xlu0.b32.start [1/16] %v1198, 128
        %1201 = vxpose.xlu0.b32.cont [2/16] %v1199, 128
        %1202 = vxpose.xlu0.b32.cont [3/16] 0.0, 128
        %1203 = vxpose.xlu0.b32.cont [4/16] 0.0, 128
        %1204 = vxpose.xlu0.b32.cont [5/16] 0.0, 128
        %1205 = vxpose.xlu0.b32.cont [6/16] 0.0, 128
        %1206 = vxpose.xlu0.b32.cont [7/16] 0.0, 128
        %1207 = vxpose.xlu0.b32.cont [8/16] 0.0, 128
        %1208 = vxpose.xlu0.b32.cont [9/16] 0.0, 128
        %1209 = vxpose.xlu0.b32.cont [10/16] 0.0, 128
        %1210 = vxpose.xlu0.b32.cont [11/16] 0.0, 128
        %1211 = vxpose.xlu0.b32.cont [12/16] 0.0, 128
        %1212 = vxpose.xlu0.b32.cont [13/16] 0.0, 128
        %1213 = vxpose.xlu0.b32.cont [14/16] 0.0, 128
        %1214 = vxpose.xlu0.b32.cont [15/16] 0.0, 128
        %1215 = vxpose.xlu0.b32.end [16/16] 0.0, 128
        %v1216 = vpop.trf.xlu0
        %v1217 = vpop.trf.xlu0
        %v1218 = vpop.trf.xlu0
        %v1219 = vpop.trf.xlu0
        %v1220 = vpop.trf.xlu0
        %v1221 = vpop.trf.xlu0
        %v1222 = vpop.trf.xlu0
        %v1223 = vpop.trf.xlu0
        %v1224 = vpop.trf.xlu0
        %v1225 = vpop.trf.xlu0
        %v1226 = vpop.trf.xlu0
        %v1227 = vpop.trf.xlu0
        %v1228 = vpop.trf.xlu0
        %v1229 = vpop.trf.xlu0
        %v1230 = vpop.trf.xlu0
        %v1231 = vpop.trf.xlu0
        %1232 = vrot.lane.b32.xlu0 %v753, 96
        %v1233 = vpop.permute.xlu0 %1232
        %1234 = vrot.lane.b32.xlu0 %v759, 96
        %v1235 = vpop.permute.xlu0 %1234
        %vm1238 = vcmask 130048
        %v1240 = vsel %vm1238, %v1216, 0
        %1242 = vmatprep.subr.mxu0 0.0
        %1243 = vmatpush1.msra.mxu0 %v1233
        %1244 = vmatprep.subr.mxu0 0.0
        %1245 = vmatpush1.msra.mxu0 %v1235
        %1246 = vmatprep.subr.mxu0 0.0
        %1247 = vmatpush1.msra.mxu0 0.0
        %1248 = vmatprep.subr.mxu0 0.0
        %1249 = vmatpush1.msra.mxu0 0.0
        %1250 = vmatprep.subr.mxu0 0.0
        %1251 = vmatpush1.msra.mxu0 0.0
        %1252 = vmatprep.subr.mxu0 0.0
        %1253 = vmatpush1.msra.mxu0 0.0
        %1254 = vmatprep.subr.mxu0 0.0
        %1255 = vmatpush1.msra.mxu0 0.0
        %1256 = vmatprep.subr.mxu0 0.0
        %1257 = vmatpush1.msra.mxu0 0.0
        %1258 = vmatprep.subr.mxu0 0.0
        %1259 = vmatpush1.msra.mxu0 0.0
        %1260 = vmatprep.subr.mxu0 0.0
        %1261 = vmatpush1.msra.mxu0 0.0
        %1262 = vmatprep.subr.mxu0 0.0
        %1263 = vmatpush1.msra.mxu0 0.0
        %1264 = vmatprep.subr.mxu0 0.0
        %1265 = vmatpush1.msra.mxu0 0.0
        %1266 = vmatprep.subr.mxu0 0.0
        %1267 = vmatpush1.msra.mxu0 0.0
        %1268 = vmatprep.subr.mxu0 0.0
        %1269 = vmatpush1.msra.mxu0 0.0
        %1270 = vmatprep.subr.mxu0 0.0
        %1271 = vmatpush1.msra.mxu0 0.0
        %1272 = vmatprep.subr.mxu0 0.0
        %1273 = vmatpush1.msra.mxu0 0.0
        %1274 = vmatprep.subr.mxu0 0.0
        %1275 = vmatpush1.msra.mxu0 0.0
        %1276 = vmatprep.subr.mxu0 0.0
        %1277 = vmatpush1.msra.mxu0 0.0
        %1278 = vmatprep.subr.mxu0 0.0
        %1279 = vmatpush1.msra.mxu0 0.0
        %1280 = vmatprep.subr.mxu0 0.0
        %1281 = vmatpush1.msra.mxu0 0.0
        %1282 = vmatprep.subr.mxu0 0.0
        %1283 = vmatpush1.msra.mxu0 0.0
        %1284 = vmatprep.subr.mxu0 0.0
        %1285 = vmatpush1.msra.mxu0 0.0
        %1286 = vmatprep.subr.mxu0 0.0
        %1287 = vmatpush1.msra.mxu0 0.0
        %1288 = vmatprep.subr.mxu0 0.0
        %1289 = vmatpush1.msra.mxu0 0.0
        %1290 = vmatprep.subr.mxu0 0.0
        %1291 = vmatpush1.msra.mxu0 0.0
        %1292 = vmatprep.subr.mxu0 0.0
        %1293 = vmatpush1.msra.mxu0 0.0
        %1294 = vmatprep.subr.mxu0 0.0
        %1295 = vmatpush1.msra.mxu0 0.0
        %1296 = vmatprep.subr.mxu0 0.0
        %1297 = vmatpush1.msra.mxu0 0.0
        %1298 = vmatprep.subr.mxu0 0.0
        %1299 = vmatpush1.msra.mxu0 0.0
        %1300 = vmatprep.subr.mxu0 0.0
        %1301 = vmatpush1.msra.mxu0 0.0
        %1302 = vmatprep.subr.mxu0 0.0
        %1303 = vmatpush1.msra.mxu0 0.0
        %1304 = vmatprep.subr.mxu0 0.0
        %1305 = vmatpush1.msra.mxu0 0.0
        %1306 = vmatprep.mubr.f32.mxu0 0.0
        %1307 = vmatmul.mubr.f32.gmra.mrb[0].mxu0 %v1240
        %v1308 = vpop.f32.mrb[0].mxu0
        %v1309 = vadd.f32 0.0, %v1308
        %v1310 = vpop.f32.mrb[0].mxu0
        %1311 = vdwg.mxu0
        %v1313 = vlaneseq
        %v1314 = vshrl.u32 %v1313, 7
        %v1315 = vsub.s32 0, %v1314
        %v1316 = vrot.slane %v984, %v1315
        %v1319 = vsel %vm632, %v1309, 0
        %1321 = vmatprep.subr.mxu0 0.0
        %1322 = vmatpush1.msra.mxu0 %v973
        %1323 = vmatprep.subr.mxu0 0.0
        %1324 = vmatpush1.msra.mxu0 %v974
        %1325 = vmatprep.subr.mxu0 0.0
        %1326 = vmatpush1.msra.mxu0 %v975
        %1327 = vmatprep.subr.mxu0 0.0
        %1328 = vmatpush1.msra.mxu0 %v976
        %1329 = vmatprep.subr.mxu0 0.0
        %1330 = vmatpush1.msra.mxu0 0.0
        %1331 = vmatprep.subr.mxu0 0.0
        %1332 = vmatpush1.msra.mxu0 0.0
        %1333 = vmatprep.subr.mxu0 0.0
        %1334 = vmatpush1.msra.mxu0 0.0
        %1335 = vmatprep.subr.mxu0 0.0
        %1336 = vmatpush1.msra.mxu0 0.0
        %1337 = vmatprep.subr.mxu0 0.0
        %1338 = vmatpush1.msra.mxu0 0.0
        %1339 = vmatprep.subr.mxu0 0.0
        %1340 = vmatpush1.msra.mxu0 0.0
        %1341 = vmatprep.subr.mxu0 0.0
        %1342 = vmatpush1.msra.mxu0 0.0
        %1343 = vmatprep.subr.mxu0 0.0
        %1344 = vmatpush1.msra.mxu0 0.0
        %1345 = vmatprep.subr.mxu0 0.0
        %1346 = vmatpush1.msra.mxu0 0.0
        %1347 = vmatprep.subr.mxu0 0.0
        %1348 = vmatpush1.msra.mxu0 0.0
        %1349 = vmatprep.subr.mxu0 0.0
        %1350 = vmatpush1.msra.mxu0 0.0
        %1351 = vmatprep.subr.mxu0 0.0
        %1352 = vmatpush1.msra.mxu0 0.0
        %1353 = vmatprep.subr.mxu0 0.0
        %1354 = vmatpush1.msra.mxu0 0.0
        %1355 = vmatprep.subr.mxu0 0.0
        %1356 = vmatpush1.msra.mxu0 0.0
        %1357 = vmatprep.subr.mxu0 0.0
        %1358 = vmatpush1.msra.mxu0 0.0
        %1359 = vmatprep.subr.mxu0 0.0
        %1360 = vmatpush1.msra.mxu0 0.0
        %1361 = vmatprep.subr.mxu0 0.0
        %1362 = vmatpush1.msra.mxu0 0.0
        %1363 = vmatprep.subr.mxu0 0.0
        %1364 = vmatpush1.msra.mxu0 0.0
        %1365 = vmatprep.subr.mxu0 0.0
        %1366 = vmatpush1.msra.mxu0 0.0
        %1367 = vmatprep.subr.mxu0 0.0
        %1368 = vmatpush1.msra.mxu0 0.0
        %1369 = vmatprep.subr.mxu0 0.0
        %1370 = vmatpush1.msra.mxu0 0.0
        %1371 = vmatprep.subr.mxu0 0.0
        %1372 = vmatpush1.msra.mxu0 0.0
        %1373 = vmatprep.subr.mxu0 0.0
        %1374 = vmatpush1.msra.mxu0 0.0
        %1375 = vmatprep.subr.mxu0 0.0
        %1376 = vmatpush1.msra.mxu0 0.0
        %1377 = vmatprep.subr.mxu0 0.0
        %1378 = vmatpush1.msra.mxu0 0.0
        %1379 = vmatprep.subr.mxu0 0.0
        %1380 = vmatpush1.msra.mxu0 0.0
        %1381 = vmatprep.subr.mxu0 0.0
        %1382 = vmatpush1.msra.mxu0 0.0
        %1383 = vmatprep.subr.mxu0 0.0
        %1384 = vmatpush1.msra.mxu0 0.0
        %1385 = vmatprep.mubr.f32.mxu0 0.0
        %1386 = vmatmul.mubr.f32.gmra.mrb[0].mxu0 %v1319
        %v1387 = vpop.f32.mrb[0].mxu0
        %v1388 = vadd.f32 %v1316, %v1387
        %v1389 = vpop.f32.mrb[0].mxu0
        %1390 = vdwg.mxu0
        %v1392 = vlaneseq
        %v1393 = vshrl.u32 %v1392, 7
        %v1394 = vsub.s32 0, %v1393
        %v1395 = vrot.slane %v985, %v1394
        %v1398 = vsel %vm632, %v763, 0
        %1400 = vmatprep.subr.mxu0 0.0
        %1401 = vmatpush1.msra.mxu0 %v977
        %1402 = vmatprep.subr.mxu0 0.0
        %1403 = vmatpush1.msra.mxu0 %v978
        %1404 = vmatprep.subr.mxu0 0.0
        %1405 = vmatpush1.msra.mxu0 %v979
        %1406 = vmatprep.subr.mxu0 0.0
        %1407 = vmatpush1.msra.mxu0 %v980
        %1408 = vmatprep.subr.mxu0 0.0
        %1409 = vmatpush1.msra.mxu0 0.0
        %1410 = vmatprep.subr.mxu0 0.0
        %1411 = vmatpush1.msra.mxu0 0.0
        %1412 = vmatprep.subr.mxu0 0.0
        %1413 = vmatpush1.msra.mxu0 0.0
        %1414 = vmatprep.subr.mxu0 0.0
        %1415 = vmatpush1.msra.mxu0 0.0
        %1416 = vmatprep.subr.mxu0 0.0
        %1417 = vmatpush1.msra.mxu0 0.0
        %1418 = vmatprep.subr.mxu0 0.0
        %1419 = vmatpush1.msra.mxu0 0.0
        %1420 = vmatprep.subr.mxu0 0.0
        %1421 = vmatpush1.msra.mxu0 0.0
        %1422 = vmatprep.subr.mxu0 0.0
        %1423 = vmatpush1.msra.mxu0 0.0
        %1424 = vmatprep.subr.mxu0 0.0
        %1425 = vmatpush1.msra.mxu0 0.0
        %1426 = vmatprep.subr.mxu0 0.0
        %1427 = vmatpush1.msra.mxu0 0.0
        %1428 = vmatprep.subr.mxu0 0.0
        %1429 = vmatpush1.msra.mxu0 0.0
        %1430 = vmatprep.subr.mxu0 0.0
        %1431 = vmatpush1.msra.mxu0 0.0
        %1432 = vmatprep.subr.mxu0 0.0
        %1433 = vmatpush1.msra.mxu0 0.0
        %1434 = vmatprep.subr.mxu0 0.0
        %1435 = vmatpush1.msra.mxu0 0.0
        %1436 = vmatprep.subr.mxu0 0.0
        %1437 = vmatpush1.msra.mxu0 0.0
        %1438 = vmatprep.subr.mxu0 0.0
        %1439 = vmatpush1.msra.mxu0 0.0
        %1440 = vmatprep.subr.mxu0 0.0
        %1441 = vmatpush1.msra.mxu0 0.0
        %1442 = vmatprep.subr.mxu0 0.0
        %1443 = vmatpush1.msra.mxu0 0.0
        %1444 = vmatprep.subr.mxu0 0.0
        %1445 = vmatpush1.msra.mxu0 0.0
        %1446 = vmatprep.subr.mxu0 0.0
        %1447 = vmatpush1.msra.mxu0 0.0
        %1448 = vmatprep.subr.mxu0 0.0
        %1449 = vmatpush1.msra.mxu0 0.0
        %1450 = vmatprep.subr.mxu0 0.0
        %1451 = vmatpush1.msra.mxu0 0.0
        %1452 = vmatprep.subr.mxu0 0.0
        %1453 = vmatpush1.msra.mxu0 0.0
        %1454 = vmatprep.subr.mxu0 0.0
        %1455 = vmatpush1.msra.mxu0 0.0
        %1456 = vmatprep.subr.mxu0 0.0
        %1457 = vmatpush1.msra.mxu0 0.0
        %1458 = vmatprep.subr.mxu0 0.0
        %1459 = vmatpush1.msra.mxu0 0.0
        %1460 = vmatprep.subr.mxu0 0.0
        %1461 = vmatpush1.msra.mxu0 0.0
        %1462 = vmatprep.subr.mxu0 0.0
        %1463 = vmatpush1.msra.mxu0 0.0
        %1464 = vmatprep.mubr.f32.mxu0 0.0
        %1465 = vmatmul.mubr.f32.gmra.mrb[0].mxu0 %v1398
        %v1466 = vpop.f32.mrb[0].mxu0
        %v1467 = vadd.f32 %v1395, %v1466
        %v1468 = vpop.f32.mrb[0].mxu0
        %1469 = vdwg.mxu0
        %v1470 = vadd.f32 %v1388, %v1467
        %v1471 = vxor.u32 %v1470, 2147483648
        %v1472 = vmul.f32 %v1471, 1.442695
        %v1473 = vpow.pop %v1472
        %v1474 = vadd.f32 %v1473, 1.0
        %v1475 = vrcp.pop %v1474
        %v1476 = vmul.f32 1.0, %v1475
        %1478 = vrot.lane.b32.xlu0 %v1467, 64
        %v1479 = vpop.permute.xlu0 %1478
        %v1481 = vmul.f32 %v1476, %v1479
        %1483 = vrot.lane.b32.xlu0 %v1481, 64
        %v1484 = vpop.permute.xlu0 %1483
        %v1486 = vadd.f32 %v1388, %v1484
        %v1487 = vtanh.pop %v1486
        %v1488 = vsub.f32 1.0, %v1476
        %1490 = vrot.lane.b32.xlu0 %v1487, 96
        %v1491 = vpop.permute.xlu0 %1490
        %v1493 = vmul.f32 %v1488, %v1491
        %1494 = vrot.lane.b32.xlu0 %v763, 32
        %v1495 = vpop.permute.xlu0 %1494
        %v1497 = vmul.f32 %v1476, %v1495
        %v1498 = vadd.f32 %v1493, %v1497
        %1500 = vrot.lane.b32.xlu0 %v1498, 96
        %v1501 = vpop.permute.xlu0 %1500
        %v1503 = vsel %vm986, %v1501, 0.0
        %1504 = vadd.xlane.f32.xlu0 %v1503
        %v1505 = vpop.xlane.xlu0 %1504
        %v1506 = vmul.f32 %v1505, %v639
        %v1507 = vsub.f32 %v1498, %v1506
        %v1508 = vmul.f32 %v1507, %v1507
        %1510 = vrot.lane.b32.xlu0 %v1508, 96
        %v1511 = vpop.permute.xlu0 %1510
        %v1513 = vsel %vm986, %v1511, 0.0
        %1514 = vadd.xlane.f32.xlu0 %v1513
        %v1515 = vpop.xlane.xlu0 %1514
        %v1516 = vmul.f32 %v1515, %v639
        %v1517 = vadd.f32 %v1516, 1e-05
        %v1518 = vrsqrt.pop %v1517
        %v1519 = vmul.f32 %v1507, %v1518
        %v1521 = vlaneseq
        %v1522 = vshrl.u32 %v1521, 7
        %v1523 = vsub.s32 0, %v1522
        %v1524 = vrot.slane %v982, %v1523
        %1527 = vrot.lane.b32.xlu0 %v1519, 96
        %v1528 = vpop.permute.xlu0 %1527
        %v1529 = vsel %vm632, %v1528, 0
        %1531 = vmatprep.subr.mxu0 0.0
        %1532 = vmatpush1.msra.mxu0 %v965
        %1533 = vmatprep.subr.mxu0 0.0
        %1534 = vmatpush1.msra.mxu0 %v966
        %1535 = vmatprep.subr.mxu0 0.0
        %1536 = vmatpush1.msra.mxu0 %v967
        %1537 = vmatprep.subr.mxu0 0.0
        %1538 = vmatpush1.msra.mxu0 %v968
        %1539 = vmatprep.subr.mxu0 0.0
        %1540 = vmatpush1.msra.mxu0 0.0
        %1541 = vmatprep.subr.mxu0 0.0
        %1542 = vmatpush1.msra.mxu0 0.0
        %1543 = vmatprep.subr.mxu0 0.0
        %1544 = vmatpush1.msra.mxu0 0.0
        %1545 = vmatprep.subr.mxu0 0.0
        %1546 = vmatpush1.msra.mxu0 0.0
        %1547 = vmatprep.subr.mxu0 0.0
        %1548 = vmatpush1.msra.mxu0 0.0
        %1549 = vmatprep.subr.mxu0 0.0
        %1550 = vmatpush1.msra.mxu0 0.0
        %1551 = vmatprep.subr.mxu0 0.0
        %1552 = vmatpush1.msra.mxu0 0.0
        %1553 = vmatprep.subr.mxu0 0.0
        %1554 = vmatpush1.msra.mxu0 0.0
        %1555 = vmatprep.subr.mxu0 0.0
        %1556 = vmatpush1.msra.mxu0 0.0
        %1557 = vmatprep.subr.mxu0 0.0
        %1558 = vmatpush1.msra.mxu0 0.0
        %1559 = vmatprep.subr.mxu0 0.0
        %1560 = vmatpush1.msra.mxu0 0.0
        %1561 = vmatprep.subr.mxu0 0.0
        %1562 = vmatpush1.msra.mxu0 0.0
        %1563 = vmatprep.subr.mxu0 0.0
        %1564 = vmatpush1.msra.mxu0 0.0
        %1565 = vmatprep.subr.mxu0 0.0
        %1566 = vmatpush1.msra.mxu0 0.0
        %1567 = vmatprep.subr.mxu0 0.0
        %1568 = vmatpush1.msra.mxu0 0.0
        %1569 = vmatprep.subr.mxu0 0.0
        %1570 = vmatpush1.msra.mxu0 0.0
        %1571 = vmatprep.subr.mxu0 0.0
        %1572 = vmatpush1.msra.mxu0 0.0
        %1573 = vmatprep.subr.mxu0 0.0
        %1574 = vmatpush1.msra.mxu0 0.0
        %1575 = vmatprep.subr.mxu0 0.0
        %1576 = vmatpush1.msra.mxu0 0.0
        %1577 = vmatprep.subr.mxu0 0.0
        %1578 = vmatpush1.msra.mxu0 0.0
        %1579 = vmatprep.subr.mxu0 0.0
        %1580 = vmatpush1.msra.mxu0 0.0
        %1581 = vmatprep.subr.mxu0 0.0
        %1582 = vmatpush1.msra.mxu0 0.0
        %1583 = vmatprep.subr.mxu0 0.0
        %1584 = vmatpush1.msra.mxu0 0.0
        %1585 = vmatprep.subr.mxu0 0.0
        %1586 = vmatpush1.msra.mxu0 0.0
        %1587 = vmatprep.subr.mxu0 0.0
        %1588 = vmatpush1.msra.mxu0 0.0
        %1589 = vmatprep.subr.mxu0 0.0
        %1590 = vmatpush1.msra.mxu0 0.0
        %1591 = vmatprep.subr.mxu0 0.0
        %1592 = vmatpush1.msra.mxu0 0.0
        %1593 = vmatprep.subr.mxu0 0.0
        %1594 = vmatpush1.msra.mxu0 0.0
        %1595 = vmatprep.mubr.f32.mxu0 0.0
        %1596 = vmatmul.mubr.f32.gmra.mrb[0].mxu0 %v1529
        %v1597 = vpop.f32.mrb[0].mxu0
        %v1598 = vadd.f32 %v1524, %v1597
        %v1599 = vpop.f32.mrb[0].mxu0
        %1600 = vdwg.mxu0
        %v1601 = vmax.f32 %v1598, 0.0
        %v1603 = vsel %vm632, %v1601, 0
        %1605 = vmatprep.subr.mxu0 0.0
        %1606 = vmatpush1.msra.mxu0 %v969
        %1607 = vmatprep.subr.mxu0 0.0
        %1608 = vmatpush1.msra.mxu0 %v970
        %1609 = vmatprep.subr.mxu0 0.0
        %1610 = vmatpush1.msra.mxu0 %v971
        %1611 = vmatprep.subr.mxu0 0.0
        %1612 = vmatpush1.msra.mxu0 %v972
        %1613 = vmatprep.subr.mxu0 0.0
        %1614 = vmatpush1.msra.mxu0 0.0
        %1615 = vmatprep.subr.mxu0 0.0
        %1616 = vmatpush1.msra.mxu0 0.0
        %1617 = vmatprep.subr.mxu0 0.0
        %1618 = vmatpush1.msra.mxu0 0.0
        %1619 = vmatprep.subr.mxu0 0.0
        %1620 = vmatpush1.msra.mxu0 0.0
        %1621 = vmatprep.subr.mxu0 0.0
        %1622 = vmatpush1.msra.mxu0 0.0
        %1623 = vmatprep.subr.mxu0 0.0
        %1624 = vmatpush1.msra.mxu0 0.0
        %1625 = vmatprep.subr.mxu0 0.0
        %1626 = vmatpush1.msra.mxu0 0.0
        %1627 = vmatprep.subr.mxu0 0.0
        %1628 = vmatpush1.msra.mxu0 0.0
        %1629 = vmatprep.subr.mxu0 0.0
        %1630 = vmatpush1.msra.mxu0 0.0
        %1631 = vmatprep.subr.mxu0 0.0
        %1632 = vmatpush1.msra.mxu0 0.0
        %1633 = vmatprep.subr.mxu0 0.0
        %1634 = vmatpush1.msra.mxu0 0.0
        %1635 = vmatprep.subr.mxu0 0.0
        %1636 = vmatpush1.msra.mxu0 0.0
        %1637 = vmatprep.subr.mxu0 0.0
        %1638 = vmatpush1.msra.mxu0 0.0
        %1639 = vmatprep.subr.mxu0 0.0
        %1640 = vmatpush1.msra.mxu0 0.0
        %1641 = vmatprep.subr.mxu0 0.0
        %1642 = vmatpush1.msra.mxu0 0.0
        %1643 = vmatprep.subr.mxu0 0.0
        %1644 = vmatpush1.msra.mxu0 0.0
        %1645 = vmatprep.subr.mxu0 0.0
        %1646 = vmatpush1.msra.mxu0 0.0
        %1647 = vmatprep.subr.mxu0 0.0
        %1648 = vmatpush1.msra.mxu0 0.0
        %1649 = vmatprep.subr.mxu0 0.0
        %1650 = vmatpush1.msra.mxu0 0.0
        %1651 = vmatprep.subr.mxu0 0.0
        %1652 = vmatpush1.msra.mxu0 0.0
        %1653 = vmatprep.subr.mxu0 0.0
        %1654 = vmatpush1.msra.mxu0 0.0
        %1655 = vmatprep.subr.mxu0 0.0
        %1656 = vmatpush1.msra.mxu0 0.0
        %1657 = vmatprep.subr.mxu0 0.0
        %1658 = vmatpush1.msra.mxu0 0.0
        %1659 = vmatprep.subr.mxu0 0.0
        %1660 = vmatpush1.msra.mxu0 0.0
        %1661 = vmatprep.subr.mxu0 0.0
        %1662 = vmatpush1.msra.mxu0 0.0
        %1663 = vmatprep.subr.mxu0 0.0
        %1664 = vmatpush1.msra.mxu0 0.0
        %1665 = vmatprep.subr.mxu0 0.0
        %1666 = vmatpush1.msra.mxu0 0.0
        %1667 = vmatprep.subr.mxu0 0.0
        %1668 = vmatpush1.msra.mxu0 0.0
        %1669 = vmatprep.mubr.f32.mxu0 0.0
        %1670 = vmatmul.mubr.f32.gmra.mrb[0].mxu0 %v1603
        %v1671 = vpop.f32.mrb[0].mxu0
        %v1672 = vadd.f32 0.0, %v1671
        %v1673 = vpop.f32.mrb[0].mxu0
        %1674 = vdwg.mxu0
        %1676 = vrot.lane.b32.xlu0 %v1672, 32
        %v1677 = vpop.permute.xlu0 %1676
        %v1679 = vadd.f32 %v1498, %v1677
        %v1681 = vlaneseq
        %v1682 = vshrl.u32 %v1681, 7
        %v1683 = vsub.s32 0, %v1682
        %v1684 = vrot.slane %v983, %v1683
        %1685 = vrot.lane.b32.xlu0 %v1684, 32
        %v1686 = vpop.permute.xlu0 %1685
        %v1688 = vadd.f32 %v1679, %v1686
        %1690 = vrot.lane.b32.xlu0 %v766, 32
        %v1691 = vpop.permute.xlu0 %1690
        %v1693 = vadd.f32 %v1688, %v1691
        %1695 = vrot.lane.b32.xlu0 %v1693, 96
        %v1696 = vpop.permute.xlu0 %1695
        %v1697 = vsel %vm632, %v1696, 0
        %1699 = vmatprep.subr.mxu0 0.0
        %1700 = vmatpush1.msra.mxu0 %v772
        %1701 = vmatprep.subr.mxu0 0.0
        %1702 = vmatpush1.msra.mxu0 %v773
        %1703 = vmatprep.subr.mxu0 0.0
        %1704 = vmatpush1.msra.mxu0 %v774
        %1705 = vmatprep.subr.mxu0 0.0
        %1706 = vmatpush1.msra.mxu0 %v775
        %1707 = vmatprep.subr.mxu0 0.0
        %1708 = vmatpush1.msra.mxu0 0.0
        %1709 = vmatprep.subr.mxu0 0.0
        %1710 = vmatpush1.msra.mxu0 0.0
        %1711 = vmatprep.subr.mxu0 0.0
        %1712 = vmatpush1.msra.mxu0 0.0
        %1713 = vmatprep.subr.mxu0 0.0
        %1714 = vmatpush1.msra.mxu0 0.0
        %1715 = vmatprep.subr.mxu0 0.0
        %1716 = vmatpush1.msra.mxu0 0.0
        %1717 = vmatprep.subr.mxu0 0.0
        %1718 = vmatpush1.msra.mxu0 0.0
        %1719 = vmatprep.subr.mxu0 0.0
        %1720 = vmatpush1.msra.mxu0 0.0
        %1721 = vmatprep.subr.mxu0 0.0
        %1722 = vmatpush1.msra.mxu0 0.0
        %1723 = vmatprep.subr.mxu0 0.0
        %1724 = vmatpush1.msra.mxu0 0.0
        %1725 = vmatprep.subr.mxu0 0.0
        %1726 = vmatpush1.msra.mxu0 0.0
        %1727 = vmatprep.subr.mxu0 0.0
        %1728 = vmatpush1.msra.mxu0 0.0
        %1729 = vmatprep.subr.mxu0 0.0
        %1730 = vmatpush1.msra.mxu0 0.0
        %1731 = vmatprep.subr.mxu0 0.0
        %1732 = vmatpush1.msra.mxu0 0.0
        %1733 = vmatprep.subr.mxu0 0.0
        %1734 = vmatpush1.msra.mxu0 0.0
        %1735 = vmatprep.subr.mxu0 0.0
        %1736 = vmatpush1.msra.mxu0 0.0
        %1737 = vmatprep.subr.mxu0 0.0
        %1738 = vmatpush1.msra.mxu0 0.0
        %1739 = vmatprep.subr.mxu0 0.0
        %1740 = vmatpush1.msra.mxu0 0.0
        %1741 = vmatprep.subr.mxu0 0.0
        %1742 = vmatpush1.msra.mxu0 0.0
        %1743 = vmatprep.subr.mxu0 0.0
        %1744 = vmatpush1.msra.mxu0 0.0
        %1745 = vmatprep.subr.mxu0 0.0
        %1746 = vmatpush1.msra.mxu0 0.0
        %1747 = vmatprep.subr.mxu0 0.0
        %1748 = vmatpush1.msra.mxu0 0.0
        %1749 = vmatprep.subr.mxu0 0.0
        %1750 = vmatpush1.msra.mxu0 0.0
        %1751 = vmatprep.subr.mxu0 0.0
        %1752 = vmatpush1.msra.mxu0 0.0
        %1753 = vmatprep.subr.mxu0 0.0
        %1754 = vmatpush1.msra.mxu0 0.0
        %1755 = vmatprep.subr.mxu0 0.0
        %1756 = vmatpush1.msra.mxu0 0.0
        %1757 = vmatprep.subr.mxu0 0.0
        %1758 = vmatpush1.msra.mxu0 0.0
        %1759 = vmatprep.subr.mxu0 0.0
        %1760 = vmatpush1.msra.mxu0 0.0
        %1761 = vmatprep.subr.mxu0 0.0
        %1762 = vmatpush1.msra.mxu0 0.0
        %1763 = vmatprep.mubr.f32.mxu0 0.0
        %1764 = vmatmul.mubr.f32.gmra.mrb[0].mxu0 %v1697
        %v1765 = vpop.f32.mrb[0].mxu0
        %v1766 = vadd.f32 0.0, %v1765
        %v1767 = vpop.f32.mrb[0].mxu0
        %1768 = vdwg.mxu0
        %1769 = vmatprep.subr.mxu0 0.0
        %1770 = vmatpush1.msra.mxu0 %v776
        %1771 = vmatprep.subr.mxu0 0.0
        %1772 = vmatpush1.msra.mxu0 %v777
        %1773 = vmatprep.subr.mxu0 0.0
        %1774 = vmatpush1.msra.mxu0 %v778
        %1775 = vmatprep.subr.mxu0 0.0
        %1776 = vmatpush1.msra.mxu0 %v779
        %1777 = vmatprep.subr.mxu0 0.0
        %1778 = vmatpush1.msra.mxu0 0.0
        %1779 = vmatprep.subr.mxu0 0.0
        %1780 = vmatpush1.msra.mxu0 0.0
        %1781 = vmatprep.subr.mxu0 0.0
        %1782 = vmatpush1.msra.mxu0 0.0
        %1783 = vmatprep.subr.mxu0 0.0
        %1784 = vmatpush1.msra.mxu0 0.0
        %1785 = vmatprep.subr.mxu0 0.0
        %1786 = vmatpush1.msra.mxu0 0.0
        %1787 = vmatprep.subr.mxu0 0.0
        %1788 = vmatpush1.msra.mxu0 0.0
        %1789 = vmatprep.subr.mxu0 0.0
        %1790 = vmatpush1.msra.mxu0 0.0
        %1791 = vmatprep.subr.mxu0 0.0
        %1792 = vmatpush1.msra.mxu0 0.0
        %1793 = vmatprep.subr.mxu0 0.0
        %1794 = vmatpush1.msra.mxu0 0.0
        %1795 = vmatprep.subr.mxu0 0.0
        %1796 = vmatpush1.msra.mxu0 0.0
        %1797 = vmatprep.subr.mxu0 0.0
        %1798 = vmatpush1.msra.mxu0 0.0
        %1799 = vmatprep.subr.mxu0 0.0
        %1800 = vmatpush1.msra.mxu0 0.0
        %1801 = vmatprep.subr.mxu0 0.0
        %1802 = vmatpush1.msra.mxu0 0.0
        %1803 = vmatprep.subr.mxu0 0.0
        %1804 = vmatpush1.msra.mxu0 0.0
        %1805 = vmatprep.subr.mxu0 0.0
        %1806 = vmatpush1.msra.mxu0 0.0
        %1807 = vmatprep.subr.mxu0 0.0
        %1808 = vmatpush1.msra.mxu0 0.0
        %1809 = vmatprep.subr.mxu0 0.0
        %1810 = vmatpush1.msra.mxu0 0.0
        %1811 = vmatprep.subr.mxu0 0.0
        %1812 = vmatpush1.msra.mxu0 0.0
        %1813 = vmatprep.subr.mxu0 0.0
        %1814 = vmatpush1.msra.mxu0 0.0
        %1815 = vmatprep.subr.mxu0 0.0
        %1816 = vmatpush1.msra.mxu0 0.0
        %1817 = vmatprep.subr.mxu0 0.0
        %1818 = vmatpush1.msra.mxu0 0.0
        %1819 = vmatprep.subr.mxu0 0.0
        %1820 = vmatpush1.msra.mxu0 0.0
        %1821 = vmatprep.subr.mxu0 0.0
        %1822 = vmatpush1.msra.mxu0 0.0
        %1823 = vmatprep.subr.mxu0 0.0
        %1824 = vmatpush1.msra.mxu0 0.0
        %1825 = vmatprep.subr.mxu0 0.0
        %1826 = vmatpush1.msra.mxu0 0.0
        %1827 = vmatprep.subr.mxu0 0.0
        %1828 = vmatpush1.msra.mxu0 0.0
        %1829 = vmatprep.subr.mxu0 0.0
        %1830 = vmatpush1.msra.mxu0 0.0
        %1831 = vmatprep.subr.mxu0 0.0
        %1832 = vmatpush1.msra.mxu0 0.0
        %1833 = vmatprep.mubr.f32.mxu0 0.0
        %1834 = vmatmul.mubr.f32.gmra.mrb[0].mxu0 %v1697
        %v1835 = vpop.f32.mrb[0].mxu0
        %v1836 = vadd.f32 0.0, %v1835
        %v1837 = vpop.f32.mrb[0].mxu0
        %1838 = vdwg.mxu0
        %v1840 = vsel %vm1238, %v878, 0
        %v1843 = vsel %vm1238, %v883, 0
        %v1846 = vsel %vm1238, %v1766, 0
        %1848 = vmatprep.subr.mxu0 0.0
        %1849 = vmatpush1.xpose.msra.mxu0 %v1846
        %1850 = vmatprep.subr.mxu0 0.0
        %1851 = vmatpush1.xpose.msra.mxu0 0.0
        %1852 = vmatprep.subr.mxu0 0.0
        %1853 = vmatpush1.xpose.msra.mxu0 0.0
        %1854 = vmatprep.subr.mxu0 0.0
        %1855 = vmatpush1.xpose.msra.mxu0 0.0
        %1856 = vmatprep.subr.mxu0 0.0
        %1857 = vmatpush1.xpose.msra.mxu0 0.0
        %1858 = vmatprep.subr.mxu0 0.0
        %1859 = vmatpush1.xpose.msra.mxu0 0.0
        %1860 = vmatprep.subr.mxu0 0.0
        %1861 = vmatpush1.xpose.msra.mxu0 0.0
        %1862 = vmatprep.subr.mxu0 0.0
        %1863 = vmatpush1.xpose.msra.mxu0 0.0
        %1864 = vmatprep.subr.mxu0 0.0
        %1865 = vmatpush1.xpose.msra.mxu0 0.0
        %1866 = vmatprep.subr.mxu0 0.0
        %1867 = vmatpush1.xpose.msra.mxu0 0.0
        %1868 = vmatprep.subr.mxu0 0.0
        %1869 = vmatpush1.xpose.msra.mxu0 0.0
        %1870 = vmatprep.subr.mxu0 0.0
        %1871 = vmatpush1.xpose.msra.mxu0 0.0
        %1872 = vmatprep.subr.mxu0 0.0
        %1873 = vmatpush1.xpose.msra.mxu0 0.0
        %1874 = vmatprep.subr.mxu0 0.0
        %1875 = vmatpush1.xpose.msra.mxu0 0.0
        %1876 = vmatprep.subr.mxu0 0.0
        %1877 = vmatpush1.xpose.msra.mxu0 0.0
        %1878 = vmatprep.subr.mxu0 0.0
        %1879 = vmatpush1.xpose.msra.mxu0 0.0
        %1880 = vmatprep.subr.mxu0 0.0
        %1881 = vmatpush1.xpose.msra.mxu0 0.0
        %1882 = vmatprep.subr.mxu0 0.0
        %1883 = vmatpush1.xpose.msra.mxu0 0.0
        %1884 = vmatprep.subr.mxu0 0.0
        %1885 = vmatpush1.xpose.msra.mxu0 0.0
        %1886 = vmatprep.subr.mxu0 0.0
        %1887 = vmatpush1.xpose.msra.mxu0 0.0
        %1888 = vmatprep.subr.mxu0 0.0
        %1889 = vmatpush1.xpose.msra.mxu0 0.0
        %1890 = vmatprep.subr.mxu0 0.0
        %1891 = vmatpush1.xpose.msra.mxu0 0.0
        %1892 = vmatprep.subr.mxu0 0.0
        %1893 = vmatpush1.xpose.msra.mxu0 0.0
        %1894 = vmatprep.subr.mxu0 0.0
        %1895 = vmatpush1.xpose.msra.mxu0 0.0
        %1896 = vmatprep.subr.mxu0 0.0
        %1897 = vmatpush1.xpose.msra.mxu0 0.0
        %1898 = vmatprep.subr.mxu0 0.0
        %1899 = vmatpush1.xpose.msra.mxu0 0.0
        %1900 = vmatprep.subr.mxu0 0.0
        %1901 = vmatpush1.xpose.msra.mxu0 0.0
        %1902 = vmatprep.subr.mxu0 0.0
        %1903 = vmatpush1.xpose.msra.mxu0 0.0
        %1904 = vmatprep.subr.mxu0 0.0
        %1905 = vmatpush1.xpose.msra.mxu0 0.0
        %1906 = vmatprep.subr.mxu0 0.0
        %1907 = vmatpush1.xpose.msra.mxu0 0.0
        %1908 = vmatprep.subr.mxu0 0.0
        %1909 = vmatpush1.xpose.msra.mxu0 0.0
        %1910 = vmatprep.subr.mxu0 0.0
        %1911 = vmatpush1.xpose.msra.mxu0 0.0
        %1912 = vmatprep.mubr.f32.mxu0 0.0
        %1913 = vmatmul.mubr.f32.gmra.mrb[0].mxu0 %v1840
        %v1914 = vpop.f32.mrb[0].mxu0
        %v1915 = vadd.f32 0.0, %v1914
        %v1916 = vpop.f32.mrb[0].mxu0
        %1917 = vmatprep.mubr.f32.mxu0 0.0
        %1918 = vmatmul.mubr.f32.gmra.mrb[0].mxu0 %v1843
        %v1919 = vpop.f32.mrb[0].mxu0
        %v1920 = vadd.f32 0.0, %v1919
        %v1921 = vpop.f32.mrb[0].mxu0
        %1922 = vdwg.mxu0
        %v1923 = vsel %vm1163, %v1915, -inf
        %1924 = vmax.xlane.f32.xlu0 %v1923
        %v1925 = vpop.xlane.xlu0 %1924
        %v1926 = vsel %vm1163, %v1920, -inf
        %1927 = vmax.xlane.f32.xlu0 %v1926
        %v1928 = vpop.xlane.xlu0 %1927
        %v1929 = vsub.f32 %v1915, %v1925
        %v1930 = vsub.f32 %v1920, %v1928
        %v1931 = vmul.f32 %v1929, 1.442695
        %v1932 = vpow.pop %v1931
        %v1933 = vmul.f32 %v1930, 1.442695
        %v1934 = vpow.pop %v1933
        %v1935 = vsel %vm1163, %v1932, 0.0
        %1936 = vadd.xlane.f32.xlu0 %v1935
        %v1937 = vpop.xlane.xlu0 %1936
        %v1938 = vsel %vm1163, %v1934, 0.0
        %1939 = vadd.xlane.f32.xlu0 %v1938
        %v1940 = vpop.xlane.xlu0 %1939
        %v1941 = vrcp.pop %v1937
        %v1942 = vrcp.pop %v1940
        %v1943 = vmul.f32 %v1932, %v1941
        %v1944 = vmul.f32 %v1934, %v1942
        %v1946 = vsel %vm1163, %v1943, 0
        %v1949 = vsel %vm1163, %v1944, 0
        %vm1951 = vcmask 1045504
        %v1953 = vsel %vm1951, %v1836, 0
        %1955 = vmatprep.subr.mxu0 0.0
        %1956 = vmatpush1.msra.mxu0 %v1953
        %1957 = vmatprep.subr.mxu0 0.0
        %1958 = vmatpush1.msra.mxu0 0.0
        %1959 = vmatprep.subr.mxu0 0.0
        %1960 = vmatpush1.msra.mxu0 0.0
        %1961 = vmatprep.subr.mxu0 0.0
        %1962 = vmatpush1.msra.mxu0 0.0
        %1963 = vmatprep.subr.mxu0 0.0
        %1964 = vmatpush1.msra.mxu0 0.0
        %1965 = vmatprep.subr.mxu0 0.0
        %1966 = vmatpush1.msra.mxu0 0.0
        %1967 = vmatprep.subr.mxu0 0.0
        %1968 = vmatpush1.msra.mxu0 0.0
        %1969 = vmatprep.subr.mxu0 0.0
        %1970 = vmatpush1.msra.mxu0 0.0
        %1971 = vmatprep.subr.mxu0 0.0
        %1972 = vmatpush1.msra.mxu0 0.0
        %1973 = vmatprep.subr.mxu0 0.0
        %1974 = vmatpush1.msra.mxu0 0.0
        %1975 = vmatprep.subr.mxu0 0.0
        %1976 = vmatpush1.msra.mxu0 0.0
        %1977 = vmatprep.subr.mxu0 0.0
        %1978 = vmatpush1.msra.mxu0 0.0
        %1979 = vmatprep.subr.mxu0 0.0
        %1980 = vmatpush1.msra.mxu0 0.0
        %1981 = vmatprep.subr.mxu0 0.0
        %1982 = vmatpush1.msra.mxu0 0.0
        %1983 = vmatprep.subr.mxu0 0.0
        %1984 = vmatpush1.msra.mxu0 0.0
        %1985 = vmatprep.subr.mxu0 0.0
        %1986 = vmatpush1.msra.mxu0 0.0
        %1987 = vmatprep.subr.mxu0 0.0
        %1988 = vmatpush1.msra.mxu0 0.0
        %1989 = vmatprep.subr.mxu0 0.0
        %1990 = vmatpush1.msra.mxu0 0.0
        %1991 = vmatprep.subr.mxu0 0.0
        %1992 = vmatpush1.msra.mxu0 0.0
        %1993 = vmatprep.subr.mxu0 0.0
        %1994 = vmatpush1.msra.mxu0 0.0
        %1995 = vmatprep.subr.mxu0 0.0
        %1996 = vmatpush1.msra.mxu0 0.0
        %1997 = vmatprep.subr.mxu0 0.0
        %1998 = vmatpush1.msra.mxu0 0.0
        %1999 = vmatprep.subr.mxu0 0.0
        %2000 = vmatpush1.msra.mxu0 0.0
        %2001 = vmatprep.subr.mxu0 0.0
        %2002 = vmatpush1.msra.mxu0 0.0
        %2003 = vmatprep.subr.mxu0 0.0
        %2004 = vmatpush1.msra.mxu0 0.0
        %2005 = vmatprep.subr.mxu0 0.0
        %2006 = vmatpush1.msra.mxu0 0.0
        %2007 = vmatprep.subr.mxu0 0.0
        %2008 = vmatpush1.msra.mxu0 0.0
        %2009 = vmatprep.subr.mxu0 0.0
        %2010 = vmatpush1.msra.mxu0 0.0
        %2011 = vmatprep.subr.mxu0 0.0
        %2012 = vmatpush1.msra.mxu0 0.0
        %2013 = vmatprep.subr.mxu0 0.0
        %2014 = vmatpush1.msra.mxu0 0.0
        %2015 = vmatprep.subr.mxu0 0.0
        %2016 = vmatpush1.msra.mxu0 0.0
        %2017 = vmatprep.subr.mxu0 0.0
        %2018 = vmatpush1.msra.mxu0 0.0
        %2019 = vmatprep.mubr.f32.mxu0 0.0
        %2020 = vmatmul.mubr.f32.gmra.mrb[0].mxu0 %v1946
        %v2021 = vpop.f32.mrb[0].mxu0
        %v2022 = vadd.f32 0.0, %v2021
        %v2023 = vpop.f32.mrb[0].mxu0
        %2024 = vmatprep.mubr.f32.mxu0 0.0
        %2025 = vmatmul.mubr.f32.gmra.mrb[0].mxu0 %v1949
        %v2026 = vpop.f32.mrb[0].mxu0
        %v2027 = vadd.f32 0.0, %v2026
        %v2028 = vpop.f32.mrb[0].mxu0
        %2029 = vdwg.mxu0
        %2030 = vrot.lane.b32.xlu0 %v878, 112
        %v2031 = vpop.permute.xlu0 %2030
        %2032 = vrot.lane.b32.xlu0 %v883, 112
        %v2033 = vpop.permute.xlu0 %2032
        %2034 = vrot.lane.b32.xlu0 %v1766, 112
        %v2035 = vpop.permute.xlu0 %2034
        %v2036 = vsel %vm1238, %v2031, 0
        %v2038 = vsel %vm1238, %v2033, 0
        %v2040 = vsel %vm1238, %v2035, 0
        %2042 = vmatprep.subr.mxu0 0.0
        %2043 = vmatpush1.xpose.msra.mxu0 %v2040
        %2044 = vmatprep.subr.mxu0 0.0
        %2045 = vmatpush1.xpose.msra.mxu0 0.0
        %2046 = vmatprep.subr.mxu0 0.0
        %2047 = vmatpush1.xpose.msra.mxu0 0.0
        %2048 = vmatprep.subr.mxu0 0.0
        %2049 = vmatpush1.xpose.msra.mxu0 0.0
        %2050 = vmatprep.subr.mxu0 0.0
        %2051 = vmatpush1.xpose.msra.mxu0 0.0
        %2052 = vmatprep.subr.mxu0 0.0
        %2053 = vmatpush1.xpose.msra.mxu0 0.0
        %2054 = vmatprep.subr.mxu0 0.0
        %2055 = vmatpush1.xpose.msra.mxu0 0.0
        %2056 = vmatprep.subr.mxu0 0.0
        %2057 = vmatpush1.xpose.msra.mxu0 0.0
        %2058 = vmatprep.subr.mxu0 0.0
        %2059 = vmatpush1.xpose.msra.mxu0 0.0
        %2060 = vmatprep.subr.mxu0 0.0
        %2061 = vmatpush1.xpose.msra.mxu0 0.0
        %2062 = vmatprep.subr.mxu0 0.0
        %2063 = vmatpush1.xpose.msra.mxu0 0.0
        %2064 = vmatprep.subr.mxu0 0.0
        %2065 = vmatpush1.xpose.msra.mxu0 0.0
        %2066 = vmatprep.subr.mxu0 0.0
        %2067 = vmatpush1.xpose.msra.mxu0 0.0
        %2068 = vmatprep.subr.mxu0 0.0
        %2069 = vmatpush1.xpose.msra.mxu0 0.0
        %2070 = vmatprep.subr.mxu0 0.0
        %2071 = vmatpush1.xpose.msra.mxu0 0.0
        %2072 = vmatprep.subr.mxu0 0.0
        %2073 = vmatpush1.xpose.msra.mxu0 0.0
        %2074 = vmatprep.subr.mxu0 0.0
        %2075 = vmatpush1.xpose.msra.mxu0 0.0
        %2076 = vmatprep.subr.mxu0 0.0
        %2077 = vmatpush1.xpose.msra.mxu0 0.0
        %2078 = vmatprep.subr.mxu0 0.0
        %2079 = vmatpush1.xpose.msra.mxu0 0.0
        %2080 = vmatprep.subr.mxu0 0.0
        %2081 = vmatpush1.xpose.msra.mxu0 0.0
        %2082 = vmatprep.subr.mxu0 0.0
        %2083 = vmatpush1.xpose.msra.mxu0 0.0
        %2084 = vmatprep.subr.mxu0 0.0
        %2085 = vmatpush1.xpose.msra.mxu0 0.0
        %2086 = vmatprep.subr.mxu0 0.0
        %2087 = vmatpush1.xpose.msra.mxu0 0.0
        %2088 = vmatprep.subr.mxu0 0.0
        %2089 = vmatpush1.xpose.msra.mxu0 0.0
        %2090 = vmatprep.subr.mxu0 0.0
        %2091 = vmatpush1.xpose.msra.mxu0 0.0
        %2092 = vmatprep.subr.mxu0 0.0
        %2093 = vmatpush1.xpose.msra.mxu0 0.0
        %2094 = vmatprep.subr.mxu0 0.0
        %2095 = vmatpush1.xpose.msra.mxu0 0.0
        %2096 = vmatprep.subr.mxu0 0.0
        %2097 = vmatpush1.xpose.msra.mxu0 0.0
        %2098 = vmatprep.subr.mxu0 0.0
        %2099 = vmatpush1.xpose.msra.mxu0 0.0
        %2100 = vmatprep.subr.mxu0 0.0
        %2101 = vmatpush1.xpose.msra.mxu0 0.0
        %2102 = vmatprep.subr.mxu0 0.0
        %2103 = vmatpush1.xpose.msra.mxu0 0.0
        %2104 = vmatprep.subr.mxu0 0.0
        %2105 = vmatpush1.xpose.msra.mxu0 0.0
        %2106 = vmatprep.mubr.f32.mxu0 0.0
        %2107 = vmatmul.mubr.f32.gmra.mrb[0].mxu0 %v2036
        %v2108 = vpop.f32.mrb[0].mxu0
        %v2109 = vadd.f32 0.0, %v2108
        %v2110 = vpop.f32.mrb[0].mxu0
        %2111 = vmatprep.mubr.f32.mxu0 0.0
        %2112 = vmatmul.mubr.f32.gmra.mrb[0].mxu0 %v2038
        %v2113 = vpop.f32.mrb[0].mxu0
        %v2114 = vadd.f32 0.0, %v2113
        %v2115 = vpop.f32.mrb[0].mxu0
        %2116 = vdwg.mxu0
        %v2117 = vsel %vm1163, %v2109, -inf
        %2118 = vmax.xlane.f32.xlu0 %v2117
        %v2119 = vpop.xlane.xlu0 %2118
        %v2120 = vsel %vm1163, %v2114, -inf
        %2121 = vmax.xlane.f32.xlu0 %v2120
        %v2122 = vpop.xlane.xlu0 %2121
        %v2123 = vsub.f32 %v2109, %v2119
        %v2124 = vsub.f32 %v2114, %v2122
        %v2125 = vmul.f32 %v2123, 1.442695
        %v2126 = vpow.pop %v2125
        %v2127 = vmul.f32 %v2124, 1.442695
        %v2128 = vpow.pop %v2127
        %v2129 = vsel %vm1163, %v2126, 0.0
        %2130 = vadd.xlane.f32.xlu0 %v2129
        %v2131 = vpop.xlane.xlu0 %2130
        %v2132 = vsel %vm1163, %v2128, 0.0
        %2133 = vadd.xlane.f32.xlu0 %v2132
        %v2134 = vpop.xlane.xlu0 %2133
        %v2135 = vrcp.pop %v2131
        %v2136 = vrcp.pop %v2134
        %v2137 = vmul.f32 %v2126, %v2135
        %v2138 = vmul.f32 %v2128, %v2136
        %v2139 = vadd.f32 %v1943, %v2137
        %v2140 = vadd.f32 %v1944, %v2138
        %2141 = vrot.lane.b32.xlu0 %v1836, 112
        %v2142 = vpop.permute.xlu0 %2141
        %v2144 = vsel %vm1163, %v2137, 0
        %v2147 = vsel %vm1163, %v2138, 0
        %v2149 = vsel %vm1951, %v2142, 0
        %2151 = vmatprep.subr.mxu0 0.0
        %2152 = vmatpush1.msra.mxu0 %v2149
        %2153 = vmatprep.subr.mxu0 0.0
        %2154 = vmatpush1.msra.mxu0 0.0
        %2155 = vmatprep.subr.mxu0 0.0
        %2156 = vmatpush1.msra.mxu0 0.0
        %2157 = vmatprep.subr.mxu0 0.0
        %2158 = vmatpush1.msra.mxu0 0.0
        %2159 = vmatprep.subr.mxu0 0.0
        %2160 = vmatpush1.msra.mxu0 0.0
        %2161 = vmatprep.subr.mxu0 0.0
        %2162 = vmatpush1.msra.mxu0 0.0
        %2163 = vmatprep.subr.mxu0 0.0
        %2164 = vmatpush1.msra.mxu0 0.0
        %2165 = vmatprep.subr.mxu0 0.0
        %2166 = vmatpush1.msra.mxu0 0.0
        %2167 = vmatprep.subr.mxu0 0.0
        %2168 = vmatpush1.msra.mxu0 0.0
        %2169 = vmatprep.subr.mxu0 0.0
        %2170 = vmatpush1.msra.mxu0 0.0
        %2171 = vmatprep.subr.mxu0 0.0
        %2172 = vmatpush1.msra.mxu0 0.0
        %2173 = vmatprep.subr.mxu0 0.0
        %2174 = vmatpush1.msra.mxu0 0.0
        %2175 = vmatprep.subr.mxu0 0.0
        %2176 = vmatpush1.msra.mxu0 0.0
        %2177 = vmatprep.subr.mxu0 0.0
        %2178 = vmatpush1.msra.mxu0 0.0
        %2179 = vmatprep.subr.mxu0 0.0
        %2180 = vmatpush1.msra.mxu0 0.0
        %2181 = vmatprep.subr.mxu0 0.0
        %2182 = vmatpush1.msra.mxu0 0.0
        %2183 = vmatprep.subr.mxu0 0.0
        %2184 = vmatpush1.msra.mxu0 0.0
        %2185 = vmatprep.subr.mxu0 0.0
        %2186 = vmatpush1.msra.mxu0 0.0
        %2187 = vmatprep.subr.mxu0 0.0
        %2188 = vmatpush1.msra.mxu0 0.0
        %2189 = vmatprep.subr.mxu0 0.0
        %2190 = vmatpush1.msra.mxu0 0.0
        %2191 = vmatprep.subr.mxu0 0.0
        %2192 = vmatpush1.msra.mxu0 0.0
        %2193 = vmatprep.subr.mxu0 0.0
        %2194 = vmatpush1.msra.mxu0 0.0
        %2195 = vmatprep.subr.mxu0 0.0
        %2196 = vmatpush1.msra.mxu0 0.0
        %2197 = vmatprep.subr.mxu0 0.0
        %2198 = vmatpush1.msra.mxu0 0.0
        %2199 = vmatprep.subr.mxu0 0.0
        %2200 = vmatpush1.msra.mxu0 0.0
        %2201 = vmatprep.subr.mxu0 0.0
        %2202 = vmatpush1.msra.mxu0 0.0
        %2203 = vmatprep.subr.mxu0 0.0
        %2204 = vmatpush1.msra.mxu0 0.0
        %2205 = vmatprep.subr.mxu0 0.0
        %2206 = vmatpush1.msra.mxu0 0.0
        %2207 = vmatprep.subr.mxu0 0.0
        %2208 = vmatpush1.msra.mxu0 0.0
        %2209 = vmatprep.subr.mxu0 0.0
        %2210 = vmatpush1.msra.mxu0 0.0
        %2211 = vmatprep.subr.mxu0 0.0
        %2212 = vmatpush1.msra.mxu0 0.0
        %2213 = vmatprep.subr.mxu0 0.0
        %2214 = vmatpush1.msra.mxu0 0.0
        %2215 = vmatprep.mubr.f32.mxu0 0.0
        %2216 = vmatmul.mubr.f32.gmra.mrb[0].mxu0 %v2144
        %v2217 = vpop.f32.mrb[0].mxu0
        %v2218 = vadd.f32 0.0, %v2217
        %v2219 = vpop.f32.mrb[0].mxu0
        %2220 = vmatprep.mubr.f32.mxu0 0.0
        %2221 = vmatmul.mubr.f32.gmra.mrb[0].mxu0 %v2147
        %v2222 = vpop.f32.mrb[0].mxu0
        %v2223 = vadd.f32 0.0, %v2222
        %v2224 = vpop.f32.mrb[0].mxu0
        %2225 = vdwg.mxu0
        %2228 = vrot.lane.b32.xlu0 %v2218, 16
        %v2229 = vpop.permute.xlu0 %2228
        %2230 = vrot.lane.b32.xlu0 %v2223, 16
        %v2231 = vpop.permute.xlu0 %2230
        %v2234 = vsel %vm1238, %v2022, %v2229
        %v2235 = vsel %vm1238, %v2027, %v2231
        %v2237 = vlaneseq
        %v2238 = vshrl.u32 %v2237, 7
        %v2239 = vsub.s32 0, %v2238
        %v2240 = vrot.slane %v797, %v2239
        %v2243 = vsel %vm632, %v2234, 0
        %v2246 = vsel %vm632, %v2235, 0
        %2248 = vmatprep.subr.mxu0 0.0
        %2249 = vmatpush1.msra.mxu0 %v793
        %2250 = vmatprep.subr.mxu0 0.0
        %2251 = vmatpush1.msra.mxu0 %v794
        %2252 = vmatprep.subr.mxu0 0.0
        %2253 = vmatpush1.msra.mxu0 %v795
        %2254 = vmatprep.subr.mxu0 0.0
        %2255 = vmatpush1.msra.mxu0 %v796
        %2256 = vmatprep.subr.mxu0 0.0
        %2257 = vmatpush1.msra.mxu0 0.0
        %2258 = vmatprep.subr.mxu0 0.0
        %2259 = vmatpush1.msra.mxu0 0.0
        %2260 = vmatprep.subr.mxu0 0.0
        %2261 = vmatpush1.msra.mxu0 0.0
        %2262 = vmatprep.subr.mxu0 0.0
        %2263 = vmatpush1.msra.mxu0 0.0
        %2264 = vmatprep.subr.mxu0 0.0
        %2265 = vmatpush1.msra.mxu0 0.0
        %2266 = vmatprep.subr.mxu0 0.0
        %2267 = vmatpush1.msra.mxu0 0.0
        %2268 = vmatprep.subr.mxu0 0.0
        %2269 = vmatpush1.msra.mxu0 0.0
        %2270 = vmatprep.subr.mxu0 0.0
        %2271 = vmatpush1.msra.mxu0 0.0
        %2272 = vmatprep.subr.mxu0 0.0
        %2273 = vmatpush1.msra.mxu0 0.0
        %2274 = vmatprep.subr.mxu0 0.0
        %2275 = vmatpush1.msra.mxu0 0.0
        %2276 = vmatprep.subr.mxu0 0.0
        %2277 = vmatpush1.msra.mxu0 0.0
        %2278 = vmatprep.subr.mxu0 0.0
        %2279 = vmatpush1.msra.mxu0 0.0
        %2280 = vmatprep.subr.mxu0 0.0
        %2281 = vmatpush1.msra.mxu0 0.0
        %2282 = vmatprep.subr.mxu0 0.0
        %2283 = vmatpush1.msra.mxu0 0.0
        %2284 = vmatprep.subr.mxu0 0.0
        %2285 = vmatpush1.msra.mxu0 0.0
        %2286 = vmatprep.subr.mxu0 0.0
        %2287 = vmatpush1.msra.mxu0 0.0
        %2288 = vmatprep.subr.mxu0 0.0
        %2289 = vmatpush1.msra.mxu0 0.0
        %2290 = vmatprep.subr.mxu0 0.0
        %2291 = vmatpush1.msra.mxu0 0.0
        %2292 = vmatprep.subr.mxu0 0.0
        %2293 = vmatpush1.msra.mxu0 0.0
        %2294 = vmatprep.subr.mxu0 0.0
        %2295 = vmatpush1.msra.mxu0 0.0
        %2296 = vmatprep.subr.mxu0 0.0
        %2297 = vmatpush1.msra.mxu0 0.0
        %2298 = vmatprep.subr.mxu0 0.0
        %2299 = vmatpush1.msra.mxu0 0.0
        %2300 = vmatprep.subr.mxu0 0.0
        %2301 = vmatpush1.msra.mxu0 0.0
        %2302 = vmatprep.subr.mxu0 0.0
        %2303 = vmatpush1.msra.mxu0 0.0
        %2304 = vmatprep.subr.mxu0 0.0
        %2305 = vmatpush1.msra.mxu0 0.0
        %2306 = vmatprep.subr.mxu0 0.0
        %2307 = vmatpush1.msra.mxu0 0.0
        %2308 = vmatprep.subr.mxu0 0.0
        %2309 = vmatpush1.msra.mxu0 0.0
        %2310 = vmatprep.subr.mxu0 0.0
        %2311 = vmatpush1.msra.mxu0 0.0
        %2312 = vmatprep.mubr.f32.mxu0 0.0
        %2313 = vmatmul.mubr.f32.gmra.mrb[0].mxu0 %v2243
        %v2314 = vpop.f32.mrb[0].mxu0
        %v2315 = vadd.f32 %v2240, %v2314
        %v2316 = vpop.f32.mrb[0].mxu0
        %2317 = vmatprep.mubr.f32.mxu0 0.0
        %2318 = vmatmul.mubr.f32.gmra.mrb[0].mxu0 %v2246
        %v2319 = vpop.f32.mrb[0].mxu0
        %v2320 = vadd.f32 %v2240, %v2319
        %v2321 = vpop.f32.mrb[0].mxu0
        %2322 = vdwg.mxu0
        %v2323 = vmul.f32 %v2139, 0.5
        %v2324 = vmul.f32 %v2140, 0.5
        %vm2325 = vcmask 80896
        %v2326 = vsel %vm2325, %v2315, 0.0
        %v2327 = vsel %vm2325, %v2320, 0.0
        %v2328 = vadd.f32 %v2326, %v2327
        %v2329 = vrot.slane %v2328, 4
        %v2330 = vadd.f32 %v2328, %v2329
        %v2331 = vrot.slane %v2330, 2
        %v2332 = vadd.f32 %v2330, %v2331
        %v2333 = vrot.slane %v2332, 1
        %v2334 = vadd.f32 %v2332, %v2333
        %v2335 = vrcp.pop 16.0
        %v2336 = vmul.f32 %v2334, %v2335
        %s2337 = scalar_lea.vmem %s5, 96
        %v2338 = vld [vmem:[%s2337] sm:$0xff]
        %v2339 = vld [vmem:[%s2337 + $0x8] sm:$0xff]
        %v2340 = vld [vmem:[%s2337 + $0x10] sm:$0xff]
        %v2341 = vld [vmem:[%s2337 + $0x18] sm:$0xff]
        %v2342 = vld [vmem:[%s2337 + $0x20] sm:$0xff]
        %v2343 = vld [vmem:[%s2337 + $0x28] sm:$0xff]
        %v2344 = vld [vmem:[%s2337 + $0x30] sm:$0xff]
        %v2345 = vld [vmem:[%s2337 + $0x38] sm:$0xff]
        %v2346 = vld [vmem:[%s2337 + $0x40] sm:$0xff]
        %v2347 = vld [vmem:[%s2337 + $0x48] sm:$0xff]
        %v2348 = vld [vmem:[%s2337 + $0x50] sm:$0xff]
        %v2349 = vld [vmem:[%s2337 + $0x58] sm:$0xff]
        %s2350 = scalar_lea.vmem %s6, 64
        %v2351 = vld [vmem:[%s2350] sm:$0xff]
        %v2352 = vld [vmem:[%s2350 + $0x8] sm:$0xff]
        %v2353 = vld [vmem:[%s2350 + $0x10] sm:$0xff]
        %v2354 = vld [vmem:[%s2350 + $0x18] sm:$0xff]
        %v2355 = vld [vmem:[%s2350 + $0x20] sm:$0xff]
        %v2356 = vld [vmem:[%s2350 + $0x28] sm:$0xff]
        %v2357 = vld [vmem:[%s2350 + $0x30] sm:$0xff]
        %v2358 = vld [vmem:[%s2350 + $0x38] sm:$0xff]
        %s2359 = scalar_lea.vmem [#allocation6], 3
        %v2360 = vld [vmem:[%s2359] sm:$0x1]
        %v2361 = vld [vmem:[%s2359 + $0x1] sm:$0x1]
        %v2362 = vld [vmem:[%s2359 + $0x2] sm:$0x1]
        %s2363 = scalar_lea.vmem [#allocation7], 2
        %v2364 = vld [vmem:[%s2363] sm:$0x1]
        %v2365 = vld [vmem:[%s2363 + $0x1] sm:$0x1]
        %vm2366 = vcmask 258048
        %v2367 = vsel %vm2366, %v764, 0.0
        %2368 = vadd.xlane.f32.xlu0 %v2367
        %v2369 = vpop.xlane.xlu0 %2368
        %v2370 = vmul.f32 %v2369, %v639
        %v2371 = vsub.f32 %v764, %v2370
        %v2372 = vmul.f32 %v2371, %v2371
        %v2373 = vsel %vm2366, %v2372, 0.0
        %2374 = vadd.xlane.f32.xlu0 %v2373
        %v2375 = vpop.xlane.xlu0 %2374
        %v2376 = vmul.f32 %v2375, %v639
        %v2377 = vadd.f32 %v2376, 1e-05
        %v2378 = vrsqrt.pop %v2377
        %v2379 = vmul.f32 %v2371, %v2378
        %v2381 = vlaneseq
        %v2382 = vshrl.u32 %v2381, 7
        %v2383 = vsub.s32 0, %v2382
        %v2384 = vrot.slane %v2360, %v2383
        %v2387 = vsel %vm632, %v2379, 0
        %2389 = vmatprep.subr.mxu0 0.0
        %2390 = vmatpush1.msra.mxu0 %v2338
        %2391 = vmatprep.subr.mxu0 0.0
        %2392 = vmatpush1.msra.mxu0 %v2339
        %2393 = vmatprep.subr.mxu0 0.0
        %2394 = vmatpush1.msra.mxu0 %v2340
        %2395 = vmatprep.subr.mxu0 0.0
        %2396 = vmatpush1.msra.mxu0 %v2341
        %2397 = vmatprep.subr.mxu0 0.0
        %2398 = vmatpush1.msra.mxu0 0.0
        %2399 = vmatprep.subr.mxu0 0.0
        %2400 = vmatpush1.msra.mxu0 0.0
        %2401 = vmatprep.subr.mxu0 0.0
        %2402 = vmatpush1.msra.mxu0 0.0
        %2403 = vmatprep.subr.mxu0 0.0
        %2404 = vmatpush1.msra.mxu0 0.0
        %2405 = vmatprep.subr.mxu0 0.0
        %2406 = vmatpush1.msra.mxu0 0.0
        %2407 = vmatprep.subr.mxu0 0.0
        %2408 = vmatpush1.msra.mxu0 0.0
        %2409 = vmatprep.subr.mxu0 0.0
        %2410 = vmatpush1.msra.mxu0 0.0
        %2411 = vmatprep.subr.mxu0 0.0
        %2412 = vmatpush1.msra.mxu0 0.0
        %2413 = vmatprep.subr.mxu0 0.0
        %2414 = vmatpush1.msra.mxu0 0.0
        %2415 = vmatprep.subr.mxu0 0.0
        %2416 = vmatpush1.msra.mxu0 0.0
        %2417 = vmatprep.subr.mxu0 0.0
        %2418 = vmatpush1.msra.mxu0 0.0
        %2419 = vmatprep.subr.mxu0 0.0
        %2420 = vmatpush1.msra.mxu0 0.0
        %2421 = vmatprep.subr.mxu0 0.0
        %2422 = vmatpush1.msra.mxu0 0.0
        %2423 = vmatprep.subr.mxu0 0.0
        %2424 = vmatpush1.msra.mxu0 0.0
        %2425 = vmatprep.subr.mxu0 0.0
        %2426 = vmatpush1.msra.mxu0 0.0
        %2427 = vmatprep.subr.mxu0 0.0
        %2428 = vmatpush1.msra.mxu0 0.0
        %2429 = vmatprep.subr.mxu0 0.0
        %2430 = vmatpush1.msra.mxu0 0.0
        %2431 = vmatprep.subr.mxu0 0.0
        %2432 = vmatpush1.msra.mxu0 0.0
        %2433 = vmatprep.subr.mxu0 0.0
        %2434 = vmatpush1.msra.mxu0 0.0
        %2435 = vmatprep.subr.mxu0 0.0
        %2436 = vmatpush1.msra.mxu0 0.0
        %2437 = vmatprep.subr.mxu0 0.0
        %2438 = vmatpush1.msra.mxu0 0.0
        %2439 = vmatprep.subr.mxu0 0.0
        %2440 = vmatpush1.msra.mxu0 0.0
        %2441 = vmatprep.subr.mxu0 0.0
        %2442 = vmatpush1.msra.mxu0 0.0
        %2443 = vmatprep.subr.mxu0 0.0
        %2444 = vmatpush1.msra.mxu0 0.0
        %2445 = vmatprep.subr.mxu0 0.0
        %2446 = vmatpush1.msra.mxu0 0.0
        %2447 = vmatprep.subr.mxu0 0.0
        %2448 = vmatpush1.msra.mxu0 0.0
        %2449 = vmatprep.subr.mxu0 0.0
        %2450 = vmatpush1.msra.mxu0 0.0
        %2451 = vmatprep.subr.mxu0 0.0
        %2452 = vmatpush1.msra.mxu0 0.0
        %2453 = vmatprep.mubr.f32.mxu0 0.0
        %2454 = vmatmul.mubr.f32.gmra.mrb[0].mxu0 %v2387
        %v2455 = vpop.f32.mrb[0].mxu0
        %v2456 = vadd.f32 %v2384, %v2455
        %v2457 = vpop.f32.mrb[0].mxu0
        %2458 = vdwg.mxu0
        %2459 = vrot.lane.b32.xlu0 %v753, 64
        %v2460 = vpop.permute.xlu0 %2459
        %2461 = vrot.lane.b32.xlu0 %v759, 64
        %v2462 = vpop.permute.xlu0 %2461
        %v2463 = vsel %vm632, %v2460, 0
        %v2465 = vsel %vm632, %v2462, 0
        %v2468 = vsel %vm632, %v2456, 0
        %2470 = vmatprep.subr.mxu0 0.0
        %2471 = vmatpush1.xpose.msra.mxu0 %v2468
        %2472 = vmatprep.subr.mxu0 0.0
        %2473 = vmatpush1.xpose.msra.mxu0 0.0
        %2474 = vmatprep.subr.mxu0 0.0
        %2475 = vmatpush1.xpose.msra.mxu0 0.0
        %2476 = vmatprep.subr.mxu0 0.0
        %2477 = vmatpush1.xpose.msra.mxu0 0.0
        %2478 = vmatprep.subr.mxu0 0.0
        %2479 = vmatpush1.xpose.msra.mxu0 0.0
        %2480 = vmatprep.subr.mxu0 0.0
        %2481 = vmatpush1.xpose.msra.mxu0 0.0
        %2482 = vmatprep.subr.mxu0 0.0
        %2483 = vmatpush1.xpose.msra.mxu0 0.0
        %2484 = vmatprep.subr.mxu0 0.0
        %2485 = vmatpush1.xpose.msra.mxu0 0.0
        %2486 = vmatprep.subr.mxu0 0.0
        %2487 = vmatpush1.xpose.msra.mxu0 0.0
        %2488 = vmatprep.subr.mxu0 0.0
        %2489 = vmatpush1.xpose.msra.mxu0 0.0
        %2490 = vmatprep.subr.mxu0 0.0
        %2491 = vmatpush1.xpose.msra.mxu0 0.0
        %2492 = vmatprep.subr.mxu0 0.0
        %2493 = vmatpush1.xpose.msra.mxu0 0.0
        %2494 = vmatprep.subr.mxu0 0.0
        %2495 = vmatpush1.xpose.msra.mxu0 0.0
        %2496 = vmatprep.subr.mxu0 0.0
        %2497 = vmatpush1.xpose.msra.mxu0 0.0
        %2498 = vmatprep.subr.mxu0 0.0
        %2499 = vmatpush1.xpose.msra.mxu0 0.0
        %2500 = vmatprep.subr.mxu0 0.0
        %2501 = vmatpush1.xpose.msra.mxu0 0.0
        %2502 = vmatprep.subr.mxu0 0.0
        %2503 = vmatpush1.xpose.msra.mxu0 0.0
        %2504 = vmatprep.subr.mxu0 0.0
        %2505 = vmatpush1.xpose.msra.mxu0 0.0
        %2506 = vmatprep.subr.mxu0 0.0
        %2507 = vmatpush1.xpose.msra.mxu0 0.0
        %2508 = vmatprep.subr.mxu0 0.0
        %2509 = vmatpush1.xpose.msra.mxu0 0.0
        %2510 = vmatprep.subr.mxu0 0.0
        %2511 = vmatpush1.xpose.msra.mxu0 0.0
        %2512 = vmatprep.subr.mxu0 0.0
        %2513 = vmatpush1.xpose.msra.mxu0 0.0
        %2514 = vmatprep.subr.mxu0 0.0
        %2515 = vmatpush1.xpose.msra.mxu0 0.0
        %2516 = vmatprep.subr.mxu0 0.0
        %2517 = vmatpush1.xpose.msra.mxu0 0.0
        %2518 = vmatprep.subr.mxu0 0.0
        %2519 = vmatpush1.xpose.msra.mxu0 0.0
        %2520 = vmatprep.subr.mxu0 0.0
        %2521 = vmatpush1.xpose.msra.mxu0 0.0
        %2522 = vmatprep.subr.mxu0 0.0
        %2523 = vmatpush1.xpose.msra.mxu0 0.0
        %2524 = vmatprep.subr.mxu0 0.0
        %2525 = vmatpush1.xpose.msra.mxu0 0.0
        %2526 = vmatprep.subr.mxu0 0.0
        %2527 = vmatpush1.xpose.msra.mxu0 0.0
        %2528 = vmatprep.subr.mxu0 0.0
        %2529 = vmatpush1.xpose.msra.mxu0 0.0
        %2530 = vmatprep.subr.mxu0 0.0
        %2531 = vmatpush1.xpose.msra.mxu0 0.0
        %2532 = vmatprep.subr.mxu0 0.0
        %2533 = vmatpush1.xpose.msra.mxu0 0.0
        %2534 = vmatprep.mubr.f32.mxu0 0.0
        %2535 = vmatmul.mubr.f32.gmra.mrb[0].mxu0 %v2463
        %v2536 = vpop.f32.mrb[0].mxu0
        %v2537 = vadd.f32 0.0, %v2536
        %v2538 = vpop.f32.mrb[0].mxu0
        %2539 = vmatprep.mubr.f32.mxu0 0.0
        %2540 = vmatmul.mubr.f32.gmra.mrb[0].mxu0 %v2465
        %v2541 = vpop.f32.mrb[0].mxu0
        %v2542 = vadd.f32 0.0, %v2541
        %v2543 = vpop.f32.mrb[0].mxu0
        %2544 = vdwg.mxu0
        %vm2545 = vcmask 39936
        %v2546 = vsel %vm2545, %v2537, -inf
        %2547 = vmax.xlane.f32.xlu0 %v2546
        %v2548 = vpop.xlane.xlu0 %2547
        %v2549 = vsel %vm2545, %v2542, -inf
        %2550 = vmax.xlane.f32.xlu0 %v2549
        %v2551 = vpop.xlane.xlu0 %2550
        %v2552 = vsub.f32 %v2537, %v2548
        %v2553 = vsub.f32 %v2542, %v2551
        %v2554 = vmul.f32 %v2552, 1.442695
        %v2555 = vpow.pop %v2554
        %v2556 = vmul.f32 %v2553, 1.442695
        %v2557 = vpow.pop %v2556
        %v2558 = vsel %vm2545, %v2555, 0.0
        %2559 = vadd.xlane.f32.xlu0 %v2558
        %v2560 = vpop.xlane.xlu0 %2559
        %v2561 = vsel %vm2545, %v2557, 0.0
        %2562 = vadd.xlane.f32.xlu0 %v2561
        %v2563 = vpop.xlane.xlu0 %2562
        %v2564 = vrcp.pop %v2560
        %v2565 = vrcp.pop %v2563
        %v2566 = vmul.f32 %v2555, %v2564
        %v2567 = vmul.f32 %v2557, %v2565
        %v2568 = vadd.f32 %v2566, 1e-08
        %v2569 = vadd.f32 %v2567, 1e-08
        %v2570 = vsel %vm2545, %v2568, 0.0
        %v2571 = vsel %vm2545, %v2569, 0.0
        %v2572 = vadd.f32 %v2570, %v2571
        %v2573 = vrot.slane %v2572, 4
        %v2574 = vadd.f32 %v2572, %v2573
        %v2575 = vrot.slane %v2574, 2
        %v2576 = vadd.f32 %v2574, %v2575
        %v2577 = vrot.slane %v2576, 1
        %v2578 = vadd.f32 %v2576, %v2577
        %v2579 = vrcp.pop %v2578
        %v2580 = vmul.f32 %v2568, %v2579
        %v2581 = vmul.f32 %v2569, %v2579
        %2582 = vxpose.xlu0.b32.start [1/16] %v2580, 128
        %2583 = vxpose.xlu0.b32.cont [2/16] %v2581, 128
        %2584 = vxpose.xlu0.b32.cont [3/16] 0.0, 128
        %2585 = vxpose.xlu0.b32.cont [4/16] 0.0, 128
        %2586 = vxpose.xlu0.b32.cont [5/16] 0.0, 128
        %2587 = vxpose.xlu0.b32.cont [6/16] 0.0, 128
        %2588 = vxpose.xlu0.b32.cont [7/16] 0.0, 128
        %2589 = vxpose.xlu0.b32.cont [8/16] 0.0, 128
        %2590 = vxpose.xlu0.b32.cont [9/16] 0.0, 128
        %2591 = vxpose.xlu0.b32.cont [10/16] 0.0, 128
        %2592 = vxpose.xlu0.b32.cont [11/16] 0.0, 128
        %2593 = vxpose.xlu0.b32.cont [12/16] 0.0, 128
        %2594 = vxpose.xlu0.b32.cont [13/16] 0.0, 128
        %2595 = vxpose.xlu0.b32.cont [14/16] 0.0, 128
        %2596 = vxpose.xlu0.b32.cont [15/16] 0.0, 128
        %2597 = vxpose.xlu0.b32.end [16/16] 0.0, 128
        %v2598 = vpop.trf.xlu0
        %v2599 = vpop.trf.xlu0
        %v2600 = vpop.trf.xlu0
        %v2601 = vpop.trf.xlu0
        %v2602 = vpop.trf.xlu0
        %v2603 = vpop.trf.xlu0
        %v2604 = vpop.trf.xlu0
        %v2605 = vpop.trf.xlu0
        %v2606 = vpop.trf.xlu0
        %v2607 = vpop.trf.xlu0
        %v2608 = vpop.trf.xlu0
        %v2609 = vpop.trf.xlu0
        %v2610 = vpop.trf.xlu0
        %v2611 = vpop.trf.xlu0
        %v2612 = vpop.trf.xlu0
        %v2613 = vpop.trf.xlu0
        %2614 = vrot.lane.b32.xlu0 %v753, 32
        %v2615 = vpop.permute.xlu0 %2614
        %2616 = vrot.lane.b32.xlu0 %v759, 32
        %v2617 = vpop.permute.xlu0 %2616
        %v2621 = vsel %vm1238, %v2598, 0
        %2623 = vmatprep.subr.mxu0 0.0
        %2624 = vmatpush1.msra.mxu0 %v2615
        %2625 = vmatprep.subr.mxu0 0.0
        %2626 = vmatpush1.msra.mxu0 %v2617
        %2627 = vmatprep.subr.mxu0 0.0
        %2628 = vmatpush1.msra.mxu0 0.0
        %2629 = vmatprep.subr.mxu0 0.0
        %2630 = vmatpush1.msra.mxu0 0.0
        %2631 = vmatprep.subr.mxu0 0.0
        %2632 = vmatpush1.msra.mxu0 0.0
        %2633 = vmatprep.subr.mxu0 0.0
        %2634 = vmatpush1.msra.mxu0 0.0
        %2635 = vmatprep.subr.mxu0 0.0
        %2636 = vmatpush1.msra.mxu0 0.0
        %2637 = vmatprep.subr.mxu0 0.0
        %2638 = vmatpush1.msra.mxu0 0.0
        %2639 = vmatprep.subr.mxu0 0.0
        %2640 = vmatpush1.msra.mxu0 0.0
        %2641 = vmatprep.subr.mxu0 0.0
        %2642 = vmatpush1.msra.mxu0 0.0
        %2643 = vmatprep.subr.mxu0 0.0
        %2644 = vmatpush1.msra.mxu0 0.0
        %2645 = vmatprep.subr.mxu0 0.0
        %2646 = vmatpush1.msra.mxu0 0.0
        %2647 = vmatprep.subr.mxu0 0.0
        %2648 = vmatpush1.msra.mxu0 0.0
        %2649 = vmatprep.subr.mxu0 0.0
        %2650 = vmatpush1.msra.mxu0 0.0
        %2651 = vmatprep.subr.mxu0 0.0
        %2652 = vmatpush1.msra.mxu0 0.0
        %2653 = vmatprep.subr.mxu0 0.0
        %2654 = vmatpush1.msra.mxu0 0.0
        %2655 = vmatprep.subr.mxu0 0.0
        %2656 = vmatpush1.msra.mxu0 0.0
        %2657 = vmatprep.subr.mxu0 0.0
        %2658 = vmatpush1.msra.mxu0 0.0
        %2659 = vmatprep.subr.mxu0 0.0
        %2660 = vmatpush1.msra.mxu0 0.0
        %2661 = vmatprep.subr.mxu0 0.0
        %2662 = vmatpush1.msra.mxu0 0.0
        %2663 = vmatprep.subr.mxu0 0.0
        %2664 = vmatpush1.msra.mxu0 0.0
        %2665 = vmatprep.subr.mxu0 0.0
        %2666 = vmatpush1.msra.mxu0 0.0
        %2667 = vmatprep.subr.mxu0 0.0
        %2668 = vmatpush1.msra.mxu0 0.0
        %2669 = vmatprep.subr.mxu0 0.0
        %2670 = vmatpush1.msra.mxu0 0.0
        %2671 = vmatprep.subr.mxu0 0.0
        %2672 = vmatpush1.msra.mxu0 0.0
        %2673 = vmatprep.subr.mxu0 0.0
        %2674 = vmatpush1.msra.mxu0 0.0
        %2675 = vmatprep.subr.mxu0 0.0
        %2676 = vmatpush1.msra.mxu0 0.0
        %2677 = vmatprep.subr.mxu0 0.0
        %2678 = vmatpush1.msra.mxu0 0.0
        %2679 = vmatprep.subr.mxu0 0.0
        %2680 = vmatpush1.msra.mxu0 0.0
        %2681 = vmatprep.subr.mxu0 0.0
        %2682 = vmatpush1.msra.mxu0 0.0
        %2683 = vmatprep.subr.mxu0 0.0
        %2684 = vmatpush1.msra.mxu0 0.0
        %2685 = vmatprep.subr.mxu0 0.0
        %2686 = vmatpush1.msra.mxu0 0.0
        %2687 = vmatprep.mubr.f32.mxu0 0.0
        %2688 = vmatmul.mubr.f32.gmra.mrb[0].mxu0 %v2621
        %v2689 = vpop.f32.mrb[0].mxu0
        %v2690 = vadd.f32 0.0, %v2689
        %v2691 = vpop.f32.mrb[0].mxu0
        %2692 = vdwg.mxu0
        %v2694 = vlaneseq
        %v2695 = vshrl.u32 %v2694, 7
        %v2696 = vsub.s32 0, %v2695
        %v2697 = vrot.slane %v2364, %v2696
        %v2700 = vsel %vm632, %v2690, 0
        %2702 = vmatprep.subr.mxu0 0.0
        %2703 = vmatpush1.msra.mxu0 %v2351
        %2704 = vmatprep.subr.mxu0 0.0
        %2705 = vmatpush1.msra.mxu0 %v2352
        %2706 = vmatprep.subr.mxu0 0.0
        %2707 = vmatpush1.msra.mxu0 %v2353
        %2708 = vmatprep.subr.mxu0 0.0
        %2709 = vmatpush1.msra.mxu0 %v2354
        %2710 = vmatprep.subr.mxu0 0.0
        %2711 = vmatpush1.msra.mxu0 0.0
        %2712 = vmatprep.subr.mxu0 0.0
        %2713 = vmatpush1.msra.mxu0 0.0
        %2714 = vmatprep.subr.mxu0 0.0
        %2715 = vmatpush1.msra.mxu0 0.0
        %2716 = vmatprep.subr.mxu0 0.0
        %2717 = vmatpush1.msra.mxu0 0.0
        %2718 = vmatprep.subr.mxu0 0.0
        %2719 = vmatpush1.msra.mxu0 0.0
        %2720 = vmatprep.subr.mxu0 0.0
        %2721 = vmatpush1.msra.mxu0 0.0
        %2722 = vmatprep.subr.mxu0 0.0
        %2723 = vmatpush1.msra.mxu0 0.0
        %2724 = vmatprep.subr.mxu0 0.0
        %2725 = vmatpush1.msra.mxu0 0.0
        %2726 = vmatprep.subr.mxu0 0.0
        %2727 = vmatpush1.msra.mxu0 0.0
        %2728 = vmatprep.subr.mxu0 0.0
        %2729 = vmatpush1.msra.mxu0 0.0
        %2730 = vmatprep.subr.mxu0 0.0
        %2731 = vmatpush1.msra.mxu0 0.0
        %2732 = vmatprep.subr.mxu0 0.0
        %2733 = vmatpush1.msra.mxu0 0.0
        %2734 = vmatprep.subr.mxu0 0.0
        %2735 = vmatpush1.msra.mxu0 0.0
        %2736 = vmatprep.subr.mxu0 0.0
        %2737 = vmatpush1.msra.mxu0 0.0
        %2738 = vmatprep.subr.mxu0 0.0
        %2739 = vmatpush1.msra.mxu0 0.0
        %2740 = vmatprep.subr.mxu0 0.0
        %2741 = vmatpush1.msra.mxu0 0.0
        %2742 = vmatprep.subr.mxu0 0.0
        %2743 = vmatpush1.msra.mxu0 0.0
        %2744 = vmatprep.subr.mxu0 0.0
        %2745 = vmatpush1.msra.mxu0 0.0
        %2746 = vmatprep.subr.mxu0 0.0
        %2747 = vmatpush1.msra.mxu0 0.0
        %2748 = vmatprep.subr.mxu0 0.0
        %2749 = vmatpush1.msra.mxu0 0.0
        %2750 = vmatprep.subr.mxu0 0.0
        %2751 = vmatpush1.msra.mxu0 0.0
        %2752 = vmatprep.subr.mxu0 0.0
        %2753 = vmatpush1.msra.mxu0 0.0
        %2754 = vmatprep.subr.mxu0 0.0
        %2755 = vmatpush1.msra.mxu0 0.0
        %2756 = vmatprep.subr.mxu0 0.0
        %2757 = vmatpush1.msra.mxu0 0.0
        %2758 = vmatprep.subr.mxu0 0.0
        %2759 = vmatpush1.msra.mxu0 0.0
        %2760 = vmatprep.subr.mxu0 0.0
        %2761 = vmatpush1.msra.mxu0 0.0
        %2762 = vmatprep.subr.mxu0 0.0
        %2763 = vmatpush1.msra.mxu0 0.0
        %2764 = vmatprep.subr.mxu0 0.0
        %2765 = vmatpush1.msra.mxu0 0.0
        %2766 = vmatprep.mubr.f32.mxu0 0.0
        %2767 = vmatmul.mubr.f32.gmra.mrb[0].mxu0 %v2700
        %v2768 = vpop.f32.mrb[0].mxu0
        %v2769 = vadd.f32 %v2697, %v2768
        %v2770 = vpop.f32.mrb[0].mxu0
        %2771 = vdwg.mxu0
        %v2773 = vlaneseq
        %v2774 = vshrl.u32 %v2773, 7
        %v2775 = vsub.s32 0, %v2774
        %v2776 = vrot.slane %v2365, %v2775
        %v2779 = vsel %vm632, %v764, 0
        %2781 = vmatprep.subr.mxu0 0.0
        %2782 = vmatpush1.msra.mxu0 %v2355
        %2783 = vmatprep.subr.mxu0 0.0
        %2784 = vmatpush1.msra.mxu0 %v2356
        %2785 = vmatprep.subr.mxu0 0.0
        %2786 = vmatpush1.msra.mxu0 %v2357
        %2787 = vmatprep.subr.mxu0 0.0
        %2788 = vmatpush1.msra.mxu0 %v2358
        %2789 = vmatprep.subr.mxu0 0.0
        %2790 = vmatpush1.msra.mxu0 0.0
        %2791 = vmatprep.subr.mxu0 0.0
        %2792 = vmatpush1.msra.mxu0 0.0
        %2793 = vmatprep.subr.mxu0 0.0
        %2794 = vmatpush1.msra.mxu0 0.0
        %2795 = vmatprep.subr.mxu0 0.0
        %2796 = vmatpush1.msra.mxu0 0.0
        %2797 = vmatprep.subr.mxu0 0.0
        %2798 = vmatpush1.msra.mxu0 0.0
        %2799 = vmatprep.subr.mxu0 0.0
        %2800 = vmatpush1.msra.mxu0 0.0
        %2801 = vmatprep.subr.mxu0 0.0
        %2802 = vmatpush1.msra.mxu0 0.0
        %2803 = vmatprep.subr.mxu0 0.0
        %2804 = vmatpush1.msra.mxu0 0.0
        %2805 = vmatprep.subr.mxu0 0.0
        %2806 = vmatpush1.msra.mxu0 0.0
        %2807 = vmatprep.subr.mxu0 0.0
        %2808 = vmatpush1.msra.mxu0 0.0
        %2809 = vmatprep.subr.mxu0 0.0
        %2810 = vmatpush1.msra.mxu0 0.0
        %2811 = vmatprep.subr.mxu0 0.0
        %2812 = vmatpush1.msra.mxu0 0.0
        %2813 = vmatprep.subr.mxu0 0.0
        %2814 = vmatpush1.msra.mxu0 0.0
        %2815 = vmatprep.subr.mxu0 0.0
        %2816 = vmatpush1.msra.mxu0 0.0
        %2817 = vmatprep.subr.mxu0 0.0
        %2818 = vmatpush1.msra.mxu0 0.0
        %2819 = vmatprep.subr.mxu0 0.0
        %2820 = vmatpush1.msra.mxu0 0.0
        %2821 = vmatprep.subr.mxu0 0.0
        %2822 = vmatpush1.msra.mxu0 0.0
        %2823 = vmatprep.subr.mxu0 0.0
        %2824 = vmatpush1.msra.mxu0 0.0
        %2825 = vmatprep.subr.mxu0 0.0
        %2826 = vmatpush1.msra.mxu0 0.0
        %2827 = vmatprep.subr.mxu0 0.0
        %2828 = vmatpush1.msra.mxu0 0.0
        %2829 = vmatprep.subr.mxu0 0.0
        %2830 = vmatpush1.msra.mxu0 0.0
        %2831 = vmatprep.subr.mxu0 0.0
        %2832 = vmatpush1.msra.mxu0 0.0
        %2833 = vmatprep.subr.mxu0 0.0
        %2834 = vmatpush1.msra.mxu0 0.0
        %2835 = vmatprep.subr.mxu0 0.0
        %2836 = vmatpush1.msra.mxu0 0.0
        %2837 = vmatprep.subr.mxu0 0.0
        %2838 = vmatpush1.msra.mxu0 0.0
        %2839 = vmatprep.subr.mxu0 0.0
        %2840 = vmatpush1.msra.mxu0 0.0
        %2841 = vmatprep.subr.mxu0 0.0
        %2842 = vmatpush1.msra.mxu0 0.0
        %2843 = vmatprep.subr.mxu0 0.0
        %2844 = vmatpush1.msra.mxu0 0.0
        %2845 = vmatprep.mubr.f32.mxu0 0.0
        %2846 = vmatmul.mubr.f32.gmra.mrb[0].mxu0 %v2779
        %v2847 = vpop.f32.mrb[0].mxu0
        %v2848 = vadd.f32 %v2776, %v2847
        %v2849 = vpop.f32.mrb[0].mxu0
        %2850 = vdwg.mxu0
        %v2851 = vadd.f32 %v2769, %v2848
        %v2852 = vxor.u32 %v2851, 2147483648
        %v2853 = vmul.f32 %v2852, 1.442695
        %v2854 = vpow.pop %v2853
        %v2855 = vadd.f32 %v2854, 1.0
        %v2856 = vrcp.pop %v2855
        %v2857 = vmul.f32 1.0, %v2856
        %2859 = vrot.lane.b32.xlu0 %v2848, 64
        %v2860 = vpop.permute.xlu0 %2859
        %v2862 = vmul.f32 %v2857, %v2860
        %2864 = vrot.lane.b32.xlu0 %v2862, 64
        %v2865 = vpop.permute.xlu0 %2864
        %v2867 = vadd.f32 %v2769, %v2865
        %v2868 = vtanh.pop %v2867
        %v2869 = vsub.f32 1.0, %v2857
        %2871 = vrot.lane.b32.xlu0 %v2868, 96
        %v2872 = vpop.permute.xlu0 %2871
        %v2874 = vmul.f32 %v2869, %v2872
        %2875 = vrot.lane.b32.xlu0 %v764, 32
        %v2876 = vpop.permute.xlu0 %2875
        %v2878 = vmul.f32 %v2857, %v2876
        %v2879 = vadd.f32 %v2874, %v2878
        %2881 = vrot.lane.b32.xlu0 %v2879, 96
        %v2882 = vpop.permute.xlu0 %2881
        %v2884 = vsel %vm2366, %v2882, 0.0
        %2885 = vadd.xlane.f32.xlu0 %v2884
        %v2886 = vpop.xlane.xlu0 %2885
        %v2887 = vmul.f32 %v2886, %v639
        %v2888 = vsub.f32 %v2879, %v2887
        %v2889 = vmul.f32 %v2888, %v2888
        %2891 = vrot.lane.b32.xlu0 %v2889, 96
        %v2892 = vpop.permute.xlu0 %2891
        %v2894 = vsel %vm2366, %v2892, 0.0
        %2895 = vadd.xlane.f32.xlu0 %v2894
        %v2896 = vpop.xlane.xlu0 %2895
        %v2897 = vmul.f32 %v2896, %v639
        %v2898 = vadd.f32 %v2897, 1e-05
        %v2899 = vrsqrt.pop %v2898
        %v2900 = vmul.f32 %v2888, %v2899
        %v2902 = vlaneseq
        %v2903 = vshrl.u32 %v2902, 7
        %v2904 = vsub.s32 0, %v2903
        %v2905 = vrot.slane %v2361, %v2904
        %2908 = vrot.lane.b32.xlu0 %v2900, 96
        %v2909 = vpop.permute.xlu0 %2908
        %v2910 = vsel %vm632, %v2909, 0
        %2912 = vmatprep.subr.mxu0 0.0
        %2913 = vmatpush1.msra.mxu0 %v2342
        %2914 = vmatprep.subr.mxu0 0.0
        %2915 = vmatpush1.msra.mxu0 %v2343
        %2916 = vmatprep.subr.mxu0 0.0
        %2917 = vmatpush1.msra.mxu0 %v2344
        %2918 = vmatprep.subr.mxu0 0.0
        %2919 = vmatpush1.msra.mxu0 %v2345
        %2920 = vmatprep.subr.mxu0 0.0
        %2921 = vmatpush1.msra.mxu0 0.0
        %2922 = vmatprep.subr.mxu0 0.0
        %2923 = vmatpush1.msra.mxu0 0.0
        %2924 = vmatprep.subr.mxu0 0.0
        %2925 = vmatpush1.msra.mxu0 0.0
        %2926 = vmatprep.subr.mxu0 0.0
        %2927 = vmatpush1.msra.mxu0 0.0
        %2928 = vmatprep.subr.mxu0 0.0
        %2929 = vmatpush1.msra.mxu0 0.0
        %2930 = vmatprep.subr.mxu0 0.0
        %2931 = vmatpush1.msra.mxu0 0.0
        %2932 = vmatprep.subr.mxu0 0.0
        %2933 = vmatpush1.msra.mxu0 0.0
        %2934 = vmatprep.subr.mxu0 0.0
        %2935 = vmatpush1.msra.mxu0 0.0
        %2936 = vmatprep.subr.mxu0 0.0
        %2937 = vmatpush1.msra.mxu0 0.0
        %2938 = vmatprep.subr.mxu0 0.0
        %2939 = vmatpush1.msra.mxu0 0.0
        %2940 = vmatprep.subr.mxu0 0.0
        %2941 = vmatpush1.msra.mxu0 0.0
        %2942 = vmatprep.subr.mxu0 0.0
        %2943 = vmatpush1.msra.mxu0 0.0
        %2944 = vmatprep.subr.mxu0 0.0
        %2945 = vmatpush1.msra.mxu0 0.0
        %2946 = vmatprep.subr.mxu0 0.0
        %2947 = vmatpush1.msra.mxu0 0.0
        %2948 = vmatprep.subr.mxu0 0.0
        %2949 = vmatpush1.msra.mxu0 0.0
        %2950 = vmatprep.subr.mxu0 0.0
        %2951 = vmatpush1.msra.mxu0 0.0
        %2952 = vmatprep.subr.mxu0 0.0
        %2953 = vmatpush1.msra.mxu0 0.0
        %2954 = vmatprep.subr.mxu0 0.0
        %2955 = vmatpush1.msra.mxu0 0.0
        %2956 = vmatprep.subr.mxu0 0.0
        %2957 = vmatpush1.msra.mxu0 0.0
        %2958 = vmatprep.subr.mxu0 0.0
        %2959 = vmatpush1.msra.mxu0 0.0
        %2960 = vmatprep.subr.mxu0 0.0
        %2961 = vmatpush1.msra.mxu0 0.0
        %2962 = vmatprep.subr.mxu0 0.0
        %2963 = vmatpush1.msra.mxu0 0.0
        %2964 = vmatprep.subr.mxu0 0.0
        %2965 = vmatpush1.msra.mxu0 0.0
        %2966 = vmatprep.subr.mxu0 0.0
        %2967 = vmatpush1.msra.mxu0 0.0
        %2968 = vmatprep.subr.mxu0 0.0
        %2969 = vmatpush1.msra.mxu0 0.0
        %2970 = vmatprep.subr.mxu0 0.0
        %2971 = vmatpush1.msra.mxu0 0.0
        %2972 = vmatprep.subr.mxu0 0.0
        %2973 = vmatpush1.msra.mxu0 0.0
        %2974 = vmatprep.subr.mxu0 0.0
        %2975 = vmatpush1.msra.mxu0 0.0
        %2976 = vmatprep.mubr.f32.mxu0 0.0
        %2977 = vmatmul.mubr.f32.gmra.mrb[0].mxu0 %v2910
        %v2978 = vpop.f32.mrb[0].mxu0
        %v2979 = vadd.f32 %v2905, %v2978
        %v2980 = vpop.f32.mrb[0].mxu0
        %2981 = vdwg.mxu0
        %v2982 = vmax.f32 %v2979, 0.0
        %v2984 = vsel %vm632, %v2982, 0
        %2986 = vmatprep.subr.mxu0 0.0
        %2987 = vmatpush1.msra.mxu0 %v2346
        %2988 = vmatprep.subr.mxu0 0.0
        %2989 = vmatpush1.msra.mxu0 %v2347
        %2990 = vmatprep.subr.mxu0 0.0
        %2991 = vmatpush1.msra.mxu0 %v2348
        %2992 = vmatprep.subr.mxu0 0.0
        %2993 = vmatpush1.msra.mxu0 %v2349
        %2994 = vmatprep.subr.mxu0 0.0
        %2995 = vmatpush1.msra.mxu0 0.0
        %2996 = vmatprep.subr.mxu0 0.0
        %2997 = vmatpush1.msra.mxu0 0.0
        %2998 = vmatprep.subr.mxu0 0.0
        %2999 = vmatpush1.msra.mxu0 0.0
        %3000 = vmatprep.subr.mxu0 0.0
        %3001 = vmatpush1.msra.mxu0 0.0
        %3002 = vmatprep.subr.mxu0 0.0
        %3003 = vmatpush1.msra.mxu0 0.0
        %3004 = vmatprep.subr.mxu0 0.0
        %3005 = vmatpush1.msra.mxu0 0.0
        %3006 = vmatprep.subr.mxu0 0.0
        %3007 = vmatpush1.msra.mxu0 0.0
        %3008 = vmatprep.subr.mxu0 0.0
        %3009 = vmatpush1.msra.mxu0 0.0
        %3010 = vmatprep.subr.mxu0 0.0
        %3011 = vmatpush1.msra.mxu0 0.0
        %3012 = vmatprep.subr.mxu0 0.0
        %3013 = vmatpush1.msra.mxu0 0.0
        %3014 = vmatprep.subr.mxu0 0.0
        %3015 = vmatpush1.msra.mxu0 0.0
        %3016 = vmatprep.subr.mxu0 0.0
        %3017 = vmatpush1.msra.mxu0 0.0
        %3018 = vmatprep.subr.mxu0 0.0
        %3019 = vmatpush1.msra.mxu0 0.0
        %3020 = vmatprep.subr.mxu0 0.0
        %3021 = vmatpush1.msra.mxu0 0.0
        %3022 = vmatprep.subr.mxu0 0.0
        %3023 = vmatpush1.msra.mxu0 0.0
        %3024 = vmatprep.subr.mxu0 0.0
        %3025 = vmatpush1.msra.mxu0 0.0
        %3026 = vmatprep.subr.mxu0 0.0
        %3027 = vmatpush1.msra.mxu0 0.0
        %3028 = vmatprep.subr.mxu0 0.0
        %3029 = vmatpush1.msra.mxu0 0.0
        %3030 = vmatprep.subr.mxu0 0.0
        %3031 = vmatpush1.msra.mxu0 0.0
        %3032 = vmatprep.subr.mxu0 0.0
        %3033 = vmatpush1.msra.mxu0 0.0
        %3034 = vmatprep.subr.mxu0 0.0
        %3035 = vmatpush1.msra.mxu0 0.0
        %3036 = vmatprep.subr.mxu0 0.0
        %3037 = vmatpush1.msra.mxu0 0.0
        %3038 = vmatprep.subr.mxu0 0.0
        %3039 = vmatpush1.msra.mxu0 0.0
        %3040 = vmatprep.subr.mxu0 0.0
        %3041 = vmatpush1.msra.mxu0 0.0
        %3042 = vmatprep.subr.mxu0 0.0
        %3043 = vmatpush1.msra.mxu0 0.0
        %3044 = vmatprep.subr.mxu0 0.0
        %3045 = vmatpush1.msra.mxu0 0.0
        %3046 = vmatprep.subr.mxu0 0.0
        %3047 = vmatpush1.msra.mxu0 0.0
        %3048 = vmatprep.subr.mxu0 0.0
        %3049 = vmatpush1.msra.mxu0 0.0
        %3050 = vmatprep.mubr.f32.mxu0 0.0
        %3051 = vmatmul.mubr.f32.gmra.mrb[0].mxu0 %v2984
        %v3052 = vpop.f32.mrb[0].mxu0
        %v3053 = vadd.f32 0.0, %v3052
        %v3054 = vpop.f32.mrb[0].mxu0
        %3055 = vdwg.mxu0
        %3057 = vrot.lane.b32.xlu0 %v3053, 32
        %v3058 = vpop.permute.xlu0 %3057
        %v3060 = vadd.f32 %v2879, %v3058
        %v3062 = vlaneseq
        %v3063 = vshrl.u32 %v3062, 7
        %v3064 = vsub.s32 0, %v3063
        %v3065 = vrot.slane %v2362, %v3064
        %3066 = vrot.lane.b32.xlu0 %v3065, 32
        %v3067 = vpop.permute.xlu0 %3066
        %v3069 = vadd.f32 %v3060, %v3067
        %3071 = vrot.lane.b32.xlu0 %v767, 32
        %v3072 = vpop.permute.xlu0 %3071
        %v3074 = vadd.f32 %v3069, %v3072
        %3076 = vrot.lane.b32.xlu0 %v3074, 96
        %v3077 = vpop.permute.xlu0 %3076
        %v3078 = vsel %vm632, %v3077, 0
        %3080 = vmatprep.subr.mxu0 0.0
        %3081 = vmatpush1.msra.mxu0 %v772
        %3082 = vmatprep.subr.mxu0 0.0
        %3083 = vmatpush1.msra.mxu0 %v773
        %3084 = vmatprep.subr.mxu0 0.0
        %3085 = vmatpush1.msra.mxu0 %v774
        %3086 = vmatprep.subr.mxu0 0.0
        %3087 = vmatpush1.msra.mxu0 %v775
        %3088 = vmatprep.subr.mxu0 0.0
        %3089 = vmatpush1.msra.mxu0 0.0
        %3090 = vmatprep.subr.mxu0 0.0
        %3091 = vmatpush1.msra.mxu0 0.0
        %3092 = vmatprep.subr.mxu0 0.0
        %3093 = vmatpush1.msra.mxu0 0.0
        %3094 = vmatprep.subr.mxu0 0.0
        %3095 = vmatpush1.msra.mxu0 0.0
        %3096 = vmatprep.subr.mxu0 0.0
        %3097 = vmatpush1.msra.mxu0 0.0
        %3098 = vmatprep.subr.mxu0 0.0
        %3099 = vmatpush1.msra.mxu0 0.0
        %3100 = vmatprep.subr.mxu0 0.0
        %3101 = vmatpush1.msra.mxu0 0.0
        %3102 = vmatprep.subr.mxu0 0.0
        %3103 = vmatpush1.msra.mxu0 0.0
        %3104 = vmatprep.subr.mxu0 0.0
        %3105 = vmatpush1.msra.mxu0 0.0
        %3106 = vmatprep.subr.mxu0 0.0
        %3107 = vmatpush1.msra.mxu0 0.0
        %3108 = vmatprep.subr.mxu0 0.0
        %3109 = vmatpush1.msra.mxu0 0.0
        %3110 = vmatprep.subr.mxu0 0.0
        %3111 = vmatpush1.msra.mxu0 0.0
        %3112 = vmatprep.subr.mxu0 0.0
        %3113 = vmatpush1.msra.mxu0 0.0
        %3114 = vmatprep.subr.mxu0 0.0
        %3115 = vmatpush1.msra.mxu0 0.0
        %3116 = vmatprep.subr.mxu0 0.0
        %3117 = vmatpush1.msra.mxu0 0.0
        %3118 = vmatprep.subr.mxu0 0.0
        %3119 = vmatpush1.msra.mxu0 0.0
        %3120 = vmatprep.subr.mxu0 0.0
        %3121 = vmatpush1.msra.mxu0 0.0
        %3122 = vmatprep.subr.mxu0 0.0
        %3123 = vmatpush1.msra.mxu0 0.0
        %3124 = vmatprep.subr.mxu0 0.0
        %3125 = vmatpush1.msra.mxu0 0.0
        %3126 = vmatprep.subr.mxu0 0.0
        %3127 = vmatpush1.msra.mxu0 0.0
        %3128 = vmatprep.subr.mxu0 0.0
        %3129 = vmatpush1.msra.mxu0 0.0
        %3130 = vmatprep.subr.mxu0 0.0
        %3131 = vmatpush1.msra.mxu0 0.0
        %3132 = vmatprep.subr.mxu0 0.0
        %3133 = vmatpush1.msra.mxu0 0.0
        %3134 = vmatprep.subr.mxu0 0.0
        %3135 = vmatpush1.msra.mxu0 0.0
        %3136 = vmatprep.subr.mxu0 0.0
        %3137 = vmatpush1.msra.mxu0 0.0
        %3138 = vmatprep.subr.mxu0 0.0
        %3139 = vmatpush1.msra.mxu0 0.0
        %3140 = vmatprep.subr.mxu0 0.0
        %3141 = vmatpush1.msra.mxu0 0.0
        %3142 = vmatprep.subr.mxu0 0.0
        %3143 = vmatpush1.msra.mxu0 0.0
        %3144 = vmatprep.mubr.f32.mxu0 0.0
        %3145 = vmatmul.mubr.f32.gmra.mrb[0].mxu0 %v3078
        %v3146 = vpop.f32.mrb[0].mxu0
        %v3147 = vadd.f32 0.0, %v3146
        %v3148 = vpop.f32.mrb[0].mxu0
        %3149 = vdwg.mxu0
        %3150 = vmatprep.subr.mxu0 0.0
        %3151 = vmatpush1.msra.mxu0 %v776
        %3152 = vmatprep.subr.mxu0 0.0
        %3153 = vmatpush1.msra.mxu0 %v777
        %3154 = vmatprep.subr.mxu0 0.0
        %3155 = vmatpush1.msra.mxu0 %v778
        %3156 = vmatprep.subr.mxu0 0.0
        %3157 = vmatpush1.msra.mxu0 %v779
        %3158 = vmatprep.subr.mxu0 0.0
        %3159 = vmatpush1.msra.mxu0 0.0
        %3160 = vmatprep.subr.mxu0 0.0
        %3161 = vmatpush1.msra.mxu0 0.0
        %3162 = vmatprep.subr.mxu0 0.0
        %3163 = vmatpush1.msra.mxu0 0.0
        %3164 = vmatprep.subr.mxu0 0.0
        %3165 = vmatpush1.msra.mxu0 0.0
        %3166 = vmatprep.subr.mxu0 0.0
        %3167 = vmatpush1.msra.mxu0 0.0
        %3168 = vmatprep.subr.mxu0 0.0
        %3169 = vmatpush1.msra.mxu0 0.0
        %3170 = vmatprep.subr.mxu0 0.0
        %3171 = vmatpush1.msra.mxu0 0.0
        %3172 = vmatprep.subr.mxu0 0.0
        %3173 = vmatpush1.msra.mxu0 0.0
        %3174 = vmatprep.subr.mxu0 0.0
        %3175 = vmatpush1.msra.mxu0 0.0
        %3176 = vmatprep.subr.mxu0 0.0
        %3177 = vmatpush1.msra.mxu0 0.0
        %3178 = vmatprep.subr.mxu0 0.0
        %3179 = vmatpush1.msra.mxu0 0.0
        %3180 = vmatprep.subr.mxu0 0.0
        %3181 = vmatpush1.msra.mxu0 0.0
        %3182 = vmatprep.subr.mxu0 0.0
        %3183 = vmatpush1.msra.mxu0 0.0
        %3184 = vmatprep.subr.mxu0 0.0
        %3185 = vmatpush1.msra.mxu0 0.0
        %3186 = vmatprep.subr.mxu0 0.0
        %3187 = vmatpush1.msra.mxu0 0.0
        %3188 = vmatprep.subr.mxu0 0.0
        %3189 = vmatpush1.msra.mxu0 0.0
        %3190 = vmatprep.subr.mxu0 0.0
        %3191 = vmatpush1.msra.mxu0 0.0
        %3192 = vmatprep.subr.mxu0 0.0
        %3193 = vmatpush1.msra.mxu0 0.0
        %3194 = vmatprep.subr.mxu0 0.0
        %3195 = vmatpush1.msra.mxu0 0.0
        %3196 = vmatprep.subr.mxu0 0.0
        %3197 = vmatpush1.msra.mxu0 0.0
        %3198 = vmatprep.subr.mxu0 0.0
        %3199 = vmatpush1.msra.mxu0 0.0
        %3200 = vmatprep.subr.mxu0 0.0
        %3201 = vmatpush1.msra.mxu0 0.0
        %3202 = vmatprep.subr.mxu0 0.0
        %3203 = vmatpush1.msra.mxu0 0.0
        %3204 = vmatprep.subr.mxu0 0.0
        %3205 = vmatpush1.msra.mxu0 0.0
        %3206 = vmatprep.subr.mxu0 0.0
        %3207 = vmatpush1.msra.mxu0 0.0
        %3208 = vmatprep.subr.mxu0 0.0
        %3209 = vmatpush1.msra.mxu0 0.0
        %3210 = vmatprep.subr.mxu0 0.0
        %3211 = vmatpush1.msra.mxu0 0.0
        %3212 = vmatprep.subr.mxu0 0.0
        %3213 = vmatpush1.msra.mxu0 0.0
        %3214 = vmatprep.mubr.f32.mxu0 0.0
        %3215 = vmatmul.mubr.f32.gmra.mrb[0].mxu0 %v3078
        %v3216 = vpop.f32.mrb[0].mxu0
        %v3217 = vadd.f32 0.0, %v3216
        %v3218 = vpop.f32.mrb[0].mxu0
        %3219 = vdwg.mxu0
        %v3221 = vsel %vm1238, %v3147, 0
        %3223 = vmatprep.subr.mxu0 0.0
        %3224 = vmatpush1.xpose.msra.mxu0 %v3221
        %3225 = vmatprep.subr.mxu0 0.0
        %3226 = vmatpush1.xpose.msra.mxu0 0.0
        %3227 = vmatprep.subr.mxu0 0.0
        %3228 = vmatpush1.xpose.msra.mxu0 0.0
        %3229 = vmatprep.subr.mxu0 0.0
        %3230 = vmatpush1.xpose.msra.mxu0 0.0
        %3231 = vmatprep.subr.mxu0 0.0
        %3232 = vmatpush1.xpose.msra.mxu0 0.0
        %3233 = vmatprep.subr.mxu0 0.0
        %3234 = vmatpush1.xpose.msra.mxu0 0.0
        %3235 = vmatprep.subr.mxu0 0.0
        %3236 = vmatpush1.xpose.msra.mxu0 0.0
        %3237 = vmatprep.subr.mxu0 0.0
        %3238 = vmatpush1.xpose.msra.mxu0 0.0
        %3239 = vmatprep.subr.mxu0 0.0
        %3240 = vmatpush1.xpose.msra.mxu0 0.0
        %3241 = vmatprep.subr.mxu0 0.0
        %3242 = vmatpush1.xpose.msra.mxu0 0.0
        %3243 = vmatprep.subr.mxu0 0.0
        %3244 = vmatpush1.xpose.msra.mxu0 0.0
        %3245 = vmatprep.subr.mxu0 0.0
        %3246 = vmatpush1.xpose.msra.mxu0 0.0
        %3247 = vmatprep.subr.mxu0 0.0
        %3248 = vmatpush1.xpose.msra.mxu0 0.0
        %3249 = vmatprep.subr.mxu0 0.0
        %3250 = vmatpush1.xpose.msra.mxu0 0.0
        %3251 = vmatprep.subr.mxu0 0.0
        %3252 = vmatpush1.xpose.msra.mxu0 0.0
        %3253 = vmatprep.subr.mxu0 0.0
        %3254 = vmatpush1.xpose.msra.mxu0 0.0
        %3255 = vmatprep.subr.mxu0 0.0
        %3256 = vmatpush1.xpose.msra.mxu0 0.0
        %3257 = vmatprep.subr.mxu0 0.0
        %3258 = vmatpush1.xpose.msra.mxu0 0.0
        %3259 = vmatprep.subr.mxu0 0.0
        %3260 = vmatpush1.xpose.msra.mxu0 0.0
        %3261 = vmatprep.subr.mxu0 0.0
        %3262 = vmatpush1.xpose.msra.mxu0 0.0
        %3263 = vmatprep.subr.mxu0 0.0
        %3264 = vmatpush1.xpose.msra.mxu0 0.0
        %3265 = vmatprep.subr.mxu0 0.0
        %3266 = vmatpush1.xpose.msra.mxu0 0.0
        %3267 = vmatprep.subr.mxu0 0.0
        %3268 = vmatpush1.xpose.msra.mxu0 0.0
        %3269 = vmatprep.subr.mxu0 0.0
        %3270 = vmatpush1.xpose.msra.mxu0 0.0
        %3271 = vmatprep.subr.mxu0 0.0
        %3272 = vmatpush1.xpose.msra.mxu0 0.0
        %3273 = vmatprep.subr.mxu0 0.0
        %3274 = vmatpush1.xpose.msra.mxu0 0.0
        %3275 = vmatprep.subr.mxu0 0.0
        %3276 = vmatpush1.xpose.msra.mxu0 0.0
        %3277 = vmatprep.subr.mxu0 0.0
        %3278 = vmatpush1.xpose.msra.mxu0 0.0
        %3279 = vmatprep.subr.mxu0 0.0
        %3280 = vmatpush1.xpose.msra.mxu0 0.0
        %3281 = vmatprep.subr.mxu0 0.0
        %3282 = vmatpush1.xpose.msra.mxu0 0.0
        %3283 = vmatprep.subr.mxu0 0.0
        %3284 = vmatpush1.xpose.msra.mxu0 0.0
        %3285 = vmatprep.subr.mxu0 0.0
        %3286 = vmatpush1.xpose.msra.mxu0 0.0
        %3287 = vmatprep.mubr.f32.mxu0 0.0
        %3288 = vmatmul.mubr.f32.gmra.mrb[0].mxu0 %v1840
        %v3289 = vpop.f32.mrb[0].mxu0
        %v3290 = vadd.f32 0.0, %v3289
        %v3291 = vpop.f32.mrb[0].mxu0
        %3292 = vmatprep.mubr.f32.mxu0 0.0
        %3293 = vmatmul.mubr.f32.gmra.mrb[0].mxu0 %v1843
        %v3294 = vpop.f32.mrb[0].mxu0
        %v3295 = vadd.f32 0.0, %v3294
        %v3296 = vpop.f32.mrb[0].mxu0
        %3297 = vdwg.mxu0
        %v3298 = vsel %vm2545, %v3290, -inf
        %3299 = vmax.xlane.f32.xlu0 %v3298
        %v3300 = vpop.xlane.xlu0 %3299
        %v3301 = vsel %vm2545, %v3295, -inf
        %3302 = vmax.xlane.f32.xlu0 %v3301
        %v3303 = vpop.xlane.xlu0 %3302
        %v3304 = vsub.f32 %v3290, %v3300
        %v3305 = vsub.f32 %v3295, %v3303
        %v3306 = vmul.f32 %v3304, 1.442695
        %v3307 = vpow.pop %v3306
        %v3308 = vmul.f32 %v3305, 1.442695
        %v3309 = vpow.pop %v3308
        %v3310 = vsel %vm2545, %v3307, 0.0
        %3311 = vadd.xlane.f32.xlu0 %v3310
        %v3312 = vpop.xlane.xlu0 %3311
        %v3313 = vsel %vm2545, %v3309, 0.0
        %3314 = vadd.xlane.f32.xlu0 %v3313
        %v3315 = vpop.xlane.xlu0 %3314
        %v3316 = vrcp.pop %v3312
        %v3317 = vrcp.pop %v3315
        %v3318 = vmul.f32 %v3307, %v3316
        %v3319 = vmul.f32 %v3309, %v3317
        %v3321 = vsel %vm2545, %v3318, 0
        %v3324 = vsel %vm2545, %v3319, 0
        %vm3326 = vcmask 1044480
        %v3328 = vsel %vm3326, %v3217, 0
        %3330 = vmatprep.subr.mxu0 0.0
        %3331 = vmatpush1.msra.mxu0 %v3328
        %3332 = vmatprep.subr.mxu0 0.0
        %3333 = vmatpush1.msra.mxu0 0.0
        %3334 = vmatprep.subr.mxu0 0.0
        %3335 = vmatpush1.msra.mxu0 0.0
        %3336 = vmatprep.subr.mxu0 0.0
        %3337 = vmatpush1.msra.mxu0 0.0
        %3338 = vmatprep.subr.mxu0 0.0
        %3339 = vmatpush1.msra.mxu0 0.0
        %3340 = vmatprep.subr.mxu0 0.0
        %3341 = vmatpush1.msra.mxu0 0.0
        %3342 = vmatprep.subr.mxu0 0.0
        %3343 = vmatpush1.msra.mxu0 0.0
        %3344 = vmatprep.subr.mxu0 0.0
        %3345 = vmatpush1.msra.mxu0 0.0
        %3346 = vmatprep.subr.mxu0 0.0
        %3347 = vmatpush1.msra.mxu0 0.0
        %3348 = vmatprep.subr.mxu0 0.0
        %3349 = vmatpush1.msra.mxu0 0.0
        %3350 = vmatprep.subr.mxu0 0.0
        %3351 = vmatpush1.msra.mxu0 0.0
        %3352 = vmatprep.subr.mxu0 0.0
        %3353 = vmatpush1.msra.mxu0 0.0
        %3354 = vmatprep.subr.mxu0 0.0
        %3355 = vmatpush1.msra.mxu0 0.0
        %3356 = vmatprep.subr.mxu0 0.0
        %3357 = vmatpush1.msra.mxu0 0.0
        %3358 = vmatprep.subr.mxu0 0.0
        %3359 = vmatpush1.msra.mxu0 0.0
        %3360 = vmatprep.subr.mxu0 0.0
        %3361 = vmatpush1.msra.mxu0 0.0
        %3362 = vmatprep.subr.mxu0 0.0
        %3363 = vmatpush1.msra.mxu0 0.0
        %3364 = vmatprep.subr.mxu0 0.0
        %3365 = vmatpush1.msra.mxu0 0.0
        %3366 = vmatprep.subr.mxu0 0.0
        %3367 = vmatpush1.msra.mxu0 0.0
        %3368 = vmatprep.subr.mxu0 0.0
        %3369 = vmatpush1.msra.mxu0 0.0
        %3370 = vmatprep.subr.mxu0 0.0
        %3371 = vmatpush1.msra.mxu0 0.0
        %3372 = vmatprep.subr.mxu0 0.0
        %3373 = vmatpush1.msra.mxu0 0.0
        %3374 = vmatprep.subr.mxu0 0.0
        %3375 = vmatpush1.msra.mxu0 0.0
        %3376 = vmatprep.subr.mxu0 0.0
        %3377 = vmatpush1.msra.mxu0 0.0
        %3378 = vmatprep.subr.mxu0 0.0
        %3379 = vmatpush1.msra.mxu0 0.0
        %3380 = vmatprep.subr.mxu0 0.0
        %3381 = vmatpush1.msra.mxu0 0.0
        %3382 = vmatprep.subr.mxu0 0.0
        %3383 = vmatpush1.msra.mxu0 0.0
        %3384 = vmatprep.subr.mxu0 0.0
        %3385 = vmatpush1.msra.mxu0 0.0
        %3386 = vmatprep.subr.mxu0 0.0
        %3387 = vmatpush1.msra.mxu0 0.0
        %3388 = vmatprep.subr.mxu0 0.0
        %3389 = vmatpush1.msra.mxu0 0.0
        %3390 = vmatprep.subr.mxu0 0.0
        %3391 = vmatpush1.msra.mxu0 0.0
        %3392 = vmatprep.subr.mxu0 0.0
        %3393 = vmatpush1.msra.mxu0 0.0
        %3394 = vmatprep.mubr.f32.mxu0 0.0
        %3395 = vmatmul.mubr.f32.gmra.mrb[0].mxu0 %v3321
        %v3396 = vpop.f32.mrb[0].mxu0
        %v3397 = vadd.f32 0.0, %v3396
        %v3398 = vpop.f32.mrb[0].mxu0
        %3399 = vmatprep.mubr.f32.mxu0 0.0
        %3400 = vmatmul.mubr.f32.gmra.mrb[0].mxu0 %v3324
        %v3401 = vpop.f32.mrb[0].mxu0
        %v3402 = vadd.f32 0.0, %v3401
        %v3403 = vpop.f32.mrb[0].mxu0
        %3404 = vdwg.mxu0
        %3405 = vrot.lane.b32.xlu0 %v3147, 112
        %v3406 = vpop.permute.xlu0 %3405
        %v3407 = vsel %vm1238, %v3406, 0
        %3409 = vmatprep.subr.mxu0 0.0
        %3410 = vmatpush1.xpose.msra.mxu0 %v3407
        %3411 = vmatprep.subr.mxu0 0.0
        %3412 = vmatpush1.xpose.msra.mxu0 0.0
        %3413 = vmatprep.subr.mxu0 0.0
        %3414 = vmatpush1.xpose.msra.mxu0 0.0
        %3415 = vmatprep.subr.mxu0 0.0
        %3416 = vmatpush1.xpose.msra.mxu0 0.0
        %3417 = vmatprep.subr.mxu0 0.0
        %3418 = vmatpush1.xpose.msra.mxu0 0.0
        %3419 = vmatprep.subr.mxu0 0.0
        %3420 = vmatpush1.xpose.msra.mxu0 0.0
        %3421 = vmatprep.subr.mxu0 0.0
        %3422 = vmatpush1.xpose.msra.mxu0 0.0
        %3423 = vmatprep.subr.mxu0 0.0
        %3424 = vmatpush1.xpose.msra.mxu0 0.0
        %3425 = vmatprep.subr.mxu0 0.0
        %3426 = vmatpush1.xpose.msra.mxu0 0.0
        %3427 = vmatprep.subr.mxu0 0.0
        %3428 = vmatpush1.xpose.msra.mxu0 0.0
        %3429 = vmatprep.subr.mxu0 0.0
        %3430 = vmatpush1.xpose.msra.mxu0 0.0
        %3431 = vmatprep.subr.mxu0 0.0
        %3432 = vmatpush1.xpose.msra.mxu0 0.0
        %3433 = vmatprep.subr.mxu0 0.0
        %3434 = vmatpush1.xpose.msra.mxu0 0.0
        %3435 = vmatprep.subr.mxu0 0.0
        %3436 = vmatpush1.xpose.msra.mxu0 0.0
        %3437 = vmatprep.subr.mxu0 0.0
        %3438 = vmatpush1.xpose.msra.mxu0 0.0
        %3439 = vmatprep.subr.mxu0 0.0
        %3440 = vmatpush1.xpose.msra.mxu0 0.0
        %3441 = vmatprep.subr.mxu0 0.0
        %3442 = vmatpush1.xpose.msra.mxu0 0.0
        %3443 = vmatprep.subr.mxu0 0.0
        %3444 = vmatpush1.xpose.msra.mxu0 0.0
        %3445 = vmatprep.subr.mxu0 0.0
        %3446 = vmatpush1.xpose.msra.mxu0 0.0
        %3447 = vmatprep.subr.mxu0 0.0
        %3448 = vmatpush1.xpose.msra.mxu0 0.0
        %3449 = vmatprep.subr.mxu0 0.0
        %3450 = vmatpush1.xpose.msra.mxu0 0.0
        %3451 = vmatprep.subr.mxu0 0.0
        %3452 = vmatpush1.xpose.msra.mxu0 0.0
        %3453 = vmatprep.subr.mxu0 0.0
        %3454 = vmatpush1.xpose.msra.mxu0 0.0
        %3455 = vmatprep.subr.mxu0 0.0
        %3456 = vmatpush1.xpose.msra.mxu0 0.0
        %3457 = vmatprep.subr.mxu0 0.0
        %3458 = vmatpush1.xpose.msra.mxu0 0.0
        %3459 = vmatprep.subr.mxu0 0.0
        %3460 = vmatpush1.xpose.msra.mxu0 0.0
        %3461 = vmatprep.subr.mxu0 0.0
        %3462 = vmatpush1.xpose.msra.mxu0 0.0
        %3463 = vmatprep.subr.mxu0 0.0
        %3464 = vmatpush1.xpose.msra.mxu0 0.0
        %3465 = vmatprep.subr.mxu0 0.0
        %3466 = vmatpush1.xpose.msra.mxu0 0.0
        %3467 = vmatprep.subr.mxu0 0.0
        %3468 = vmatpush1.xpose.msra.mxu0 0.0
        %3469 = vmatprep.subr.mxu0 0.0
        %3470 = vmatpush1.xpose.msra.mxu0 0.0
        %3471 = vmatprep.subr.mxu0 0.0
        %3472 = vmatpush1.xpose.msra.mxu0 0.0
        %3473 = vmatprep.mubr.f32.mxu0 0.0
        %3474 = vmatmul.mubr.f32.gmra.mrb[0].mxu0 %v2036
        %v3475 = vpop.f32.mrb[0].mxu0
        %v3476 = vadd.f32 0.0, %v3475
        %v3477 = vpop.f32.mrb[0].mxu0
        %3478 = vmatprep.mubr.f32.mxu0 0.0
        %3479 = vmatmul.mubr.f32.gmra.mrb[0].mxu0 %v2038
        %v3480 = vpop.f32.mrb[0].mxu0
        %v3481 = vadd.f32 0.0, %v3480
        %v3482 = vpop.f32.mrb[0].mxu0
        %3483 = vdwg.mxu0
        %v3484 = vsel %vm2545, %v3476, -inf
        %3485 = vmax.xlane.f32.xlu0 %v3484
        %v3486 = vpop.xlane.xlu0 %3485
        %v3487 = vsel %vm2545, %v3481, -inf
        %3488 = vmax.xlane.f32.xlu0 %v3487
        %v3489 = vpop.xlane.xlu0 %3488
        %v3490 = vsub.f32 %v3476, %v3486
        %v3491 = vsub.f32 %v3481, %v3489
        %v3492 = vmul.f32 %v3490, 1.442695
        %v3493 = vpow.pop %v3492
        %v3494 = vmul.f32 %v3491, 1.442695
        %v3495 = vpow.pop %v3494
        %v3496 = vsel %vm2545, %v3493, 0.0
        %3497 = vadd.xlane.f32.xlu0 %v3496
        %v3498 = vpop.xlane.xlu0 %3497
        %v3499 = vsel %vm2545, %v3495, 0.0
        %3500 = vadd.xlane.f32.xlu0 %v3499
        %v3501 = vpop.xlane.xlu0 %3500
        %v3502 = vrcp.pop %v3498
        %v3503 = vrcp.pop %v3501
        %v3504 = vmul.f32 %v3493, %v3502
        %v3505 = vmul.f32 %v3495, %v3503
        %v3506 = vadd.f32 %v3318, %v3504
        %v3507 = vadd.f32 %v3319, %v3505
        %3508 = vrot.lane.b32.xlu0 %v3217, 112
        %v3509 = vpop.permute.xlu0 %3508
        %v3511 = vsel %vm2545, %v3504, 0
        %v3514 = vsel %vm2545, %v3505, 0
        %v3516 = vsel %vm3326, %v3509, 0
        %3518 = vmatprep.subr.mxu0 0.0
        %3519 = vmatpush1.msra.mxu0 %v3516
        %3520 = vmatprep.subr.mxu0 0.0
        %3521 = vmatpush1.msra.mxu0 0.0
        %3522 = vmatprep.subr.mxu0 0.0
        %3523 = vmatpush1.msra.mxu0 0.0
        %3524 = vmatprep.subr.mxu0 0.0
        %3525 = vmatpush1.msra.mxu0 0.0
        %3526 = vmatprep.subr.mxu0 0.0
        %3527 = vmatpush1.msra.mxu0 0.0
        %3528 = vmatprep.subr.mxu0 0.0
        %3529 = vmatpush1.msra.mxu0 0.0
        %3530 = vmatprep.subr.mxu0 0.0
        %3531 = vmatpush1.msra.mxu0 0.0
        %3532 = vmatprep.subr.mxu0 0.0
        %3533 = vmatpush1.msra.mxu0 0.0
        %3534 = vmatprep.subr.mxu0 0.0
        %3535 = vmatpush1.msra.mxu0 0.0
        %3536 = vmatprep.subr.mxu0 0.0
        %3537 = vmatpush1.msra.mxu0 0.0
        %3538 = vmatprep.subr.mxu0 0.0
        %3539 = vmatpush1.msra.mxu0 0.0
        %3540 = vmatprep.subr.mxu0 0.0
        %3541 = vmatpush1.msra.mxu0 0.0
        %3542 = vmatprep.subr.mxu0 0.0
        %3543 = vmatpush1.msra.mxu0 0.0
        %3544 = vmatprep.subr.mxu0 0.0
        %3545 = vmatpush1.msra.mxu0 0.0
        %3546 = vmatprep.subr.mxu0 0.0
        %3547 = vmatpush1.msra.mxu0 0.0
        %3548 = vmatprep.subr.mxu0 0.0
        %3549 = vmatpush1.msra.mxu0 0.0
        %3550 = vmatprep.subr.mxu0 0.0
        %3551 = vmatpush1.msra.mxu0 0.0
        %3552 = vmatprep.subr.mxu0 0.0
        %3553 = vmatpush1.msra.mxu0 0.0
        %3554 = vmatprep.subr.mxu0 0.0
        %3555 = vmatpush1.msra.mxu0 0.0
        %3556 = vmatprep.subr.mxu0 0.0
        %3557 = vmatpush1.msra.mxu0 0.0
        %3558 = vmatprep.subr.mxu0 0.0
        %3559 = vmatpush1.msra.mxu0 0.0
        %3560 = vmatprep.subr.mxu0 0.0
        %3561 = vmatpush1.msra.mxu0 0.0
        %3562 = vmatprep.subr.mxu0 0.0
        %3563 = vmatpush1.msra.mxu0 0.0
        %3564 = vmatprep.subr.mxu0 0.0
        %3565 = vmatpush1.msra.mxu0 0.0
        %3566 = vmatprep.subr.mxu0 0.0
        %3567 = vmatpush1.msra.mxu0 0.0
        %3568 = vmatprep.subr.mxu0 0.0
        %3569 = vmatpush1.msra.mxu0 0.0
        %3570 = vmatprep.subr.mxu0 0.0
        %3571 = vmatpush1.msra.mxu0 0.0
        %3572 = vmatprep.subr.mxu0 0.0
        %3573 = vmatpush1.msra.mxu0 0.0
        %3574 = vmatprep.subr.mxu0 0.0
        %3575 = vmatpush1.msra.mxu0 0.0
        %3576 = vmatprep.subr.mxu0 0.0
        %3577 = vmatpush1.msra.mxu0 0.0
        %3578 = vmatprep.subr.mxu0 0.0
        %3579 = vmatpush1.msra.mxu0 0.0
        %3580 = vmatprep.subr.mxu0 0.0
        %3581 = vmatpush1.msra.mxu0 0.0
        %3582 = vmatprep.mubr.f32.mxu0 0.0
        %3583 = vmatmul.mubr.f32.gmra.mrb[0].mxu0 %v3511
        %v3584 = vpop.f32.mrb[0].mxu0
        %v3585 = vadd.f32 0.0, %v3584
        %v3586 = vpop.f32.mrb[0].mxu0
        %3587 = vmatprep.mubr.f32.mxu0 0.0
        %3588 = vmatmul.mubr.f32.gmra.mrb[0].mxu0 %v3514
        %v3589 = vpop.f32.mrb[0].mxu0
        %v3590 = vadd.f32 0.0, %v3589
        %v3591 = vpop.f32.mrb[0].mxu0
        %3592 = vdwg.mxu0
        %3595 = vrot.lane.b32.xlu0 %v3585, 16
        %v3596 = vpop.permute.xlu0 %3595
        %3597 = vrot.lane.b32.xlu0 %v3590, 16
        %v3598 = vpop.permute.xlu0 %3597
        %v3601 = vsel %vm1238, %v3397, %v3596
        %v3602 = vsel %vm1238, %v3402, %v3598
        %v3604 = vsel %vm632, %v3601, 0
        %v3607 = vsel %vm632, %v3602, 0
        %3609 = vmatprep.subr.mxu0 0.0
        %3610 = vmatpush1.msra.mxu0 %v793
        %3611 = vmatprep.subr.mxu0 0.0
        %3612 = vmatpush1.msra.mxu0 %v794
        %3613 = vmatprep.subr.mxu0 0.0
        %3614 = vmatpush1.msra.mxu0 %v795
        %3615 = vmatprep.subr.mxu0 0.0
        %3616 = vmatpush1.msra.mxu0 %v796
        %3617 = vmatprep.subr.mxu0 0.0
        %3618 = vmatpush1.msra.mxu0 0.0
        %3619 = vmatprep.subr.mxu0 0.0
        %3620 = vmatpush1.msra.mxu0 0.0
        %3621 = vmatprep.subr.mxu0 0.0
        %3622 = vmatpush1.msra.mxu0 0.0
        %3623 = vmatprep.subr.mxu0 0.0
        %3624 = vmatpush1.msra.mxu0 0.0
        %3625 = vmatprep.subr.mxu0 0.0
        %3626 = vmatpush1.msra.mxu0 0.0
        %3627 = vmatprep.subr.mxu0 0.0
        %3628 = vmatpush1.msra.mxu0 0.0
        %3629 = vmatprep.subr.mxu0 0.0
        %3630 = vmatpush1.msra.mxu0 0.0
        %3631 = vmatprep.subr.mxu0 0.0
        %3632 = vmatpush1.msra.mxu0 0.0
        %3633 = vmatprep.subr.mxu0 0.0
        %3634 = vmatpush1.msra.mxu0 0.0
        %3635 = vmatprep.subr.mxu0 0.0
        %3636 = vmatpush1.msra.mxu0 0.0
        %3637 = vmatprep.subr.mxu0 0.0
        %3638 = vmatpush1.msra.mxu0 0.0
        %3639 = vmatprep.subr.mxu0 0.0
        %3640 = vmatpush1.msra.mxu0 0.0
        %3641 = vmatprep.subr.mxu0 0.0
        %3642 = vmatpush1.msra.mxu0 0.0
        %3643 = vmatprep.subr.mxu0 0.0
        %3644 = vmatpush1.msra.mxu0 0.0
        %3645 = vmatprep.subr.mxu0 0.0
        %3646 = vmatpush1.msra.mxu0 0.0
        %3647 = vmatprep.subr.mxu0 0.0
        %3648 = vmatpush1.msra.mxu0 0.0
        %3649 = vmatprep.subr.mxu0 0.0
        %3650 = vmatpush1.msra.mxu0 0.0
        %3651 = vmatprep.subr.mxu0 0.0
        %3652 = vmatpush1.msra.mxu0 0.0
        %3653 = vmatprep.subr.mxu0 0.0
        %3654 = vmatpush1.msra.mxu0 0.0
        %3655 = vmatprep.subr.mxu0 0.0
        %3656 = vmatpush1.msra.mxu0 0.0
        %3657 = vmatprep.subr.mxu0 0.0
        %3658 = vmatpush1.msra.mxu0 0.0
        %3659 = vmatprep.subr.mxu0 0.0
        %3660 = vmatpush1.msra.mxu0 0.0
        %3661 = vmatprep.subr.mxu0 0.0
        %3662 = vmatpush1.msra.mxu0 0.0
        %3663 = vmatprep.subr.mxu0 0.0
        %3664 = vmatpush1.msra.mxu0 0.0
        %3665 = vmatprep.subr.mxu0 0.0
        %3666 = vmatpush1.msra.mxu0 0.0
        %3667 = vmatprep.subr.mxu0 0.0
        %3668 = vmatpush1.msra.mxu0 0.0
        %3669 = vmatprep.subr.mxu0 0.0
        %3670 = vmatpush1.msra.mxu0 0.0
        %3671 = vmatprep.subr.mxu0 0.0
        %3672 = vmatpush1.msra.mxu0 0.0
        %3673 = vmatprep.mubr.f32.mxu0 0.0
        %3674 = vmatmul.mubr.f32.gmra.mrb[0].mxu0 %v3604
        %v3675 = vpop.f32.mrb[0].mxu0
        %v3676 = vadd.f32 %v2240, %v3675
        %v3677 = vpop.f32.mrb[0].mxu0
        %3678 = vmatprep.mubr.f32.mxu0 0.0
        %3679 = vmatmul.mubr.f32.gmra.mrb[0].mxu0 %v3607
        %v3680 = vpop.f32.mrb[0].mxu0
        %v3681 = vadd.f32 %v2240, %v3680
        %v3682 = vpop.f32.mrb[0].mxu0
        %3683 = vdwg.mxu0
        %v3684 = vmul.f32 %v3506, 0.5
        %v3685 = vmul.f32 %v3507, 0.5
        %v3686 = vsel %vm2325, %v3676, 0.0
        %v3687 = vsel %vm2325, %v3681, 0.0
        %v3688 = vadd.f32 %v3686, %v3687
        %v3689 = vrot.slane %v3688, 4
        %v3690 = vadd.f32 %v3688, %v3689
        %v3691 = vrot.slane %v3690, 2
        %v3692 = vadd.f32 %v3690, %v3691
        %v3693 = vrot.slane %v3692, 1
        %v3694 = vadd.f32 %v3692, %v3693
        %v3695 = vmul.f32 %v3694, %v2335
        %v3696 = vsel %vm2545, %v3684, 0.0
        %v3697 = vsel %vm2545, %v3685, 0.0
        %v3698 = vadd.f32 %v3696, %v3697
        %v3699 = vrot.slane %v3698, 4
        %v3700 = vadd.f32 %v3698, %v3699
        %v3701 = vrot.slane %v3700, 2
        %v3702 = vadd.f32 %v3700, %v3701
        %v3703 = vrot.slane %v3702, 1
        %v3704 = vadd.f32 %v3702, %v3703
        %v3705 = vmul.f32 %v3704, %v2335
        %s3706 = scalar_lea.vmem %s5, 192
        %v3707 = vld [vmem:[%s3706] sm:$0xff]
        %v3708 = vld [vmem:[%s3706 + $0x8] sm:$0xff]
        %v3709 = vld [vmem:[%s3706 + $0x10] sm:$0xff]
        %v3710 = vld [vmem:[%s3706 + $0x18] sm:$0xff]
        %v3711 = vld [vmem:[%s3706 + $0x20] sm:$0xff]
        %v3712 = vld [vmem:[%s3706 + $0x28] sm:$0xff]
        %v3713 = vld [vmem:[%s3706 + $0x30] sm:$0xff]
        %v3714 = vld [vmem:[%s3706 + $0x38] sm:$0xff]
        %v3715 = vld [vmem:[%s3706 + $0x40] sm:$0xff]
        %v3716 = vld [vmem:[%s3706 + $0x48] sm:$0xff]
        %v3717 = vld [vmem:[%s3706 + $0x50] sm:$0xff]
        %v3718 = vld [vmem:[%s3706 + $0x58] sm:$0xff]
        %s3719 = scalar_lea.vmem %s6, 128
        %v3720 = vld [vmem:[%s3719] sm:$0xff]
        %v3721 = vld [vmem:[%s3719 + $0x8] sm:$0xff]
        %v3722 = vld [vmem:[%s3719 + $0x10] sm:$0xff]
        %v3723 = vld [vmem:[%s3719 + $0x18] sm:$0xff]
        %v3724 = vld [vmem:[%s3719 + $0x20] sm:$0xff]
        %v3725 = vld [vmem:[%s3719 + $0x28] sm:$0xff]
        %v3726 = vld [vmem:[%s3719 + $0x30] sm:$0xff]
        %v3727 = vld [vmem:[%s3719 + $0x38] sm:$0xff]
        %s3728 = scalar_lea.vmem [#allocation6], 6
        %v3729 = vld [vmem:[%s3728] sm:$0x1]
        %v3730 = vld [vmem:[%s3728 + $0x1] sm:$0x1]
        %v3731 = vld [vmem:[%s3728 + $0x2] sm:$0x1]
        %s3732 = scalar_lea.vmem [#allocation7], 4
        %v3733 = vld [vmem:[%s3732] sm:$0x1]
        %v3734 = vld [vmem:[%s3732 + $0x1] sm:$0x1]
        %vm3735 = vcmask 260096
        %v3736 = vsel %vm3735, %v765, 0.0
        %3737 = vadd.xlane.f32.xlu0 %v3736
        %v3738 = vpop.xlane.xlu0 %3737
        %v3739 = vmul.f32 %v3738, %v639
        %v3740 = vsub.f32 %v765, %v3739
        %v3741 = vmul.f32 %v3740, %v3740
        %v3742 = vsel %vm3735, %v3741, 0.0
        %3743 = vadd.xlane.f32.xlu0 %v3742
        %v3744 = vpop.xlane.xlu0 %3743
        %v3745 = vmul.f32 %v3744, %v639
        %v3746 = vadd.f32 %v3745, 1e-05
        %v3747 = vrsqrt.pop %v3746
        %v3748 = vmul.f32 %v3740, %v3747
        %v3750 = vlaneseq
        %v3751 = vshrl.u32 %v3750, 7
        %v3752 = vsub.s32 0, %v3751
        %v3753 = vrot.slane %v3729, %v3752
        %v3756 = vsel %vm632, %v3748, 0
        %3758 = vmatprep.subr.mxu0 0.0
        %3759 = vmatpush1.msra.mxu0 %v3707
        %3760 = vmatprep.subr.mxu0 0.0
        %3761 = vmatpush1.msra.mxu0 %v3708
        %3762 = vmatprep.subr.mxu0 0.0
        %3763 = vmatpush1.msra.mxu0 %v3709
        %3764 = vmatprep.subr.mxu0 0.0
        %3765 = vmatpush1.msra.mxu0 %v3710
        %3766 = vmatprep.subr.mxu0 0.0
        %3767 = vmatpush1.msra.mxu0 0.0
        %3768 = vmatprep.subr.mxu0 0.0
        %3769 = vmatpush1.msra.mxu0 0.0
        %3770 = vmatprep.subr.mxu0 0.0
        %3771 = vmatpush1.msra.mxu0 0.0
        %3772 = vmatprep.subr.mxu0 0.0
        %3773 = vmatpush1.msra.mxu0 0.0
        %3774 = vmatprep.subr.mxu0 0.0
        %3775 = vmatpush1.msra.mxu0 0.0
        %3776 = vmatprep.subr.mxu0 0.0
        %3777 = vmatpush1.msra.mxu0 0.0
        %3778 = vmatprep.subr.mxu0 0.0
        %3779 = vmatpush1.msra.mxu0 0.0
        %3780 = vmatprep.subr.mxu0 0.0
        %3781 = vmatpush1.msra.mxu0 0.0
        %3782 = vmatprep.subr.mxu0 0.0
        %3783 = vmatpush1.msra.mxu0 0.0
        %3784 = vmatprep.subr.mxu0 0.0
        %3785 = vmatpush1.msra.mxu0 0.0
        %3786 = vmatprep.subr.mxu0 0.0
        %3787 = vmatpush1.msra.mxu0 0.0
        %3788 = vmatprep.subr.mxu0 0.0
        %3789 = vmatpush1.msra.mxu0 0.0
        %3790 = vmatprep.subr.mxu0 0.0
        %3791 = vmatpush1.msra.mxu0 0.0
        %3792 = vmatprep.subr.mxu0 0.0
        %3793 = vmatpush1.msra.mxu0 0.0
        %3794 = vmatprep.subr.mxu0 0.0
        %3795 = vmatpush1.msra.mxu0 0.0
        %3796 = vmatprep.subr.mxu0 0.0
        %3797 = vmatpush1.msra.mxu0 0.0
        %3798 = vmatprep.subr.mxu0 0.0
        %3799 = vmatpush1.msra.mxu0 0.0
        %3800 = vmatprep.subr.mxu0 0.0
        %3801 = vmatpush1.msra.mxu0 0.0
        %3802 = vmatprep.subr.mxu0 0.0
        %3803 = vmatpush1.msra.mxu0 0.0
        %3804 = vmatprep.subr.mxu0 0.0
        %3805 = vmatpush1.msra.mxu0 0.0
        %3806 = vmatprep.subr.mxu0 0.0
        %3807 = vmatpush1.msra.mxu0 0.0
        %3808 = vmatprep.subr.mxu0 0.0
        %3809 = vmatpush1.msra.mxu0 0.0
        %3810 = vmatprep.subr.mxu0 0.0
        %3811 = vmatpush1.msra.mxu0 0.0
        %3812 = vmatprep.subr.mxu0 0.0
        %3813 = vmatpush1.msra.mxu0 0.0
        %3814 = vmatprep.subr.mxu0 0.0
        %3815 = vmatpush1.msra.mxu0 0.0
        %3816 = vmatprep.subr.mxu0 0.0
        %3817 = vmatpush1.msra.mxu0 0.0
        %3818 = vmatprep.subr.mxu0 0.0
        %3819 = vmatpush1.msra.mxu0 0.0
        %3820 = vmatprep.subr.mxu0 0.0
        %3821 = vmatpush1.msra.mxu0 0.0
        %3822 = vmatprep.mubr.f32.mxu0 0.0
        %3823 = vmatmul.mubr.f32.gmra.mrb[0].mxu0 %v3756
        %v3824 = vpop.f32.mrb[0].mxu0
        %v3825 = vadd.f32 %v3753, %v3824
        %v3826 = vpop.f32.mrb[0].mxu0
        %3827 = vdwg.mxu0
        %v3829 = vsel %vm632, %v755, 0
        %v3832 = vsel %vm632, %v761, 0
        %v3835 = vsel %vm632, %v3825, 0
        %3837 = vmatprep.subr.mxu0 0.0
        %3838 = vmatpush1.xpose.msra.mxu0 %v3835
        %3839 = vmatprep.subr.mxu0 0.0
        %3840 = vmatpush1.xpose.msra.mxu0 0.0
        %3841 = vmatprep.subr.mxu0 0.0
        %3842 = vmatpush1.xpose.msra.mxu0 0.0
        %3843 = vmatprep.subr.mxu0 0.0
        %3844 = vmatpush1.xpose.msra.mxu0 0.0
        %3845 = vmatprep.subr.mxu0 0.0
        %3846 = vmatpush1.xpose.msra.mxu0 0.0
        %3847 = vmatprep.subr.mxu0 0.0
        %3848 = vmatpush1.xpose.msra.mxu0 0.0
        %3849 = vmatprep.subr.mxu0 0.0
        %3850 = vmatpush1.xpose.msra.mxu0 0.0
        %3851 = vmatprep.subr.mxu0 0.0
        %3852 = vmatpush1.xpose.msra.mxu0 0.0
        %3853 = vmatprep.subr.mxu0 0.0
        %3854 = vmatpush1.xpose.msra.mxu0 0.0
        %3855 = vmatprep.subr.mxu0 0.0
        %3856 = vmatpush1.xpose.msra.mxu0 0.0
        %3857 = vmatprep.subr.mxu0 0.0
        %3858 = vmatpush1.xpose.msra.mxu0 0.0
        %3859 = vmatprep.subr.mxu0 0.0
        %3860 = vmatpush1.xpose.msra.mxu0 0.0
        %3861 = vmatprep.subr.mxu0 0.0
        %3862 = vmatpush1.xpose.msra.mxu0 0.0
        %3863 = vmatprep.subr.mxu0 0.0
        %3864 = vmatpush1.xpose.msra.mxu0 0.0
        %3865 = vmatprep.subr.mxu0 0.0
        %3866 = vmatpush1.xpose.msra.mxu0 0.0
        %3867 = vmatprep.subr.mxu0 0.0
        %3868 = vmatpush1.xpose.msra.mxu0 0.0
        %3869 = vmatprep.subr.mxu0 0.0
        %3870 = vmatpush1.xpose.msra.mxu0 0.0
        %3871 = vmatprep.subr.mxu0 0.0
        %3872 = vmatpush1.xpose.msra.mxu0 0.0
        %3873 = vmatprep.subr.mxu0 0.0
        %3874 = vmatpush1.xpose.msra.mxu0 0.0
        %3875 = vmatprep.subr.mxu0 0.0
        %3876 = vmatpush1.xpose.msra.mxu0 0.0
        %3877 = vmatprep.subr.mxu0 0.0
        %3878 = vmatpush1.xpose.msra.mxu0 0.0
        %3879 = vmatprep.subr.mxu0 0.0
        %3880 = vmatpush1.xpose.msra.mxu0 0.0
        %3881 = vmatprep.subr.mxu0 0.0
        %3882 = vmatpush1.xpose.msra.mxu0 0.0
        %3883 = vmatprep.subr.mxu0 0.0
        %3884 = vmatpush1.xpose.msra.mxu0 0.0
        %3885 = vmatprep.subr.mxu0 0.0
        %3886 = vmatpush1.xpose.msra.mxu0 0.0
        %3887 = vmatprep.subr.mxu0 0.0
        %3888 = vmatpush1.xpose.msra.mxu0 0.0
        %3889 = vmatprep.subr.mxu0 0.0
        %3890 = vmatpush1.xpose.msra.mxu0 0.0
        %3891 = vmatprep.subr.mxu0 0.0
        %3892 = vmatpush1.xpose.msra.mxu0 0.0
        %3893 = vmatprep.subr.mxu0 0.0
        %3894 = vmatpush1.xpose.msra.mxu0 0.0
        %3895 = vmatprep.subr.mxu0 0.0
        %3896 = vmatpush1.xpose.msra.mxu0 0.0
        %3897 = vmatprep.subr.mxu0 0.0
        %3898 = vmatpush1.xpose.msra.mxu0 0.0
        %3899 = vmatprep.subr.mxu0 0.0
        %3900 = vmatpush1.xpose.msra.mxu0 0.0
        %3901 = vmatprep.mubr.f32.mxu0 0.0
        %3902 = vmatmul.mubr.f32.gmra.mrb[0].mxu0 %v3829
        %v3903 = vpop.f32.mrb[0].mxu0
        %v3904 = vadd.f32 0.0, %v3903
        %v3905 = vpop.f32.mrb[0].mxu0
        %3906 = vmatprep.mubr.f32.mxu0 0.0
        %3907 = vmatmul.mubr.f32.gmra.mrb[0].mxu0 %v3832
        %v3908 = vpop.f32.mrb[0].mxu0
        %v3909 = vadd.f32 0.0, %v3908
        %v3910 = vpop.f32.mrb[0].mxu0
        %3911 = vdwg.mxu0
        %vm3912 = vcmask 56320
        %v3913 = vsel %vm3912, %v3904, -inf
        %3914 = vmax.xlane.f32.xlu0 %v3913
        %v3915 = vpop.xlane.xlu0 %3914
        %v3916 = vsel %vm3912, %v3909, -inf
        %3917 = vmax.xlane.f32.xlu0 %v3916
        %v3918 = vpop.xlane.xlu0 %3917
        %v3919 = vsub.f32 %v3904, %v3915
        %v3920 = vsub.f32 %v3909, %v3918
        %v3921 = vmul.f32 %v3919, 1.442695
        %v3922 = vpow.pop %v3921
        %v3923 = vmul.f32 %v3920, 1.442695
        %v3924 = vpow.pop %v3923
        %v3925 = vsel %vm3912, %v3922, 0.0
        %3926 = vadd.xlane.f32.xlu0 %v3925
        %v3927 = vpop.xlane.xlu0 %3926
        %v3928 = vsel %vm3912, %v3924, 0.0
        %3929 = vadd.xlane.f32.xlu0 %v3928
        %v3930 = vpop.xlane.xlu0 %3929
        %v3931 = vrcp.pop %v3927
        %v3932 = vrcp.pop %v3930
        %v3933 = vmul.f32 %v3922, %v3931
        %v3934 = vmul.f32 %v3924, %v3932
        %v3935 = vadd.f32 %v3933, 1e-08
        %v3936 = vadd.f32 %v3934, 1e-08
        %v3937 = vsel %vm3912, %v3935, 0.0
        %v3938 = vsel %vm3912, %v3936, 0.0
        %v3939 = vadd.f32 %v3937, %v3938
        %v3940 = vrot.slane %v3939, 4
        %v3941 = vadd.f32 %v3939, %v3940
        %v3942 = vrot.slane %v3941, 2
        %v3943 = vadd.f32 %v3941, %v3942
        %v3944 = vrot.slane %v3943, 1
        %v3945 = vadd.f32 %v3943, %v3944
        %v3946 = vrcp.pop %v3945
        %v3947 = vmul.f32 %v3935, %v3946
        %v3948 = vmul.f32 %v3936, %v3946
        %3949 = vxpose.xlu0.b32.start [1/16] %v3947, 128
        %3950 = vxpose.xlu0.b32.cont [2/16] %v3948, 128
        %3951 = vxpose.xlu0.b32.cont [3/16] 0.0, 128
        %3952 = vxpose.xlu0.b32.cont [4/16] 0.0, 128
        %3953 = vxpose.xlu0.b32.cont [5/16] 0.0, 128
        %3954 = vxpose.xlu0.b32.cont [6/16] 0.0, 128
        %3955 = vxpose.xlu0.b32.cont [7/16] 0.0, 128
        %3956 = vxpose.xlu0.b32.cont [8/16] 0.0, 128
        %3957 = vxpose.xlu0.b32.cont [9/16] 0.0, 128
        %3958 = vxpose.xlu0.b32.cont [10/16] 0.0, 128
        %3959 = vxpose.xlu0.b32.cont [11/16] 0.0, 128
        %3960 = vxpose.xlu0.b32.cont [12/16] 0.0, 128
        %3961 = vxpose.xlu0.b32.cont [13/16] 0.0, 128
        %3962 = vxpose.xlu0.b32.cont [14/16] 0.0, 128
        %3963 = vxpose.xlu0.b32.cont [15/16] 0.0, 128
        %3964 = vxpose.xlu0.b32.end [16/16] 0.0, 128
        %v3965 = vpop.trf.xlu0
        %v3966 = vpop.trf.xlu0
        %v3967 = vpop.trf.xlu0
        %v3968 = vpop.trf.xlu0
        %v3969 = vpop.trf.xlu0
        %v3970 = vpop.trf.xlu0
        %v3971 = vpop.trf.xlu0
        %v3972 = vpop.trf.xlu0
        %v3973 = vpop.trf.xlu0
        %v3974 = vpop.trf.xlu0
        %v3975 = vpop.trf.xlu0
        %v3976 = vpop.trf.xlu0
        %v3977 = vpop.trf.xlu0
        %v3978 = vpop.trf.xlu0
        %v3979 = vpop.trf.xlu0
        %v3980 = vpop.trf.xlu0
        %3981 = vrot.lane.b32.xlu0 %v755, 96
        %v3982 = vpop.permute.xlu0 %3981
        %3983 = vrot.lane.b32.xlu0 %v761, 96
        %v3984 = vpop.permute.xlu0 %3983
        %v3988 = vsel %vm1238, %v3965, 0
        %3990 = vmatprep.subr.mxu0 0.0
        %3991 = vmatpush1.msra.mxu0 %v3982
        %3992 = vmatprep.subr.mxu0 0.0
        %3993 = vmatpush1.msra.mxu0 %v3984
        %3994 = vmatprep.subr.mxu0 0.0
        %3995 = vmatpush1.msra.mxu0 0.0
        %3996 = vmatprep.subr.mxu0 0.0
        %3997 = vmatpush1.msra.mxu0 0.0
        %3998 = vmatprep.subr.mxu0 0.0
        %3999 = vmatpush1.msra.mxu0 0.0
        %4000 = vmatprep.subr.mxu0 0.0
        %4001 = vmatpush1.msra.mxu0 0.0
        %4002 = vmatprep.subr.mxu0 0.0
        %4003 = vmatpush1.msra.mxu0 0.0
        %4004 = vmatprep.subr.mxu0 0.0
        %4005 = vmatpush1.msra.mxu0 0.0
        %4006 = vmatprep.subr.mxu0 0.0
        %4007 = vmatpush1.msra.mxu0 0.0
        %4008 = vmatprep.subr.mxu0 0.0
        %4009 = vmatpush1.msra.mxu0 0.0
        %4010 = vmatprep.subr.mxu0 0.0
        %4011 = vmatpush1.msra.mxu0 0.0
        %4012 = vmatprep.subr.mxu0 0.0
        %4013 = vmatpush1.msra.mxu0 0.0
        %4014 = vmatprep.subr.mxu0 0.0
        %4015 = vmatpush1.msra.mxu0 0.0
        %4016 = vmatprep.subr.mxu0 0.0
        %4017 = vmatpush1.msra.mxu0 0.0
        %4018 = vmatprep.subr.mxu0 0.0
        %4019 = vmatpush1.msra.mxu0 0.0
        %4020 = vmatprep.subr.mxu0 0.0
        %4021 = vmatpush1.msra.mxu0 0.0
        %4022 = vmatprep.subr.mxu0 0.0
        %4023 = vmatpush1.msra.mxu0 0.0
        %4024 = vmatprep.subr.mxu0 0.0
        %4025 = vmatpush1.msra.mxu0 0.0
        %4026 = vmatprep.subr.mxu0 0.0
        %4027 = vmatpush1.msra.mxu0 0.0
        %4028 = vmatprep.subr.mxu0 0.0
        %4029 = vmatpush1.msra.mxu0 0.0
        %4030 = vmatprep.subr.mxu0 0.0
        %4031 = vmatpush1.msra.mxu0 0.0
        %4032 = vmatprep.subr.mxu0 0.0
        %4033 = vmatpush1.msra.mxu0 0.0
        %4034 = vmatprep.subr.mxu0 0.0
        %4035 = vmatpush1.msra.mxu0 0.0
        %4036 = vmatprep.subr.mxu0 0.0
        %4037 = vmatpush1.msra.mxu0 0.0
        %4038 = vmatprep.subr.mxu0 0.0
        %4039 = vmatpush1.msra.mxu0 0.0
        %4040 = vmatprep.subr.mxu0 0.0
        %4041 = vmatpush1.msra.mxu0 0.0
        %4042 = vmatprep.subr.mxu0 0.0
        %4043 = vmatpush1.msra.mxu0 0.0
        %4044 = vmatprep.subr.mxu0 0.0
        %4045 = vmatpush1.msra.mxu0 0.0
        %4046 = vmatprep.subr.mxu0 0.0
        %4047 = vmatpush1.msra.mxu0 0.0
        %4048 = vmatprep.subr.mxu0 0.0
        %4049 = vmatpush1.msra.mxu0 0.0
        %4050 = vmatprep.subr.mxu0 0.0
        %4051 = vmatpush1.msra.mxu0 0.0
        %4052 = vmatprep.subr.mxu0 0.0
        %4053 = vmatpush1.msra.mxu0 0.0
        %4054 = vmatprep.mubr.f32.mxu0 0.0
        %4055 = vmatmul.mubr.f32.gmra.mrb[0].mxu0 %v3988
        %v4056 = vpop.f32.mrb[0].mxu0
        %v4057 = vadd.f32 0.0, %v4056
        %v4058 = vpop.f32.mrb[0].mxu0
        %4059 = vdwg.mxu0
        %v4061 = vlaneseq
        %v4062 = vshrl.u32 %v4061, 7
        %v4063 = vsub.s32 0, %v4062
        %v4064 = vrot.slane %v3733, %v4063
        %v4067 = vsel %vm632, %v4057, 0
        %4069 = vmatprep.subr.mxu0 0.0
        %4070 = vmatpush1.msra.mxu0 %v3720
        %4071 = vmatprep.subr.mxu0 0.0
        %4072 = vmatpush1.msra.mxu0 %v3721
        %4073 = vmatprep.subr.mxu0 0.0
        %4074 = vmatpush1.msra.mxu0 %v3722
        %4075 = vmatprep.subr.mxu0 0.0
        %4076 = vmatpush1.msra.mxu0 %v3723
        %4077 = vmatprep.subr.mxu0 0.0
        %4078 = vmatpush1.msra.mxu0 0.0
        %4079 = vmatprep.subr.mxu0 0.0
        %4080 = vmatpush1.msra.mxu0 0.0
        %4081 = vmatprep.subr.mxu0 0.0
        %4082 = vmatpush1.msra.mxu0 0.0
        %4083 = vmatprep.subr.mxu0 0.0
        %4084 = vmatpush1.msra.mxu0 0.0
        %4085 = vmatprep.subr.mxu0 0.0
        %4086 = vmatpush1.msra.mxu0 0.0
        %4087 = vmatprep.subr.mxu0 0.0
        %4088 = vmatpush1.msra.mxu0 0.0
        %4089 = vmatprep.subr.mxu0 0.0
        %4090 = vmatpush1.msra.mxu0 0.0
        %4091 = vmatprep.subr.mxu0 0.0
        %4092 = vmatpush1.msra.mxu0 0.0
        %4093 = vmatprep.subr.mxu0 0.0
        %4094 = vmatpush1.msra.mxu0 0.0
        %4095 = vmatprep.subr.mxu0 0.0
        %4096 = vmatpush1.msra.mxu0 0.0
        %4097 = vmatprep.subr.mxu0 0.0
        %4098 = vmatpush1.msra.mxu0 0.0
        %4099 = vmatprep.subr.mxu0 0.0
        %4100 = vmatpush1.msra.mxu0 0.0
        %4101 = vmatprep.subr.mxu0 0.0
        %4102 = vmatpush1.msra.mxu0 0.0
        %4103 = vmatprep.subr.mxu0 0.0
        %4104 = vmatpush1.msra.mxu0 0.0
        %4105 = vmatprep.subr.mxu0 0.0
        %4106 = vmatpush1.msra.mxu0 0.0
        %4107 = vmatprep.subr.mxu0 0.0
        %4108 = vmatpush1.msra.mxu0 0.0
        %4109 = vmatprep.subr.mxu0 0.0
        %4110 = vmatpush1.msra.mxu0 0.0
        %4111 = vmatprep.subr.mxu0 0.0
        %4112 = vmatpush1.msra.mxu0 0.0
        %4113 = vmatprep.subr.mxu0 0.0
        %4114 = vmatpush1.msra.mxu0 0.0
        %4115 = vmatprep.subr.mxu0 0.0
        %4116 = vmatpush1.msra.mxu0 0.0
        %4117 = vmatprep.subr.mxu0 0.0
        %4118 = vmatpush1.msra.mxu0 0.0
        %4119 = vmatprep.subr.mxu0 0.0
        %4120 = vmatpush1.msra.mxu0 0.0
        %4121 = vmatprep.subr.mxu0 0.0
        %4122 = vmatpush1.msra.mxu0 0.0
        %4123 = vmatprep.subr.mxu0 0.0
        %4124 = vmatpush1.msra.mxu0 0.0
        %4125 = vmatprep.subr.mxu0 0.0
        %4126 = vmatpush1.msra.mxu0 0.0
        %4127 = vmatprep.subr.mxu0 0.0
        %4128 = vmatpush1.msra.mxu0 0.0
        %4129 = vmatprep.subr.mxu0 0.0
        %4130 = vmatpush1.msra.mxu0 0.0
        %4131 = vmatprep.subr.mxu0 0.0
        %4132 = vmatpush1.msra.mxu0 0.0
        %4133 = vmatprep.mubr.f32.mxu0 0.0
        %4134 = vmatmul.mubr.f32.gmra.mrb[0].mxu0 %v4067
        %v4135 = vpop.f32.mrb[0].mxu0
        %v4136 = vadd.f32 %v4064, %v4135
        %v4137 = vpop.f32.mrb[0].mxu0
        %4138 = vdwg.mxu0
        %v4140 = vlaneseq
        %v4141 = vshrl.u32 %v4140, 7
        %v4142 = vsub.s32 0, %v4141
        %v4143 = vrot.slane %v3734, %v4142
        %v4146 = vsel %vm632, %v765, 0
        %4148 = vmatprep.subr.mxu0 0.0
        %4149 = vmatpush1.msra.mxu0 %v3724
        %4150 = vmatprep.subr.mxu0 0.0
        %4151 = vmatpush1.msra.mxu0 %v3725
        %4152 = vmatprep.subr.mxu0 0.0
        %4153 = vmatpush1.msra.mxu0 %v3726
        %4154 = vmatprep.subr.mxu0 0.0
        %4155 = vmatpush1.msra.mxu0 %v3727
        %4156 = vmatprep.subr.mxu0 0.0
        %4157 = vmatpush1.msra.mxu0 0.0
        %4158 = vmatprep.subr.mxu0 0.0
        %4159 = vmatpush1.msra.mxu0 0.0
        %4160 = vmatprep.subr.mxu0 0.0
        %4161 = vmatpush1.msra.mxu0 0.0
        %4162 = vmatprep.subr.mxu0 0.0
        %4163 = vmatpush1.msra.mxu0 0.0
        %4164 = vmatprep.subr.mxu0 0.0
        %4165 = vmatpush1.msra.mxu0 0.0
        %4166 = vmatprep.subr.mxu0 0.0
        %4167 = vmatpush1.msra.mxu0 0.0
        %4168 = vmatprep.subr.mxu0 0.0
        %4169 = vmatpush1.msra.mxu0 0.0
        %4170 = vmatprep.subr.mxu0 0.0
        %4171 = vmatpush1.msra.mxu0 0.0
        %4172 = vmatprep.subr.mxu0 0.0
        %4173 = vmatpush1.msra.mxu0 0.0
        %4174 = vmatprep.subr.mxu0 0.0
        %4175 = vmatpush1.msra.mxu0 0.0
        %4176 = vmatprep.subr.mxu0 0.0
        %4177 = vmatpush1.msra.mxu0 0.0
        %4178 = vmatprep.subr.mxu0 0.0
        %4179 = vmatpush1.msra.mxu0 0.0
        %4180 = vmatprep.subr.mxu0 0.0
        %4181 = vmatpush1.msra.mxu0 0.0
        %4182 = vmatprep.subr.mxu0 0.0
        %4183 = vmatpush1.msra.mxu0 0.0
        %4184 = vmatprep.subr.mxu0 0.0
        %4185 = vmatpush1.msra.mxu0 0.0
        %4186 = vmatprep.subr.mxu0 0.0
        %4187 = vmatpush1.msra.mxu0 0.0
        %4188 = vmatprep.subr.mxu0 0.0
        %4189 = vmatpush1.msra.mxu0 0.0
        %4190 = vmatprep.subr.mxu0 0.0
        %4191 = vmatpush1.msra.mxu0 0.0
        %4192 = vmatprep.subr.mxu0 0.0
        %4193 = vmatpush1.msra.mxu0 0.0
        %4194 = vmatprep.subr.mxu0 0.0
        %4195 = vmatpush1.msra.mxu0 0.0
        %4196 = vmatprep.subr.mxu0 0.0
        %4197 = vmatpush1.msra.mxu0 0.0
        %4198 = vmatprep.subr.mxu0 0.0
        %4199 = vmatpush1.msra.mxu0 0.0
        %4200 = vmatprep.subr.mxu0 0.0
        %4201 = vmatpush1.msra.mxu0 0.0
        %4202 = vmatprep.subr.mxu0 0.0
        %4203 = vmatpush1.msra.mxu0 0.0
        %4204 = vmatprep.subr.mxu0 0.0
        %4205 = vmatpush1.msra.mxu0 0.0
        %4206 = vmatprep.subr.mxu0 0.0
        %4207 = vmatpush1.msra.mxu0 0.0
        %4208 = vmatprep.subr.mxu0 0.0
        %4209 = vmatpush1.msra.mxu0 0.0
        %4210 = vmatprep.subr.mxu0 0.0
        %4211 = vmatpush1.msra.mxu0 0.0
        %4212 = vmatprep.mubr.f32.mxu0 0.0
        %4213 = vmatmul.mubr.f32.gmra.mrb[0].mxu0 %v4146
        %v4214 = vpop.f32.mrb[0].mxu0
        %v4215 = vadd.f32 %v4143, %v4214
        %v4216 = vpop.f32.mrb[0].mxu0
        %4217 = vdwg.mxu0
        %v4218 = vadd.f32 %v4136, %v4215
        %v4219 = vxor.u32 %v4218, 2147483648
        %v4220 = vmul.f32 %v4219, 1.442695
        %v4221 = vpow.pop %v4220
        %v4222 = vadd.f32 %v4221, 1.0
        %v4223 = vrcp.pop %v4222
        %v4224 = vmul.f32 1.0, %v4223
        %4226 = vrot.lane.b32.xlu0 %v4215, 64
        %v4227 = vpop.permute.xlu0 %4226
        %v4229 = vmul.f32 %v4224, %v4227
        %4231 = vrot.lane.b32.xlu0 %v4229, 64
        %v4232 = vpop.permute.xlu0 %4231
        %v4234 = vadd.f32 %v4136, %v4232
        %v4235 = vtanh.pop %v4234
        %v4236 = vsub.f32 1.0, %v4224
        %4238 = vrot.lane.b32.xlu0 %v4235, 96
        %v4239 = vpop.permute.xlu0 %4238
        %v4241 = vmul.f32 %v4236, %v4239
        %4242 = vrot.lane.b32.xlu0 %v765, 32
        %v4243 = vpop.permute.xlu0 %4242
        %v4245 = vmul.f32 %v4224, %v4243
        %v4246 = vadd.f32 %v4241, %v4245
        %4248 = vrot.lane.b32.xlu0 %v4246, 96
        %v4249 = vpop.permute.xlu0 %4248
        %v4251 = vsel %vm3735, %v4249, 0.0
        %4252 = vadd.xlane.f32.xlu0 %v4251
        %v4253 = vpop.xlane.xlu0 %4252
        %v4254 = vmul.f32 %v4253, %v639
        %v4255 = vsub.f32 %v4246, %v4254
        %v4256 = vmul.f32 %v4255, %v4255
        %4258 = vrot.lane.b32.xlu0 %v4256, 96
        %v4259 = vpop.permute.xlu0 %4258
        %v4261 = vsel %vm3735, %v4259, 0.0
        %4262 = vadd.xlane.f32.xlu0 %v4261
        %v4263 = vpop.xlane.xlu0 %4262
        %v4264 = vmul.f32 %v4263, %v639
        %v4265 = vadd.f32 %v4264, 1e-05
        %v4266 = vrsqrt.pop %v4265
        %v4267 = vmul.f32 %v4255, %v4266
        %v4269 = vlaneseq
        %v4270 = vshrl.u32 %v4269, 7
        %v4271 = vsub.s32 0, %v4270
        %v4272 = vrot.slane %v3730, %v4271
        %4275 = vrot.lane.b32.xlu0 %v4267, 96
        %v4276 = vpop.permute.xlu0 %4275
        %v4277 = vsel %vm632, %v4276, 0
        %4279 = vmatprep.subr.mxu0 0.0
        %4280 = vmatpush1.msra.mxu0 %v3711
        %4281 = vmatprep.subr.mxu0 0.0
        %4282 = vmatpush1.msra.mxu0 %v3712
        %4283 = vmatprep.subr.mxu0 0.0
        %4284 = vmatpush1.msra.mxu0 %v3713
        %4285 = vmatprep.subr.mxu0 0.0
        %4286 = vmatpush1.msra.mxu0 %v3714
        %4287 = vmatprep.subr.mxu0 0.0
        %4288 = vmatpush1.msra.mxu0 0.0
        %4289 = vmatprep.subr.mxu0 0.0
        %4290 = vmatpush1.msra.mxu0 0.0
        %4291 = vmatprep.subr.mxu0 0.0
        %4292 = vmatpush1.msra.mxu0 0.0
        %4293 = vmatprep.subr.mxu0 0.0
        %4294 = vmatpush1.msra.mxu0 0.0
        %4295 = vmatprep.subr.mxu0 0.0
        %4296 = vmatpush1.msra.mxu0 0.0
        %4297 = vmatprep.subr.mxu0 0.0
        %4298 = vmatpush1.msra.mxu0 0.0
        %4299 = vmatprep.subr.mxu0 0.0
        %4300 = vmatpush1.msra.mxu0 0.0
        %4301 = vmatprep.subr.mxu0 0.0
        %4302 = vmatpush1.msra.mxu0 0.0
        %4303 = vmatprep.subr.mxu0 0.0
        %4304 = vmatpush1.msra.mxu0 0.0
        %4305 = vmatprep.subr.mxu0 0.0
        %4306 = vmatpush1.msra.mxu0 0.0
        %4307 = vmatprep.subr.mxu0 0.0
        %4308 = vmatpush1.msra.mxu0 0.0
        %4309 = vmatprep.subr.mxu0 0.0
        %4310 = vmatpush1.msra.mxu0 0.0
        %4311 = vmatprep.subr.mxu0 0.0
        %4312 = vmatpush1.msra.mxu0 0.0
        %4313 = vmatprep.subr.mxu0 0.0
        %4314 = vmatpush1.msra.mxu0 0.0
        %4315 = vmatprep.subr.mxu0 0.0
        %4316 = vmatpush1.msra.mxu0 0.0
        %4317 = vmatprep.subr.mxu0 0.0
        %4318 = vmatpush1.msra.mxu0 0.0
        %4319 = vmatprep.subr.mxu0 0.0
        %4320 = vmatpush1.msra.mxu0 0.0
        %4321 = vmatprep.subr.mxu0 0.0
        %4322 = vmatpush1.msra.mxu0 0.0
        %4323 = vmatprep.subr.mxu0 0.0
        %4324 = vmatpush1.msra.mxu0 0.0
        %4325 = vmatprep.subr.mxu0 0.0
        %4326 = vmatpush1.msra.mxu0 0.0
        %4327 = vmatprep.subr.mxu0 0.0
        %4328 = vmatpush1.msra.mxu0 0.0
        %4329 = vmatprep.subr.mxu0 0.0
        %4330 = vmatpush1.msra.mxu0 0.0
        %4331 = vmatprep.subr.mxu0 0.0
        %4332 = vmatpush1.msra.mxu0 0.0
        %4333 = vmatprep.subr.mxu0 0.0
        %4334 = vmatpush1.msra.mxu0 0.0
        %4335 = vmatprep.subr.mxu0 0.0
        %4336 = vmatpush1.msra.mxu0 0.0
        %4337 = vmatprep.subr.mxu0 0.0
        %4338 = vmatpush1.msra.mxu0 0.0
        %4339 = vmatprep.subr.mxu0 0.0
        %4340 = vmatpush1.msra.mxu0 0.0
        %4341 = vmatprep.subr.mxu0 0.0
        %4342 = vmatpush1.msra.mxu0 0.0
        %4343 = vmatprep.mubr.f32.mxu0 0.0
        %4344 = vmatmul.mubr.f32.gmra.mrb[0].mxu0 %v4277
        %v4345 = vpop.f32.mrb[0].mxu0
        %v4346 = vadd.f32 %v4272, %v4345
        %v4347 = vpop.f32.mrb[0].mxu0
        %4348 = vdwg.mxu0
        %v4349 = vmax.f32 %v4346, 0.0
        %v4351 = vsel %vm632, %v4349, 0
        %4353 = vmatprep.subr.mxu0 0.0
        %4354 = vmatpush1.msra.mxu0 %v3715
        %4355 = vmatprep.subr.mxu0 0.0
        %4356 = vmatpush1.msra.mxu0 %v3716
        %4357 = vmatprep.subr.mxu0 0.0
        %4358 = vmatpush1.msra.mxu0 %v3717
        %4359 = vmatprep.subr.mxu0 0.0
        %4360 = vmatpush1.msra.mxu0 %v3718
        %4361 = vmatprep.subr.mxu0 0.0
        %4362 = vmatpush1.msra.mxu0 0.0
        %4363 = vmatprep.subr.mxu0 0.0
        %4364 = vmatpush1.msra.mxu0 0.0
        %4365 = vmatprep.subr.mxu0 0.0
        %4366 = vmatpush1.msra.mxu0 0.0
        %4367 = vmatprep.subr.mxu0 0.0
        %4368 = vmatpush1.msra.mxu0 0.0
        %4369 = vmatprep.subr.mxu0 0.0
        %4370 = vmatpush1.msra.mxu0 0.0
        %4371 = vmatprep.subr.mxu0 0.0
        %4372 = vmatpush1.msra.mxu0 0.0
        %4373 = vmatprep.subr.mxu0 0.0
        %4374 = vmatpush1.msra.mxu0 0.0
        %4375 = vmatprep.subr.mxu0 0.0
        %4376 = vmatpush1.msra.mxu0 0.0
        %4377 = vmatprep.subr.mxu0 0.0
        %4378 = vmatpush1.msra.mxu0 0.0
        %4379 = vmatprep.subr.mxu0 0.0
        %4380 = vmatpush1.msra.mxu0 0.0
        %4381 = vmatprep.subr.mxu0 0.0
        %4382 = vmatpush1.msra.mxu0 0.0
        %4383 = vmatprep.subr.mxu0 0.0
        %4384 = vmatpush1.msra.mxu0 0.0
        %4385 = vmatprep.subr.mxu0 0.0
        %4386 = vmatpush1.msra.mxu0 0.0
        %4387 = vmatprep.subr.mxu0 0.0
        %4388 = vmatpush1.msra.mxu0 0.0
        %4389 = vmatprep.subr.mxu0 0.0
        %4390 = vmatpush1.msra.mxu0 0.0
        %4391 = vmatprep.subr.mxu0 0.0
        %4392 = vmatpush1.msra.mxu0 0.0
        %4393 = vmatprep.subr.mxu0 0.0
        %4394 = vmatpush1.msra.mxu0 0.0
        %4395 = vmatprep.subr.mxu0 0.0
        %4396 = vmatpush1.msra.mxu0 0.0
        %4397 = vmatprep.subr.mxu0 0.0
        %4398 = vmatpush1.msra.mxu0 0.0
        %4399 = vmatprep.subr.mxu0 0.0
        %4400 = vmatpush1.msra.mxu0 0.0
        %4401 = vmatprep.subr.mxu0 0.0
        %4402 = vmatpush1.msra.mxu0 0.0
        %4403 = vmatprep.subr.mxu0 0.0
        %4404 = vmatpush1.msra.mxu0 0.0
        %4405 = vmatprep.subr.mxu0 0.0
        %4406 = vmatpush1.msra.mxu0 0.0
        %4407 = vmatprep.subr.mxu0 0.0
        %4408 = vmatpush1.msra.mxu0 0.0
        %4409 = vmatprep.subr.mxu0 0.0
        %4410 = vmatpush1.msra.mxu0 0.0
        %4411 = vmatprep.subr.mxu0 0.0
        %4412 = vmatpush1.msra.mxu0 0.0
        %4413 = vmatprep.subr.mxu0 0.0
        %4414 = vmatpush1.msra.mxu0 0.0
        %4415 = vmatprep.subr.mxu0 0.0
        %4416 = vmatpush1.msra.mxu0 0.0
        %4417 = vmatprep.mubr.f32.mxu0 0.0
        %4418 = vmatmul.mubr.f32.gmra.mrb[0].mxu0 %v4351
        %v4419 = vpop.f32.mrb[0].mxu0
        %v4420 = vadd.f32 0.0, %v4419
        %v4421 = vpop.f32.mrb[0].mxu0
        %4422 = vdwg.mxu0
        %4424 = vrot.lane.b32.xlu0 %v4420, 32
        %v4425 = vpop.permute.xlu0 %4424
        %v4427 = vadd.f32 %v4246, %v4425
        %v4429 = vlaneseq
        %v4430 = vshrl.u32 %v4429, 7
        %v4431 = vsub.s32 0, %v4430
        %v4432 = vrot.slane %v3731, %v4431
        %4433 = vrot.lane.b32.xlu0 %v4432, 32
        %v4434 = vpop.permute.xlu0 %4433
        %v4436 = vadd.f32 %v4427, %v4434
        %4438 = vrot.lane.b32.xlu0 %v4436, 96
        %v4439 = vpop.permute.xlu0 %4438
        %v4440 = vsel %vm632, %v4439, 0
        %4442 = vmatprep.subr.mxu0 0.0
        %4443 = vmatpush1.msra.mxu0 %v785
        %4444 = vmatprep.subr.mxu0 0.0
        %4445 = vmatpush1.msra.mxu0 %v786
        %4446 = vmatprep.subr.mxu0 0.0
        %4447 = vmatpush1.msra.mxu0 %v787
        %4448 = vmatprep.subr.mxu0 0.0
        %4449 = vmatpush1.msra.mxu0 %v788
        %4450 = vmatprep.subr.mxu0 0.0
        %4451 = vmatpush1.msra.mxu0 0.0
        %4452 = vmatprep.subr.mxu0 0.0
        %4453 = vmatpush1.msra.mxu0 0.0
        %4454 = vmatprep.subr.mxu0 0.0
        %4455 = vmatpush1.msra.mxu0 0.0
        %4456 = vmatprep.subr.mxu0 0.0
        %4457 = vmatpush1.msra.mxu0 0.0
        %4458 = vmatprep.subr.mxu0 0.0
        %4459 = vmatpush1.msra.mxu0 0.0
        %4460 = vmatprep.subr.mxu0 0.0
        %4461 = vmatpush1.msra.mxu0 0.0
        %4462 = vmatprep.subr.mxu0 0.0
        %4463 = vmatpush1.msra.mxu0 0.0
        %4464 = vmatprep.subr.mxu0 0.0
        %4465 = vmatpush1.msra.mxu0 0.0
        %4466 = vmatprep.subr.mxu0 0.0
        %4467 = vmatpush1.msra.mxu0 0.0
        %4468 = vmatprep.subr.mxu0 0.0
        %4469 = vmatpush1.msra.mxu0 0.0
        %4470 = vmatprep.subr.mxu0 0.0
        %4471 = vmatpush1.msra.mxu0 0.0
        %4472 = vmatprep.subr.mxu0 0.0
        %4473 = vmatpush1.msra.mxu0 0.0
        %4474 = vmatprep.subr.mxu0 0.0
        %4475 = vmatpush1.msra.mxu0 0.0
        %4476 = vmatprep.subr.mxu0 0.0
        %4477 = vmatpush1.msra.mxu0 0.0
        %4478 = vmatprep.subr.mxu0 0.0
        %4479 = vmatpush1.msra.mxu0 0.0
        %4480 = vmatprep.subr.mxu0 0.0
        %4481 = vmatpush1.msra.mxu0 0.0
        %4482 = vmatprep.subr.mxu0 0.0
        %4483 = vmatpush1.msra.mxu0 0.0
        %4484 = vmatprep.subr.mxu0 0.0
        %4485 = vmatpush1.msra.mxu0 0.0
        %4486 = vmatprep.subr.mxu0 0.0
        %4487 = vmatpush1.msra.mxu0 0.0
        %4488 = vmatprep.subr.mxu0 0.0
        %4489 = vmatpush1.msra.mxu0 0.0
        %4490 = vmatprep.subr.mxu0 0.0
        %4491 = vmatpush1.msra.mxu0 0.0
        %4492 = vmatprep.subr.mxu0 0.0
        %4493 = vmatpush1.msra.mxu0 0.0
        %4494 = vmatprep.subr.mxu0 0.0
        %4495 = vmatpush1.msra.mxu0 0.0
        %4496 = vmatprep.subr.mxu0 0.0
        %4497 = vmatpush1.msra.mxu0 0.0
        %4498 = vmatprep.subr.mxu0 0.0
        %4499 = vmatpush1.msra.mxu0 0.0
        %4500 = vmatprep.subr.mxu0 0.0
        %4501 = vmatpush1.msra.mxu0 0.0
        %4502 = vmatprep.subr.mxu0 0.0
        %4503 = vmatpush1.msra.mxu0 0.0
        %4504 = vmatprep.subr.mxu0 0.0
        %4505 = vmatpush1.msra.mxu0 0.0
        %4506 = vmatprep.mubr.f32.mxu0 0.0
        %4507 = vmatmul.mubr.f32.gmra.mrb[0].mxu0 %v4440
        %v4508 = vpop.f32.mrb[0].mxu0
        %v4509 = vadd.f32 0.0, %v4508
        %v4510 = vpop.f32.mrb[0].mxu0
        %4511 = vdwg.mxu0
        %4512 = vmatprep.subr.mxu0 0.0
        %4513 = vmatpush1.msra.mxu0 %v789
        %4514 = vmatprep.subr.mxu0 0.0
        %4515 = vmatpush1.msra.mxu0 %v790
        %4516 = vmatprep.subr.mxu0 0.0
        %4517 = vmatpush1.msra.mxu0 %v791
        %4518 = vmatprep.subr.mxu0 0.0
        %4519 = vmatpush1.msra.mxu0 %v792
        %4520 = vmatprep.subr.mxu0 0.0
        %4521 = vmatpush1.msra.mxu0 0.0
        %4522 = vmatprep.subr.mxu0 0.0
        %4523 = vmatpush1.msra.mxu0 0.0
        %4524 = vmatprep.subr.mxu0 0.0
        %4525 = vmatpush1.msra.mxu0 0.0
        %4526 = vmatprep.subr.mxu0 0.0
        %4527 = vmatpush1.msra.mxu0 0.0
        %4528 = vmatprep.subr.mxu0 0.0
        %4529 = vmatpush1.msra.mxu0 0.0
        %4530 = vmatprep.subr.mxu0 0.0
        %4531 = vmatpush1.msra.mxu0 0.0
        %4532 = vmatprep.subr.mxu0 0.0
        %4533 = vmatpush1.msra.mxu0 0.0
        %4534 = vmatprep.subr.mxu0 0.0
        %4535 = vmatpush1.msra.mxu0 0.0
        %4536 = vmatprep.subr.mxu0 0.0
        %4537 = vmatpush1.msra.mxu0 0.0
        %4538 = vmatprep.subr.mxu0 0.0
        %4539 = vmatpush1.msra.mxu0 0.0
        %4540 = vmatprep.subr.mxu0 0.0
        %4541 = vmatpush1.msra.mxu0 0.0
        %4542 = vmatprep.subr.mxu0 0.0
        %4543 = vmatpush1.msra.mxu0 0.0
        %4544 = vmatprep.subr.mxu0 0.0
        %4545 = vmatpush1.msra.mxu0 0.0
        %4546 = vmatprep.subr.mxu0 0.0
        %4547 = vmatpush1.msra.mxu0 0.0
        %4548 = vmatprep.subr.mxu0 0.0
        %4549 = vmatpush1.msra.mxu0 0.0
        %4550 = vmatprep.subr.mxu0 0.0
        %4551 = vmatpush1.msra.mxu0 0.0
        %4552 = vmatprep.subr.mxu0 0.0
        %4553 = vmatpush1.msra.mxu0 0.0
        %4554 = vmatprep.subr.mxu0 0.0
        %4555 = vmatpush1.msra.mxu0 0.0
        %4556 = vmatprep.subr.mxu0 0.0
        %4557 = vmatpush1.msra.mxu0 0.0
        %4558 = vmatprep.subr.mxu0 0.0
        %4559 = vmatpush1.msra.mxu0 0.0
        %4560 = vmatprep.subr.mxu0 0.0
        %4561 = vmatpush1.msra.mxu0 0.0
        %4562 = vmatprep.subr.mxu0 0.0
        %4563 = vmatpush1.msra.mxu0 0.0
        %4564 = vmatprep.subr.mxu0 0.0
        %4565 = vmatpush1.msra.mxu0 0.0
        %4566 = vmatprep.subr.mxu0 0.0
        %4567 = vmatpush1.msra.mxu0 0.0
        %4568 = vmatprep.subr.mxu0 0.0
        %4569 = vmatpush1.msra.mxu0 0.0
        %4570 = vmatprep.subr.mxu0 0.0
        %4571 = vmatpush1.msra.mxu0 0.0
        %4572 = vmatprep.subr.mxu0 0.0
        %4573 = vmatpush1.msra.mxu0 0.0
        %4574 = vmatprep.subr.mxu0 0.0
        %4575 = vmatpush1.msra.mxu0 0.0
        %4576 = vmatprep.mubr.f32.mxu0 0.0
        %4577 = vmatmul.mubr.f32.gmra.mrb[0].mxu0 %v4440
        %v4578 = vpop.f32.mrb[0].mxu0
        %v4579 = vadd.f32 0.0, %v4578
        %v4580 = vpop.f32.mrb[0].mxu0
        %4581 = vdwg.mxu0
        %v4583 = vsel %vm1238, %v953, 0
        %v4586 = vsel %vm1238, %v958, 0
        %v4589 = vsel %vm1238, %v4509, 0
        %4591 = vmatprep.subr.mxu0 0.0
        %4592 = vmatpush1.xpose.msra.mxu0 %v4589
        %4593 = vmatprep.subr.mxu0 0.0
        %4594 = vmatpush1.xpose.msra.mxu0 0.0
        %4595 = vmatprep.subr.mxu0 0.0
        %4596 = vmatpush1.xpose.msra.mxu0 0.0
        %4597 = vmatprep.subr.mxu0 0.0
        %4598 = vmatpush1.xpose.msra.mxu0 0.0
        %4599 = vmatprep.subr.mxu0 0.0
        %4600 = vmatpush1.xpose.msra.mxu0 0.0
        %4601 = vmatprep.subr.mxu0 0.0
        %4602 = vmatpush1.xpose.msra.mxu0 0.0
        %4603 = vmatprep.subr.mxu0 0.0
        %4604 = vmatpush1.xpose.msra.mxu0 0.0
        %4605 = vmatprep.subr.mxu0 0.0
        %4606 = vmatpush1.xpose.msra.mxu0 0.0
        %4607 = vmatprep.subr.mxu0 0.0
        %4608 = vmatpush1.xpose.msra.mxu0 0.0
        %4609 = vmatprep.subr.mxu0 0.0
        %4610 = vmatpush1.xpose.msra.mxu0 0.0
        %4611 = vmatprep.subr.mxu0 0.0
        %4612 = vmatpush1.xpose.msra.mxu0 0.0
        %4613 = vmatprep.subr.mxu0 0.0
        %4614 = vmatpush1.xpose.msra.mxu0 0.0
        %4615 = vmatprep.subr.mxu0 0.0
        %4616 = vmatpush1.xpose.msra.mxu0 0.0
        %4617 = vmatprep.subr.mxu0 0.0
        %4618 = vmatpush1.xpose.msra.mxu0 0.0
        %4619 = vmatprep.subr.mxu0 0.0
        %4620 = vmatpush1.xpose.msra.mxu0 0.0
        %4621 = vmatprep.subr.mxu0 0.0
        %4622 = vmatpush1.xpose.msra.mxu0 0.0
        %4623 = vmatprep.subr.mxu0 0.0
        %4624 = vmatpush1.xpose.msra.mxu0 0.0
        %4625 = vmatprep.subr.mxu0 0.0
        %4626 = vmatpush1.xpose.msra.mxu0 0.0
        %4627 = vmatprep.subr.mxu0 0.0
        %4628 = vmatpush1.xpose.msra.mxu0 0.0
        %4629 = vmatprep.subr.mxu0 0.0
        %4630 = vmatpush1.xpose.msra.mxu0 0.0
        %4631 = vmatprep.subr.mxu0 0.0
        %4632 = vmatpush1.xpose.msra.mxu0 0.0
        %4633 = vmatprep.subr.mxu0 0.0
        %4634 = vmatpush1.xpose.msra.mxu0 0.0
        %4635 = vmatprep.subr.mxu0 0.0
        %4636 = vmatpush1.xpose.msra.mxu0 0.0
        %4637 = vmatprep.subr.mxu0 0.0
        %4638 = vmatpush1.xpose.msra.mxu0 0.0
        %4639 = vmatprep.subr.mxu0 0.0
        %4640 = vmatpush1.xpose.msra.mxu0 0.0
        %4641 = vmatprep.subr.mxu0 0.0
        %4642 = vmatpush1.xpose.msra.mxu0 0.0
        %4643 = vmatprep.subr.mxu0 0.0
        %4644 = vmatpush1.xpose.msra.mxu0 0.0
        %4645 = vmatprep.subr.mxu0 0.0
        %4646 = vmatpush1.xpose.msra.mxu0 0.0
        %4647 = vmatprep.subr.mxu0 0.0
        %4648 = vmatpush1.xpose.msra.mxu0 0.0
        %4649 = vmatprep.subr.mxu0 0.0
        %4650 = vmatpush1.xpose.msra.mxu0 0.0
        %4651 = vmatprep.subr.mxu0 0.0
        %4652 = vmatpush1.xpose.msra.mxu0 0.0
        %4653 = vmatprep.subr.mxu0 0.0
        %4654 = vmatpush1.xpose.msra.mxu0 0.0
        %4655 = vmatprep.mubr.f32.mxu0 0.0
        %4656 = vmatmul.mubr.f32.gmra.mrb[0].mxu0 %v4583
        %v4657 = vpop.f32.mrb[0].mxu0
        %v4658 = vadd.f32 0.0, %v4657
        %v4659 = vpop.f32.mrb[0].mxu0
        %4660 = vmatprep.mubr.f32.mxu0 0.0
        %4661 = vmatmul.mubr.f32.gmra.mrb[0].mxu0 %v4586
        %v4662 = vpop.f32.mrb[0].mxu0
        %v4663 = vadd.f32 0.0, %v4662
        %v4664 = vpop.f32.mrb[0].mxu0
        %4665 = vdwg.mxu0
        %v4666 = vsel %vm3912, %v4658, -inf
        %4667 = vmax.xlane.f32.xlu0 %v4666
        %v4668 = vpop.xlane.xlu0 %4667
        %v4669 = vsel %vm3912, %v4663, -inf
        %4670 = vmax.xlane.f32.xlu0 %v4669
        %v4671 = vpop.xlane.xlu0 %4670
        %v4672 = vsub.f32 %v4658, %v4668
        %v4673 = vsub.f32 %v4663, %v4671
        %v4674 = vmul.f32 %v4672, 1.442695
        %v4675 = vpow.pop %v4674
        %v4676 = vmul.f32 %v4673, 1.442695
        %v4677 = vpow.pop %v4676
        %v4678 = vsel %vm3912, %v4675, 0.0
        %4679 = vadd.xlane.f32.xlu0 %v4678
        %v4680 = vpop.xlane.xlu0 %4679
        %v4681 = vsel %vm3912, %v4677, 0.0
        %4682 = vadd.xlane.f32.xlu0 %v4681
        %v4683 = vpop.xlane.xlu0 %4682
        %v4684 = vrcp.pop %v4680
        %v4685 = vrcp.pop %v4683
        %v4686 = vmul.f32 %v4675, %v4684
        %v4687 = vmul.f32 %v4677, %v4685
        %v4689 = vsel %vm3912, %v4686, 0
        %v4692 = vsel %vm3912, %v4687, 0
        %vm4694 = vcmask 1046528
        %v4696 = vsel %vm4694, %v4579, 0
        %4698 = vmatprep.subr.mxu0 0.0
        %4699 = vmatpush1.msra.mxu0 %v4696
        %4700 = vmatprep.subr.mxu0 0.0
        %4701 = vmatpush1.msra.mxu0 0.0
        %4702 = vmatprep.subr.mxu0 0.0
        %4703 = vmatpush1.msra.mxu0 0.0
        %4704 = vmatprep.subr.mxu0 0.0
        %4705 = vmatpush1.msra.mxu0 0.0
        %4706 = vmatprep.subr.mxu0 0.0
        %4707 = vmatpush1.msra.mxu0 0.0
        %4708 = vmatprep.subr.mxu0 0.0
        %4709 = vmatpush1.msra.mxu0 0.0
        %4710 = vmatprep.subr.mxu0 0.0
        %4711 = vmatpush1.msra.mxu0 0.0
        %4712 = vmatprep.subr.mxu0 0.0
        %4713 = vmatpush1.msra.mxu0 0.0
        %4714 = vmatprep.subr.mxu0 0.0
        %4715 = vmatpush1.msra.mxu0 0.0
        %4716 = vmatprep.subr.mxu0 0.0
        %4717 = vmatpush1.msra.mxu0 0.0
        %4718 = vmatprep.subr.mxu0 0.0
        %4719 = vmatpush1.msra.mxu0 0.0
        %4720 = vmatprep.subr.mxu0 0.0
        %4721 = vmatpush1.msra.mxu0 0.0
        %4722 = vmatprep.subr.mxu0 0.0
        %4723 = vmatpush1.msra.mxu0 0.0
        %4724 = vmatprep.subr.mxu0 0.0
        %4725 = vmatpush1.msra.mxu0 0.0
        %4726 = vmatprep.subr.mxu0 0.0
        %4727 = vmatpush1.msra.mxu0 0.0
        %4728 = vmatprep.subr.mxu0 0.0
        %4729 = vmatpush1.msra.mxu0 0.0
        %4730 = vmatprep.subr.mxu0 0.0
        %4731 = vmatpush1.msra.mxu0 0.0
        %4732 = vmatprep.subr.mxu0 0.0
        %4733 = vmatpush1.msra.mxu0 0.0
        %4734 = vmatprep.subr.mxu0 0.0
        %4735 = vmatpush1.msra.mxu0 0.0
        %4736 = vmatprep.subr.mxu0 0.0
        %4737 = vmatpush1.msra.mxu0 0.0
        %4738 = vmatprep.subr.mxu0 0.0
        %4739 = vmatpush1.msra.mxu0 0.0
        %4740 = vmatprep.subr.mxu0 0.0
        %4741 = vmatpush1.msra.mxu0 0.0
        %4742 = vmatprep.subr.mxu0 0.0
        %4743 = vmatpush1.msra.mxu0 0.0
        %4744 = vmatprep.subr.mxu0 0.0
        %4745 = vmatpush1.msra.mxu0 0.0
        %4746 = vmatprep.subr.mxu0 0.0
        %4747 = vmatpush1.msra.mxu0 0.0
        %4748 = vmatprep.subr.mxu0 0.0
        %4749 = vmatpush1.msra.mxu0 0.0
        %4750 = vmatprep.subr.mxu0 0.0
        %4751 = vmatpush1.msra.mxu0 0.0
        %4752 = vmatprep.subr.mxu0 0.0
        %4753 = vmatpush1.msra.mxu0 0.0
        %4754 = vmatprep.subr.mxu0 0.0
        %4755 = vmatpush1.msra.mxu0 0.0
        %4756 = vmatprep.subr.mxu0 0.0
        %4757 = vmatpush1.msra.mxu0 0.0
        %4758 = vmatprep.subr.mxu0 0.0
        %4759 = vmatpush1.msra.mxu0 0.0
        %4760 = vmatprep.subr.mxu0 0.0
        %4761 = vmatpush1.msra.mxu0 0.0
        %4762 = vmatprep.mubr.f32.mxu0 0.0
        %4763 = vmatmul.mubr.f32.gmra.mrb[0].mxu0 %v4689
        %v4764 = vpop.f32.mrb[0].mxu0
        %v4765 = vadd.f32 0.0, %v4764
        %v4766 = vpop.f32.mrb[0].mxu0
        %4767 = vmatprep.mubr.f32.mxu0 0.0
        %4768 = vmatmul.mubr.f32.gmra.mrb[0].mxu0 %v4692
        %v4769 = vpop.f32.mrb[0].mxu0
        %v4770 = vadd.f32 0.0, %v4769
        %v4771 = vpop.f32.mrb[0].mxu0
        %4772 = vdwg.mxu0
        %4773 = vrot.lane.b32.xlu0 %v953, 112
        %v4774 = vpop.permute.xlu0 %4773
        %4775 = vrot.lane.b32.xlu0 %v958, 112
        %v4776 = vpop.permute.xlu0 %4775
        %4777 = vrot.lane.b32.xlu0 %v4509, 112
        %v4778 = vpop.permute.xlu0 %4777
        %v4779 = vsel %vm1238, %v4774, 0
        %v4781 = vsel %vm1238, %v4776, 0
        %v4783 = vsel %vm1238, %v4778, 0
        %4785 = vmatprep.subr.mxu0 0.0
        %4786 = vmatpush1.xpose.msra.mxu0 %v4783
        %4787 = vmatprep.subr.mxu0 0.0
        %4788 = vmatpush1.xpose.msra.mxu0 0.0
        %4789 = vmatprep.subr.mxu0 0.0
        %4790 = vmatpush1.xpose.msra.mxu0 0.0
        %4791 = vmatprep.subr.mxu0 0.0
        %4792 = vmatpush1.xpose.msra.mxu0 0.0
        %4793 = vmatprep.subr.mxu0 0.0
        %4794 = vmatpush1.xpose.msra.mxu0 0.0
        %4795 = vmatprep.subr.mxu0 0.0
        %4796 = vmatpush1.xpose.msra.mxu0 0.0
        %4797 = vmatprep.subr.mxu0 0.0
        %4798 = vmatpush1.xpose.msra.mxu0 0.0
        %4799 = vmatprep.subr.mxu0 0.0
        %4800 = vmatpush1.xpose.msra.mxu0 0.0
        %4801 = vmatprep.subr.mxu0 0.0
        %4802 = vmatpush1.xpose.msra.mxu0 0.0
        %4803 = vmatprep.subr.mxu0 0.0
        %4804 = vmatpush1.xpose.msra.mxu0 0.0
        %4805 = vmatprep.subr.mxu0 0.0
        %4806 = vmatpush1.xpose.msra.mxu0 0.0
        %4807 = vmatprep.subr.mxu0 0.0
        %4808 = vmatpush1.xpose.msra.mxu0 0.0
        %4809 = vmatprep.subr.mxu0 0.0
        %4810 = vmatpush1.xpose.msra.mxu0 0.0
        %4811 = vmatprep.subr.mxu0 0.0
        %4812 = vmatpush1.xpose.msra.mxu0 0.0
        %4813 = vmatprep.subr.mxu0 0.0
        %4814 = vmatpush1.xpose.msra.mxu0 0.0
        %4815 = vmatprep.subr.mxu0 0.0
        %4816 = vmatpush1.xpose.msra.mxu0 0.0
        %4817 = vmatprep.subr.mxu0 0.0
        %4818 = vmatpush1.xpose.msra.mxu0 0.0
        %4819 = vmatprep.subr.mxu0 0.0
        %4820 = vmatpush1.xpose.msra.mxu0 0.0
        %4821 = vmatprep.subr.mxu0 0.0
        %4822 = vmatpush1.xpose.msra.mxu0 0.0
        %4823 = vmatprep.subr.mxu0 0.0
        %4824 = vmatpush1.xpose.msra.mxu0 0.0
        %4825 = vmatprep.subr.mxu0 0.0
        %4826 = vmatpush1.xpose.msra.mxu0 0.0
        %4827 = vmatprep.subr.mxu0 0.0
        %4828 = vmatpush1.xpose.msra.mxu0 0.0
        %4829 = vmatprep.subr.mxu0 0.0
        %4830 = vmatpush1.xpose.msra.mxu0 0.0
        %4831 = vmatprep.subr.mxu0 0.0
        %4832 = vmatpush1.xpose.msra.mxu0 0.0
        %4833 = vmatprep.subr.mxu0 0.0
        %4834 = vmatpush1.xpose.msra.mxu0 0.0
        %4835 = vmatprep.subr.mxu0 0.0
        %4836 = vmatpush1.xpose.msra.mxu0 0.0
        %4837 = vmatprep.subr.mxu0 0.0
        %4838 = vmatpush1.xpose.msra.mxu0 0.0
        %4839 = vmatprep.subr.mxu0 0.0
        %4840 = vmatpush1.xpose.msra.mxu0 0.0
        %4841 = vmatprep.subr.mxu0 0.0
        %4842 = vmatpush1.xpose.msra.mxu0 0.0
        %4843 = vmatprep.subr.mxu0 0.0
        %4844 = vmatpush1.xpose.msra.mxu0 0.0
        %4845 = vmatprep.subr.mxu0 0.0
        %4846 = vmatpush1.xpose.msra.mxu0 0.0
        %4847 = vmatprep.subr.mxu0 0.0
        %4848 = vmatpush1.xpose.msra.mxu0 0.0
        %4849 = vmatprep.mubr.f32.mxu0 0.0
        %4850 = vmatmul.mubr.f32.gmra.mrb[0].mxu0 %v4779
        %v4851 = vpop.f32.mrb[0].mxu0
        %v4852 = vadd.f32 0.0, %v4851
        %v4853 = vpop.f32.mrb[0].mxu0
        %4854 = vmatprep.mubr.f32.mxu0 0.0
        %4855 = vmatmul.mubr.f32.gmra.mrb[0].mxu0 %v4781
        %v4856 = vpop.f32.mrb[0].mxu0
        %v4857 = vadd.f32 0.0, %v4856
        %v4858 = vpop.f32.mrb[0].mxu0
        %4859 = vdwg.mxu0
        %v4860 = vsel %vm3912, %v4852, -inf
        %4861 = vmax.xlane.f32.xlu0 %v4860
        %v4862 = vpop.xlane.xlu0 %4861
        %v4863 = vsel %vm3912, %v4857, -inf
        %4864 = vmax.xlane.f32.xlu0 %v4863
        %v4865 = vpop.xlane.xlu0 %4864
        %v4866 = vsub.f32 %v4852, %v4862
        %v4867 = vsub.f32 %v4857, %v4865
        %v4868 = vmul.f32 %v4866, 1.442695
        %v4869 = vpow.pop %v4868
        %v4870 = vmul.f32 %v4867, 1.442695
        %v4871 = vpow.pop %v4870
        %v4872 = vsel %vm3912, %v4869, 0.0
        %4873 = vadd.xlane.f32.xlu0 %v4872
        %v4874 = vpop.xlane.xlu0 %4873
        %v4875 = vsel %vm3912, %v4871, 0.0
        %4876 = vadd.xlane.f32.xlu0 %v4875
        %v4877 = vpop.xlane.xlu0 %4876
        %v4878 = vrcp.pop %v4874
        %v4879 = vrcp.pop %v4877
        %v4880 = vmul.f32 %v4869, %v4878
        %v4881 = vmul.f32 %v4871, %v4879
        %v4882 = vadd.f32 %v4686, %v4880
        %v4883 = vadd.f32 %v4687, %v4881
        %4884 = vrot.lane.b32.xlu0 %v4579, 112
        %v4885 = vpop.permute.xlu0 %4884
        %v4887 = vsel %vm3912, %v4880, 0
        %v4890 = vsel %vm3912, %v4881, 0
        %v4892 = vsel %vm4694, %v4885, 0
        %4894 = vmatprep.subr.mxu0 0.0
        %4895 = vmatpush1.msra.mxu0 %v4892
        %4896 = vmatprep.subr.mxu0 0.0
        %4897 = vmatpush1.msra.mxu0 0.0
        %4898 = vmatprep.subr.mxu0 0.0
        %4899 = vmatpush1.msra.mxu0 0.0
        %4900 = vmatprep.subr.mxu0 0.0
        %4901 = vmatpush1.msra.mxu0 0.0
        %4902 = vmatprep.subr.mxu0 0.0
        %4903 = vmatpush1.msra.mxu0 0.0
        %4904 = vmatprep.subr.mxu0 0.0
        %4905 = vmatpush1.msra.mxu0 0.0
        %4906 = vmatprep.subr.mxu0 0.0
        %4907 = vmatpush1.msra.mxu0 0.0
        %4908 = vmatprep.subr.mxu0 0.0
        %4909 = vmatpush1.msra.mxu0 0.0
        %4910 = vmatprep.subr.mxu0 0.0
        %4911 = vmatpush1.msra.mxu0 0.0
        %4912 = vmatprep.subr.mxu0 0.0
        %4913 = vmatpush1.msra.mxu0 0.0
        %4914 = vmatprep.subr.mxu0 0.0
        %4915 = vmatpush1.msra.mxu0 0.0
        %4916 = vmatprep.subr.mxu0 0.0
        %4917 = vmatpush1.msra.mxu0 0.0
        %4918 = vmatprep.subr.mxu0 0.0
        %4919 = vmatpush1.msra.mxu0 0.0
        %4920 = vmatprep.subr.mxu0 0.0
        %4921 = vmatpush1.msra.mxu0 0.0
        %4922 = vmatprep.subr.mxu0 0.0
        %4923 = vmatpush1.msra.mxu0 0.0
        %4924 = vmatprep.subr.mxu0 0.0
        %4925 = vmatpush1.msra.mxu0 0.0
        %4926 = vmatprep.subr.mxu0 0.0
        %4927 = vmatpush1.msra.mxu0 0.0
        %4928 = vmatprep.subr.mxu0 0.0
        %4929 = vmatpush1.msra.mxu0 0.0
        %4930 = vmatprep.subr.mxu0 0.0
        %4931 = vmatpush1.msra.mxu0 0.0
        %4932 = vmatprep.subr.mxu0 0.0
        %4933 = vmatpush1.msra.mxu0 0.0
        %4934 = vmatprep.subr.mxu0 0.0
        %4935 = vmatpush1.msra.mxu0 0.0
        %4936 = vmatprep.subr.mxu0 0.0
        %4937 = vmatpush1.msra.mxu0 0.0
        %4938 = vmatprep.subr.mxu0 0.0
        %4939 = vmatpush1.msra.mxu0 0.0
        %4940 = vmatprep.subr.mxu0 0.0
        %4941 = vmatpush1.msra.mxu0 0.0
        %4942 = vmatprep.subr.mxu0 0.0
        %4943 = vmatpush1.msra.mxu0 0.0
        %4944 = vmatprep.subr.mxu0 0.0
        %4945 = vmatpush1.msra.mxu0 0.0
        %4946 = vmatprep.subr.mxu0 0.0
        %4947 = vmatpush1.msra.mxu0 0.0
        %4948 = vmatprep.subr.mxu0 0.0
        %4949 = vmatpush1.msra.mxu0 0.0
        %4950 = vmatprep.subr.mxu0 0.0
        %4951 = vmatpush1.msra.mxu0 0.0
        %4952 = vmatprep.subr.mxu0 0.0
        %4953 = vmatpush1.msra.mxu0 0.0
        %4954 = vmatprep.subr.mxu0 0.0
        %4955 = vmatpush1.msra.mxu0 0.0
        %4956 = vmatprep.subr.mxu0 0.0
        %4957 = vmatpush1.msra.mxu0 0.0
        %4958 = vmatprep.mubr.f32.mxu0 0.0
        %4959 = vmatmul.mubr.f32.gmra.mrb[0].mxu0 %v4887
        %v4960 = vpop.f32.mrb[0].mxu0
        %v4961 = vadd.f32 0.0, %v4960
        %v4962 = vpop.f32.mrb[0].mxu0
        %4963 = vmatprep.mubr.f32.mxu0 0.0
        %4964 = vmatmul.mubr.f32.gmra.mrb[0].mxu0 %v4890
        %v4965 = vpop.f32.mrb[0].mxu0
        %v4966 = vadd.f32 0.0, %v4965
        %v4967 = vpop.f32.mrb[0].mxu0
        %4968 = vdwg.mxu0
        %4971 = vrot.lane.b32.xlu0 %v4961, 16
        %v4972 = vpop.permute.xlu0 %4971
        %4973 = vrot.lane.b32.xlu0 %v4966, 16
        %v4974 = vpop.permute.xlu0 %4973
        %v4977 = vsel %vm1238, %v4765, %v4972
        %v4978 = vsel %vm1238, %v4770, %v4974
        %v4980 = vlaneseq
        %v4981 = vshrl.u32 %v4980, 7
        %v4982 = vsub.s32 0, %v4981
        %v4983 = vrot.slane %v804, %v4982
        %v4986 = vsel %vm632, %v4977, 0
        %v4989 = vsel %vm632, %v4978, 0
        %4991 = vmatprep.subr.mxu0 0.0
        %4992 = vmatpush1.msra.mxu0 %v799
        %4993 = vmatprep.subr.mxu0 0.0
        %4994 = vmatpush1.msra.mxu0 %v800
        %4995 = vmatprep.subr.mxu0 0.0
        %4996 = vmatpush1.msra.mxu0 %v801
        %4997 = vmatprep.subr.mxu0 0.0
        %4998 = vmatpush1.msra.mxu0 %v802
        %4999 = vmatprep.subr.mxu0 0.0
        %5000 = vmatpush1.msra.mxu0 0.0
        %5001 = vmatprep.subr.mxu0 0.0
        %5002 = vmatpush1.msra.mxu0 0.0
        %5003 = vmatprep.subr.mxu0 0.0
        %5004 = vmatpush1.msra.mxu0 0.0
        %5005 = vmatprep.subr.mxu0 0.0
        %5006 = vmatpush1.msra.mxu0 0.0
        %5007 = vmatprep.subr.mxu0 0.0
        %5008 = vmatpush1.msra.mxu0 0.0
        %5009 = vmatprep.subr.mxu0 0.0
        %5010 = vmatpush1.msra.mxu0 0.0
        %5011 = vmatprep.subr.mxu0 0.0
        %5012 = vmatpush1.msra.mxu0 0.0
        %5013 = vmatprep.subr.mxu0 0.0
        %5014 = vmatpush1.msra.mxu0 0.0
        %5015 = vmatprep.subr.mxu0 0.0
        %5016 = vmatpush1.msra.mxu0 0.0
        %5017 = vmatprep.subr.mxu0 0.0
        %5018 = vmatpush1.msra.mxu0 0.0
        %5019 = vmatprep.subr.mxu0 0.0
        %5020 = vmatpush1.msra.mxu0 0.0
        %5021 = vmatprep.subr.mxu0 0.0
        %5022 = vmatpush1.msra.mxu0 0.0
        %5023 = vmatprep.subr.mxu0 0.0
        %5024 = vmatpush1.msra.mxu0 0.0
        %5025 = vmatprep.subr.mxu0 0.0
        %5026 = vmatpush1.msra.mxu0 0.0
        %5027 = vmatprep.subr.mxu0 0.0
        %5028 = vmatpush1.msra.mxu0 0.0
        %5029 = vmatprep.subr.mxu0 0.0
        %5030 = vmatpush1.msra.mxu0 0.0
        %5031 = vmatprep.subr.mxu0 0.0
        %5032 = vmatpush1.msra.mxu0 0.0
        %5033 = vmatprep.subr.mxu0 0.0
        %5034 = vmatpush1.msra.mxu0 0.0
        %5035 = vmatprep.subr.mxu0 0.0
        %5036 = vmatpush1.msra.mxu0 0.0
        %5037 = vmatprep.subr.mxu0 0.0
        %5038 = vmatpush1.msra.mxu0 0.0
        %5039 = vmatprep.subr.mxu0 0.0
        %5040 = vmatpush1.msra.mxu0 0.0
        %5041 = vmatprep.subr.mxu0 0.0
        %5042 = vmatpush1.msra.mxu0 0.0
        %5043 = vmatprep.subr.mxu0 0.0
        %5044 = vmatpush1.msra.mxu0 0.0
        %5045 = vmatprep.subr.mxu0 0.0
        %5046 = vmatpush1.msra.mxu0 0.0
        %5047 = vmatprep.subr.mxu0 0.0
        %5048 = vmatpush1.msra.mxu0 0.0
        %5049 = vmatprep.subr.mxu0 0.0
        %5050 = vmatpush1.msra.mxu0 0.0
        %5051 = vmatprep.subr.mxu0 0.0
        %5052 = vmatpush1.msra.mxu0 0.0
        %5053 = vmatprep.subr.mxu0 0.0
        %5054 = vmatpush1.msra.mxu0 0.0
        %5055 = vmatprep.mubr.f32.mxu0 0.0
        %5056 = vmatmul.mubr.f32.gmra.mrb[0].mxu0 %v4986
        %v5057 = vpop.f32.mrb[0].mxu0
        %v5058 = vadd.f32 %v4983, %v5057
        %v5059 = vpop.f32.mrb[0].mxu0
        %5060 = vmatprep.mubr.f32.mxu0 0.0
        %5061 = vmatmul.mubr.f32.gmra.mrb[0].mxu0 %v4989
        %v5062 = vpop.f32.mrb[0].mxu0
        %v5063 = vadd.f32 %v4983, %v5062
        %v5064 = vpop.f32.mrb[0].mxu0
        %5065 = vdwg.mxu0
        %v5066 = vmul.f32 %v4882, 0.5
        %v5067 = vmul.f32 %v4883, 0.5
        %v5068 = vsel %vm2325, %v5058, 0.0
        %v5069 = vsel %vm2325, %v5063, 0.0
        %v5070 = vadd.f32 %v5068, %v5069
        %v5071 = vrot.slane %v5070, 4
        %v5072 = vadd.f32 %v5070, %v5071
        %v5073 = vrot.slane %v5072, 2
        %v5074 = vadd.f32 %v5072, %v5073
        %v5075 = vrot.slane %v5074, 1
        %v5076 = vadd.f32 %v5074, %v5075
        %v5077 = vmul.f32 %v5076, %v2335
        %v5078 = vadd.f32 %v2336, %v3695
        %v5079 = vadd.f32 %v5078, %v5077
        %5082 = vrot.lane.b32.xlu0 %v5066, 6
        %v5083 = vpop.permute.xlu0 %5082
        %5084 = vrot.lane.b32.xlu0 %v5067, 6
        %v5085 = vpop.permute.xlu0 %5084
        %5089 = vrot.lane.b32.xlu0 %v5079, 13
        %v5090 = vpop.permute.xlu0 %5089
        %5093 = vrot.lane.b32.xlu0 %v3705, 23
        %v5094 = vpop.permute.xlu0 %5093
        %v5096 = vsel %vm1163, %v2323, %v5083
        %v5097 = vsel %vm1163, %v2324, %v5085
        %vm5098 = vcmask 105472
        %v5099 = vsel %vm5098, %v5096, %v5090
        %v5100 = vsel %vm5098, %v5097, %v5090
        %vm5101 = vcmask 187392
        %v5102 = vsel %vm5101, %v5099, %v5094
        %v5103 = vsel %vm5101, %v5100, %v5094
        %vm5104 = vcmask 228352
        %v5105 = vsel %vm5104, %v5102, 0.0
        %v5106 = vsel %vm5104, %v5103, 0.0
        %5107 = vst [vmem:[%s526] sm:$0xff] %v5105
        %5108 = vst [vmem:[%s526 + $0x8] sm:$0xff] %v5106
        %p5109 = scmp.lt.s32.totalorder %s28, 1
        %s5110 = scalar_select %p5109, %s28, 1
        %s5111 = smul.addr %s5110, 2
        %s5112 = smul.addr %s5111, 8
        %s5113 = scalar_lea.vmem %s13, %s5112
        // Predicated region
        $region97: #{slot_cswin_qsa_forward.1} parent=71 // pred_check
          %p5114 = pneg %p324
        $region98: #{slot_cswin_qsa_forward.1} parent=71 // pred_check_branch
          %5116 = sbr.rel (%p5114) target = $region100
        $region99: #{slot_cswin_qsa_forward.1} parent=71 // pred_region
          _
        $region100: #{slot_cswin_qsa_forward.1} parent=71 // pred_fallthru
          _
      $region72: #{slot_cswin_qsa_forward.1} parent=5 // pred_fallthru
        _
      %p5117 = scmp.le.s32.totalorder 2, %s23
      // Predicated region
      $region101: #{slot_cswin_qsa_forward.1} parent=5 // pred_check
        %p5118 = pneg %p5117
      $region102: #{slot_cswin_qsa_forward.1} parent=5 // pred_check_branch
        %5120 = sbr.rel (%p5118) target = $region104
      $region103: #{slot_cswin_qsa_forward.1} parent=5 // pred_region
        %s5121 = ssub.s32 %s23, 2
        // Predicated region
        $region105: #{slot_cswin_qsa_forward.1} parent=103 // pred_check
          %p5122 = pneg %p330
        $region106: #{slot_cswin_qsa_forward.1} parent=103 // pred_check_branch
          %5124 = sbr.rel (%p5122) target = $region108
        $region107: #{slot_cswin_qsa_forward.1} parent=103 // pred_region
          %p5125 = scmp.lt.s32.totalorder %s29, 1
          %s5126 = scalar_select %p5125, %s29, 1
          %s5127 = smul.addr %s5126, 2
          %s5128 = smul.addr %s5127, 8
          %s5129 = scalar_lea.vmem %s13, %s5128
        $region108: #{slot_cswin_qsa_forward.1} parent=103 // pred_fallthru
          _
      $region104: #{slot_cswin_qsa_forward.1} parent=5 // pred_fallthru
        _
    $region6: #{slot_cswin_qsa_forward.1} parent=1 // loop_footer
      %s27 = sadd.s32 1, %s23
    $region7: #{slot_cswin_qsa_forward.1} parent=1 // loop_footer_branch
      %22 = sbr.rel target = $region3
    $region8: #{slot_cswin_qsa_forward.1} parent=1 // loop_exit
      _
    %5130 = vsyncpa [#allocation3], 1
    %s5131 = scalar_lea.sflag [#allocation3], 1
    %5132 = vsyncpa %s5131, 1
    %5133 = vsyncpa [#allocation5], 1
    %5134 = vsyncpa [#allocation8], 1
    %5135 = vsyncpa [#allocation11], 1

</llo_original>
